<compile_context>
chip_gen: v7x
topology: tpu7x:2x2x1
jax: 0.10.0
libtpu: 0.0.40
codegen_flags: <defaults>
</compile_context>

<pallas_src>
import numpy as np

import jax
import jax.numpy as jnp
from jax.experimental import pallas as pl
from jax.experimental.pallas import tpu as pltpu

N = 2            # batch (bag size)
H0 = W0 = 28     # MNIST spatial size (required so flatten == 64*3*3)
BN_EPS = 1e-5


# ----------------------------------------------------------------------------
# Host-side construction of the matmul-form parameters.
# ----------------------------------------------------------------------------
def _conv_matrices(wt, in_w):
    """Torch conv weight (c_out, c_in, 3, 3) -> band matrices (3, c_in*in_w, c_out*out_w).

    Layout convention: activation lane index = c * width + w  (channel-major).
    M[dy, c*in_w + (w+dx), co*out_w + w] = wt[co, c, dy, dx].
    """
    c_out, c_in, _, _ = wt.shape
    out_w = in_w - 2
    m = np.zeros((3, c_in * in_w, c_out * out_w), np.float32)
    for dy in range(3):
        for dx in range(3):
            for w in range(out_w):
                rows = np.arange(c_in) * in_w + w + dx
                cols = np.arange(c_out) * out_w + w
                m[dy][np.ix_(rows, cols)] = wt[:, :, dy, dx].T  # (c_in, c_out)
    return m


def _pool_h(in_h):
    """Left-multiplication 0/1 selectors for the H half of a 2x2/2 max-pool."""
    out_h = in_h // 2
    m = np.zeros((2, out_h, in_h), np.float32)
    m[0, np.arange(out_h), 2 * np.arange(out_h)] = 1.0
    m[1, np.arange(out_h), 2 * np.arange(out_h) + 1] = 1.0
    return m


def _pool_w(c, in_w):
    """Right-multiplication 0/1 selectors for the W half (lane layout c*in_w + w)."""
    out_w = in_w // 2
    m = np.zeros((2, c * in_w, c * out_w), np.float32)
    for cc in range(c):
        m[0, cc * in_w + 2 * np.arange(out_w), cc * out_w + np.arange(out_w)] = 1.0
        m[1, cc * in_w + 2 * np.arange(out_w) + 1, cc * out_w + np.arange(out_w)] = 1.0
    return m


def _bn_rows(gamma, beta, mean, var, conv_bias, out_w):
    """Fold conv bias + eval-mode BN into per-lane scale/shift rows (1, C*out_w)."""
    scale = gamma / np.sqrt(var + BN_EPS)
    shift = beta - mean * scale
    g = np.repeat(scale, out_w)[None, :].astype(np.float32)
    h = np.repeat(conv_bias * scale + shift, out_w)[None, :].astype(np.float32)
    return g, h


def make_params(key):
    ks = list(jax.random.split(key, 22))

    def nrm(k, shape, scale=0.1):
        return np.asarray(scale * jax.random.normal(k, shape, dtype=jnp.float32))

    # PyTorch-layout parameters.
    w1 = nrm(ks[0], (16, 1, 3, 3));  b1 = nrm(ks[1], (16,))
    w2 = nrm(ks[2], (32, 16, 3, 3)); b2 = nrm(ks[3], (32,))
    w3 = nrm(ks[4], (64, 32, 3, 3)); b3 = nrm(ks[5], (64,))

    def bn(kg, kb, km, kv, c):
        gamma = 1.0 + nrm(kg, (c,))
        beta = nrm(kb, (c,))
        mean = nrm(km, (c,))
        var = 1.0 + np.abs(nrm(kv, (c,)))
        return gamma, beta, mean, var

    bn1 = bn(ks[6], ks[7], ks[8], ks[9], 16)
    bn2 = bn(ks[10], ks[11], ks[12], ks[13], 32)
    bn3 = bn(ks[14], ks[15], ks[16], ks[17], 64)

    fc1w = nrm(ks[18], (64, 576), 0.05)   # torch Linear weight (out, in = c*9 + h*3 + w)
    fc1b = nrm(ks[19], (64,))
    fc2w = nrm(ks[20], (1, 64))
    fc2b = nrm(ks[21], (1,))

    g1, h1 = _bn_rows(*bn1, b1, 26)
    g2, h2 = _bn_rows(*bn2, b2, 11)
    g3, h3 = _bn_rows(*bn3, b3, 3)

    # FC1 reindexed so that row index matches the kernel's (c*3 + w) lane layout
    # per H row:  w1h[h, c*3+w, o] = fc1w[o, c*9 + h*3 + w].
    w1h = np.transpose(fc1w.reshape(64, 64, 3, 3), (2, 1, 3, 0)).reshape(3, 192, 64)

    p = dict(
        a1=_conv_matrices(w1, 28), g1=g1, h1=h1,          # (3,28,416), (1,416)
        p1h=_pool_h(26), p1w=_pool_w(16, 26),             # (2,13,26), (2,416,208)
        a2=_conv_matrices(w2, 13), g2=g2, h2=h2,          # (3,208,352), (1,352)
        p2h=_pool_h(11), p2w=_pool_w(32, 11),             # (2,5,11), (2,352,160)
        a3=_conv_matrices(w3, 5), g3=g3, h3=h3,           # (3,160,192), (1,192)
        w1h=w1h, b1f=fc1b.reshape(1, 64),
        w2f=fc2w.reshape(1, 64), b2f=fc2b.reshape(1, 1),
    )
    return {k: jnp.asarray(v, dtype=jnp.float32) for k, v in p.items()}


# ----------------------------------------------------------------------------
# Kernel.
# ----------------------------------------------------------------------------
def _mil_kernel(x_ref,
                a1_ref, g1_ref, h1_ref, p1h_ref, p1w_ref,
                a2_ref, g2_ref, h2_ref, p2h_ref, p2w_ref,
                a3_ref, g3_ref, h3_ref,
                w1h_ref, b1f_ref, w2f_ref, b2f_ref,
                out_ref,
                p1_s, p2_s, s3_s):
    f32 = jnp.float32
    batch = out_ref.shape[0]

    def dot(a, b):
        return jnp.dot(a, b, preferred_element_type=f32)

    for n in range(batch):
        # --- Conv1 (1->16, 3x3 valid) + BN(eval) + ReLU : (26, 16*26) --------
        s = (dot(x_ref[n, 0:26, :], a1_ref[0]) +
             dot(x_ref[n, 1:27, :], a1_ref[1]) +
             dot(x_ref[n, 2:28, :], a1_ref[2]))
        s1 = jnp.maximum(s * g1_ref[...] + h1_ref[...], 0.0)

        # --- MaxPool 2x2 stride 2: 26x26 -> 13x13 (exact selection matmuls) --
        hm = jnp.maximum(dot(p1h_ref[0], s1), dot(p1h_ref[1], s1))
        p1_s[...] = jnp.maximum(dot(hm, p1w_ref[0]), dot(hm, p1w_ref[1]))

        # --- Conv2 (16->32, 3x3 valid) + BN + ReLU : (11, 32*11) -------------
        s = (dot(p1_s[0:11, :], a2_ref[0]) +
             dot(p1_s[1:12, :], a2_ref[1]) +
             dot(p1_s[2:13, :], a2_ref[2]))
        s2 = jnp.maximum(s * g2_ref[...] + h2_ref[...], 0.0)

        # --- MaxPool 2x2 stride 2 (floor): 11x11 -> 5x5 ----------------------
        hm = jnp.maximum(dot(p2h_ref[0], s2), dot(p2h_ref[1], s2))
        p2_s[...] = jnp.maximum(dot(hm, p2w_ref[0]), dot(hm, p2w_ref[1]))

        # --- Conv3 (32->64, 3x3 valid) + BN + ReLU : (3, 64*3) ---------------
        s = (dot(p2_s[0:3, :], a3_ref[0]) +
             dot(p2_s[1:4, :], a3_ref[1]) +
             dot(p2_s[2:5, :], a3_ref[2]))
        s3_s[...] = jnp.maximum(s * g3_ref[...] + h3_ref[...], 0.0)

        # --- Linear(576->64) + ReLU (torch (c,h,w) flatten absorbed in w1h) --
        hid = (dot(s3_s[0:1, :], w1h_ref[0]) +
               dot(s3_s[1:2, :], w1h_ref[1]) +
               dot(s3_s[2:3, :], w1h_ref[2]) + b1f_ref[...])
        hid = jnp.maximum(hid, 0.0)

        # --- Linear(64->1) + Sigmoid (stable tanh form) ----------------------
        logit = jnp.sum(hid * w2f_ref[...], axis=1, keepdims=True) + b2f_ref[...]
        out_ref[n:n + 1, :] = 0.5 * (jnp.tanh(0.5 * logit) + 1.0)


# ----------------------------------------------------------------------------
# Wrapper.
# ----------------------------------------------------------------------------
@jax.jit
def mnist_mil_forward(x_nchw, params):
    # Wrapper input is NCHW (PyTorch); the kernel consumes per-image (H, W).
    x = x_nchw[:, 0, :, :].astype(jnp.float32)       # (B, 28, 28)
    b = x.shape[0]

    args = (x,
            params["a1"], params["g1"], params["h1"], params["p1h"], params["p1w"],
            params["a2"], params["g2"], params["h2"], params["p2h"], params["p2w"],
            params["a3"], params["g3"], params["h3"],
            params["w1h"], params["b1f"], params["w2f"], params["b2f"])

    vmem_spec = pl.BlockSpec(memory_space=pltpu.MemorySpace.VMEM)

    return pl.pallas_call(
        _mil_kernel,
        out_shape=jax.ShapeDtypeStruct((b, 1), jnp.float32),
        in_specs=[vmem_spec] * len(args),
        out_specs=vmem_spec,
        scratch_shapes=[
            pltpu.VMEM((13, 16 * 13), jnp.float32),   # p1 : pool1 out (13, 208)
            pltpu.VMEM((5, 32 * 5), jnp.float32),     # p2 : pool2 out (5, 160)
            pltpu.VMEM((3, 64 * 3), jnp.float32),     # s3 : conv3 out (3, 192)
        ],
    )(*args)


if __name__ == "__main__":
    key = jax.random.PRNGKey(0)
    kx, kp = jax.random.split(key)
    x = jax.random.normal(kx, (N, 1, H0, W0), dtype=jnp.float32)   # NCHW, like PyTorch
    params = make_params(kp)

    out = mnist_mil_forward(x, params)
    out = jax.block_until_ready(out)

    assert out.shape == (N, 1), out.shape
    assert bool(jnp.all(jnp.isfinite(out)))
    assert bool(jnp.all((out >= 0.0) & (out <= 1.0)))   # sigmoid range
    print("KERNEL_OK")
</pallas_src>

<mosaic_0001>
module attributes {stable_mosaic.version = 11 : i64} {
  func.func @_mil_kernel(%arg0: memref<2x28x28xf32, #tpu.memory_space<vmem>>, %arg1: memref<3x28x416xf32, #tpu.memory_space<vmem>>, %arg2: memref<1x416xf32, #tpu.memory_space<vmem>>, %arg3: memref<1x416xf32, #tpu.memory_space<vmem>>, %arg4: memref<2x13x26xf32, #tpu.memory_space<vmem>>, %arg5: memref<2x416x208xf32, #tpu.memory_space<vmem>>, %arg6: memref<3x208x352xf32, #tpu.memory_space<vmem>>, %arg7: memref<1x352xf32, #tpu.memory_space<vmem>>, %arg8: memref<1x352xf32, #tpu.memory_space<vmem>>, %arg9: memref<2x5x11xf32, #tpu.memory_space<vmem>>, %arg10: memref<2x352x160xf32, #tpu.memory_space<vmem>>, %arg11: memref<3x160x192xf32, #tpu.memory_space<vmem>>, %arg12: memref<1x192xf32, #tpu.memory_space<vmem>>, %arg13: memref<1x192xf32, #tpu.memory_space<vmem>>, %arg14: memref<3x192x64xf32, #tpu.memory_space<vmem>>, %arg15: memref<1x64xf32, #tpu.memory_space<vmem>>, %arg16: memref<1x64xf32, #tpu.memory_space<vmem>>, %arg17: memref<1x1xf32, #tpu.memory_space<vmem>>, %arg18: memref<2x1xf32, #tpu.memory_space<vmem>>, %arg19: memref<13x208xf32, #tpu.memory_space<vmem>>, %arg20: memref<5x160xf32, #tpu.memory_space<vmem>>, %arg21: memref<3x192xf32, #tpu.memory_space<vmem>>) attributes {dimension_semantics = [], scalar_prefetch = 0 : i64, scratch_operands = 3 : i64, tpu.core_type = #tpu.core_type<tc>} {
    %c0 = arith.constant 0 : index
    %c0_0 = arith.constant 0 : index
    %c0_1 = arith.constant 0 : index
    %0 = vector.load %arg0[%c0, %c0_0, %c0_1] : memref<2x28x28xf32, #tpu.memory_space<vmem>>, vector<1x26x28xf32>
    %1 = vector.shape_cast %0 : vector<1x26x28xf32> to vector<26x28xf32>
    %c0_2 = arith.constant 0 : index
    %c0_3 = arith.constant 0 : index
    %c0_4 = arith.constant 0 : index
    %2 = vector.load %arg1[%c0_2, %c0_3, %c0_4] : memref<3x28x416xf32, #tpu.memory_space<vmem>>, vector<1x28x416xf32>
    %3 = vector.shape_cast %2 : vector<1x28x416xf32> to vector<28x416xf32>
    %cst = arith.constant dense<0.000000e+00> : vector<26x416xf32>
    %4 = tpu.matmul %1, %3, %cst {dimension_numbers = #tpu.dot_dimension_numbers<[1], [0], [0], [1], [0, 0, 1, 1], [], []>} : vector<26x28xf32>, vector<28x416xf32>, vector<26x416xf32> -> vector<26x416xf32>
    %c0_5 = arith.constant 0 : index
    %c1 = arith.constant 1 : index
    %c0_6 = arith.constant 0 : index
    %5 = vector.load %arg0[%c0_5, %c1, %c0_6] : memref<2x28x28xf32, #tpu.memory_space<vmem>>, vector<1x26x28xf32>
    %6 = vector.shape_cast %5 : vector<1x26x28xf32> to vector<26x28xf32>
    %c1_7 = arith.constant 1 : index
    %c0_8 = arith.constant 0 : index
    %c0_9 = arith.constant 0 : index
    %7 = vector.load %arg1[%c1_7, %c0_8, %c0_9] : memref<3x28x416xf32, #tpu.memory_space<vmem>>, vector<1x28x416xf32>
    %8 = vector.shape_cast %7 : vector<1x28x416xf32> to vector<28x416xf32>
    %cst_10 = arith.constant dense<0.000000e+00> : vector<26x416xf32>
    %9 = tpu.matmul %6, %8, %cst_10 {dimension_numbers = #tpu.dot_dimension_numbers<[1], [0], [0], [1], [0, 0, 1, 1], [], []>} : vector<26x28xf32>, vector<28x416xf32>, vector<26x416xf32> -> vector<26x416xf32>
    %10 = arith.addf %4, %9 : vector<26x416xf32>
    %c0_11 = arith.constant 0 : index
    %c2 = arith.constant 2 : index
    %c0_12 = arith.constant 0 : index
    %11 = vector.load %arg0[%c0_11, %c2, %c0_12] : memref<2x28x28xf32, #tpu.memory_space<vmem>>, vector<1x26x28xf32>
    %12 = vector.shape_cast %11 : vector<1x26x28xf32> to vector<26x28xf32>
    %c2_13 = arith.constant 2 : index
    %c0_14 = arith.constant 0 : index
    %c0_15 = arith.constant 0 : index
    %13 = vector.load %arg1[%c2_13, %c0_14, %c0_15] : memref<3x28x416xf32, #tpu.memory_space<vmem>>, vector<1x28x416xf32>
    %14 = vector.shape_cast %13 : vector<1x28x416xf32> to vector<28x416xf32>
    %cst_16 = arith.constant dense<0.000000e+00> : vector<26x416xf32>
    %15 = tpu.matmul %12, %14, %cst_16 {dimension_numbers = #tpu.dot_dimension_numbers<[1], [0], [0], [1], [0, 0, 1, 1], [], []>} : vector<26x28xf32>, vector<28x416xf32>, vector<26x416xf32> -> vector<26x416xf32>
    %16 = arith.addf %10, %15 : vector<26x416xf32>
    %c0_17 = arith.constant 0 : index
    %c0_18 = arith.constant 0 : index
    %17 = vector.load %arg2[%c0_17, %c0_18] : memref<1x416xf32, #tpu.memory_space<vmem>>, vector<1x416xf32>
    %18 = vector.broadcast %17 : vector<1x416xf32> to vector<26x416xf32>
    %19 = arith.mulf %16, %18 : vector<26x416xf32>
    %c0_19 = arith.constant 0 : index
    %c0_20 = arith.constant 0 : index
    %20 = vector.load %arg3[%c0_19, %c0_20] : memref<1x416xf32, #tpu.memory_space<vmem>>, vector<1x416xf32>
    %21 = vector.broadcast %20 : vector<1x416xf32> to vector<26x416xf32>
    %22 = arith.addf %19, %21 : vector<26x416xf32>
    %cst_21 = arith.constant 0.000000e+00 : f32
    %23 = vector.broadcast %cst_21 : f32 to vector<26x416xf32>
    %24 = arith.maximumf %22, %23 : vector<26x416xf32>
    %c0_22 = arith.constant 0 : index
    %c0_23 = arith.constant 0 : index
    %c0_24 = arith.constant 0 : index
    %25 = vector.load %arg4[%c0_22, %c0_23, %c0_24] : memref<2x13x26xf32, #tpu.memory_space<vmem>>, vector<1x13x26xf32>
    %26 = vector.shape_cast %25 : vector<1x13x26xf32> to vector<13x26xf32>
    %cst_25 = arith.constant dense<0.000000e+00> : vector<13x416xf32>
    %27 = tpu.matmul %26, %24, %cst_25 {dimension_numbers = #tpu.dot_dimension_numbers<[1], [0], [0], [1], [0, 0, 1, 1], [], []>} : vector<13x26xf32>, vector<26x416xf32>, vector<13x416xf32> -> vector<13x416xf32>
    %c1_26 = arith.constant 1 : index
    %c0_27 = arith.constant 0 : index
    %c0_28 = arith.constant 0 : index
    %28 = vector.load %arg4[%c1_26, %c0_27, %c0_28] : memref<2x13x26xf32, #tpu.memory_space<vmem>>, vector<1x13x26xf32>
    %29 = vector.shape_cast %28 : vector<1x13x26xf32> to vector<13x26xf32>
    %cst_29 = arith.constant dense<0.000000e+00> : vector<13x416xf32>
    %30 = tpu.matmul %29, %24, %cst_29 {dimension_numbers = #tpu.dot_dimension_numbers<[1], [0], [0], [1], [0, 0, 1, 1], [], []>} : vector<13x26xf32>, vector<26x416xf32>, vector<13x416xf32> -> vector<13x416xf32>
    %31 = arith.maximumf %27, %30 : vector<13x416xf32>
    %c0_30 = arith.constant 0 : index
    %c0_31 = arith.constant 0 : index
    %c0_32 = arith.constant 0 : index
    %32 = vector.load %arg5[%c0_30, %c0_31, %c0_32] : memref<2x416x208xf32, #tpu.memory_space<vmem>>, vector<1x416x208xf32>
    %33 = vector.shape_cast %32 : vector<1x416x208xf32> to vector<416x208xf32>
    %cst_33 = arith.constant dense<0.000000e+00> : vector<13x208xf32>
    %34 = tpu.matmul %31, %33, %cst_33 {dimension_numbers = #tpu.dot_dimension_numbers<[1], [0], [0], [1], [0, 0, 1, 1], [], []>} : vector<13x416xf32>, vector<416x208xf32>, vector<13x208xf32> -> vector<13x208xf32>
    %c1_34 = arith.constant 1 : index
    %c0_35 = arith.constant 0 : index
    %c0_36 = arith.constant 0 : index
    %35 = vector.load %arg5[%c1_34, %c0_35, %c0_36] : memref<2x416x208xf32, #tpu.memory_space<vmem>>, vector<1x416x208xf32>
    %36 = vector.shape_cast %35 : vector<1x416x208xf32> to vector<416x208xf32>
    %cst_37 = arith.constant dense<0.000000e+00> : vector<13x208xf32>
    %37 = tpu.matmul %31, %36, %cst_37 {dimension_numbers = #tpu.dot_dimension_numbers<[1], [0], [0], [1], [0, 0, 1, 1], [], []>} : vector<13x416xf32>, vector<416x208xf32>, vector<13x208xf32> -> vector<13x208xf32>
    %38 = arith.maximumf %34, %37 : vector<13x208xf32>
    %c0_38 = arith.constant 0 : index
    %c0_39 = arith.constant 0 : index
    %39 = vector.load %arg19[%c0_38, %c0_39] : memref<13x208xf32, #tpu.memory_space<vmem>>, vector<13x208xf32>
    tpu.vector_store %arg19[%c0_38, %c0_39], %38 {strides = array<i32>} : memref<13x208xf32, #tpu.memory_space<vmem>>, vector<13x208xf32>,
    %c0_40 = arith.constant 0 : index
    %c0_41 = arith.constant 0 : index
    %40 = vector.load %arg19[%c0_40, %c0_41] : memref<13x208xf32, #tpu.memory_space<vmem>>, vector<11x208xf32>
    %c0_42 = arith.constant 0 : index
    %c0_43 = arith.constant 0 : index
    %c0_44 = arith.constant 0 : index
    %41 = vector.load %arg6[%c0_42, %c0_43, %c0_44] : memref<3x208x352xf32, #tpu.memory_space<vmem>>, vector<1x208x352xf32>
    %42 = vector.shape_cast %41 : vector<1x208x352xf32> to vector<208x352xf32>
    %cst_45 = arith.constant dense<0.000000e+00> : vector<11x352xf32>
    %43 = tpu.matmul %40, %42, %cst_45 {dimension_numbers = #tpu.dot_dimension_numbers<[1], [0], [0], [1], [0, 0, 1, 1], [], []>} : vector<11x208xf32>, vector<208x352xf32>, vector<11x352xf32> -> vector<11x352xf32>
    %c1_46 = arith.constant 1 : index
    %c0_47 = arith.constant 0 : index
    %44 = vector.load %arg19[%c1_46, %c0_47] : memref<13x208xf32, #tpu.memory_space<vmem>>, vector<11x208xf32>
    %c1_48 = arith.constant 1 : index
    %c0_49 = arith.constant 0 : index
    %c0_50 = arith.constant 0 : index
    %45 = vector.load %arg6[%c1_48, %c0_49, %c0_50] : memref<3x208x352xf32, #tpu.memory_space<vmem>>, vector<1x208x352xf32>
    %46 = vector.shape_cast %45 : vector<1x208x352xf32> to vector<208x352xf32>
    %cst_51 = arith.constant dense<0.000000e+00> : vector<11x352xf32>
    %47 = tpu.matmul %44, %46, %cst_51 {dimension_numbers = #tpu.dot_dimension_numbers<[1], [0], [0], [1], [0, 0, 1, 1], [], []>} : vector<11x208xf32>, vector<208x352xf32>, vector<11x352xf32> -> vector<11x352xf32>
    %48 = arith.addf %43, %47 : vector<11x352xf32>
    %c2_52 = arith.constant 2 : index
    %c0_53 = arith.constant 0 : index
    %49 = vector.load %arg19[%c2_52, %c0_53] : memref<13x208xf32, #tpu.memory_space<vmem>>, vector<11x208xf32>
    %c2_54 = arith.constant 2 : index
    %c0_55 = arith.constant 0 : index
    %c0_56 = arith.constant 0 : index
    %50 = vector.load %arg6[%c2_54, %c0_55, %c0_56] : memref<3x208x352xf32, #tpu.memory_space<vmem>>, vector<1x208x352xf32>
    %51 = vector.shape_cast %50 : vector<1x208x352xf32> to vector<208x352xf32>
    %cst_57 = arith.constant dense<0.000000e+00> : vector<11x352xf32>
    %52 = tpu.matmul %49, %51, %cst_57 {dimension_numbers = #tpu.dot_dimension_numbers<[1], [0], [0], [1], [0, 0, 1, 1], [], []>} : vector<11x208xf32>, vector<208x352xf32>, vector<11x352xf32> -> vector<11x352xf32>
    %53 = arith.addf %48, %52 : vector<11x352xf32>
    %c0_58 = arith.constant 0 : index
    %c0_59 = arith.constant 0 : index
    %54 = vector.load %arg7[%c0_58, %c0_59] : memref<1x352xf32, #tpu.memory_space<vmem>>, vector<1x352xf32>
    %55 = vector.broadcast %54 : vector<1x352xf32> to vector<11x352xf32>
    %56 = arith.mulf %53, %55 : vector<11x352xf32>
    %c0_60 = arith.constant 0 : index
    %c0_61 = arith.constant 0 : index
    %57 = vector.load %arg8[%c0_60, %c0_61] : memref<1x352xf32, #tpu.memory_space<vmem>>, vector<1x352xf32>
    %58 = vector.broadcast %57 : vector<1x352xf32> to vector<11x352xf32>
    %59 = arith.addf %56, %58 : vector<11x352xf32>
    %cst_62 = arith.constant 0.000000e+00 : f32
    %60 = vector.broadcast %cst_62 : f32 to vector<11x352xf32>
    %61 = arith.maximumf %59, %60 : vector<11x352xf32>
    %c0_63 = arith.constant 0 : index
    %c0_64 = arith.constant 0 : index
    %c0_65 = arith.constant 0 : index
    %62 = vector.load %arg9[%c0_63, %c0_64, %c0_65] : memref<2x5x11xf32, #tpu.memory_space<vmem>>, vector<1x5x11xf32>
    %63 = vector.shape_cast %62 : vector<1x5x11xf32> to vector<5x11xf32>
    %cst_66 = arith.constant dense<0.000000e+00> : vector<5x352xf32>
    %64 = tpu.matmul %63, %61, %cst_66 {dimension_numbers = #tpu.dot_dimension_numbers<[1], [0], [0], [1], [0, 0, 1, 1], [], []>} : vector<5x11xf32>, vector<11x352xf32>, vector<5x352xf32> -> vector<5x352xf32>
    %c1_67 = arith.constant 1 : index
    %c0_68 = arith.constant 0 : index
    %c0_69 = arith.constant 0 : index
    %65 = vector.load %arg9[%c1_67, %c0_68, %c0_69] : memref<2x5x11xf32, #tpu.memory_space<vmem>>, vector<1x5x11xf32>
    %66 = vector.shape_cast %65 : vector<1x5x11xf32> to vector<5x11xf32>
    %cst_70 = arith.constant dense<0.000000e+00> : vector<5x352xf32>
    %67 = tpu.matmul %66, %61, %cst_70 {dimension_numbers = #tpu.dot_dimension_numbers<[1], [0], [0], [1], [0, 0, 1, 1], [], []>} : vector<5x11xf32>, vector<11x352xf32>, vector<5x352xf32> -> vector<5x352xf32>
    %68 = arith.maximumf %64, %67 : vector<5x352xf32>
    %c0_71 = arith.constant 0 : index
    %c0_72 = arith.constant 0 : index
    %c0_73 = arith.constant 0 : index
    %69 = vector.load %arg10[%c0_71, %c0_72, %c0_73] : memref<2x352x160xf32, #tpu.memory_space<vmem>>, vector<1x352x160xf32>
    %70 = vector.shape_cast %69 : vector<1x352x160xf32> to vector<352x160xf32>
    %cst_74 = arith.constant dense<0.000000e+00> : vector<5x160xf32>
    %71 = tpu.matmul %68, %70, %cst_74 {dimension_numbers = #tpu.dot_dimension_numbers<[1], [0], [0], [1], [0, 0, 1, 1], [], []>} : vector<5x352xf32>, vector<352x160xf32>, vector<5x160xf32> -> vector<5x160xf32>
    %c1_75 = arith.constant 1 : index
    %c0_76 = arith.constant 0 : index
    %c0_77 = arith.constant 0 : index
    %72 = vector.load %arg10[%c1_75, %c0_76, %c0_77] : memref<2x352x160xf32, #tpu.memory_space<vmem>>, vector<1x352x160xf32>
    %73 = vector.shape_cast %72 : vector<1x352x160xf32> to vector<352x160xf32>
    %cst_78 = arith.constant dense<0.000000e+00> : vector<5x160xf32>
    %74 = tpu.matmul %68, %73, %cst_78 {dimension_numbers = #tpu.dot_dimension_numbers<[1], [0], [0], [1], [0, 0, 1, 1], [], []>} : vector<5x352xf32>, vector<352x160xf32>, vector<5x160xf32> -> vector<5x160xf32>
    %75 = arith.maximumf %71, %74 : vector<5x160xf32>
    %c0_79 = arith.constant 0 : index
    %c0_80 = arith.constant 0 : index
    %76 = vector.load %arg20[%c0_79, %c0_80] : memref<5x160xf32, #tpu.memory_space<vmem>>, vector<5x160xf32>
    tpu.vector_store %arg20[%c0_79, %c0_80], %75 {strides = array<i32>} : memref<5x160xf32, #tpu.memory_space<vmem>>, vector<5x160xf32>,
    %c0_81 = arith.constant 0 : index
    %c0_82 = arith.constant 0 : index
    %77 = vector.load %arg20[%c0_81, %c0_82] : memref<5x160xf32, #tpu.memory_space<vmem>>, vector<3x160xf32>
    %c0_83 = arith.constant 0 : index
    %c0_84 = arith.constant 0 : index
    %c0_85 = arith.constant 0 : index
    %78 = vector.load %arg11[%c0_83, %c0_84, %c0_85] : memref<3x160x192xf32, #tpu.memory_space<vmem>>, vector<1x160x192xf32>
    %79 = vector.shape_cast %78 : vector<1x160x192xf32> to vector<160x192xf32>
    %cst_86 = arith.constant dense<0.000000e+00> : vector<3x192xf32>
    %80 = tpu.matmul %77, %79, %cst_86 {dimension_numbers = #tpu.dot_dimension_numbers<[1], [0], [0], [1], [0, 0, 1, 1], [], []>} : vector<3x160xf32>, vector<160x192xf32>, vector<3x192xf32> -> vector<3x192xf32>
    %c1_87 = arith.constant 1 : index
    %c0_88 = arith.constant 0 : index
    %81 = vector.load %arg20[%c1_87, %c0_88] : memref<5x160xf32, #tpu.memory_space<vmem>>, vector<3x160xf32>
    %c1_89 = arith.constant 1 : index
    %c0_90 = arith.constant 0 : index
    %c0_91 = arith.constant 0 : index
    %82 = vector.load %arg11[%c1_89, %c0_90, %c0_91] : memref<3x160x192xf32, #tpu.memory_space<vmem>>, vector<1x160x192xf32>
    %83 = vector.shape_cast %82 : vector<1x160x192xf32> to vector<160x192xf32>
    %cst_92 = arith.constant dense<0.000000e+00> : vector<3x192xf32>
    %84 = tpu.matmul %81, %83, %cst_92 {dimension_numbers = #tpu.dot_dimension_numbers<[1], [0], [0], [1], [0, 0, 1, 1], [], []>} : vector<3x160xf32>, vector<160x192xf32>, vector<3x192xf32> -> vector<3x192xf32>
    %85 = arith.addf %80, %84 : vector<3x192xf32>
    %c2_93 = arith.constant 2 : index
    %c0_94 = arith.constant 0 : index
    %86 = vector.load %arg20[%c2_93, %c0_94] : memref<5x160xf32, #tpu.memory_space<vmem>>, vector<3x160xf32>
    %c2_95 = arith.constant 2 : index
    %c0_96 = arith.constant 0 : index
    %c0_97 = arith.constant 0 : index
    %87 = vector.load %arg11[%c2_95, %c0_96, %c0_97] : memref<3x160x192xf32, #tpu.memory_space<vmem>>, vector<1x160x192xf32>
    %88 = vector.shape_cast %87 : vector<1x160x192xf32> to vector<160x192xf32>
    %cst_98 = arith.constant dense<0.000000e+00> : vector<3x192xf32>
    %89 = tpu.matmul %86, %88, %cst_98 {dimension_numbers = #tpu.dot_dimension_numbers<[1], [0], [0], [1], [0, 0, 1, 1], [], []>} : vector<3x160xf32>, vector<160x192xf32>, vector<3x192xf32> -> vector<3x192xf32>
    %90 = arith.addf %85, %89 : vector<3x192xf32>
    %c0_99 = arith.constant 0 : index
    %c0_100 = arith.constant 0 : index
    %91 = vector.load %arg12[%c0_99, %c0_100] : memref<1x192xf32, #tpu.memory_space<vmem>>, vector<1x192xf32>
    %92 = vector.broadcast %91 : vector<1x192xf32> to vector<3x192xf32>
    %93 = arith.mulf %90, %92 : vector<3x192xf32>
    %c0_101 = arith.constant 0 : index
    %c0_102 = arith.constant 0 : index
    %94 = vector.load %arg13[%c0_101, %c0_102] : memref<1x192xf32, #tpu.memory_space<vmem>>, vector<1x192xf32>
    %95 = vector.broadcast %94 : vector<1x192xf32> to vector<3x192xf32>
    %96 = arith.addf %93, %95 : vector<3x192xf32>
    %cst_103 = arith.constant 0.000000e+00 : f32
    %97 = vector.broadcast %cst_103 : f32 to vector<3x192xf32>
    %98 = arith.maximumf %96, %97 : vector<3x192xf32>
    %c0_104 = arith.constant 0 : index
    %c0_105 = arith.constant 0 : index
    %99 = vector.load %arg21[%c0_104, %c0_105] : memref<3x192xf32, #tpu.memory_space<vmem>>, vector<3x192xf32>
    tpu.vector_store %arg21[%c0_104, %c0_105], %98 {strides = array<i32>} : memref<3x192xf32, #tpu.memory_space<vmem>>, vector<3x192xf32>,
    %c0_106 = arith.constant 0 : index
    %c0_107 = arith.constant 0 : index
    %100 = vector.load %arg21[%c0_106, %c0_107] : memref<3x192xf32, #tpu.memory_space<vmem>>, vector<1x192xf32>
    %c0_108 = arith.constant 0 : index
    %c0_109 = arith.constant 0 : index
    %c0_110 = arith.constant 0 : index
    %101 = vector.load %arg14[%c0_108, %c0_109, %c0_110] : memref<3x192x64xf32, #tpu.memory_space<vmem>>, vector<1x192x64xf32>
    %102 = vector.shape_cast %101 : vector<1x192x64xf32> to vector<192x64xf32>
    %cst_111 = arith.constant dense<0.000000e+00> : vector<1x64xf32>
    %103 = tpu.matmul %100, %102, %cst_111 {dimension_numbers = #tpu.dot_dimension_numbers<[1], [0], [0], [1], [0, 0, 1, 1], [], []>} : vector<1x192xf32>, vector<192x64xf32>, vector<1x64xf32> -> vector<1x64xf32>
    %c1_112 = arith.constant 1 : index
    %c0_113 = arith.constant 0 : index
    %104 = vector.load %arg21[%c1_112, %c0_113] : memref<3x192xf32, #tpu.memory_space<vmem>>, vector<1x192xf32>
    %c1_114 = arith.constant 1 : index
    %c0_115 = arith.constant 0 : index
    %c0_116 = arith.constant 0 : index
    %105 = vector.load %arg14[%c1_114, %c0_115, %c0_116] : memref<3x192x64xf32, #tpu.memory_space<vmem>>, vector<1x192x64xf32>
    %106 = vector.shape_cast %105 : vector<1x192x64xf32> to vector<192x64xf32>
    %cst_117 = arith.constant dense<0.000000e+00> : vector<1x64xf32>
    %107 = tpu.matmul %104, %106, %cst_117 {dimension_numbers = #tpu.dot_dimension_numbers<[1], [0], [0], [1], [0, 0, 1, 1], [], []>} : vector<1x192xf32>, vector<192x64xf32>, vector<1x64xf32> -> vector<1x64xf32>
    %108 = arith.addf %103, %107 : vector<1x64xf32>
    %c2_118 = arith.constant 2 : index
    %c0_119 = arith.constant 0 : index
    %109 = vector.load %arg21[%c2_118, %c0_119] : memref<3x192xf32, #tpu.memory_space<vmem>>, vector<1x192xf32>
    %c2_120 = arith.constant 2 : index
    %c0_121 = arith.constant 0 : index
    %c0_122 = arith.constant 0 : index
    %110 = vector.load %arg14[%c2_120, %c0_121, %c0_122] : memref<3x192x64xf32, #tpu.memory_space<vmem>>, vector<1x192x64xf32>
    %111 = vector.shape_cast %110 : vector<1x192x64xf32> to vector<192x64xf32>
    %cst_123 = arith.constant dense<0.000000e+00> : vector<1x64xf32>
    %112 = tpu.matmul %109, %111, %cst_123 {dimension_numbers = #tpu.dot_dimension_numbers<[1], [0], [0], [1], [0, 0, 1, 1], [], []>} : vector<1x192xf32>, vector<192x64xf32>, vector<1x64xf32> -> vector<1x64xf32>
    %113 = arith.addf %108, %112 : vector<1x64xf32>
    %c0_124 = arith.constant 0 : index
    %c0_125 = arith.constant 0 : index
    %114 = vector.load %arg15[%c0_124, %c0_125] : memref<1x64xf32, #tpu.memory_space<vmem>>, vector<1x64xf32>
    %115 = arith.addf %113, %114 : vector<1x64xf32>
    %cst_126 = arith.constant 0.000000e+00 : f32
    %116 = vector.broadcast %cst_126 : f32 to vector<1x64xf32>
    %117 = arith.maximumf %115, %116 : vector<1x64xf32>
    %c0_127 = arith.constant 0 : index
    %c0_128 = arith.constant 0 : index
    %118 = vector.load %arg16[%c0_127, %c0_128] : memref<1x64xf32, #tpu.memory_space<vmem>>, vector<1x64xf32>
    %119 = arith.mulf %117, %118 : vector<1x64xf32>
    %cst_129 = arith.constant dense<0.000000e+00> : vector<1xf32>
    %120 = vector.multi_reduction <add>, %119, %cst_129 [1] : vector<1x64xf32> to vector<1xf32>
    %121 = vector.shape_cast %120 : vector<1xf32> to vector<1x1xf32>
    %c0_130 = arith.constant 0 : index
    %c0_131 = arith.constant 0 : index
    %122 = vector.load %arg17[%c0_130, %c0_131] : memref<1x1xf32, #tpu.memory_space<vmem>>, vector<1x1xf32>
    %123 = arith.addf %121, %122 : vector<1x1xf32>
    %cst_132 = arith.constant 5.000000e-01 : f32
    %124 = vector.broadcast %cst_132 : f32 to vector<1x1xf32>
    %125 = arith.mulf %124, %123 : vector<1x1xf32>
    %126 = math.tanh %125 : vector<1x1xf32>
    %cst_133 = arith.constant 1.000000e+00 : f32
    %127 = vector.broadcast %cst_133 : f32 to vector<1x1xf32>
    %128 = arith.addf %126, %127 : vector<1x1xf32>
    %cst_134 = arith.constant 5.000000e-01 : f32
    %129 = vector.broadcast %cst_134 : f32 to vector<1x1xf32>
    %130 = arith.mulf %129, %128 : vector<1x1xf32>
    %c0_135 = arith.constant 0 : index
    %c0_136 = arith.constant 0 : index
    %131 = vector.load %arg18[%c0_135, %c0_136] : memref<2x1xf32, #tpu.memory_space<vmem>>, vector<1x1xf32>
    tpu.vector_store %arg18[%c0_135, %c0_136], %130 {strides = array<i32>} : memref<2x1xf32, #tpu.memory_space<vmem>>, vector<1x1xf32>,
    %c1_137 = arith.constant 1 : index
    %c0_138 = arith.constant 0 : index
    %c0_139 = arith.constant 0 : index
    %132 = vector.load %arg0[%c1_137, %c0_138, %c0_139] : memref<2x28x28xf32, #tpu.memory_space<vmem>>, vector<1x26x28xf32>
    %133 = vector.shape_cast %132 : vector<1x26x28xf32> to vector<26x28xf32>
    %c0_140 = arith.constant 0 : index
    %c0_141 = arith.constant 0 : index
    %c0_142 = arith.constant 0 : index
    %134 = vector.load %arg1[%c0_140, %c0_141, %c0_142] : memref<3x28x416xf32, #tpu.memory_space<vmem>>, vector<1x28x416xf32>
    %135 = vector.shape_cast %134 : vector<1x28x416xf32> to vector<28x416xf32>
    %cst_143 = arith.constant dense<0.000000e+00> : vector<26x416xf32>
    %136 = tpu.matmul %133, %135, %cst_143 {dimension_numbers = #tpu.dot_dimension_numbers<[1], [0], [0], [1], [0, 0, 1, 1], [], []>} : vector<26x28xf32>, vector<28x416xf32>, vector<26x416xf32> -> vector<26x416xf32>
    %c1_144 = arith.constant 1 : index
    %c1_145 = arith.constant 1 : index
    %c0_146 = arith.constant 0 : index
    %137 = vector.load %arg0[%c1_144, %c1_145, %c0_146] : memref<2x28x28xf32, #tpu.memory_space<vmem>>, vector<1x26x28xf32>
    %138 = vector.shape_cast %137 : vector<1x26x28xf32> to vector<26x28xf32>
    %c1_147 = arith.constant 1 : index
    %c0_148 = arith.constant 0 : index
    %c0_149 = arith.constant 0 : index
    %139 = vector.load %arg1[%c1_147, %c0_148, %c0_149] : memref<3x28x416xf32, #tpu.memory_space<vmem>>, vector<1x28x416xf32>
    %140 = vector.shape_cast %139 : vector<1x28x416xf32> to vector<28x416xf32>
    %cst_150 = arith.constant dense<0.000000e+00> : vector<26x416xf32>
    %141 = tpu.matmul %138, %140, %cst_150 {dimension_numbers = #tpu.dot_dimension_numbers<[1], [0], [0], [1], [0, 0, 1, 1], [], []>} : vector<26x28xf32>, vector<28x416xf32>, vector<26x416xf32> -> vector<26x416xf32>
    %142 = arith.addf %136, %141 : vector<26x416xf32>
    %c1_151 = arith.constant 1 : index
    %c2_152 = arith.constant 2 : index
    %c0_153 = arith.constant 0 : index
    %143 = vector.load %arg0[%c1_151, %c2_152, %c0_153] : memref<2x28x28xf32, #tpu.memory_space<vmem>>, vector<1x26x28xf32>
    %144 = vector.shape_cast %143 : vector<1x26x28xf32> to vector<26x28xf32>
    %c2_154 = arith.constant 2 : index
    %c0_155 = arith.constant 0 : index
    %c0_156 = arith.constant 0 : index
    %145 = vector.load %arg1[%c2_154, %c0_155, %c0_156] : memref<3x28x416xf32, #tpu.memory_space<vmem>>, vector<1x28x416xf32>
    %146 = vector.shape_cast %145 : vector<1x28x416xf32> to vector<28x416xf32>
    %cst_157 = arith.constant dense<0.000000e+00> : vector<26x416xf32>
    %147 = tpu.matmul %144, %146, %cst_157 {dimension_numbers = #tpu.dot_dimension_numbers<[1], [0], [0], [1], [0, 0, 1, 1], [], []>} : vector<26x28xf32>, vector<28x416xf32>, vector<26x416xf32> -> vector<26x416xf32>
    %148 = arith.addf %142, %147 : vector<26x416xf32>
    %c0_158 = arith.constant 0 : index
    %c0_159 = arith.constant 0 : index
    %149 = vector.load %arg2[%c0_158, %c0_159] : memref<1x416xf32, #tpu.memory_space<vmem>>, vector<1x416xf32>
    %150 = vector.broadcast %149 : vector<1x416xf32> to vector<26x416xf32>
    %151 = arith.mulf %148, %150 : vector<26x416xf32>
    %c0_160 = arith.constant 0 : index
    %c0_161 = arith.constant 0 : index
    %152 = vector.load %arg3[%c0_160, %c0_161] : memref<1x416xf32, #tpu.memory_space<vmem>>, vector<1x416xf32>
    %153 = vector.broadcast %152 : vector<1x416xf32> to vector<26x416xf32>
    %154 = arith.addf %151, %153 : vector<26x416xf32>
    %cst_162 = arith.constant 0.000000e+00 : f32
    %155 = vector.broadcast %cst_162 : f32 to vector<26x416xf32>
    %156 = arith.maximumf %154, %155 : vector<26x416xf32>
    %c0_163 = arith.constant 0 : index
    %c0_164 = arith.constant 0 : index
    %c0_165 = arith.constant 0 : index
    %157 = vector.load %arg4[%c0_163, %c0_164, %c0_165] : memref<2x13x26xf32, #tpu.memory_space<vmem>>, vector<1x13x26xf32>
    %158 = vector.shape_cast %157 : vector<1x13x26xf32> to vector<13x26xf32>
    %cst_166 = arith.constant dense<0.000000e+00> : vector<13x416xf32>
    %159 = tpu.matmul %158, %156, %cst_166 {dimension_numbers = #tpu.dot_dimension_numbers<[1], [0], [0], [1], [0, 0, 1, 1], [], []>} : vector<13x26xf32>, vector<26x416xf32>, vector<13x416xf32> -> vector<13x416xf32>
    %c1_167 = arith.constant 1 : index
    %c0_168 = arith.constant 0 : index
    %c0_169 = arith.constant 0 : index
    %160 = vector.load %arg4[%c1_167, %c0_168, %c0_169] : memref<2x13x26xf32, #tpu.memory_space<vmem>>, vector<1x13x26xf32>
    %161 = vector.shape_cast %160 : vector<1x13x26xf32> to vector<13x26xf32>
    %cst_170 = arith.constant dense<0.000000e+00> : vector<13x416xf32>
    %162 = tpu.matmul %161, %156, %cst_170 {dimension_numbers = #tpu.dot_dimension_numbers<[1], [0], [0], [1], [0, 0, 1, 1], [], []>} : vector<13x26xf32>, vector<26x416xf32>, vector<13x416xf32> -> vector<13x416xf32>
    %163 = arith.maximumf %159, %162 : vector<13x416xf32>
    %c0_171 = arith.constant 0 : index
    %c0_172 = arith.constant 0 : index
    %c0_173 = arith.constant 0 : index
    %164 = vector.load %arg5[%c0_171, %c0_172, %c0_173] : memref<2x416x208xf32, #tpu.memory_space<vmem>>, vector<1x416x208xf32>
    %165 = vector.shape_cast %164 : vector<1x416x208xf32> to vector<416x208xf32>
    %cst_174 = arith.constant dense<0.000000e+00> : vector<13x208xf32>
    %166 = tpu.matmul %163, %165, %cst_174 {dimension_numbers = #tpu.dot_dimension_numbers<[1], [0], [0], [1], [0, 0, 1, 1], [], []>} : vector<13x416xf32>, vector<416x208xf32>, vector<13x208xf32> -> vector<13x208xf32>
    %c1_175 = arith.constant 1 : index
    %c0_176 = arith.constant 0 : index
    %c0_177 = arith.constant 0 : index
    %167 = vector.load %arg5[%c1_175, %c0_176, %c0_177] : memref<2x416x208xf32, #tpu.memory_space<vmem>>, vector<1x416x208xf32>
    %168 = vector.shape_cast %167 : vector<1x416x208xf32> to vector<416x208xf32>
    %cst_178 = arith.constant dense<0.000000e+00> : vector<13x208xf32>
    %169 = tpu.matmul %163, %168, %cst_178 {dimension_numbers = #tpu.dot_dimension_numbers<[1], [0], [0], [1], [0, 0, 1, 1], [], []>} : vector<13x416xf32>, vector<416x208xf32>, vector<13x208xf32> -> vector<13x208xf32>
    %170 = arith.maximumf %166, %169 : vector<13x208xf32>
    %c0_179 = arith.constant 0 : index
    %c0_180 = arith.constant 0 : index
    %171 = vector.load %arg19[%c0_179, %c0_180] : memref<13x208xf32, #tpu.memory_space<vmem>>, vector<13x208xf32>
    tpu.vector_store %arg19[%c0_179, %c0_180], %170 {strides = array<i32>} : memref<13x208xf32, #tpu.memory_space<vmem>>, vector<13x208xf32>,
    %c0_181 = arith.constant 0 : index
    %c0_182 = arith.constant 0 : index
    %172 = vector.load %arg19[%c0_181, %c0_182] : memref<13x208xf32, #tpu.memory_space<vmem>>, vector<11x208xf32>
    %c0_183 = arith.constant 0 : index
    %c0_184 = arith.constant 0 : index
    %c0_185 = arith.constant 0 : index
    %173 = vector.load %arg6[%c0_183, %c0_184, %c0_185] : memref<3x208x352xf32, #tpu.memory_space<vmem>>, vector<1x208x352xf32>
    %174 = vector.shape_cast %173 : vector<1x208x352xf32> to vector<208x352xf32>
    %cst_186 = arith.constant dense<0.000000e+00> : vector<11x352xf32>
    %175 = tpu.matmul %172, %174, %cst_186 {dimension_numbers = #tpu.dot_dimension_numbers<[1], [0], [0], [1], [0, 0, 1, 1], [], []>} : vector<11x208xf32>, vector<208x352xf32>, vector<11x352xf32> -> vector<11x352xf32>
    %c1_187 = arith.constant 1 : index
    %c0_188 = arith.constant 0 : index
    %176 = vector.load %arg19[%c1_187, %c0_188] : memref<13x208xf32, #tpu.memory_space<vmem>>, vector<11x208xf32>
    %c1_189 = arith.constant 1 : index
    %c0_190 = arith.constant 0 : index
    %c0_191 = arith.constant 0 : index
    %177 = vector.load %arg6[%c1_189, %c0_190, %c0_191] : memref<3x208x352xf32, #tpu.memory_space<vmem>>, vector<1x208x352xf32>
    %178 = vector.shape_cast %177 : vector<1x208x352xf32> to vector<208x352xf32>
    %cst_192 = arith.constant dense<0.000000e+00> : vector<11x352xf32>
    %179 = tpu.matmul %176, %178, %cst_192 {dimension_numbers = #tpu.dot_dimension_numbers<[1], [0], [0], [1], [0, 0, 1, 1], [], []>} : vector<11x208xf32>, vector<208x352xf32>, vector<11x352xf32> -> vector<11x352xf32>
    %180 = arith.addf %175, %179 : vector<11x352xf32>
    %c2_193 = arith.constant 2 : index
    %c0_194 = arith.constant 0 : index
    %181 = vector.load %arg19[%c2_193, %c0_194] : memref<13x208xf32, #tpu.memory_space<vmem>>, vector<11x208xf32>
    %c2_195 = arith.constant 2 : index
    %c0_196 = arith.constant 0 : index
    %c0_197 = arith.constant 0 : index
    %182 = vector.load %arg6[%c2_195, %c0_196, %c0_197] : memref<3x208x352xf32, #tpu.memory_space<vmem>>, vector<1x208x352xf32>
    %183 = vector.shape_cast %182 : vector<1x208x352xf32> to vector<208x352xf32>
    %cst_198 = arith.constant dense<0.000000e+00> : vector<11x352xf32>
    %184 = tpu.matmul %181, %183, %cst_198 {dimension_numbers = #tpu.dot_dimension_numbers<[1], [0], [0], [1], [0, 0, 1, 1], [], []>} : vector<11x208xf32>, vector<208x352xf32>, vector<11x352xf32> -> vector<11x352xf32>
    %185 = arith.addf %180, %184 : vector<11x352xf32>
    %c0_199 = arith.constant 0 : index
    %c0_200 = arith.constant 0 : index
    %186 = vector.load %arg7[%c0_199, %c0_200] : memref<1x352xf32, #tpu.memory_space<vmem>>, vector<1x352xf32>
    %187 = vector.broadcast %186 : vector<1x352xf32> to vector<11x352xf32>
    %188 = arith.mulf %185, %187 : vector<11x352xf32>
    %c0_201 = arith.constant 0 : index
    %c0_202 = arith.constant 0 : index
    %189 = vector.load %arg8[%c0_201, %c0_202] : memref<1x352xf32, #tpu.memory_space<vmem>>, vector<1x352xf32>
    %190 = vector.broadcast %189 : vector<1x352xf32> to vector<11x352xf32>
    %191 = arith.addf %188, %190 : vector<11x352xf32>
    %cst_203 = arith.constant 0.000000e+00 : f32
    %192 = vector.broadcast %cst_203 : f32 to vector<11x352xf32>
    %193 = arith.maximumf %191, %192 : vector<11x352xf32>
    %c0_204 = arith.constant 0 : index
    %c0_205 = arith.constant 0 : index
    %c0_206 = arith.constant 0 : index
    %194 = vector.load %arg9[%c0_204, %c0_205, %c0_206] : memref<2x5x11xf32, #tpu.memory_space<vmem>>, vector<1x5x11xf32>
    %195 = vector.shape_cast %194 : vector<1x5x11xf32> to vector<5x11xf32>
    %cst_207 = arith.constant dense<0.000000e+00> : vector<5x352xf32>
    %196 = tpu.matmul %195, %193, %cst_207 {dimension_numbers = #tpu.dot_dimension_numbers<[1], [0], [0], [1], [0, 0, 1, 1], [], []>} : vector<5x11xf32>, vector<11x352xf32>, vector<5x352xf32> -> vector<5x352xf32>
    %c1_208 = arith.constant 1 : index
    %c0_209 = arith.constant 0 : index
    %c0_210 = arith.constant 0 : index
    %197 = vector.load %arg9[%c1_208, %c0_209, %c0_210] : memref<2x5x11xf32, #tpu.memory_space<vmem>>, vector<1x5x11xf32>
    %198 = vector.shape_cast %197 : vector<1x5x11xf32> to vector<5x11xf32>
    %cst_211 = arith.constant dense<0.000000e+00> : vector<5x352xf32>
    %199 = tpu.matmul %198, %193, %cst_211 {dimension_numbers = #tpu.dot_dimension_numbers<[1], [0], [0], [1], [0, 0, 1, 1], [], []>} : vector<5x11xf32>, vector<11x352xf32>, vector<5x352xf32> -> vector<5x352xf32>
    %200 = arith.maximumf %196, %199 : vector<5x352xf32>
    %c0_212 = arith.constant 0 : index
    %c0_213 = arith.constant 0 : index
    %c0_214 = arith.constant 0 : index
    %201 = vector.load %arg10[%c0_212, %c0_213, %c0_214] : memref<2x352x160xf32, #tpu.memory_space<vmem>>, vector<1x352x160xf32>
    %202 = vector.shape_cast %201 : vector<1x352x160xf32> to vector<352x160xf32>
    %cst_215 = arith.constant dense<0.000000e+00> : vector<5x160xf32>
    %203 = tpu.matmul %200, %202, %cst_215 {dimension_numbers = #tpu.dot_dimension_numbers<[1], [0], [0], [1], [0, 0, 1, 1], [], []>} : vector<5x352xf32>, vector<352x160xf32>, vector<5x160xf32> -> vector<5x160xf32>
    %c1_216 = arith.constant 1 : index
    %c0_217 = arith.constant 0 : index
    %c0_218 = arith.constant 0 : index
    %204 = vector.load %arg10[%c1_216, %c0_217, %c0_218] : memref<2x352x160xf32, #tpu.memory_space<vmem>>, vector<1x352x160xf32>
    %205 = vector.shape_cast %204 : vector<1x352x160xf32> to vector<352x160xf32>
    %cst_219 = arith.constant dense<0.000000e+00> : vector<5x160xf32>
    %206 = tpu.matmul %200, %205, %cst_219 {dimension_numbers = #tpu.dot_dimension_numbers<[1], [0], [0], [1], [0, 0, 1, 1], [], []>} : vector<5x352xf32>, vector<352x160xf32>, vector<5x160xf32> -> vector<5x160xf32>
    %207 = arith.maximumf %203, %206 : vector<5x160xf32>
    %c0_220 = arith.constant 0 : index
    %c0_221 = arith.constant 0 : index
    %208 = vector.load %arg20[%c0_220, %c0_221] : memref<5x160xf32, #tpu.memory_space<vmem>>, vector<5x160xf32>
    tpu.vector_store %arg20[%c0_220, %c0_221], %207 {strides = array<i32>} : memref<5x160xf32, #tpu.memory_space<vmem>>, vector<5x160xf32>,
    %c0_222 = arith.constant 0 : index
    %c0_223 = arith.constant 0 : index
    %209 = vector.load %arg20[%c0_222, %c0_223] : memref<5x160xf32, #tpu.memory_space<vmem>>, vector<3x160xf32>
    %c0_224 = arith.constant 0 : index
    %c0_225 = arith.constant 0 : index
    %c0_226 = arith.constant 0 : index
    %210 = vector.load %arg11[%c0_224, %c0_225, %c0_226] : memref<3x160x192xf32, #tpu.memory_space<vmem>>, vector<1x160x192xf32>
    %211 = vector.shape_cast %210 : vector<1x160x192xf32> to vector<160x192xf32>
    %cst_227 = arith.constant dense<0.000000e+00> : vector<3x192xf32>
    %212 = tpu.matmul %209, %211, %cst_227 {dimension_numbers = #tpu.dot_dimension_numbers<[1], [0], [0], [1], [0, 0, 1, 1], [], []>} : vector<3x160xf32>, vector<160x192xf32>, vector<3x192xf32> -> vector<3x192xf32>
    %c1_228 = arith.constant 1 : index
    %c0_229 = arith.constant 0 : index
    %213 = vector.load %arg20[%c1_228, %c0_229] : memref<5x160xf32, #tpu.memory_space<vmem>>, vector<3x160xf32>
    %c1_230 = arith.constant 1 : index
    %c0_231 = arith.constant 0 : index
    %c0_232 = arith.constant 0 : index
    %214 = vector.load %arg11[%c1_230, %c0_231, %c0_232] : memref<3x160x192xf32, #tpu.memory_space<vmem>>, vector<1x160x192xf32>
    %215 = vector.shape_cast %214 : vector<1x160x192xf32> to vector<160x192xf32>
    %cst_233 = arith.constant dense<0.000000e+00> : vector<3x192xf32>
    %216 = tpu.matmul %213, %215, %cst_233 {dimension_numbers = #tpu.dot_dimension_numbers<[1], [0], [0], [1], [0, 0, 1, 1], [], []>} : vector<3x160xf32>, vector<160x192xf32>, vector<3x192xf32> -> vector<3x192xf32>
    %217 = arith.addf %212, %216 : vector<3x192xf32>
    %c2_234 = arith.constant 2 : index
    %c0_235 = arith.constant 0 : index
    %218 = vector.load %arg20[%c2_234, %c0_235] : memref<5x160xf32, #tpu.memory_space<vmem>>, vector<3x160xf32>
    %c2_236 = arith.constant 2 : index
    %c0_237 = arith.constant 0 : index
    %c0_238 = arith.constant 0 : index
    %219 = vector.load %arg11[%c2_236, %c0_237, %c0_238] : memref<3x160x192xf32, #tpu.memory_space<vmem>>, vector<1x160x192xf32>
    %220 = vector.shape_cast %219 : vector<1x160x192xf32> to vector<160x192xf32>
    %cst_239 = arith.constant dense<0.000000e+00> : vector<3x192xf32>
    %221 = tpu.matmul %218, %220, %cst_239 {dimension_numbers = #tpu.dot_dimension_numbers<[1], [0], [0], [1], [0, 0, 1, 1], [], []>} : vector<3x160xf32>, vector<160x192xf32>, vector<3x192xf32> -> vector<3x192xf32>
    %222 = arith.addf %217, %221 : vector<3x192xf32>
    %c0_240 = arith.constant 0 : index
    %c0_241 = arith.constant 0 : index
    %223 = vector.load %arg12[%c0_240, %c0_241] : memref<1x192xf32, #tpu.memory_space<vmem>>, vector<1x192xf32>
    %224 = vector.broadcast %223 : vector<1x192xf32> to vector<3x192xf32>
    %225 = arith.mulf %222, %224 : vector<3x192xf32>
    %c0_242 = arith.constant 0 : index
    %c0_243 = arith.constant 0 : index
    %226 = vector.load %arg13[%c0_242, %c0_243] : memref<1x192xf32, #tpu.memory_space<vmem>>, vector<1x192xf32>
    %227 = vector.broadcast %226 : vector<1x192xf32> to vector<3x192xf32>
    %228 = arith.addf %225, %227 : vector<3x192xf32>
    %cst_244 = arith.constant 0.000000e+00 : f32
    %229 = vector.broadcast %cst_244 : f32 to vector<3x192xf32>
    %230 = arith.maximumf %228, %229 : vector<3x192xf32>
    %c0_245 = arith.constant 0 : index
    %c0_246 = arith.constant 0 : index
    %231 = vector.load %arg21[%c0_245, %c0_246] : memref<3x192xf32, #tpu.memory_space<vmem>>, vector<3x192xf32>
    tpu.vector_store %arg21[%c0_245, %c0_246], %230 {strides = array<i32>} : memref<3x192xf32, #tpu.memory_space<vmem>>, vector<3x192xf32>,
    %c0_247 = arith.constant 0 : index
    %c0_248 = arith.constant 0 : index
    %232 = vector.load %arg21[%c0_247, %c0_248] : memref<3x192xf32, #tpu.memory_space<vmem>>, vector<1x192xf32>
    %c0_249 = arith.constant 0 : index
    %c0_250 = arith.constant 0 : index
    %c0_251 = arith.constant 0 : index
    %233 = vector.load %arg14[%c0_249, %c0_250, %c0_251] : memref<3x192x64xf32, #tpu.memory_space<vmem>>, vector<1x192x64xf32>
    %234 = vector.shape_cast %233 : vector<1x192x64xf32> to vector<192x64xf32>
    %cst_252 = arith.constant dense<0.000000e+00> : vector<1x64xf32>
    %235 = tpu.matmul %232, %234, %cst_252 {dimension_numbers = #tpu.dot_dimension_numbers<[1], [0], [0], [1], [0, 0, 1, 1], [], []>} : vector<1x192xf32>, vector<192x64xf32>, vector<1x64xf32> -> vector<1x64xf32>
    %c1_253 = arith.constant 1 : index
    %c0_254 = arith.constant 0 : index
    %236 = vector.load %arg21[%c1_253, %c0_254] : memref<3x192xf32, #tpu.memory_space<vmem>>, vector<1x192xf32>
    %c1_255 = arith.constant 1 : index
    %c0_256 = arith.constant 0 : index
    %c0_257 = arith.constant 0 : index
    %237 = vector.load %arg14[%c1_255, %c0_256, %c0_257] : memref<3x192x64xf32, #tpu.memory_space<vmem>>, vector<1x192x64xf32>
    %238 = vector.shape_cast %237 : vector<1x192x64xf32> to vector<192x64xf32>
    %cst_258 = arith.constant dense<0.000000e+00> : vector<1x64xf32>
    %239 = tpu.matmul %236, %238, %cst_258 {dimension_numbers = #tpu.dot_dimension_numbers<[1], [0], [0], [1], [0, 0, 1, 1], [], []>} : vector<1x192xf32>, vector<192x64xf32>, vector<1x64xf32> -> vector<1x64xf32>
    %240 = arith.addf %235, %239 : vector<1x64xf32>
    %c2_259 = arith.constant 2 : index
    %c0_260 = arith.constant 0 : index
    %241 = vector.load %arg21[%c2_259, %c0_260] : memref<3x192xf32, #tpu.memory_space<vmem>>, vector<1x192xf32>
    %c2_261 = arith.constant 2 : index
    %c0_262 = arith.constant 0 : index
    %c0_263 = arith.constant 0 : index
    %242 = vector.load %arg14[%c2_261, %c0_262, %c0_263] : memref<3x192x64xf32, #tpu.memory_space<vmem>>, vector<1x192x64xf32>
    %243 = vector.shape_cast %242 : vector<1x192x64xf32> to vector<192x64xf32>
    %cst_264 = arith.constant dense<0.000000e+00> : vector<1x64xf32>
    %244 = tpu.matmul %241, %243, %cst_264 {dimension_numbers = #tpu.dot_dimension_numbers<[1], [0], [0], [1], [0, 0, 1, 1], [], []>} : vector<1x192xf32>, vector<192x64xf32>, vector<1x64xf32> -> vector<1x64xf32>
    %245 = arith.addf %240, %244 : vector<1x64xf32>
    %c0_265 = arith.constant 0 : index
    %c0_266 = arith.constant 0 : index
    %246 = vector.load %arg15[%c0_265, %c0_266] : memref<1x64xf32, #tpu.memory_space<vmem>>, vector<1x64xf32>
    %247 = arith.addf %245, %246 : vector<1x64xf32>
    %cst_267 = arith.constant 0.000000e+00 : f32
    %248 = vector.broadcast %cst_267 : f32 to vector<1x64xf32>
    %249 = arith.maximumf %247, %248 : vector<1x64xf32>
    %c0_268 = arith.constant 0 : index
    %c0_269 = arith.constant 0 : index
    %250 = vector.load %arg16[%c0_268, %c0_269] : memref<1x64xf32, #tpu.memory_space<vmem>>, vector<1x64xf32>
    %251 = arith.mulf %249, %250 : vector<1x64xf32>
    %cst_270 = arith.constant dense<0.000000e+00> : vector<1xf32>
    %252 = vector.multi_reduction <add>, %251, %cst_270 [1] : vector<1x64xf32> to vector<1xf32>
    %253 = vector.shape_cast %252 : vector<1xf32> to vector<1x1xf32>
    %c0_271 = arith.constant 0 : index
    %c0_272 = arith.constant 0 : index
    %254 = vector.load %arg17[%c0_271, %c0_272] : memref<1x1xf32, #tpu.memory_space<vmem>>, vector<1x1xf32>
    %255 = arith.addf %253, %254 : vector<1x1xf32>
    %cst_273 = arith.constant 5.000000e-01 : f32
    %256 = vector.broadcast %cst_273 : f32 to vector<1x1xf32>
    %257 = arith.mulf %256, %255 : vector<1x1xf32>
    %258 = math.tanh %257 : vector<1x1xf32>
    %cst_274 = arith.constant 1.000000e+00 : f32
    %259 = vector.broadcast %cst_274 : f32 to vector<1x1xf32>
    %260 = arith.addf %258, %259 : vector<1x1xf32>
    %cst_275 = arith.constant 5.000000e-01 : f32
    %261 = vector.broadcast %cst_275 : f32 to vector<1x1xf32>
    %262 = arith.mulf %261, %260 : vector<1x1xf32>
    %c1_276 = arith.constant 1 : index
    %c0_277 = arith.constant 0 : index
    %263 = vector.load %arg18[%c1_276, %c0_277] : memref<2x1xf32, #tpu.memory_space<vmem>>, vector<1x1xf32>
    tpu.vector_store %arg18[%c1_276, %c0_277], %262 {strides = array<i32>} : memref<2x1xf32, #tpu.memory_space<vmem>>, vector<1x1xf32>,
    return
  }
}

</mosaic_0001>

<llo_original>
// kernel: mnist_mil_forward.1
$region0: #{mnist_mil_forward.1}
  #allocation0 [shape = 'u32[]', space=smem, size = 0x4, offset = 0x4, fixed_abs, tag = 'smem constant byte address 0x4 - core index']
  #allocation1 [shape = 'u32[144,128]{1,0:T(1,128)}', space=vmem, size = 0x12000, scoped, tag = 'internal scratch']
  #allocation2 [shape = 'f32[13,208]{1,0:T(8,128)}', space=vmem, size = 0x4000, scoped, tag = 'scratch operand']
  #allocation3 [shape = 'f32[5,160]{1,0:T(8,128)}', space=vmem, size = 0x2000, scoped, tag = 'scratch operand']
  #allocation4 [shape = 'f32[3,192]{1,0:T(4,128)}', space=vmem, size = 0x1000, scoped, tag = 'scratch operand']
  #allocation5 [shape = 'f32[1,1]{1,0:T(1,128)S(1)}', space=vmem, size = 0x200, scoped, tag = 'scoped memory for mnist_mil_forward.1']
  %s0 = inlined_call_operand.vmem [shape: f32[2,28,28], index: 0, kind: input, shape index: {}]
  %s1 = inlined_call_operand.hbm [shape: f32[3,28,416], index: 1, kind: input, shape index: {}]
  %s2 = inlined_call_operand.vmem [shape: f32[1,416], index: 2, kind: input, shape index: {}]
  %s3 = inlined_call_operand.vmem [shape: f32[1,416], index: 3, kind: input, shape index: {}]
  %s4 = inlined_call_operand.vmem [shape: f32[2,13,26], index: 4, kind: input, shape index: {}]
  %s5 = inlined_call_operand.vmem [shape: f32[2,416,208], index: 5, kind: input, shape index: {}]
  %s6 = inlined_call_operand.vmem [shape: f32[3,208,352], index: 6, kind: input, shape index: {}]
  %s7 = inlined_call_operand.vmem [shape: f32[1,352], index: 7, kind: input, shape index: {}]
  %s8 = inlined_call_operand.vmem [shape: f32[1,352], index: 8, kind: input, shape index: {}]
  %s9 = inlined_call_operand.vmem [shape: f32[2,5,11], index: 9, kind: input, shape index: {}]
  %s10 = inlined_call_operand.vmem [shape: f32[2,352,160], index: 10, kind: input, shape index: {}]
  %s11 = inlined_call_operand.hbm [shape: f32[3,160,192], index: 11, kind: input, shape index: {}]
  %s12 = inlined_call_operand.vmem [shape: f32[1,192], index: 12, kind: input, shape index: {}]
  %s13 = inlined_call_operand.vmem [shape: f32[1,192], index: 13, kind: input, shape index: {}]
  %s14 = inlined_call_operand.vmem [shape: f32[3,192,64], index: 14, kind: input, shape index: {}]
  %s15 = inlined_call_operand.vmem [shape: f32[1,64], index: 15, kind: input, shape index: {}]
  %s16 = inlined_call_operand.vmem [shape: f32[1,64], index: 16, kind: input, shape index: {}]
  %s17 = inlined_call_operand.<no memory space> [shape: f32[1,1], index: 17, kind: input, shape index: {}]
  %s18 = inlined_call_operand.vmem [shape: f32[2,1], index: 18, kind: output, shape index: {}]
  %s19 = sld [smem:[#allocation0]]
  $region90: #{mnist_mil_forward.1} parent=0
    _
  %s21 = ssub.s32 1, %s19
  %s22 = scalar_select 0, %s21, %s19
  %v23 = vstv %s17
  %24 = vst [vmem:[#allocation5] sm:$0x1] %v23
  $region1: #{mnist_mil_forward.1} parent=0
    #allocation6 [shape = 'u8[196608]{0}', space=vmem, size = 0x30000, scoped, tag = 'input window, operand 1, single buffered']
    #allocation7 [shape = 's32[1]{0}', space=sflag, size = 0x4, scoped, tag = 'scoped memory for mnist_mil_forward.1']
    #allocation8 [shape = 'u8[491520]{0}', space=vmem, size = 0x78000, scoped, tag = 'input window, operand 11, single buffered']
    #allocation9 [shape = 's32[1]{0}', space=sflag, size = 0x4, scoped, tag = 'scoped memory for mnist_mil_forward.1']
    %25 = vsyncpa [#allocation7], 0
    %26 = vsyncpa [#allocation9], 0
    // Predicated region
    $region2: #{mnist_mil_forward.1} parent=1 // pred_check
      _
    $region3: #{mnist_mil_forward.1} parent=1 // pred_check_branch
      %28 = sbr.rel (0) target = $region5
    $region4: #{mnist_mil_forward.1} parent=1 // pred_region
      _
    $region5: #{mnist_mil_forward.1} parent=1 // pred_fallthru
      _
    // Predicated region
    $region6: #{mnist_mil_forward.1} parent=1 // pred_check
      _
    $region7: #{mnist_mil_forward.1} parent=1 // pred_check_branch
      %30 = sbr.rel (0) target = $region9
    $region8: #{mnist_mil_forward.1} parent=1 // pred_region
      %s32 = ssub.s32 6144, 6144
      %33 = vsyncadd [#allocation7], %s32
      %s34 = sshll.u32 [#allocation6], 4
      %s35 = int_to_ptr.vmem [resolvable:$true] %s34
      %40 = dma.hbm_to_vmem [thread:$0]  %s1, 6144, %s35, [#allocation7], 512, 512, 32
    $region9: #{mnist_mil_forward.1} parent=1 // pred_fallthru
      _
    // Predicated region
    $region10: #{mnist_mil_forward.1} parent=1 // pred_check
      _
    $region11: #{mnist_mil_forward.1} parent=1 // pred_check_branch
      %42 = sbr.rel (0) target = $region13
    $region12: #{mnist_mil_forward.1} parent=1 // pred_region
      _
    $region13: #{mnist_mil_forward.1} parent=1 // pred_fallthru
      _
    // Predicated region
    $region14: #{mnist_mil_forward.1} parent=1 // pred_check
      _
    $region15: #{mnist_mil_forward.1} parent=1 // pred_check_branch
      %44 = sbr.rel (0) target = $region17
    $region16: #{mnist_mil_forward.1} parent=1 // pred_region
      _
    $region17: #{mnist_mil_forward.1} parent=1 // pred_fallthru
      _
    // Predicated region
    $region18: #{mnist_mil_forward.1} parent=1 // pred_check
      _
    $region19: #{mnist_mil_forward.1} parent=1 // pred_check_branch
      %46 = sbr.rel (0) target = $region21
    $region20: #{mnist_mil_forward.1} parent=1 // pred_region
      _
    $region21: #{mnist_mil_forward.1} parent=1 // pred_fallthru
      _
    // Predicated region
    $region22: #{mnist_mil_forward.1} parent=1 // pred_check
      _
    $region23: #{mnist_mil_forward.1} parent=1 // pred_check_branch
      %48 = sbr.rel (0) target = $region25
    $region24: #{mnist_mil_forward.1} parent=1 // pred_region
      _
    $region25: #{mnist_mil_forward.1} parent=1 // pred_fallthru
      _
    // Predicated region
    $region26: #{mnist_mil_forward.1} parent=1 // pred_check
      _
    $region27: #{mnist_mil_forward.1} parent=1 // pred_check_branch
      %50 = sbr.rel (0) target = $region29
    $region28: #{mnist_mil_forward.1} parent=1 // pred_region
      _
    $region29: #{mnist_mil_forward.1} parent=1 // pred_fallthru
      _
    // Predicated region
    $region30: #{mnist_mil_forward.1} parent=1 // pred_check
      _
    $region31: #{mnist_mil_forward.1} parent=1 // pred_check_branch
      %52 = sbr.rel (0) target = $region33
    $region32: #{mnist_mil_forward.1} parent=1 // pred_region
      _
    $region33: #{mnist_mil_forward.1} parent=1 // pred_fallthru
      _
    // Predicated region
    $region34: #{mnist_mil_forward.1} parent=1 // pred_check
      _
    $region35: #{mnist_mil_forward.1} parent=1 // pred_check_branch
      %54 = sbr.rel (0) target = $region37
    $region36: #{mnist_mil_forward.1} parent=1 // pred_region
      _
    $region37: #{mnist_mil_forward.1} parent=1 // pred_fallthru
      _
    // Predicated region
    $region38: #{mnist_mil_forward.1} parent=1 // pred_check
      _
    $region39: #{mnist_mil_forward.1} parent=1 // pred_check_branch
      %56 = sbr.rel (0) target = $region41
    $region40: #{mnist_mil_forward.1} parent=1 // pred_region
      _
    $region41: #{mnist_mil_forward.1} parent=1 // pred_fallthru
      _
    // Predicated region
    $region42: #{mnist_mil_forward.1} parent=1 // pred_check
      _
    $region43: #{mnist_mil_forward.1} parent=1 // pred_check_branch
      %58 = sbr.rel (0) target = $region45
    $region44: #{mnist_mil_forward.1} parent=1 // pred_region
      _
    $region45: #{mnist_mil_forward.1} parent=1 // pred_fallthru
      _
    // Predicated region
    $region46: #{mnist_mil_forward.1} parent=1 // pred_check
      _
    $region47: #{mnist_mil_forward.1} parent=1 // pred_check_branch
      %60 = sbr.rel (0) target = $region49
    $region48: #{mnist_mil_forward.1} parent=1 // pred_region
      %s62 = ssub.s32 15360, 15360
      %63 = vsyncadd [#allocation9], %s62
      %s64 = sshll.u32 [#allocation8], 4
      %s65 = int_to_ptr.vmem [resolvable:$true] %s64
      %70 = dma.hbm_to_vmem [thread:$0]  %s11, 15360, %s65, [#allocation9], 256, 256, 16
    $region49: #{mnist_mil_forward.1} parent=1 // pred_fallthru
      _
    // Predicated region
    $region50: #{mnist_mil_forward.1} parent=1 // pred_check
      _
    $region51: #{mnist_mil_forward.1} parent=1 // pred_check_branch
      %72 = sbr.rel (0) target = $region53
    $region52: #{mnist_mil_forward.1} parent=1 // pred_region
      _
    $region53: #{mnist_mil_forward.1} parent=1 // pred_fallthru
      _
    // Predicated region
    $region54: #{mnist_mil_forward.1} parent=1 // pred_check
      _
    $region55: #{mnist_mil_forward.1} parent=1 // pred_check_branch
      %74 = sbr.rel (0) target = $region57
    $region56: #{mnist_mil_forward.1} parent=1 // pred_region
      _
    $region57: #{mnist_mil_forward.1} parent=1 // pred_fallthru
      _
    // Predicated region
    $region58: #{mnist_mil_forward.1} parent=1 // pred_check
      _
    $region59: #{mnist_mil_forward.1} parent=1 // pred_check_branch
      %76 = sbr.rel (0) target = $region61
    $region60: #{mnist_mil_forward.1} parent=1 // pred_region
      _
    $region61: #{mnist_mil_forward.1} parent=1 // pred_fallthru
      _
    // Predicated region
    $region62: #{mnist_mil_forward.1} parent=1 // pred_check
      _
    $region63: #{mnist_mil_forward.1} parent=1 // pred_check_branch
      %78 = sbr.rel (0) target = $region65
    $region64: #{mnist_mil_forward.1} parent=1 // pred_region
      _
    $region65: #{mnist_mil_forward.1} parent=1 // pred_fallthru
      _
    // Predicated region
    $region66: #{mnist_mil_forward.1} parent=1 // pred_check
      _
    $region67: #{mnist_mil_forward.1} parent=1 // pred_check_branch
      %80 = sbr.rel (0) target = $region69
    $region68: #{mnist_mil_forward.1} parent=1 // pred_region
      _
    $region69: #{mnist_mil_forward.1} parent=1 // pred_fallthru
      _
    // Predicated region
    $region70: #{mnist_mil_forward.1} parent=1 // pred_check
      _
    $region71: #{mnist_mil_forward.1} parent=1 // pred_check_branch
      %82 = sbr.rel (0) target = $region73
    $region72: #{mnist_mil_forward.1} parent=1 // pred_region
      _
    $region73: #{mnist_mil_forward.1} parent=1 // pred_fallthru
      _
    // Predicated region
    $region74: #{mnist_mil_forward.1} parent=1 // pred_check
      _
    $region75: #{mnist_mil_forward.1} parent=1 // pred_check_branch
      %84 = sbr.rel (0) target = $region77
    $region76: #{mnist_mil_forward.1} parent=1 // pred_region
      %85 = dma.done [#allocation7], 6144
    $region77: #{mnist_mil_forward.1} parent=1 // pred_fallthru
      _
    // Predicated region
    $region78: #{mnist_mil_forward.1} parent=1 // pred_check
      _
    $region79: #{mnist_mil_forward.1} parent=1 // pred_check_branch
      %87 = sbr.rel (0) target = $region81
    $region80: #{mnist_mil_forward.1} parent=1 // pred_region
      %88 = dma.done [#allocation9], 15360
    $region81: #{mnist_mil_forward.1} parent=1 // pred_fallthru
      _
    %v89 = vld [vmem:[%s0] sm:$0xff]
    %v90 = vld [vmem:[%s0 + $0x8] sm:$0xff]
    %v91 = vld [vmem:[%s0 + $0x10] sm:$0xff]
    %v92 = vld [vmem:[%s0 + $0x18] sm:$0x3]
    %v93 = vld [vmem:[#allocation6] sm:$0xff]
    %v94 = vld [vmem:[#allocation6 + $0x8] sm:$0xff]
    %v95 = vld [vmem:[#allocation6 + $0x10] sm:$0xff]
    %v96 = vld [vmem:[#allocation6 + $0x18] sm:$0xff]
    %v97 = vld [vmem:[#allocation6 + $0x20] sm:$0xff]
    %v98 = vld [vmem:[#allocation6 + $0x28] sm:$0xff]
    %v99 = vld [vmem:[#allocation6 + $0x30] sm:$0xff]
    %v100 = vld [vmem:[#allocation6 + $0x38] sm:$0xff]
    %v101 = vld [vmem:[#allocation6 + $0x40] sm:$0xff]
    %v102 = vld [vmem:[#allocation6 + $0x48] sm:$0xff]
    %v103 = vld [vmem:[#allocation6 + $0x50] sm:$0xff]
    %v104 = vld [vmem:[#allocation6 + $0x58] sm:$0xff]
    %v105 = vld [vmem:[#allocation6 + $0x60] sm:$0xf]
    %v106 = vld [vmem:[#allocation6 + $0x68] sm:$0xf]
    %v107 = vld [vmem:[#allocation6 + $0x70] sm:$0xf]
    %v108 = vld [vmem:[#allocation6 + $0x78] sm:$0xf]
    %v109 = vld [vmem:[%s0 + $0x1] sm:$0xff]
    %v110 = vld [vmem:[%s0 + $0x9] sm:$0xff]
    %v111 = vld [vmem:[%s0 + $0x11] sm:$0xff]
    %v112 = vld [vmem:[%s0 + $0x19] sm:$0x3]
    %s113 = scalar_lea.vmem [#allocation6], 128
    %v114 = vld [vmem:[%s113] sm:$0xff]
    %v115 = vld [vmem:[%s113 + $0x8] sm:$0xff]
    %v116 = vld [vmem:[%s113 + $0x10] sm:$0xff]
    %v117 = vld [vmem:[%s113 + $0x18] sm:$0xff]
    %v118 = vld [vmem:[%s113 + $0x20] sm:$0xff]
    %v119 = vld [vmem:[%s113 + $0x28] sm:$0xff]
    %v120 = vld [vmem:[%s113 + $0x30] sm:$0xff]
    %v121 = vld [vmem:[%s113 + $0x38] sm:$0xff]
    %v122 = vld [vmem:[%s113 + $0x40] sm:$0xff]
    %v123 = vld [vmem:[%s113 + $0x48] sm:$0xff]
    %v124 = vld [vmem:[%s113 + $0x50] sm:$0xff]
    %v125 = vld [vmem:[%s113 + $0x58] sm:$0xff]
    %v126 = vld [vmem:[%s113 + $0x60] sm:$0xf]
    %v127 = vld [vmem:[%s113 + $0x68] sm:$0xf]
    %v128 = vld [vmem:[%s113 + $0x70] sm:$0xf]
    %v129 = vld [vmem:[%s113 + $0x78] sm:$0xf]
    %vm130 = vcmask 228352
    %v132 = vsel %vm130, %v109, 0
    %v135 = vsel %vm130, %v110, 0
    %v138 = vsel %vm130, %v111, 0
    %v141 = vsel %vm130, %v112, 0
    %vm143 = vcmask 1043456
    %v145 = vsel %vm143, %v126, 0
    %v148 = vsel %vm143, %v127, 0
    %v151 = vsel %vm143, %v128, 0
    %v154 = vsel %vm143, %v129, 0
    %156 = vmatprep.subr.mxu0 %v115
    %157 = vmatpush1.msra.mxu0 %v114
    %158 = vmatprep.subr.mxu0 %v119
    %159 = vmatpush1.msra.mxu0 %v118
    %160 = vmatprep.subr.mxu0 %v123
    %161 = vmatpush1.msra.mxu0 %v122
    %162 = vmatprep.subr.mxu0 %v148
    %163 = vmatpush1.msra.mxu0 %v145
    %164 = vmatprep.subr.mxu0 0.0
    %165 = vmatpush1.msra.mxu0 0.0
    %166 = vmatprep.subr.mxu0 0.0
    %167 = vmatpush1.msra.mxu0 0.0
    %168 = vmatprep.subr.mxu0 0.0
    %169 = vmatpush1.msra.mxu0 0.0
    %170 = vmatprep.subr.mxu0 0.0
    %171 = vmatpush1.msra.mxu0 0.0
    %172 = vmatprep.subr.mxu0 0.0
    %173 = vmatpush1.msra.mxu0 0.0
    %174 = vmatprep.subr.mxu0 0.0
    %175 = vmatpush1.msra.mxu0 0.0
    %176 = vmatprep.subr.mxu0 0.0
    %177 = vmatpush1.msra.mxu0 0.0
    %178 = vmatprep.subr.mxu0 0.0
    %179 = vmatpush1.msra.mxu0 0.0
    %180 = vmatprep.subr.mxu0 0.0
    %181 = vmatpush1.msra.mxu0 0.0
    %182 = vmatprep.subr.mxu0 0.0
    %183 = vmatpush1.msra.mxu0 0.0
    %184 = vmatprep.subr.mxu0 0.0
    %185 = vmatpush1.msra.mxu0 0.0
    %186 = vmatprep.subr.mxu0 0.0
    %187 = vmatpush1.msra.mxu0 0.0
    %188 = vmatprep.subr.mxu0 0.0
    %189 = vmatpush1.msra.mxu0 0.0
    %190 = vmatprep.subr.mxu0 0.0
    %191 = vmatpush1.msra.mxu0 0.0
    %192 = vmatprep.subr.mxu0 0.0
    %193 = vmatpush1.msra.mxu0 0.0
    %194 = vmatprep.subr.mxu0 0.0
    %195 = vmatpush1.msra.mxu0 0.0
    %196 = vmatprep.subr.mxu0 0.0
    %197 = vmatpush1.msra.mxu0 0.0
    %198 = vmatprep.subr.mxu0 0.0
    %199 = vmatpush1.msra.mxu0 0.0
    %200 = vmatprep.subr.mxu0 0.0
    %201 = vmatpush1.msra.mxu0 0.0
    %202 = vmatprep.subr.mxu0 0.0
    %203 = vmatpush1.msra.mxu0 0.0
    %204 = vmatprep.subr.mxu0 0.0
    %205 = vmatpush1.msra.mxu0 0.0
    %206 = vmatprep.subr.mxu0 0.0
    %207 = vmatpush1.msra.mxu0 0.0
    %208 = vmatprep.subr.mxu0 0.0
    %209 = vmatpush1.msra.mxu0 0.0
    %210 = vmatprep.subr.mxu0 0.0
    %211 = vmatpush1.msra.mxu0 0.0
    %212 = vmatprep.subr.mxu0 0.0
    %213 = vmatpush1.msra.mxu0 0.0
    %214 = vmatprep.subr.mxu0 0.0
    %215 = vmatpush1.msra.mxu0 0.0
    %216 = vmatprep.subr.mxu0 0.0
    %217 = vmatpush1.msra.mxu0 0.0
    %218 = vmatprep.subr.mxu0 0.0
    %219 = vmatpush1.msra.mxu0 0.0
    %220 = vmatprep.mubr.f32.mxu0 0.0
    %221 = vmatmul.mubr.f32.gmra.mrb[0].mxu0 %v132
    %v222 = vpop.f32.mrb[0].mxu0
    %v223 = vadd.f32 0.0, %v222
    %v224 = vpop.f32.mrb[0].mxu0
    %v225 = vadd.f32 0.0, %v224
    %226 = vmatprep.mubr.f32.mxu0 0.0
    %227 = vmatmul.mubr.f32.gmra.mrb[0].mxu0 %v135
    %v228 = vpop.f32.mrb[0].mxu0
    %v229 = vadd.f32 0.0, %v228
    %v230 = vpop.f32.mrb[0].mxu0
    %v231 = vadd.f32 0.0, %v230
    %232 = vmatprep.mubr.f32.mxu0 0.0
    %233 = vmatmul.mubr.f32.gmra.mrb[0].mxu0 %v138
    %v234 = vpop.f32.mrb[0].mxu0
    %v235 = vadd.f32 0.0, %v234
    %v236 = vpop.f32.mrb[0].mxu0
    %v237 = vadd.f32 0.0, %v236
    %238 = vmatprep.mubr.f32.mxu0 0.0
    %239 = vmatmul.mubr.f32.gmra.mrb[0].mxu0 %v141
    %v240 = vpop.f32.mrb[0].mxu0
    %v241 = vadd.f32 0.0, %v240
    %v242 = vpop.f32.mrb[0].mxu0
    %v243 = vadd.f32 0.0, %v242
    %244 = vdwg.mxu0
    %245 = vmatprep.subr.mxu0 %v117
    %246 = vmatpush1.msra.mxu0 %v116
    %247 = vmatprep.subr.mxu0 %v121
    %248 = vmatpush1.msra.mxu0 %v120
    %249 = vmatprep.subr.mxu0 %v125
    %250 = vmatpush1.msra.mxu0 %v124
    %251 = vmatprep.subr.mxu0 %v154
    %252 = vmatpush1.msra.mxu0 %v151
    %253 = vmatprep.subr.mxu0 0.0
    %254 = vmatpush1.msra.mxu0 0.0
    %255 = vmatprep.subr.mxu0 0.0
    %256 = vmatpush1.msra.mxu0 0.0
    %257 = vmatprep.subr.mxu0 0.0
    %258 = vmatpush1.msra.mxu0 0.0
    %259 = vmatprep.subr.mxu0 0.0
    %260 = vmatpush1.msra.mxu0 0.0
    %261 = vmatprep.subr.mxu0 0.0
    %262 = vmatpush1.msra.mxu0 0.0
    %263 = vmatprep.subr.mxu0 0.0
    %264 = vmatpush1.msra.mxu0 0.0
    %265 = vmatprep.subr.mxu0 0.0
    %266 = vmatpush1.msra.mxu0 0.0
    %267 = vmatprep.subr.mxu0 0.0
    %268 = vmatpush1.msra.mxu0 0.0
    %269 = vmatprep.subr.mxu0 0.0
    %270 = vmatpush1.msra.mxu0 0.0
    %271 = vmatprep.subr.mxu0 0.0
    %272 = vmatpush1.msra.mxu0 0.0
    %273 = vmatprep.subr.mxu0 0.0
    %274 = vmatpush1.msra.mxu0 0.0
    %275 = vmatprep.subr.mxu0 0.0
    %276 = vmatpush1.msra.mxu0 0.0
    %277 = vmatprep.subr.mxu0 0.0
    %278 = vmatpush1.msra.mxu0 0.0
    %279 = vmatprep.subr.mxu0 0.0
    %280 = vmatpush1.msra.mxu0 0.0
    %281 = vmatprep.subr.mxu0 0.0
    %282 = vmatpush1.msra.mxu0 0.0
    %283 = vmatprep.subr.mxu0 0.0
    %284 = vmatpush1.msra.mxu0 0.0
    %285 = vmatprep.subr.mxu0 0.0
    %286 = vmatpush1.msra.mxu0 0.0
    %287 = vmatprep.subr.mxu0 0.0
    %288 = vmatpush1.msra.mxu0 0.0
    %289 = vmatprep.subr.mxu0 0.0
    %290 = vmatpush1.msra.mxu0 0.0
    %291 = vmatprep.subr.mxu0 0.0
    %292 = vmatpush1.msra.mxu0 0.0
    %293 = vmatprep.subr.mxu0 0.0
    %294 = vmatpush1.msra.mxu0 0.0
    %295 = vmatprep.subr.mxu0 0.0
    %296 = vmatpush1.msra.mxu0 0.0
    %297 = vmatprep.subr.mxu0 0.0
    %298 = vmatpush1.msra.mxu0 0.0
    %299 = vmatprep.subr.mxu0 0.0
    %300 = vmatpush1.msra.mxu0 0.0
    %301 = vmatprep.subr.mxu0 0.0
    %302 = vmatpush1.msra.mxu0 0.0
    %303 = vmatprep.subr.mxu0 0.0
    %304 = vmatpush1.msra.mxu0 0.0
    %305 = vmatprep.subr.mxu0 0.0
    %306 = vmatpush1.msra.mxu0 0.0
    %307 = vmatprep.subr.mxu0 0.0
    %308 = vmatpush1.msra.mxu0 0.0
    %309 = vmatprep.mubr.f32.mxu0 0.0
    %310 = vmatmul.mubr.f32.gmra.mrb[0].mxu0 %v132
    %v311 = vpop.f32.mrb[0].mxu0
    %v312 = vadd.f32 0.0, %v311
    %v313 = vpop.f32.mrb[0].mxu0
    %v314 = vadd.f32 0.0, %v313
    %315 = vmatprep.mubr.f32.mxu0 0.0
    %316 = vmatmul.mubr.f32.gmra.mrb[0].mxu0 %v135
    %v317 = vpop.f32.mrb[0].mxu0
    %v318 = vadd.f32 0.0, %v317
    %v319 = vpop.f32.mrb[0].mxu0
    %v320 = vadd.f32 0.0, %v319
    %321 = vmatprep.mubr.f32.mxu0 0.0
    %322 = vmatmul.mubr.f32.gmra.mrb[0].mxu0 %v138
    %v323 = vpop.f32.mrb[0].mxu0
    %v324 = vadd.f32 0.0, %v323
    %v325 = vpop.f32.mrb[0].mxu0
    %v326 = vadd.f32 0.0, %v325
    %327 = vmatprep.mubr.f32.mxu0 0.0
    %328 = vmatmul.mubr.f32.gmra.mrb[0].mxu0 %v141
    %v329 = vpop.f32.mrb[0].mxu0
    %v330 = vadd.f32 0.0, %v329
    %v331 = vpop.f32.mrb[0].mxu0
    %v332 = vadd.f32 0.0, %v331
    %333 = vdwg.mxu0
    %v335 = vsel %vm130, %v89, 0
    %v338 = vsel %vm130, %v90, 0
    %v341 = vsel %vm130, %v91, 0
    %v344 = vsel %vm130, %v92, 0
    %v347 = vsel %vm143, %v105, 0
    %v350 = vsel %vm143, %v106, 0
    %v353 = vsel %vm143, %v107, 0
    %v356 = vsel %vm143, %v108, 0
    %358 = vmatprep.subr.mxu0 %v94
    %359 = vmatpush1.msra.mxu0 %v93
    %360 = vmatprep.subr.mxu0 %v98
    %361 = vmatpush1.msra.mxu0 %v97
    %362 = vmatprep.subr.mxu0 %v102
    %363 = vmatpush1.msra.mxu0 %v101
    %364 = vmatprep.subr.mxu0 %v350
    %365 = vmatpush1.msra.mxu0 %v347
    %366 = vmatprep.subr.mxu0 0.0
    %367 = vmatpush1.msra.mxu0 0.0
    %368 = vmatprep.subr.mxu0 0.0
    %369 = vmatpush1.msra.mxu0 0.0
    %370 = vmatprep.subr.mxu0 0.0
    %371 = vmatpush1.msra.mxu0 0.0
    %372 = vmatprep.subr.mxu0 0.0
    %373 = vmatpush1.msra.mxu0 0.0
    %374 = vmatprep.subr.mxu0 0.0
    %375 = vmatpush1.msra.mxu0 0.0
    %376 = vmatprep.subr.mxu0 0.0
    %377 = vmatpush1.msra.mxu0 0.0
    %378 = vmatprep.subr.mxu0 0.0
    %379 = vmatpush1.msra.mxu0 0.0
    %380 = vmatprep.subr.mxu0 0.0
    %381 = vmatpush1.msra.mxu0 0.0
    %382 = vmatprep.subr.mxu0 0.0
    %383 = vmatpush1.msra.mxu0 0.0
    %384 = vmatprep.subr.mxu0 0.0
    %385 = vmatpush1.msra.mxu0 0.0
    %386 = vmatprep.subr.mxu0 0.0
    %387 = vmatpush1.msra.mxu0 0.0
    %388 = vmatprep.subr.mxu0 0.0
    %389 = vmatpush1.msra.mxu0 0.0
    %390 = vmatprep.subr.mxu0 0.0
    %391 = vmatpush1.msra.mxu0 0.0
    %392 = vmatprep.subr.mxu0 0.0
    %393 = vmatpush1.msra.mxu0 0.0
    %394 = vmatprep.subr.mxu0 0.0
    %395 = vmatpush1.msra.mxu0 0.0
    %396 = vmatprep.subr.mxu0 0.0
    %397 = vmatpush1.msra.mxu0 0.0
    %398 = vmatprep.subr.mxu0 0.0
    %399 = vmatpush1.msra.mxu0 0.0
    %400 = vmatprep.subr.mxu0 0.0
    %401 = vmatpush1.msra.mxu0 0.0
    %402 = vmatprep.subr.mxu0 0.0
    %403 = vmatpush1.msra.mxu0 0.0
    %404 = vmatprep.subr.mxu0 0.0
    %405 = vmatpush1.msra.mxu0 0.0
    %406 = vmatprep.subr.mxu0 0.0
    %407 = vmatpush1.msra.mxu0 0.0
    %408 = vmatprep.subr.mxu0 0.0
    %409 = vmatpush1.msra.mxu0 0.0
    %410 = vmatprep.subr.mxu0 0.0
    %411 = vmatpush1.msra.mxu0 0.0
    %412 = vmatprep.subr.mxu0 0.0
    %413 = vmatpush1.msra.mxu0 0.0
    %414 = vmatprep.subr.mxu0 0.0
    %415 = vmatpush1.msra.mxu0 0.0
    %416 = vmatprep.subr.mxu0 0.0
    %417 = vmatpush1.msra.mxu0 0.0
    %418 = vmatprep.subr.mxu0 0.0
    %419 = vmatpush1.msra.mxu0 0.0
    %420 = vmatprep.subr.mxu0 0.0
    %421 = vmatpush1.msra.mxu0 0.0
    %422 = vmatprep.mubr.f32.mxu0 0.0
    %423 = vmatmul.mubr.f32.gmra.mrb[0].mxu0 %v335
    %v424 = vpop.f32.mrb[0].mxu0
    %v425 = vadd.f32 %v223, %v424
    %v426 = vpop.f32.mrb[0].mxu0
    %v427 = vadd.f32 %v225, %v426
    %428 = vmatprep.mubr.f32.mxu0 0.0
    %429 = vmatmul.mubr.f32.gmra.mrb[0].mxu0 %v338
    %v430 = vpop.f32.mrb[0].mxu0
    %v431 = vadd.f32 %v229, %v430
    %v432 = vpop.f32.mrb[0].mxu0
    %v433 = vadd.f32 %v231, %v432
    %434 = vmatprep.mubr.f32.mxu0 0.0
    %435 = vmatmul.mubr.f32.gmra.mrb[0].mxu0 %v341
    %v436 = vpop.f32.mrb[0].mxu0
    %v437 = vadd.f32 %v235, %v436
    %v438 = vpop.f32.mrb[0].mxu0
    %v439 = vadd.f32 %v237, %v438
    %440 = vmatprep.mubr.f32.mxu0 0.0
    %441 = vmatmul.mubr.f32.gmra.mrb[0].mxu0 %v344
    %v442 = vpop.f32.mrb[0].mxu0
    %v443 = vadd.f32 %v241, %v442
    %v444 = vpop.f32.mrb[0].mxu0
    %v445 = vadd.f32 %v243, %v444
    %446 = vdwg.mxu0
    %447 = vmatprep.subr.mxu0 %v96
    %448 = vmatpush1.msra.mxu0 %v95
    %449 = vmatprep.subr.mxu0 %v100
    %450 = vmatpush1.msra.mxu0 %v99
    %451 = vmatprep.subr.mxu0 %v104
    %452 = vmatpush1.msra.mxu0 %v103
    %453 = vmatprep.subr.mxu0 %v356
    %454 = vmatpush1.msra.mxu0 %v353
    %455 = vmatprep.subr.mxu0 0.0
    %456 = vmatpush1.msra.mxu0 0.0
    %457 = vmatprep.subr.mxu0 0.0
    %458 = vmatpush1.msra.mxu0 0.0
    %459 = vmatprep.subr.mxu0 0.0
    %460 = vmatpush1.msra.mxu0 0.0
    %461 = vmatprep.subr.mxu0 0.0
    %462 = vmatpush1.msra.mxu0 0.0
    %463 = vmatprep.subr.mxu0 0.0
    %464 = vmatpush1.msra.mxu0 0.0
    %465 = vmatprep.subr.mxu0 0.0
    %466 = vmatpush1.msra.mxu0 0.0
    %467 = vmatprep.subr.mxu0 0.0
    %468 = vmatpush1.msra.mxu0 0.0
    %469 = vmatprep.subr.mxu0 0.0
    %470 = vmatpush1.msra.mxu0 0.0
    %471 = vmatprep.subr.mxu0 0.0
    %472 = vmatpush1.msra.mxu0 0.0
    %473 = vmatprep.subr.mxu0 0.0
    %474 = vmatpush1.msra.mxu0 0.0
    %475 = vmatprep.subr.mxu0 0.0
    %476 = vmatpush1.msra.mxu0 0.0
    %477 = vmatprep.subr.mxu0 0.0
    %478 = vmatpush1.msra.mxu0 0.0
    %479 = vmatprep.subr.mxu0 0.0
    %480 = vmatpush1.msra.mxu0 0.0
    %481 = vmatprep.subr.mxu0 0.0
    %482 = vmatpush1.msra.mxu0 0.0
    %483 = vmatprep.subr.mxu0 0.0
    %484 = vmatpush1.msra.mxu0 0.0
    %485 = vmatprep.subr.mxu0 0.0
    %486 = vmatpush1.msra.mxu0 0.0
    %487 = vmatprep.subr.mxu0 0.0
    %488 = vmatpush1.msra.mxu0 0.0
    %489 = vmatprep.subr.mxu0 0.0
    %490 = vmatpush1.msra.mxu0 0.0
    %491 = vmatprep.subr.mxu0 0.0
    %492 = vmatpush1.msra.mxu0 0.0
    %493 = vmatprep.subr.mxu0 0.0
    %494 = vmatpush1.msra.mxu0 0.0
    %495 = vmatprep.subr.mxu0 0.0
    %496 = vmatpush1.msra.mxu0 0.0
    %497 = vmatprep.subr.mxu0 0.0
    %498 = vmatpush1.msra.mxu0 0.0
    %499 = vmatprep.subr.mxu0 0.0
    %500 = vmatpush1.msra.mxu0 0.0
    %501 = vmatprep.subr.mxu0 0.0
    %502 = vmatpush1.msra.mxu0 0.0
    %503 = vmatprep.subr.mxu0 0.0
    %504 = vmatpush1.msra.mxu0 0.0
    %505 = vmatprep.subr.mxu0 0.0
    %506 = vmatpush1.msra.mxu0 0.0
    %507 = vmatprep.subr.mxu0 0.0
    %508 = vmatpush1.msra.mxu0 0.0
    %509 = vmatprep.subr.mxu0 0.0
    %510 = vmatpush1.msra.mxu0 0.0
    %511 = vmatprep.mubr.f32.mxu0 0.0
    %512 = vmatmul.mubr.f32.gmra.mrb[0].mxu0 %v335
    %v513 = vpop.f32.mrb[0].mxu0
    %v514 = vadd.f32 %v312, %v513
    %v515 = vpop.f32.mrb[0].mxu0
    %v516 = vadd.f32 %v314, %v515
    %517 = vmatprep.mubr.f32.mxu0 0.0
    %518 = vmatmul.mubr.f32.gmra.mrb[0].mxu0 %v338
    %v519 = vpop.f32.mrb[0].mxu0
    %v520 = vadd.f32 %v318, %v519
    %v521 = vpop.f32.mrb[0].mxu0
    %v522 = vadd.f32 %v320, %v521
    %523 = vmatprep.mubr.f32.mxu0 0.0
    %524 = vmatmul.mubr.f32.gmra.mrb[0].mxu0 %v341
    %v525 = vpop.f32.mrb[0].mxu0
    %v526 = vadd.f32 %v324, %v525
    %v527 = vpop.f32.mrb[0].mxu0
    %v528 = vadd.f32 %v326, %v527
    %529 = vmatprep.mubr.f32.mxu0 0.0
    %530 = vmatmul.mubr.f32.gmra.mrb[0].mxu0 %v344
    %v531 = vpop.f32.mrb[0].mxu0
    %v532 = vadd.f32 %v330, %v531
    %v533 = vpop.f32.mrb[0].mxu0
    %v534 = vadd.f32 %v332, %v533
    %535 = vdwg.mxu0
    %v536 = vld [vmem:[%s0 + $0x2] sm:$0xff]
    %v537 = vld [vmem:[%s0 + $0xa] sm:$0xff]
    %v538 = vld [vmem:[%s0 + $0x12] sm:$0xff]
    %v539 = vld [vmem:[%s0 + $0x1a] sm:$0x3]
    %s540 = scalar_lea.vmem [#allocation6], 256
    %v541 = vld [vmem:[%s540] sm:$0xff]
    %v542 = vld [vmem:[%s540 + $0x8] sm:$0xff]
    %v543 = vld [vmem:[%s540 + $0x10] sm:$0xff]
    %v544 = vld [vmem:[%s540 + $0x18] sm:$0xff]
    %v545 = vld [vmem:[%s540 + $0x20] sm:$0xff]
    %v546 = vld [vmem:[%s540 + $0x28] sm:$0xff]
    %v547 = vld [vmem:[%s540 + $0x30] sm:$0xff]
    %v548 = vld [vmem:[%s540 + $0x38] sm:$0xff]
    %v549 = vld [vmem:[%s540 + $0x40] sm:$0xff]
    %v550 = vld [vmem:[%s540 + $0x48] sm:$0xff]
    %v551 = vld [vmem:[%s540 + $0x50] sm:$0xff]
    %v552 = vld [vmem:[%s540 + $0x58] sm:$0xff]
    %v553 = vld [vmem:[%s540 + $0x60] sm:$0xf]
    %v554 = vld [vmem:[%s540 + $0x68] sm:$0xf]
    %v555 = vld [vmem:[%s540 + $0x70] sm:$0xf]
    %v556 = vld [vmem:[%s540 + $0x78] sm:$0xf]
    %v558 = vsel %vm130, %v536, 0
    %v561 = vsel %vm130, %v537, 0
    %v564 = vsel %vm130, %v538, 0
    %v567 = vsel %vm130, %v539, 0
    %v570 = vsel %vm143, %v553, 0
    %v573 = vsel %vm143, %v554, 0
    %v576 = vsel %vm143, %v555, 0
    %v579 = vsel %vm143, %v556, 0
    %581 = vmatprep.subr.mxu0 %v542
    %582 = vmatpush1.msra.mxu0 %v541
    %583 = vmatprep.subr.mxu0 %v546
    %584 = vmatpush1.msra.mxu0 %v545
    %585 = vmatprep.subr.mxu0 %v550
    %586 = vmatpush1.msra.mxu0 %v549
    %587 = vmatprep.subr.mxu0 %v573
    %588 = vmatpush1.msra.mxu0 %v570
    %589 = vmatprep.subr.mxu0 0.0
    %590 = vmatpush1.msra.mxu0 0.0
    %591 = vmatprep.subr.mxu0 0.0
    %592 = vmatpush1.msra.mxu0 0.0
    %593 = vmatprep.subr.mxu0 0.0
    %594 = vmatpush1.msra.mxu0 0.0
    %595 = vmatprep.subr.mxu0 0.0
    %596 = vmatpush1.msra.mxu0 0.0
    %597 = vmatprep.subr.mxu0 0.0
    %598 = vmatpush1.msra.mxu0 0.0
    %599 = vmatprep.subr.mxu0 0.0
    %600 = vmatpush1.msra.mxu0 0.0
    %601 = vmatprep.subr.mxu0 0.0
    %602 = vmatpush1.msra.mxu0 0.0
    %603 = vmatprep.subr.mxu0 0.0
    %604 = vmatpush1.msra.mxu0 0.0
    %605 = vmatprep.subr.mxu0 0.0
    %606 = vmatpush1.msra.mxu0 0.0
    %607 = vmatprep.subr.mxu0 0.0
    %608 = vmatpush1.msra.mxu0 0.0
    %609 = vmatprep.subr.mxu0 0.0
    %610 = vmatpush1.msra.mxu0 0.0
    %611 = vmatprep.subr.mxu0 0.0
    %612 = vmatpush1.msra.mxu0 0.0
    %613 = vmatprep.subr.mxu0 0.0
    %614 = vmatpush1.msra.mxu0 0.0
    %615 = vmatprep.subr.mxu0 0.0
    %616 = vmatpush1.msra.mxu0 0.0
    %617 = vmatprep.subr.mxu0 0.0
    %618 = vmatpush1.msra.mxu0 0.0
    %619 = vmatprep.subr.mxu0 0.0
    %620 = vmatpush1.msra.mxu0 0.0
    %621 = vmatprep.subr.mxu0 0.0
    %622 = vmatpush1.msra.mxu0 0.0
    %623 = vmatprep.subr.mxu0 0.0
    %624 = vmatpush1.msra.mxu0 0.0
    %625 = vmatprep.subr.mxu0 0.0
    %626 = vmatpush1.msra.mxu0 0.0
    %627 = vmatprep.subr.mxu0 0.0
    %628 = vmatpush1.msra.mxu0 0.0
    %629 = vmatprep.subr.mxu0 0.0
    %630 = vmatpush1.msra.mxu0 0.0
    %631 = vmatprep.subr.mxu0 0.0
    %632 = vmatpush1.msra.mxu0 0.0
    %633 = vmatprep.subr.mxu0 0.0
    %634 = vmatpush1.msra.mxu0 0.0
    %635 = vmatprep.subr.mxu0 0.0
    %636 = vmatpush1.msra.mxu0 0.0
    %637 = vmatprep.subr.mxu0 0.0
    %638 = vmatpush1.msra.mxu0 0.0
    %639 = vmatprep.subr.mxu0 0.0
    %640 = vmatpush1.msra.mxu0 0.0
    %641 = vmatprep.subr.mxu0 0.0
    %642 = vmatpush1.msra.mxu0 0.0
    %643 = vmatprep.subr.mxu0 0.0
    %644 = vmatpush1.msra.mxu0 0.0
    %645 = vmatprep.mubr.f32.mxu0 0.0
    %646 = vmatmul.mubr.f32.gmra.mrb[0].mxu0 %v558
    %v647 = vpop.f32.mrb[0].mxu0
    %v648 = vadd.f32 0.0, %v647
    %v649 = vpop.f32.mrb[0].mxu0
    %v650 = vadd.f32 0.0, %v649
    %651 = vmatprep.mubr.f32.mxu0 0.0
    %652 = vmatmul.mubr.f32.gmra.mrb[0].mxu0 %v561
    %v653 = vpop.f32.mrb[0].mxu0
    %v654 = vadd.f32 0.0, %v653
    %v655 = vpop.f32.mrb[0].mxu0
    %v656 = vadd.f32 0.0, %v655
    %657 = vmatprep.mubr.f32.mxu0 0.0
    %658 = vmatmul.mubr.f32.gmra.mrb[0].mxu0 %v564
    %v659 = vpop.f32.mrb[0].mxu0
    %v660 = vadd.f32 0.0, %v659
    %v661 = vpop.f32.mrb[0].mxu0
    %v662 = vadd.f32 0.0, %v661
    %663 = vmatprep.mubr.f32.mxu0 0.0
    %664 = vmatmul.mubr.f32.gmra.mrb[0].mxu0 %v567
    %v665 = vpop.f32.mrb[0].mxu0
    %v666 = vadd.f32 0.0, %v665
    %v667 = vpop.f32.mrb[0].mxu0
    %v668 = vadd.f32 0.0, %v667
    %669 = vdwg.mxu0
    %670 = vmatprep.subr.mxu0 %v544
    %671 = vmatpush1.msra.mxu0 %v543
    %672 = vmatprep.subr.mxu0 %v548
    %673 = vmatpush1.msra.mxu0 %v547
    %674 = vmatprep.subr.mxu0 %v552
    %675 = vmatpush1.msra.mxu0 %v551
    %676 = vmatprep.subr.mxu0 %v579
    %677 = vmatpush1.msra.mxu0 %v576
    %678 = vmatprep.subr.mxu0 0.0
    %679 = vmatpush1.msra.mxu0 0.0
    %680 = vmatprep.subr.mxu0 0.0
    %681 = vmatpush1.msra.mxu0 0.0
    %682 = vmatprep.subr.mxu0 0.0
    %683 = vmatpush1.msra.mxu0 0.0
    %684 = vmatprep.subr.mxu0 0.0
    %685 = vmatpush1.msra.mxu0 0.0
    %686 = vmatprep.subr.mxu0 0.0
    %687 = vmatpush1.msra.mxu0 0.0
    %688 = vmatprep.subr.mxu0 0.0
    %689 = vmatpush1.msra.mxu0 0.0
    %690 = vmatprep.subr.mxu0 0.0
    %691 = vmatpush1.msra.mxu0 0.0
    %692 = vmatprep.subr.mxu0 0.0
    %693 = vmatpush1.msra.mxu0 0.0
    %694 = vmatprep.subr.mxu0 0.0
    %695 = vmatpush1.msra.mxu0 0.0
    %696 = vmatprep.subr.mxu0 0.0
    %697 = vmatpush1.msra.mxu0 0.0
    %698 = vmatprep.subr.mxu0 0.0
    %699 = vmatpush1.msra.mxu0 0.0
    %700 = vmatprep.subr.mxu0 0.0
    %701 = vmatpush1.msra.mxu0 0.0
    %702 = vmatprep.subr.mxu0 0.0
    %703 = vmatpush1.msra.mxu0 0.0
    %704 = vmatprep.subr.mxu0 0.0
    %705 = vmatpush1.msra.mxu0 0.0
    %706 = vmatprep.subr.mxu0 0.0
    %707 = vmatpush1.msra.mxu0 0.0
    %708 = vmatprep.subr.mxu0 0.0
    %709 = vmatpush1.msra.mxu0 0.0
    %710 = vmatprep.subr.mxu0 0.0
    %711 = vmatpush1.msra.mxu0 0.0
    %712 = vmatprep.subr.mxu0 0.0
    %713 = vmatpush1.msra.mxu0 0.0
    %714 = vmatprep.subr.mxu0 0.0
    %715 = vmatpush1.msra.mxu0 0.0
    %716 = vmatprep.subr.mxu0 0.0
    %717 = vmatpush1.msra.mxu0 0.0
    %718 = vmatprep.subr.mxu0 0.0
    %719 = vmatpush1.msra.mxu0 0.0
    %720 = vmatprep.subr.mxu0 0.0
    %721 = vmatpush1.msra.mxu0 0.0
    %722 = vmatprep.subr.mxu0 0.0
    %723 = vmatpush1.msra.mxu0 0.0
    %724 = vmatprep.subr.mxu0 0.0
    %725 = vmatpush1.msra.mxu0 0.0
    %726 = vmatprep.subr.mxu0 0.0
    %727 = vmatpush1.msra.mxu0 0.0
    %728 = vmatprep.subr.mxu0 0.0
    %729 = vmatpush1.msra.mxu0 0.0
    %730 = vmatprep.subr.mxu0 0.0
    %731 = vmatpush1.msra.mxu0 0.0
    %732 = vmatprep.subr.mxu0 0.0
    %733 = vmatpush1.msra.mxu0 0.0
    %734 = vmatprep.mubr.f32.mxu0 0.0
    %735 = vmatmul.mubr.f32.gmra.mrb[0].mxu0 %v558
    %v736 = vpop.f32.mrb[0].mxu0
    %v737 = vadd.f32 0.0, %v736
    %v738 = vpop.f32.mrb[0].mxu0
    %v739 = vadd.f32 0.0, %v738
    %740 = vmatprep.mubr.f32.mxu0 0.0
    %741 = vmatmul.mubr.f32.gmra.mrb[0].mxu0 %v561
    %v742 = vpop.f32.mrb[0].mxu0
    %v743 = vadd.f32 0.0, %v742
    %v744 = vpop.f32.mrb[0].mxu0
    %v745 = vadd.f32 0.0, %v744
    %746 = vmatprep.mubr.f32.mxu0 0.0
    %747 = vmatmul.mubr.f32.gmra.mrb[0].mxu0 %v564
    %v748 = vpop.f32.mrb[0].mxu0
    %v749 = vadd.f32 0.0, %v748
    %v750 = vpop.f32.mrb[0].mxu0
    %v751 = vadd.f32 0.0, %v750
    %752 = vmatprep.mubr.f32.mxu0 0.0
    %753 = vmatmul.mubr.f32.gmra.mrb[0].mxu0 %v567
    %v754 = vpop.f32.mrb[0].mxu0
    %v755 = vadd.f32 0.0, %v754
    %v756 = vpop.f32.mrb[0].mxu0
    %v757 = vadd.f32 0.0, %v756
    %758 = vdwg.mxu0
    %v759 = vadd.f32 %v425, %v648
    %v760 = vadd.f32 %v427, %v650
    %v761 = vadd.f32 %v514, %v737
    %v762 = vadd.f32 %v516, %v739
    %v763 = vadd.f32 %v431, %v654
    %v764 = vadd.f32 %v433, %v656
    %v765 = vadd.f32 %v520, %v743
    %v766 = vadd.f32 %v522, %v745
    %v767 = vadd.f32 %v437, %v660
    %v768 = vadd.f32 %v439, %v662
    %v769 = vadd.f32 %v526, %v749
    %v770 = vadd.f32 %v528, %v751
    %v771 = vadd.f32 %v443, %v666
    %v772 = vadd.f32 %v445, %v668
    %v773 = vadd.f32 %v532, %v755
    %v774 = vadd.f32 %v534, %v757
    %v775 = vld [vmem:[%s2] sm:$0xf]
    %v777 = vlaneseq
    %v778 = vshrl.u32 %v777, 7
    %v779 = vsub.s32 0, %v778
    %v780 = vrot.slane %v775, %v779
    %v781 = vlaneseq
    %v782 = vshrl.u32 %v781, 7
    %v783 = vsub.s32 1, %v782
    %v784 = vrot.slane %v775, %v783
    %v785 = vlaneseq
    %v786 = vshrl.u32 %v785, 7
    %v787 = vsub.s32 2, %v786
    %v788 = vrot.slane %v775, %v787
    %v789 = vlaneseq
    %v790 = vshrl.u32 %v789, 7
    %v791 = vsub.s32 3, %v790
    %v792 = vrot.slane %v775, %v791
    %v797 = vmul.f32 %v759, %v780
    %v798 = vmul.f32 %v760, %v784
    %v799 = vmul.f32 %v761, %v788
    %v800 = vmul.f32 %v762, %v792
    %v801 = vmul.f32 %v763, %v780
    %v802 = vmul.f32 %v764, %v784
    %v803 = vmul.f32 %v765, %v788
    %v804 = vmul.f32 %v766, %v792
    %v805 = vmul.f32 %v767, %v780
    %v806 = vmul.f32 %v768, %v784
    %v807 = vmul.f32 %v769, %v788
    %v808 = vmul.f32 %v770, %v792
    %v809 = vmul.f32 %v771, %v780
    %v810 = vmul.f32 %v772, %v784
    %v811 = vmul.f32 %v773, %v788
    %v812 = vmul.f32 %v774, %v792
    %v813 = vld [vmem:[%s3] sm:$0xf]
    %v815 = vlaneseq
    %v816 = vshrl.u32 %v815, 7
    %v817 = vsub.s32 0, %v816
    %v818 = vrot.slane %v813, %v817
    %v819 = vlaneseq
    %v820 = vshrl.u32 %v819, 7
    %v821 = vsub.s32 1, %v820
    %v822 = vrot.slane %v813, %v821
    %v823 = vlaneseq
    %v824 = vshrl.u32 %v823, 7
    %v825 = vsub.s32 2, %v824
    %v826 = vrot.slane %v813, %v825
    %v827 = vlaneseq
    %v828 = vshrl.u32 %v827, 7
    %v829 = vsub.s32 3, %v828
    %v830 = vrot.slane %v813, %v829
    %v835 = vadd.f32 %v797, %v818
    %v836 = vadd.f32 %v798, %v822
    %v837 = vadd.f32 %v799, %v826
    %v838 = vadd.f32 %v800, %v830
    %v839 = vadd.f32 %v801, %v818
    %v840 = vadd.f32 %v802, %v822
    %v841 = vadd.f32 %v803, %v826
    %v842 = vadd.f32 %v804, %v830
    %v843 = vadd.f32 %v805, %v818
    %v844 = vadd.f32 %v806, %v822
    %v845 = vadd.f32 %v807, %v826
    %v846 = vadd.f32 %v808, %v830
    %v847 = vadd.f32 %v809, %v818
    %v848 = vadd.f32 %v810, %v822
    %v849 = vadd.f32 %v811, %v826
    %v850 = vadd.f32 %v812, %v830
    %v851 = vmax.f32 %v835, 0.0
    %v852 = vmax.f32 %v836, 0.0
    %v853 = vmax.f32 %v837, 0.0
    %v854 = vmax.f32 %v838, 0.0
    %v855 = vmax.f32 %v839, 0.0
    %v856 = vmax.f32 %v840, 0.0
    %v857 = vmax.f32 %v841, 0.0
    %v858 = vmax.f32 %v842, 0.0
    %v859 = vmax.f32 %v843, 0.0
    %v860 = vmax.f32 %v844, 0.0
    %v861 = vmax.f32 %v845, 0.0
    %v862 = vmax.f32 %v846, 0.0
    %v863 = vmax.f32 %v847, 0.0
    %v864 = vmax.f32 %v848, 0.0
    %v865 = vmax.f32 %v849, 0.0
    %v866 = vmax.f32 %v850, 0.0
    %v867 = vld [vmem:[%s4] sm:$0xff]
    %v868 = vld [vmem:[%s4 + $0x8] sm:$0x1f]
    %vm869 = vcmask 211968
    %v871 = vsel %vm869, %v867, 0
    %v874 = vsel %vm869, %v868, 0
    %vm876 = vcmask 1041408
    %v878 = vsel %vm876, %v863, 0
    %v881 = vsel %vm876, %v864, 0
    %v884 = vsel %vm876, %v865, 0
    %v887 = vsel %vm876, %v866, 0
    %889 = vmatprep.subr.mxu0 %v852
    %890 = vmatpush1.msra.mxu0 %v851
    %891 = vmatprep.subr.mxu0 %v856
    %892 = vmatpush1.msra.mxu0 %v855
    %893 = vmatprep.subr.mxu0 %v860
    %894 = vmatpush1.msra.mxu0 %v859
    %895 = vmatprep.subr.mxu0 %v881
    %896 = vmatpush1.msra.mxu0 %v878
    %897 = vmatprep.subr.mxu0 0.0
    %898 = vmatpush1.msra.mxu0 0.0
    %899 = vmatprep.subr.mxu0 0.0
    %900 = vmatpush1.msra.mxu0 0.0
    %901 = vmatprep.subr.mxu0 0.0
    %902 = vmatpush1.msra.mxu0 0.0
    %903 = vmatprep.subr.mxu0 0.0
    %904 = vmatpush1.msra.mxu0 0.0
    %905 = vmatprep.subr.mxu0 0.0
    %906 = vmatpush1.msra.mxu0 0.0
    %907 = vmatprep.subr.mxu0 0.0
    %908 = vmatpush1.msra.mxu0 0.0
    %909 = vmatprep.subr.mxu0 0.0
    %910 = vmatpush1.msra.mxu0 0.0
    %911 = vmatprep.subr.mxu0 0.0
    %912 = vmatpush1.msra.mxu0 0.0
    %913 = vmatprep.subr.mxu0 0.0
    %914 = vmatpush1.msra.mxu0 0.0
    %915 = vmatprep.subr.mxu0 0.0
    %916 = vmatpush1.msra.mxu0 0.0
    %917 = vmatprep.subr.mxu0 0.0
    %918 = vmatpush1.msra.mxu0 0.0
    %919 = vmatprep.subr.mxu0 0.0
    %920 = vmatpush1.msra.mxu0 0.0
    %921 = vmatprep.subr.mxu0 0.0
    %922 = vmatpush1.msra.mxu0 0.0
    %923 = vmatprep.subr.mxu0 0.0
    %924 = vmatpush1.msra.mxu0 0.0
    %925 = vmatprep.subr.mxu0 0.0
    %926 = vmatpush1.msra.mxu0 0.0
    %927 = vmatprep.subr.mxu0 0.0
    %928 = vmatpush1.msra.mxu0 0.0
    %929 = vmatprep.subr.mxu0 0.0
    %930 = vmatpush1.msra.mxu0 0.0
    %931 = vmatprep.subr.mxu0 0.0
    %932 = vmatpush1.msra.mxu0 0.0
    %933 = vmatprep.subr.mxu0 0.0
    %934 = vmatpush1.msra.mxu0 0.0
    %935 = vmatprep.subr.mxu0 0.0
    %936 = vmatpush1.msra.mxu0 0.0
    %937 = vmatprep.subr.mxu0 0.0
    %938 = vmatpush1.msra.mxu0 0.0
    %939 = vmatprep.subr.mxu0 0.0
    %940 = vmatpush1.msra.mxu0 0.0
    %941 = vmatprep.subr.mxu0 0.0
    %942 = vmatpush1.msra.mxu0 0.0
    %943 = vmatprep.subr.mxu0 0.0
    %944 = vmatpush1.msra.mxu0 0.0
    %945 = vmatprep.subr.mxu0 0.0
    %946 = vmatpush1.msra.mxu0 0.0
    %947 = vmatprep.subr.mxu0 0.0
    %948 = vmatpush1.msra.mxu0 0.0
    %949 = vmatprep.subr.mxu0 0.0
    %950 = vmatpush1.msra.mxu0 0.0
    %951 = vmatprep.subr.mxu0 0.0
    %952 = vmatpush1.msra.mxu0 0.0
    %953 = vmatprep.mubr.f32.mxu0 0.0
    %954 = vmatmul.mubr.f32.gmra.mrb[0].mxu0 %v871
    %v955 = vpop.f32.mrb[0].mxu0
    %v956 = vadd.f32 0.0, %v955
    %v957 = vpop.f32.mrb[0].mxu0
    %v958 = vadd.f32 0.0, %v957
    %959 = vmatprep.mubr.f32.mxu0 0.0
    %960 = vmatmul.mubr.f32.gmra.mrb[0].mxu0 %v874
    %v961 = vpop.f32.mrb[0].mxu0
    %v962 = vadd.f32 0.0, %v961
    %v963 = vpop.f32.mrb[0].mxu0
    %v964 = vadd.f32 0.0, %v963
    %965 = vdwg.mxu0
    %966 = vmatprep.subr.mxu0 %v854
    %967 = vmatpush1.msra.mxu0 %v853
    %968 = vmatprep.subr.mxu0 %v858
    %969 = vmatpush1.msra.mxu0 %v857
    %970 = vmatprep.subr.mxu0 %v862
    %971 = vmatpush1.msra.mxu0 %v861
    %972 = vmatprep.subr.mxu0 %v887
    %973 = vmatpush1.msra.mxu0 %v884
    %974 = vmatprep.subr.mxu0 0.0
    %975 = vmatpush1.msra.mxu0 0.0
    %976 = vmatprep.subr.mxu0 0.0
    %977 = vmatpush1.msra.mxu0 0.0
    %978 = vmatprep.subr.mxu0 0.0
    %979 = vmatpush1.msra.mxu0 0.0
    %980 = vmatprep.subr.mxu0 0.0
    %981 = vmatpush1.msra.mxu0 0.0
    %982 = vmatprep.subr.mxu0 0.0
    %983 = vmatpush1.msra.mxu0 0.0
    %984 = vmatprep.subr.mxu0 0.0
    %985 = vmatpush1.msra.mxu0 0.0
    %986 = vmatprep.subr.mxu0 0.0
    %987 = vmatpush1.msra.mxu0 0.0
    %988 = vmatprep.subr.mxu0 0.0
    %989 = vmatpush1.msra.mxu0 0.0
    %990 = vmatprep.subr.mxu0 0.0
    %991 = vmatpush1.msra.mxu0 0.0
    %992 = vmatprep.subr.mxu0 0.0
    %993 = vmatpush1.msra.mxu0 0.0
    %994 = vmatprep.subr.mxu0 0.0
    %995 = vmatpush1.msra.mxu0 0.0
    %996 = vmatprep.subr.mxu0 0.0
    %997 = vmatpush1.msra.mxu0 0.0
    %998 = vmatprep.subr.mxu0 0.0
    %999 = vmatpush1.msra.mxu0 0.0
    %1000 = vmatprep.subr.mxu0 0.0
    %1001 = vmatpush1.msra.mxu0 0.0
    %1002 = vmatprep.subr.mxu0 0.0
    %1003 = vmatpush1.msra.mxu0 0.0
    %1004 = vmatprep.subr.mxu0 0.0
    %1005 = vmatpush1.msra.mxu0 0.0
    %1006 = vmatprep.subr.mxu0 0.0
    %1007 = vmatpush1.msra.mxu0 0.0
    %1008 = vmatprep.subr.mxu0 0.0
    %1009 = vmatpush1.msra.mxu0 0.0
    %1010 = vmatprep.subr.mxu0 0.0
    %1011 = vmatpush1.msra.mxu0 0.0
    %1012 = vmatprep.subr.mxu0 0.0
    %1013 = vmatpush1.msra.mxu0 0.0
    %1014 = vmatprep.subr.mxu0 0.0
    %1015 = vmatpush1.msra.mxu0 0.0
    %1016 = vmatprep.subr.mxu0 0.0
    %1017 = vmatpush1.msra.mxu0 0.0
    %1018 = vmatprep.subr.mxu0 0.0
    %1019 = vmatpush1.msra.mxu0 0.0
    %1020 = vmatprep.subr.mxu0 0.0
    %1021 = vmatpush1.msra.mxu0 0.0
    %1022 = vmatprep.subr.mxu0 0.0
    %1023 = vmatpush1.msra.mxu0 0.0
    %1024 = vmatprep.subr.mxu0 0.0
    %1025 = vmatpush1.msra.mxu0 0.0
    %1026 = vmatprep.subr.mxu0 0.0
    %1027 = vmatpush1.msra.mxu0 0.0
    %1028 = vmatprep.subr.mxu0 0.0
    %1029 = vmatpush1.msra.mxu0 0.0
    %1030 = vmatprep.mubr.f32.mxu0 0.0
    %1031 = vmatmul.mubr.f32.gmra.mrb[0].mxu0 %v871
    %v1032 = vpop.f32.mrb[0].mxu0
    %v1033 = vadd.f32 0.0, %v1032
    %v1034 = vpop.f32.mrb[0].mxu0
    %v1035 = vadd.f32 0.0, %v1034
    %1036 = vmatprep.mubr.f32.mxu0 0.0
    %1037 = vmatmul.mubr.f32.gmra.mrb[0].mxu0 %v874
    %v1038 = vpop.f32.mrb[0].mxu0
    %v1039 = vadd.f32 0.0, %v1038
    %v1040 = vpop.f32.mrb[0].mxu0
    %v1041 = vadd.f32 0.0, %v1040
    %1042 = vdwg.mxu0
    %s1043 = scalar_lea.vmem %s4, 16
    %v1044 = vld [vmem:[%s1043] sm:$0xff]
    %v1045 = vld [vmem:[%s1043 + $0x8] sm:$0x1f]
    %v1047 = vsel %vm869, %v1044, 0
    %v1050 = vsel %vm869, %v1045, 0
    %1052 = vmatprep.subr.mxu0 %v852
    %1053 = vmatpush1.msra.mxu0 %v851
    %1054 = vmatprep.subr.mxu0 %v856
    %1055 = vmatpush1.msra.mxu0 %v855
    %1056 = vmatprep.subr.mxu0 %v860
    %1057 = vmatpush1.msra.mxu0 %v859
    %1058 = vmatprep.subr.mxu0 %v881
    %1059 = vmatpush1.msra.mxu0 %v878
    %1060 = vmatprep.subr.mxu0 0.0
    %1061 = vmatpush1.msra.mxu0 0.0
    %1062 = vmatprep.subr.mxu0 0.0
    %1063 = vmatpush1.msra.mxu0 0.0
    %1064 = vmatprep.subr.mxu0 0.0
    %1065 = vmatpush1.msra.mxu0 0.0
    %1066 = vmatprep.subr.mxu0 0.0
    %1067 = vmatpush1.msra.mxu0 0.0
    %1068 = vmatprep.subr.mxu0 0.0
    %1069 = vmatpush1.msra.mxu0 0.0
    %1070 = vmatprep.subr.mxu0 0.0
    %1071 = vmatpush1.msra.mxu0 0.0
    %1072 = vmatprep.subr.mxu0 0.0
    %1073 = vmatpush1.msra.mxu0 0.0
    %1074 = vmatprep.subr.mxu0 0.0
    %1075 = vmatpush1.msra.mxu0 0.0
    %1076 = vmatprep.subr.mxu0 0.0
    %1077 = vmatpush1.msra.mxu0 0.0
    %1078 = vmatprep.subr.mxu0 0.0
    %1079 = vmatpush1.msra.mxu0 0.0
    %1080 = vmatprep.subr.mxu0 0.0
    %1081 = vmatpush1.msra.mxu0 0.0
    %1082 = vmatprep.subr.mxu0 0.0
    %1083 = vmatpush1.msra.mxu0 0.0
    %1084 = vmatprep.subr.mxu0 0.0
    %1085 = vmatpush1.msra.mxu0 0.0
    %1086 = vmatprep.subr.mxu0 0.0
    %1087 = vmatpush1.msra.mxu0 0.0
    %1088 = vmatprep.subr.mxu0 0.0
    %1089 = vmatpush1.msra.mxu0 0.0
    %1090 = vmatprep.subr.mxu0 0.0
    %1091 = vmatpush1.msra.mxu0 0.0
    %1092 = vmatprep.subr.mxu0 0.0
    %1093 = vmatpush1.msra.mxu0 0.0
    %1094 = vmatprep.subr.mxu0 0.0
    %1095 = vmatpush1.msra.mxu0 0.0
    %1096 = vmatprep.subr.mxu0 0.0
    %1097 = vmatpush1.msra.mxu0 0.0
    %1098 = vmatprep.subr.mxu0 0.0
    %1099 = vmatpush1.msra.mxu0 0.0
    %1100 = vmatprep.subr.mxu0 0.0
    %1101 = vmatpush1.msra.mxu0 0.0
    %1102 = vmatprep.subr.mxu0 0.0
    %1103 = vmatpush1.msra.mxu0 0.0
    %1104 = vmatprep.subr.mxu0 0.0
    %1105 = vmatpush1.msra.mxu0 0.0
    %1106 = vmatprep.subr.mxu0 0.0
    %1107 = vmatpush1.msra.mxu0 0.0
    %1108 = vmatprep.subr.mxu0 0.0
    %1109 = vmatpush1.msra.mxu0 0.0
    %1110 = vmatprep.subr.mxu0 0.0
    %1111 = vmatpush1.msra.mxu0 0.0
    %1112 = vmatprep.subr.mxu0 0.0
    %1113 = vmatpush1.msra.mxu0 0.0
    %1114 = vmatprep.subr.mxu0 0.0
    %1115 = vmatpush1.msra.mxu0 0.0
    %1116 = vmatprep.mubr.f32.mxu0 0.0
    %1117 = vmatmul.mubr.f32.gmra.mrb[0].mxu0 %v1047
    %v1118 = vpop.f32.mrb[0].mxu0
    %v1119 = vadd.f32 0.0, %v1118
    %v1120 = vpop.f32.mrb[0].mxu0
    %v1121 = vadd.f32 0.0, %v1120
    %1122 = vmatprep.mubr.f32.mxu0 0.0
    %1123 = vmatmul.mubr.f32.gmra.mrb[0].mxu0 %v1050
    %v1124 = vpop.f32.mrb[0].mxu0
    %v1125 = vadd.f32 0.0, %v1124
    %v1126 = vpop.f32.mrb[0].mxu0
    %v1127 = vadd.f32 0.0, %v1126
    %1128 = vdwg.mxu0
    %1129 = vmatprep.subr.mxu0 %v854
    %1130 = vmatpush1.msra.mxu0 %v853
    %1131 = vmatprep.subr.mxu0 %v858
    %1132 = vmatpush1.msra.mxu0 %v857
    %1133 = vmatprep.subr.mxu0 %v862
    %1134 = vmatpush1.msra.mxu0 %v861
    %1135 = vmatprep.subr.mxu0 %v887
    %1136 = vmatpush1.msra.mxu0 %v884
    %1137 = vmatprep.subr.mxu0 0.0
    %1138 = vmatpush1.msra.mxu0 0.0
    %1139 = vmatprep.subr.mxu0 0.0
    %1140 = vmatpush1.msra.mxu0 0.0
    %1141 = vmatprep.subr.mxu0 0.0
    %1142 = vmatpush1.msra.mxu0 0.0
    %1143 = vmatprep.subr.mxu0 0.0
    %1144 = vmatpush1.msra.mxu0 0.0
    %1145 = vmatprep.subr.mxu0 0.0
    %1146 = vmatpush1.msra.mxu0 0.0
    %1147 = vmatprep.subr.mxu0 0.0
    %1148 = vmatpush1.msra.mxu0 0.0
    %1149 = vmatprep.subr.mxu0 0.0
    %1150 = vmatpush1.msra.mxu0 0.0
    %1151 = vmatprep.subr.mxu0 0.0
    %1152 = vmatpush1.msra.mxu0 0.0
    %1153 = vmatprep.subr.mxu0 0.0
    %1154 = vmatpush1.msra.mxu0 0.0
    %1155 = vmatprep.subr.mxu0 0.0
    %1156 = vmatpush1.msra.mxu0 0.0
    %1157 = vmatprep.subr.mxu0 0.0
    %1158 = vmatpush1.msra.mxu0 0.0
    %1159 = vmatprep.subr.mxu0 0.0
    %1160 = vmatpush1.msra.mxu0 0.0
    %1161 = vmatprep.subr.mxu0 0.0
    %1162 = vmatpush1.msra.mxu0 0.0
    %1163 = vmatprep.subr.mxu0 0.0
    %1164 = vmatpush1.msra.mxu0 0.0
    %1165 = vmatprep.subr.mxu0 0.0
    %1166 = vmatpush1.msra.mxu0 0.0
    %1167 = vmatprep.subr.mxu0 0.0
    %1168 = vmatpush1.msra.mxu0 0.0
    %1169 = vmatprep.subr.mxu0 0.0
    %1170 = vmatpush1.msra.mxu0 0.0
    %1171 = vmatprep.subr.mxu0 0.0
    %1172 = vmatpush1.msra.mxu0 0.0
    %1173 = vmatprep.subr.mxu0 0.0
    %1174 = vmatpush1.msra.mxu0 0.0
    %1175 = vmatprep.subr.mxu0 0.0
    %1176 = vmatpush1.msra.mxu0 0.0
    %1177 = vmatprep.subr.mxu0 0.0
    %1178 = vmatpush1.msra.mxu0 0.0
    %1179 = vmatprep.subr.mxu0 0.0
    %1180 = vmatpush1.msra.mxu0 0.0
    %1181 = vmatprep.subr.mxu0 0.0
    %1182 = vmatpush1.msra.mxu0 0.0
    %1183 = vmatprep.subr.mxu0 0.0
    %1184 = vmatpush1.msra.mxu0 0.0
    %1185 = vmatprep.subr.mxu0 0.0
    %1186 = vmatpush1.msra.mxu0 0.0
    %1187 = vmatprep.subr.mxu0 0.0
    %1188 = vmatpush1.msra.mxu0 0.0
    %1189 = vmatprep.subr.mxu0 0.0
    %1190 = vmatpush1.msra.mxu0 0.0
    %1191 = vmatprep.subr.mxu0 0.0
    %1192 = vmatpush1.msra.mxu0 0.0
    %1193 = vmatprep.mubr.f32.mxu0 0.0
    %1194 = vmatmul.mubr.f32.gmra.mrb[0].mxu0 %v1047
    %v1195 = vpop.f32.mrb[0].mxu0
    %v1196 = vadd.f32 0.0, %v1195
    %v1197 = vpop.f32.mrb[0].mxu0
    %v1198 = vadd.f32 0.0, %v1197
    %1199 = vmatprep.mubr.f32.mxu0 0.0
    %1200 = vmatmul.mubr.f32.gmra.mrb[0].mxu0 %v1050
    %v1201 = vpop.f32.mrb[0].mxu0
    %v1202 = vadd.f32 0.0, %v1201
    %v1203 = vpop.f32.mrb[0].mxu0
    %v1204 = vadd.f32 0.0, %v1203
    %1205 = vdwg.mxu0
    %v1206 = vmax.f32 %v956, %v1119
    %v1207 = vmax.f32 %v958, %v1121
    %v1208 = vmax.f32 %v1033, %v1196
    %v1209 = vmax.f32 %v1035, %v1198
    %v1210 = vmax.f32 %v962, %v1125
    %v1211 = vmax.f32 %v964, %v1127
    %v1212 = vmax.f32 %v1039, %v1202
    %v1213 = vmax.f32 %v1041, %v1204
    %v1214 = vld [vmem:[%s5] sm:$0xff]
    %v1215 = vld [vmem:[%s5 + $0x8] sm:$0xff]
    %v1216 = vld [vmem:[%s5 + $0x10] sm:$0xff]
    %v1217 = vld [vmem:[%s5 + $0x18] sm:$0xff]
    %v1218 = vld [vmem:[%s5 + $0x20] sm:$0xff]
    %v1219 = vld [vmem:[%s5 + $0x28] sm:$0xff]
    %v1220 = vld [vmem:[%s5 + $0x30] sm:$0xff]
    %v1221 = vld [vmem:[%s5 + $0x38] sm:$0xff]
    %v1222 = vld [vmem:[%s5 + $0x40] sm:$0xff]
    %v1223 = vld [vmem:[%s5 + $0x48] sm:$0xff]
    %v1224 = vld [vmem:[%s5 + $0x50] sm:$0xff]
    %v1225 = vld [vmem:[%s5 + $0x58] sm:$0xff]
    %v1226 = vld [vmem:[%s5 + $0x60] sm:$0xff]
    %v1227 = vld [vmem:[%s5 + $0x68] sm:$0xff]
    %v1228 = vld [vmem:[%s5 + $0x70] sm:$0xff]
    %v1229 = vld [vmem:[%s5 + $0x78] sm:$0xff]
    %v1230 = vld [vmem:[%s5 + $0x80] sm:$0xff]
    %v1231 = vld [vmem:[%s5 + $0x88] sm:$0xff]
    %v1232 = vld [vmem:[%s5 + $0x90] sm:$0xff]
    %v1233 = vld [vmem:[%s5 + $0x98] sm:$0xff]
    %v1234 = vld [vmem:[%s5 + $0xa0] sm:$0xff]
    %v1235 = vld [vmem:[%s5 + $0xa8] sm:$0xff]
    %v1236 = vld [vmem:[%s5 + $0xb0] sm:$0xff]
    %v1237 = vld [vmem:[%s5 + $0xb8] sm:$0xff]
    %v1238 = vld [vmem:[%s5 + $0xc0] sm:$0xff]
    %v1239 = vld [vmem:[%s5 + $0xc8] sm:$0xff]
    %v1240 = vld [vmem:[%s5 + $0xd0] sm:$0xff]
    %v1241 = vld [vmem:[%s5 + $0xd8] sm:$0xff]
    %v1242 = vld [vmem:[%s5 + $0xe0] sm:$0xff]
    %v1243 = vld [vmem:[%s5 + $0xe8] sm:$0xff]
    %v1244 = vld [vmem:[%s5 + $0xf0] sm:$0xff]
    %v1245 = vld [vmem:[%s5 + $0xf8] sm:$0xff]
    %v1246 = vld [vmem:[%s5 + $0x100] sm:$0xff]
    %v1247 = vld [vmem:[%s5 + $0x108] sm:$0xff]
    %v1248 = vld [vmem:[%s5 + $0x110] sm:$0xff]
    %v1249 = vld [vmem:[%s5 + $0x118] sm:$0xff]
    %v1250 = vld [vmem:[%s5 + $0x120] sm:$0xff]
    %v1251 = vld [vmem:[%s5 + $0x128] sm:$0xff]
    %v1252 = vld [vmem:[%s5 + $0x130] sm:$0xff]
    %v1253 = vld [vmem:[%s5 + $0x138] sm:$0xff]
    %v1254 = vld [vmem:[%s5 + $0x140] sm:$0xff]
    %v1255 = vld [vmem:[%s5 + $0x148] sm:$0xff]
    %v1256 = vld [vmem:[%s5 + $0x150] sm:$0xff]
    %v1257 = vld [vmem:[%s5 + $0x158] sm:$0xff]
    %v1258 = vld [vmem:[%s5 + $0x160] sm:$0xff]
    %v1259 = vld [vmem:[%s5 + $0x168] sm:$0xff]
    %v1260 = vld [vmem:[%s5 + $0x170] sm:$0xff]
    %v1261 = vld [vmem:[%s5 + $0x178] sm:$0xff]
    %v1262 = vld [vmem:[%s5 + $0x180] sm:$0xff]
    %v1263 = vld [vmem:[%s5 + $0x188] sm:$0xff]
    %v1264 = vld [vmem:[%s5 + $0x190] sm:$0xff]
    %v1265 = vld [vmem:[%s5 + $0x198] sm:$0xff]
    %v1266 = vld [vmem:[%s5 + $0x1a0] sm:$0xff]
    %v1267 = vld [vmem:[%s5 + $0x1a8] sm:$0xff]
    %v1268 = vld [vmem:[%s5 + $0x1b0] sm:$0xff]
    %v1269 = vld [vmem:[%s5 + $0x1b8] sm:$0xff]
    %v1270 = vld [vmem:[%s5 + $0x1c0] sm:$0xff]
    %v1271 = vld [vmem:[%s5 + $0x1c8] sm:$0xff]
    %v1272 = vld [vmem:[%s5 + $0x1d0] sm:$0xff]
    %v1273 = vld [vmem:[%s5 + $0x1d8] sm:$0xff]
    %v1274 = vld [vmem:[%s5 + $0x1e0] sm:$0xff]
    %v1275 = vld [vmem:[%s5 + $0x1e8] sm:$0xff]
    %v1276 = vld [vmem:[%s5 + $0x1f0] sm:$0xff]
    %v1277 = vld [vmem:[%s5 + $0x1f8] sm:$0xff]
    %v1278 = vld [vmem:[%s5 + $0x200] sm:$0xff]
    %v1279 = vld [vmem:[%s5 + $0x208] sm:$0xff]
    %v1280 = vld [vmem:[%s5 + $0x210] sm:$0xff]
    %v1281 = vld [vmem:[%s5 + $0x218] sm:$0xff]
    %v1282 = vld [vmem:[%s5 + $0x220] sm:$0xff]
    %v1283 = vld [vmem:[%s5 + $0x228] sm:$0xff]
    %v1284 = vld [vmem:[%s5 + $0x230] sm:$0xff]
    %v1285 = vld [vmem:[%s5 + $0x238] sm:$0xff]
    %v1286 = vld [vmem:[%s5 + $0x240] sm:$0xff]
    %v1287 = vld [vmem:[%s5 + $0x248] sm:$0xff]
    %v1288 = vld [vmem:[%s5 + $0x250] sm:$0xff]
    %v1289 = vld [vmem:[%s5 + $0x258] sm:$0xff]
    %v1290 = vld [vmem:[%s5 + $0x260] sm:$0xff]
    %v1291 = vld [vmem:[%s5 + $0x268] sm:$0xff]
    %v1292 = vld [vmem:[%s5 + $0x270] sm:$0xff]
    %v1293 = vld [vmem:[%s5 + $0x278] sm:$0xff]
    %v1294 = vld [vmem:[%s5 + $0x280] sm:$0xff]
    %v1295 = vld [vmem:[%s5 + $0x288] sm:$0xff]
    %v1296 = vld [vmem:[%s5 + $0x290] sm:$0xff]
    %v1297 = vld [vmem:[%s5 + $0x298] sm:$0xff]
    %v1298 = vld [vmem:[%s5 + $0x2a0] sm:$0xff]
    %v1299 = vld [vmem:[%s5 + $0x2a8] sm:$0xff]
    %v1300 = vld [vmem:[%s5 + $0x2b0] sm:$0xff]
    %v1301 = vld [vmem:[%s5 + $0x2b8] sm:$0xff]
    %v1302 = vld [vmem:[%s5 + $0x2c0] sm:$0xff]
    %v1303 = vld [vmem:[%s5 + $0x2c8] sm:$0xff]
    %v1304 = vld [vmem:[%s5 + $0x2d0] sm:$0xff]
    %v1305 = vld [vmem:[%s5 + $0x2d8] sm:$0xff]
    %v1306 = vld [vmem:[%s5 + $0x2e0] sm:$0xff]
    %v1307 = vld [vmem:[%s5 + $0x2e8] sm:$0xff]
    %v1308 = vld [vmem:[%s5 + $0x2f0] sm:$0xff]
    %v1309 = vld [vmem:[%s5 + $0x2f8] sm:$0xff]
    %v1310 = vld [vmem:[%s5 + $0x300] sm:$0xff]
    %v1311 = vld [vmem:[%s5 + $0x308] sm:$0xff]
    %v1312 = vld [vmem:[%s5 + $0x310] sm:$0xff]
    %v1313 = vld [vmem:[%s5 + $0x318] sm:$0xff]
    %v1314 = vld [vmem:[%s5 + $0x320] sm:$0xff]
    %v1315 = vld [vmem:[%s5 + $0x328] sm:$0xff]
    %v1316 = vld [vmem:[%s5 + $0x330] sm:$0xff]
    %v1317 = vld [vmem:[%s5 + $0x338] sm:$0xff]
    %vm1318 = vcmask 261120
    %v1320 = vsel %vm1318, %v1209, 0
    %v1323 = vsel %vm1318, %v1213, 0
    %1325 = vmatprep.subr.mxu0 %v1215
    %1326 = vmatpush1.msra.mxu0 %v1214
    %1327 = vmatprep.subr.mxu0 %v1217
    %1328 = vmatpush1.msra.mxu0 %v1216
    %1329 = vmatprep.subr.mxu0 %v1219
    %1330 = vmatpush1.msra.mxu0 %v1218
    %1331 = vmatprep.subr.mxu0 %v1221
    %1332 = vmatpush1.msra.mxu0 %v1220
    %1333 = vmatprep.subr.mxu0 %v1223
    %1334 = vmatpush1.msra.mxu0 %v1222
    %1335 = vmatprep.subr.mxu0 %v1225
    %1336 = vmatpush1.msra.mxu0 %v1224
    %1337 = vmatprep.subr.mxu0 %v1227
    %1338 = vmatpush1.msra.mxu0 %v1226
    %1339 = vmatprep.subr.mxu0 %v1229
    %1340 = vmatpush1.msra.mxu0 %v1228
    %1341 = vmatprep.subr.mxu0 %v1231
    %1342 = vmatpush1.msra.mxu0 %v1230
    %1343 = vmatprep.subr.mxu0 %v1233
    %1344 = vmatpush1.msra.mxu0 %v1232
    %1345 = vmatprep.subr.mxu0 %v1235
    %1346 = vmatpush1.msra.mxu0 %v1234
    %1347 = vmatprep.subr.mxu0 %v1237
    %1348 = vmatpush1.msra.mxu0 %v1236
    %1349 = vmatprep.subr.mxu0 %v1239
    %1350 = vmatpush1.msra.mxu0 %v1238
    %1351 = vmatprep.subr.mxu0 %v1241
    %1352 = vmatpush1.msra.mxu0 %v1240
    %1353 = vmatprep.subr.mxu0 %v1243
    %1354 = vmatpush1.msra.mxu0 %v1242
    %1355 = vmatprep.subr.mxu0 %v1245
    %1356 = vmatpush1.msra.mxu0 %v1244
    %1357 = vmatprep.subr.mxu0 %v1247
    %1358 = vmatpush1.msra.mxu0 %v1246
    %1359 = vmatprep.subr.mxu0 %v1249
    %1360 = vmatpush1.msra.mxu0 %v1248
    %1361 = vmatprep.subr.mxu0 %v1251
    %1362 = vmatpush1.msra.mxu0 %v1250
    %1363 = vmatprep.subr.mxu0 %v1253
    %1364 = vmatpush1.msra.mxu0 %v1252
    %1365 = vmatprep.subr.mxu0 %v1255
    %1366 = vmatpush1.msra.mxu0 %v1254
    %1367 = vmatprep.subr.mxu0 %v1257
    %1368 = vmatpush1.msra.mxu0 %v1256
    %1369 = vmatprep.subr.mxu0 %v1259
    %1370 = vmatpush1.msra.mxu0 %v1258
    %1371 = vmatprep.subr.mxu0 %v1261
    %1372 = vmatpush1.msra.mxu0 %v1260
    %1373 = vmatprep.subr.mxu0 %v1263
    %1374 = vmatpush1.msra.mxu0 %v1262
    %1375 = vmatprep.subr.mxu0 %v1265
    %1376 = vmatpush1.msra.mxu0 %v1264
    %1377 = vmatprep.subr.mxu0 %v1267
    %1378 = vmatpush1.msra.mxu0 %v1266
    %1379 = vmatprep.subr.mxu0 %v1269
    %1380 = vmatpush1.msra.mxu0 %v1268
    %1381 = vmatprep.subr.mxu0 %v1271
    %1382 = vmatpush1.msra.mxu0 %v1270
    %1383 = vmatprep.subr.mxu0 %v1273
    %1384 = vmatpush1.msra.mxu0 %v1272
    %1385 = vmatprep.subr.mxu0 %v1275
    %1386 = vmatpush1.msra.mxu0 %v1274
    %1387 = vmatprep.subr.mxu0 %v1277
    %1388 = vmatpush1.msra.mxu0 %v1276
    %1389 = vmatprep.mubr.f32.mxu0 %v1207
    %1390 = vmatmul.mubr.f32.gmra.mrb[0].mxu0 %v1206
    %v1391 = vpop.f32.mrb[0].mxu0
    %v1392 = vadd.f32 0.0, %v1391
    %v1393 = vpop.f32.mrb[0].mxu0
    %v1394 = vadd.f32 0.0, %v1393
    %1395 = vmatprep.mubr.f32.mxu0 %v1211
    %1396 = vmatmul.mubr.f32.gmra.mrb[0].mxu0 %v1210
    %v1397 = vpop.f32.mrb[0].mxu0
    %v1398 = vadd.f32 0.0, %v1397
    %v1399 = vpop.f32.mrb[0].mxu0
    %v1400 = vadd.f32 0.0, %v1399
    %1401 = vdwg.mxu0
    %1402 = vmatprep.subr.mxu0 %v1279
    %1403 = vmatpush1.msra.mxu0 %v1278
    %1404 = vmatprep.subr.mxu0 %v1281
    %1405 = vmatpush1.msra.mxu0 %v1280
    %1406 = vmatprep.subr.mxu0 %v1283
    %1407 = vmatpush1.msra.mxu0 %v1282
    %1408 = vmatprep.subr.mxu0 %v1285
    %1409 = vmatpush1.msra.mxu0 %v1284
    %1410 = vmatprep.subr.mxu0 %v1287
    %1411 = vmatpush1.msra.mxu0 %v1286
    %1412 = vmatprep.subr.mxu0 %v1289
    %1413 = vmatpush1.msra.mxu0 %v1288
    %1414 = vmatprep.subr.mxu0 %v1291
    %1415 = vmatpush1.msra.mxu0 %v1290
    %1416 = vmatprep.subr.mxu0 %v1293
    %1417 = vmatpush1.msra.mxu0 %v1292
    %1418 = vmatprep.subr.mxu0 %v1295
    %1419 = vmatpush1.msra.mxu0 %v1294
    %1420 = vmatprep.subr.mxu0 %v1297
    %1421 = vmatpush1.msra.mxu0 %v1296
    %1422 = vmatprep.subr.mxu0 %v1299
    %1423 = vmatpush1.msra.mxu0 %v1298
    %1424 = vmatprep.subr.mxu0 %v1301
    %1425 = vmatpush1.msra.mxu0 %v1300
    %1426 = vmatprep.subr.mxu0 %v1303
    %1427 = vmatpush1.msra.mxu0 %v1302
    %1428 = vmatprep.subr.mxu0 %v1305
    %1429 = vmatpush1.msra.mxu0 %v1304
    %1430 = vmatprep.subr.mxu0 %v1307
    %1431 = vmatpush1.msra.mxu0 %v1306
    %1432 = vmatprep.subr.mxu0 %v1309
    %1433 = vmatpush1.msra.mxu0 %v1308
    %1434 = vmatprep.subr.mxu0 %v1311
    %1435 = vmatpush1.msra.mxu0 %v1310
    %1436 = vmatprep.subr.mxu0 %v1313
    %1437 = vmatpush1.msra.mxu0 %v1312
    %1438 = vmatprep.subr.mxu0 %v1315
    %1439 = vmatpush1.msra.mxu0 %v1314
    %1440 = vmatprep.subr.mxu0 %v1317
    %1441 = vmatpush1.msra.mxu0 %v1316
    %1442 = vmatprep.subr.mxu0 0.0
    %1443 = vmatpush1.msra.mxu0 0.0
    %1444 = vmatprep.subr.mxu0 0.0
    %1445 = vmatpush1.msra.mxu0 0.0
    %1446 = vmatprep.subr.mxu0 0.0
    %1447 = vmatpush1.msra.mxu0 0.0
    %1448 = vmatprep.subr.mxu0 0.0
    %1449 = vmatpush1.msra.mxu0 0.0
    %1450 = vmatprep.subr.mxu0 0.0
    %1451 = vmatpush1.msra.mxu0 0.0
    %1452 = vmatprep.subr.mxu0 0.0
    %1453 = vmatpush1.msra.mxu0 0.0
    %1454 = vmatprep.subr.mxu0 0.0
    %1455 = vmatpush1.msra.mxu0 0.0
    %1456 = vmatprep.subr.mxu0 0.0
    %1457 = vmatpush1.msra.mxu0 0.0
    %1458 = vmatprep.subr.mxu0 0.0
    %1459 = vmatpush1.msra.mxu0 0.0
    %1460 = vmatprep.subr.mxu0 0.0
    %1461 = vmatpush1.msra.mxu0 0.0
    %1462 = vmatprep.subr.mxu0 0.0
    %1463 = vmatpush1.msra.mxu0 0.0
    %1464 = vmatprep.subr.mxu0 0.0
    %1465 = vmatpush1.msra.mxu0 0.0
    %1466 = vmatprep.mubr.f32.mxu0 %v1320
    %1467 = vmatmul.mubr.f32.gmra.mrb[0].mxu0 %v1208
    %v1468 = vpop.f32.mrb[0].mxu0
    %v1469 = vadd.f32 %v1392, %v1468
    %v1470 = vpop.f32.mrb[0].mxu0
    %v1471 = vadd.f32 %v1394, %v1470
    %1472 = vmatprep.mubr.f32.mxu0 %v1323
    %1473 = vmatmul.mubr.f32.gmra.mrb[0].mxu0 %v1212
    %v1474 = vpop.f32.mrb[0].mxu0
    %v1475 = vadd.f32 %v1398, %v1474
    %v1476 = vpop.f32.mrb[0].mxu0
    %v1477 = vadd.f32 %v1400, %v1476
    %1478 = vdwg.mxu0
    %s1479 = scalar_lea.vmem %s5, 832
    %v1480 = vld [vmem:[%s1479] sm:$0xff]
    %v1481 = vld [vmem:[%s1479 + $0x8] sm:$0xff]
    %v1482 = vld [vmem:[%s1479 + $0x10] sm:$0xff]
    %v1483 = vld [vmem:[%s1479 + $0x18] sm:$0xff]
    %v1484 = vld [vmem:[%s1479 + $0x20] sm:$0xff]
    %v1485 = vld [vmem:[%s1479 + $0x28] sm:$0xff]
    %v1486 = vld [vmem:[%s1479 + $0x30] sm:$0xff]
    %v1487 = vld [vmem:[%s1479 + $0x38] sm:$0xff]
    %v1488 = vld [vmem:[%s1479 + $0x40] sm:$0xff]
    %v1489 = vld [vmem:[%s1479 + $0x48] sm:$0xff]
    %v1490 = vld [vmem:[%s1479 + $0x50] sm:$0xff]
    %v1491 = vld [vmem:[%s1479 + $0x58] sm:$0xff]
    %v1492 = vld [vmem:[%s1479 + $0x60] sm:$0xff]
    %v1493 = vld [vmem:[%s1479 + $0x68] sm:$0xff]
    %v1494 = vld [vmem:[%s1479 + $0x70] sm:$0xff]
    %v1495 = vld [vmem:[%s1479 + $0x78] sm:$0xff]
    %v1496 = vld [vmem:[%s1479 + $0x80] sm:$0xff]
    %v1497 = vld [vmem:[%s1479 + $0x88] sm:$0xff]
    %v1498 = vld [vmem:[%s1479 + $0x90] sm:$0xff]
    %v1499 = vld [vmem:[%s1479 + $0x98] sm:$0xff]
    %v1500 = vld [vmem:[%s1479 + $0xa0] sm:$0xff]
    %v1501 = vld [vmem:[%s1479 + $0xa8] sm:$0xff]
    %v1502 = vld [vmem:[%s1479 + $0xb0] sm:$0xff]
    %v1503 = vld [vmem:[%s1479 + $0xb8] sm:$0xff]
    %v1504 = vld [vmem:[%s1479 + $0xc0] sm:$0xff]
    %v1505 = vld [vmem:[%s1479 + $0xc8] sm:$0xff]
    %v1506 = vld [vmem:[%s1479 + $0xd0] sm:$0xff]
    %v1507 = vld [vmem:[%s1479 + $0xd8] sm:$0xff]
    %v1508 = vld [vmem:[%s1479 + $0xe0] sm:$0xff]
    %v1509 = vld [vmem:[%s1479 + $0xe8] sm:$0xff]
    %v1510 = vld [vmem:[%s1479 + $0xf0] sm:$0xff]
    %v1511 = vld [vmem:[%s1479 + $0xf8] sm:$0xff]
    %v1512 = vld [vmem:[%s1479 + $0x100] sm:$0xff]
    %v1513 = vld [vmem:[%s1479 + $0x108] sm:$0xff]
    %v1514 = vld [vmem:[%s1479 + $0x110] sm:$0xff]
    %v1515 = vld [vmem:[%s1479 + $0x118] sm:$0xff]
    %v1516 = vld [vmem:[%s1479 + $0x120] sm:$0xff]
    %v1517 = vld [vmem:[%s1479 + $0x128] sm:$0xff]
    %v1518 = vld [vmem:[%s1479 + $0x130] sm:$0xff]
    %v1519 = vld [vmem:[%s1479 + $0x138] sm:$0xff]
    %v1520 = vld [vmem:[%s1479 + $0x140] sm:$0xff]
    %v1521 = vld [vmem:[%s1479 + $0x148] sm:$0xff]
    %v1522 = vld [vmem:[%s1479 + $0x150] sm:$0xff]
    %v1523 = vld [vmem:[%s1479 + $0x158] sm:$0xff]
    %v1524 = vld [vmem:[%s1479 + $0x160] sm:$0xff]
    %v1525 = vld [vmem:[%s1479 + $0x168] sm:$0xff]
    %v1526 = vld [vmem:[%s1479 + $0x170] sm:$0xff]
    %v1527 = vld [vmem:[%s1479 + $0x178] sm:$0xff]
    %v1528 = vld [vmem:[%s1479 + $0x180] sm:$0xff]
    %v1529 = vld [vmem:[%s1479 + $0x188] sm:$0xff]
    %v1530 = vld [vmem:[%s1479 + $0x190] sm:$0xff]
    %v1531 = vld [vmem:[%s1479 + $0x198] sm:$0xff]
    %v1532 = vld [vmem:[%s1479 + $0x1a0] sm:$0xff]
    %v1533 = vld [vmem:[%s1479 + $0x1a8] sm:$0xff]
    %v1534 = vld [vmem:[%s1479 + $0x1b0] sm:$0xff]
    %v1535 = vld [vmem:[%s1479 + $0x1b8] sm:$0xff]
    %v1536 = vld [vmem:[%s1479 + $0x1c0] sm:$0xff]
    %v1537 = vld [vmem:[%s1479 + $0x1c8] sm:$0xff]
    %v1538 = vld [vmem:[%s1479 + $0x1d0] sm:$0xff]
    %v1539 = vld [vmem:[%s1479 + $0x1d8] sm:$0xff]
    %v1540 = vld [vmem:[%s1479 + $0x1e0] sm:$0xff]
    %v1541 = vld [vmem:[%s1479 + $0x1e8] sm:$0xff]
    %v1542 = vld [vmem:[%s1479 + $0x1f0] sm:$0xff]
    %v1543 = vld [vmem:[%s1479 + $0x1f8] sm:$0xff]
    %v1544 = vld [vmem:[%s1479 + $0x200] sm:$0xff]
    %v1545 = vld [vmem:[%s1479 + $0x208] sm:$0xff]
    %v1546 = vld [vmem:[%s1479 + $0x210] sm:$0xff]
    %v1547 = vld [vmem:[%s1479 + $0x218] sm:$0xff]
    %v1548 = vld [vmem:[%s1479 + $0x220] sm:$0xff]
    %v1549 = vld [vmem:[%s1479 + $0x228] sm:$0xff]
    %v1550 = vld [vmem:[%s1479 + $0x230] sm:$0xff]
    %v1551 = vld [vmem:[%s1479 + $0x238] sm:$0xff]
    %v1552 = vld [vmem:[%s1479 + $0x240] sm:$0xff]
    %v1553 = vld [vmem:[%s1479 + $0x248] sm:$0xff]
    %v1554 = vld [vmem:[%s1479 + $0x250] sm:$0xff]
    %v1555 = vld [vmem:[%s1479 + $0x258] sm:$0xff]
    %v1556 = vld [vmem:[%s1479 + $0x260] sm:$0xff]
    %v1557 = vld [vmem:[%s1479 + $0x268] sm:$0xff]
    %v1558 = vld [vmem:[%s1479 + $0x270] sm:$0xff]
    %v1559 = vld [vmem:[%s1479 + $0x278] sm:$0xff]
    %v1560 = vld [vmem:[%s1479 + $0x280] sm:$0xff]
    %v1561 = vld [vmem:[%s1479 + $0x288] sm:$0xff]
    %v1562 = vld [vmem:[%s1479 + $0x290] sm:$0xff]
    %v1563 = vld [vmem:[%s1479 + $0x298] sm:$0xff]
    %v1564 = vld [vmem:[%s1479 + $0x2a0] sm:$0xff]
    %v1565 = vld [vmem:[%s1479 + $0x2a8] sm:$0xff]
    %v1566 = vld [vmem:[%s1479 + $0x2b0] sm:$0xff]
    %v1567 = vld [vmem:[%s1479 + $0x2b8] sm:$0xff]
    %v1568 = vld [vmem:[%s1479 + $0x2c0] sm:$0xff]
    %v1569 = vld [vmem:[%s1479 + $0x2c8] sm:$0xff]
    %v1570 = vld [vmem:[%s1479 + $0x2d0] sm:$0xff]
    %v1571 = vld [vmem:[%s1479 + $0x2d8] sm:$0xff]
    %v1572 = vld [vmem:[%s1479 + $0x2e0] sm:$0xff]
    %v1573 = vld [vmem:[%s1479 + $0x2e8] sm:$0xff]
    %v1574 = vld [vmem:[%s1479 + $0x2f0] sm:$0xff]
    %v1575 = vld [vmem:[%s1479 + $0x2f8] sm:$0xff]
    %v1576 = vld [vmem:[%s1479 + $0x300] sm:$0xff]
    %v1577 = vld [vmem:[%s1479 + $0x308] sm:$0xff]
    %v1578 = vld [vmem:[%s1479 + $0x310] sm:$0xff]
    %v1579 = vld [vmem:[%s1479 + $0x318] sm:$0xff]
    %v1580 = vld [vmem:[%s1479 + $0x320] sm:$0xff]
    %v1581 = vld [vmem:[%s1479 + $0x328] sm:$0xff]
    %v1582 = vld [vmem:[%s1479 + $0x330] sm:$0xff]
    %v1583 = vld [vmem:[%s1479 + $0x338] sm:$0xff]
    %1584 = vmatprep.subr.mxu0 %v1481
    %1585 = vmatpush1.msra.mxu0 %v1480
    %1586 = vmatprep.subr.mxu0 %v1483
    %1587 = vmatpush1.msra.mxu0 %v1482
    %1588 = vmatprep.subr.mxu0 %v1485
    %1589 = vmatpush1.msra.mxu0 %v1484
    %1590 = vmatprep.subr.mxu0 %v1487
    %1591 = vmatpush1.msra.mxu0 %v1486
    %1592 = vmatprep.subr.mxu0 %v1489
    %1593 = vmatpush1.msra.mxu0 %v1488
    %1594 = vmatprep.subr.mxu0 %v1491
    %1595 = vmatpush1.msra.mxu0 %v1490
    %1596 = vmatprep.subr.mxu0 %v1493
    %1597 = vmatpush1.msra.mxu0 %v1492
    %1598 = vmatprep.subr.mxu0 %v1495
    %1599 = vmatpush1.msra.mxu0 %v1494
    %1600 = vmatprep.subr.mxu0 %v1497
    %1601 = vmatpush1.msra.mxu0 %v1496
    %1602 = vmatprep.subr.mxu0 %v1499
    %1603 = vmatpush1.msra.mxu0 %v1498
    %1604 = vmatprep.subr.mxu0 %v1501
    %1605 = vmatpush1.msra.mxu0 %v1500
    %1606 = vmatprep.subr.mxu0 %v1503
    %1607 = vmatpush1.msra.mxu0 %v1502
    %1608 = vmatprep.subr.mxu0 %v1505
    %1609 = vmatpush1.msra.mxu0 %v1504
    %1610 = vmatprep.subr.mxu0 %v1507
    %1611 = vmatpush1.msra.mxu0 %v1506
    %1612 = vmatprep.subr.mxu0 %v1509
    %1613 = vmatpush1.msra.mxu0 %v1508
    %1614 = vmatprep.subr.mxu0 %v1511
    %1615 = vmatpush1.msra.mxu0 %v1510
    %1616 = vmatprep.subr.mxu0 %v1513
    %1617 = vmatpush1.msra.mxu0 %v1512
    %1618 = vmatprep.subr.mxu0 %v1515
    %1619 = vmatpush1.msra.mxu0 %v1514
    %1620 = vmatprep.subr.mxu0 %v1517
    %1621 = vmatpush1.msra.mxu0 %v1516
    %1622 = vmatprep.subr.mxu0 %v1519
    %1623 = vmatpush1.msra.mxu0 %v1518
    %1624 = vmatprep.subr.mxu0 %v1521
    %1625 = vmatpush1.msra.mxu0 %v1520
    %1626 = vmatprep.subr.mxu0 %v1523
    %1627 = vmatpush1.msra.mxu0 %v1522
    %1628 = vmatprep.subr.mxu0 %v1525
    %1629 = vmatpush1.msra.mxu0 %v1524
    %1630 = vmatprep.subr.mxu0 %v1527
    %1631 = vmatpush1.msra.mxu0 %v1526
    %1632 = vmatprep.subr.mxu0 %v1529
    %1633 = vmatpush1.msra.mxu0 %v1528
    %1634 = vmatprep.subr.mxu0 %v1531
    %1635 = vmatpush1.msra.mxu0 %v1530
    %1636 = vmatprep.subr.mxu0 %v1533
    %1637 = vmatpush1.msra.mxu0 %v1532
    %1638 = vmatprep.subr.mxu0 %v1535
    %1639 = vmatpush1.msra.mxu0 %v1534
    %1640 = vmatprep.subr.mxu0 %v1537
    %1641 = vmatpush1.msra.mxu0 %v1536
    %1642 = vmatprep.subr.mxu0 %v1539
    %1643 = vmatpush1.msra.mxu0 %v1538
    %1644 = vmatprep.subr.mxu0 %v1541
    %1645 = vmatpush1.msra.mxu0 %v1540
    %1646 = vmatprep.subr.mxu0 %v1543
    %1647 = vmatpush1.msra.mxu0 %v1542
    %1648 = vmatprep.mubr.f32.mxu0 %v1207
    %1649 = vmatmul.mubr.f32.gmra.mrb[0].mxu0 %v1206
    %v1650 = vpop.f32.mrb[0].mxu0
    %v1651 = vadd.f32 0.0, %v1650
    %v1652 = vpop.f32.mrb[0].mxu0
    %v1653 = vadd.f32 0.0, %v1652
    %1654 = vmatprep.mubr.f32.mxu0 %v1211
    %1655 = vmatmul.mubr.f32.gmra.mrb[0].mxu0 %v1210
    %v1656 = vpop.f32.mrb[0].mxu0
    %v1657 = vadd.f32 0.0, %v1656
    %v1658 = vpop.f32.mrb[0].mxu0
    %v1659 = vadd.f32 0.0, %v1658
    %1660 = vdwg.mxu0
    %1661 = vmatprep.subr.mxu0 %v1545
    %1662 = vmatpush1.msra.mxu0 %v1544
    %1663 = vmatprep.subr.mxu0 %v1547
    %1664 = vmatpush1.msra.mxu0 %v1546
    %1665 = vmatprep.subr.mxu0 %v1549
    %1666 = vmatpush1.msra.mxu0 %v1548
    %1667 = vmatprep.subr.mxu0 %v1551
    %1668 = vmatpush1.msra.mxu0 %v1550
    %1669 = vmatprep.subr.mxu0 %v1553
    %1670 = vmatpush1.msra.mxu0 %v1552
    %1671 = vmatprep.subr.mxu0 %v1555
    %1672 = vmatpush1.msra.mxu0 %v1554
    %1673 = vmatprep.subr.mxu0 %v1557
    %1674 = vmatpush1.msra.mxu0 %v1556
    %1675 = vmatprep.subr.mxu0 %v1559
    %1676 = vmatpush1.msra.mxu0 %v1558
    %1677 = vmatprep.subr.mxu0 %v1561
    %1678 = vmatpush1.msra.mxu0 %v1560
    %1679 = vmatprep.subr.mxu0 %v1563
    %1680 = vmatpush1.msra.mxu0 %v1562
    %1681 = vmatprep.subr.mxu0 %v1565
    %1682 = vmatpush1.msra.mxu0 %v1564
    %1683 = vmatprep.subr.mxu0 %v1567
    %1684 = vmatpush1.msra.mxu0 %v1566
    %1685 = vmatprep.subr.mxu0 %v1569
    %1686 = vmatpush1.msra.mxu0 %v1568
    %1687 = vmatprep.subr.mxu0 %v1571
    %1688 = vmatpush1.msra.mxu0 %v1570
    %1689 = vmatprep.subr.mxu0 %v1573
    %1690 = vmatpush1.msra.mxu0 %v1572
    %1691 = vmatprep.subr.mxu0 %v1575
    %1692 = vmatpush1.msra.mxu0 %v1574
    %1693 = vmatprep.subr.mxu0 %v1577
    %1694 = vmatpush1.msra.mxu0 %v1576
    %1695 = vmatprep.subr.mxu0 %v1579
    %1696 = vmatpush1.msra.mxu0 %v1578
    %1697 = vmatprep.subr.mxu0 %v1581
    %1698 = vmatpush1.msra.mxu0 %v1580
    %1699 = vmatprep.subr.mxu0 %v1583
    %1700 = vmatpush1.msra.mxu0 %v1582
    %1701 = vmatprep.subr.mxu0 0.0
    %1702 = vmatpush1.msra.mxu0 0.0
    %1703 = vmatprep.subr.mxu0 0.0
    %1704 = vmatpush1.msra.mxu0 0.0
    %1705 = vmatprep.subr.mxu0 0.0
    %1706 = vmatpush1.msra.mxu0 0.0
    %1707 = vmatprep.subr.mxu0 0.0
    %1708 = vmatpush1.msra.mxu0 0.0
    %1709 = vmatprep.subr.mxu0 0.0
    %1710 = vmatpush1.msra.mxu0 0.0
    %1711 = vmatprep.subr.mxu0 0.0
    %1712 = vmatpush1.msra.mxu0 0.0
    %1713 = vmatprep.subr.mxu0 0.0
    %1714 = vmatpush1.msra.mxu0 0.0
    %1715 = vmatprep.subr.mxu0 0.0
    %1716 = vmatpush1.msra.mxu0 0.0
    %1717 = vmatprep.subr.mxu0 0.0
    %1718 = vmatpush1.msra.mxu0 0.0
    %1719 = vmatprep.subr.mxu0 0.0
    %1720 = vmatpush1.msra.mxu0 0.0
    %1721 = vmatprep.subr.mxu0 0.0
    %1722 = vmatpush1.msra.mxu0 0.0
    %1723 = vmatprep.subr.mxu0 0.0
    %1724 = vmatpush1.msra.mxu0 0.0
    %1725 = vmatprep.mubr.f32.mxu0 %v1320
    %1726 = vmatmul.mubr.f32.gmra.mrb[0].mxu0 %v1208
    %v1727 = vpop.f32.mrb[0].mxu0
    %v1728 = vadd.f32 %v1651, %v1727
    %v1729 = vpop.f32.mrb[0].mxu0
    %v1730 = vadd.f32 %v1653, %v1729
    %1731 = vmatprep.mubr.f32.mxu0 %v1323
    %1732 = vmatmul.mubr.f32.gmra.mrb[0].mxu0 %v1212
    %v1733 = vpop.f32.mrb[0].mxu0
    %v1734 = vadd.f32 %v1657, %v1733
    %v1735 = vpop.f32.mrb[0].mxu0
    %v1736 = vadd.f32 %v1659, %v1735
    %1737 = vdwg.mxu0
    %v1738 = vmax.f32 %v1469, %v1728
    %v1739 = vmax.f32 %v1471, %v1730
    %v1740 = vmax.f32 %v1475, %v1734
    %v1741 = vmax.f32 %v1477, %v1736
    %1742 = vst [vmem:[#allocation2] sm:$0xff] %v1738
    %vm1743 = vcmask 654336
    %1744 = vst.msk [vmem:[#allocation2 + $0x8] sm:$0xff] %vm1743, %v1739
    %1745 = vst [vmem:[#allocation2 + $0x10] sm:$0x1f] %v1740
    %vm1746 = vcmask 651264
    %1747 = vst.msk [vmem:[#allocation2 + $0x18] sm:$0x1f] %vm1746, %v1741
    %v1748 = vld [vmem:[#allocation2] sm:$0xff]
    %v1749 = vld [vmem:[#allocation2 + $0x8] sm:$0xff]
    %v1750 = vld [vmem:[#allocation2 + $0x10] sm:$0x7]
    %v1751 = vld [vmem:[#allocation2 + $0x18] sm:$0x7]
    %v1752 = vld [vmem:[%s6] sm:$0xff]
    %v1753 = vld [vmem:[%s6 + $0x8] sm:$0xff]
    %v1754 = vld [vmem:[%s6 + $0x10] sm:$0xff]
    %v1755 = vld [vmem:[%s6 + $0x18] sm:$0xff]
    %v1756 = vld [vmem:[%s6 + $0x20] sm:$0xff]
    %v1757 = vld [vmem:[%s6 + $0x28] sm:$0xff]
    %v1758 = vld [vmem:[%s6 + $0x30] sm:$0xff]
    %v1759 = vld [vmem:[%s6 + $0x38] sm:$0xff]
    %v1760 = vld [vmem:[%s6 + $0x40] sm:$0xff]
    %v1761 = vld [vmem:[%s6 + $0x48] sm:$0xff]
    %v1762 = vld [vmem:[%s6 + $0x50] sm:$0xff]
    %v1763 = vld [vmem:[%s6 + $0x58] sm:$0xff]
    %v1764 = vld [vmem:[%s6 + $0x60] sm:$0xff]
    %v1765 = vld [vmem:[%s6 + $0x68] sm:$0xff]
    %v1766 = vld [vmem:[%s6 + $0x70] sm:$0xff]
    %v1767 = vld [vmem:[%s6 + $0x78] sm:$0xff]
    %v1768 = vld [vmem:[%s6 + $0x80] sm:$0xff]
    %v1769 = vld [vmem:[%s6 + $0x88] sm:$0xff]
    %v1770 = vld [vmem:[%s6 + $0x90] sm:$0xff]
    %v1771 = vld [vmem:[%s6 + $0x98] sm:$0xff]
    %v1772 = vld [vmem:[%s6 + $0xa0] sm:$0xff]
    %v1773 = vld [vmem:[%s6 + $0xa8] sm:$0xff]
    %v1774 = vld [vmem:[%s6 + $0xb0] sm:$0xff]
    %v1775 = vld [vmem:[%s6 + $0xb8] sm:$0xff]
    %v1776 = vld [vmem:[%s6 + $0xc0] sm:$0xff]
    %v1777 = vld [vmem:[%s6 + $0xc8] sm:$0xff]
    %v1778 = vld [vmem:[%s6 + $0xd0] sm:$0xff]
    %v1779 = vld [vmem:[%s6 + $0xd8] sm:$0xff]
    %v1780 = vld [vmem:[%s6 + $0xe0] sm:$0xff]
    %v1781 = vld [vmem:[%s6 + $0xe8] sm:$0xff]
    %v1782 = vld [vmem:[%s6 + $0xf0] sm:$0xff]
    %v1783 = vld [vmem:[%s6 + $0xf8] sm:$0xff]
    %v1784 = vld [vmem:[%s6 + $0x100] sm:$0xff]
    %v1785 = vld [vmem:[%s6 + $0x108] sm:$0xff]
    %v1786 = vld [vmem:[%s6 + $0x110] sm:$0xff]
    %v1787 = vld [vmem:[%s6 + $0x118] sm:$0xff]
    %v1788 = vld [vmem:[%s6 + $0x120] sm:$0xff]
    %v1789 = vld [vmem:[%s6 + $0x128] sm:$0xff]
    %v1790 = vld [vmem:[%s6 + $0x130] sm:$0xff]
    %v1791 = vld [vmem:[%s6 + $0x138] sm:$0xff]
    %v1792 = vld [vmem:[%s6 + $0x140] sm:$0xff]
    %v1793 = vld [vmem:[%s6 + $0x148] sm:$0xff]
    %v1794 = vld [vmem:[%s6 + $0x150] sm:$0xff]
    %v1795 = vld [vmem:[%s6 + $0x158] sm:$0xff]
    %v1796 = vld [vmem:[%s6 + $0x160] sm:$0xff]
    %v1797 = vld [vmem:[%s6 + $0x168] sm:$0xff]
    %v1798 = vld [vmem:[%s6 + $0x170] sm:$0xff]
    %v1799 = vld [vmem:[%s6 + $0x178] sm:$0xff]
    %v1800 = vld [vmem:[%s6 + $0x180] sm:$0xff]
    %v1801 = vld [vmem:[%s6 + $0x188] sm:$0xff]
    %v1802 = vld [vmem:[%s6 + $0x190] sm:$0xff]
    %v1803 = vld [vmem:[%s6 + $0x198] sm:$0xff]
    %v1804 = vld [vmem:[%s6 + $0x1a0] sm:$0xff]
    %v1805 = vld [vmem:[%s6 + $0x1a8] sm:$0xff]
    %v1806 = vld [vmem:[%s6 + $0x1b0] sm:$0xff]
    %v1807 = vld [vmem:[%s6 + $0x1b8] sm:$0xff]
    %v1808 = vld [vmem:[%s6 + $0x1c0] sm:$0xff]
    %v1809 = vld [vmem:[%s6 + $0x1c8] sm:$0xff]
    %v1810 = vld [vmem:[%s6 + $0x1d0] sm:$0xff]
    %v1811 = vld [vmem:[%s6 + $0x1d8] sm:$0xff]
    %v1812 = vld [vmem:[%s6 + $0x1e0] sm:$0xff]
    %v1813 = vld [vmem:[%s6 + $0x1e8] sm:$0xff]
    %v1814 = vld [vmem:[%s6 + $0x1f0] sm:$0xff]
    %v1815 = vld [vmem:[%s6 + $0x1f8] sm:$0xff]
    %v1816 = vld [vmem:[%s6 + $0x200] sm:$0xff]
    %v1817 = vld [vmem:[%s6 + $0x208] sm:$0xff]
    %v1818 = vld [vmem:[%s6 + $0x210] sm:$0xff]
    %v1819 = vld [vmem:[%s6 + $0x218] sm:$0xff]
    %v1820 = vld [vmem:[%s6 + $0x220] sm:$0xff]
    %v1821 = vld [vmem:[%s6 + $0x228] sm:$0xff]
    %v1822 = vld [vmem:[%s6 + $0x230] sm:$0xff]
    %v1823 = vld [vmem:[%s6 + $0x238] sm:$0xff]
    %v1824 = vld [vmem:[%s6 + $0x240] sm:$0xff]
    %v1825 = vld [vmem:[%s6 + $0x248] sm:$0xff]
    %v1826 = vld [vmem:[%s6 + $0x250] sm:$0xff]
    %v1827 = vld [vmem:[%s6 + $0x258] sm:$0xff]
    %v1828 = vld [vmem:[%s6 + $0x260] sm:$0xff]
    %v1829 = vld [vmem:[%s6 + $0x268] sm:$0xff]
    %v1830 = vld [vmem:[#allocation2] sm:$0xfe]
    %v1831 = vld [vmem:[#allocation2 + $0x8] sm:$0xfe]
    %v1832 = vld [vmem:[#allocation2 + $0x10] sm:$0xf]
    %v1833 = vld [vmem:[#allocation2 + $0x18] sm:$0xf]
    %s1834 = scalar_lea.vmem %s6, 624
    %v1835 = vld [vmem:[%s1834] sm:$0xff]
    %v1836 = vld [vmem:[%s1834 + $0x8] sm:$0xff]
    %v1837 = vld [vmem:[%s1834 + $0x10] sm:$0xff]
    %v1838 = vld [vmem:[%s1834 + $0x18] sm:$0xff]
    %v1839 = vld [vmem:[%s1834 + $0x20] sm:$0xff]
    %v1840 = vld [vmem:[%s1834 + $0x28] sm:$0xff]
    %v1841 = vld [vmem:[%s1834 + $0x30] sm:$0xff]
    %v1842 = vld [vmem:[%s1834 + $0x38] sm:$0xff]
    %v1843 = vld [vmem:[%s1834 + $0x40] sm:$0xff]
    %v1844 = vld [vmem:[%s1834 + $0x48] sm:$0xff]
    %v1845 = vld [vmem:[%s1834 + $0x50] sm:$0xff]
    %v1846 = vld [vmem:[%s1834 + $0x58] sm:$0xff]
    %v1847 = vld [vmem:[%s1834 + $0x60] sm:$0xff]
    %v1848 = vld [vmem:[%s1834 + $0x68] sm:$0xff]
    %v1849 = vld [vmem:[%s1834 + $0x70] sm:$0xff]
    %v1850 = vld [vmem:[%s1834 + $0x78] sm:$0xff]
    %v1851 = vld [vmem:[%s1834 + $0x80] sm:$0xff]
    %v1852 = vld [vmem:[%s1834 + $0x88] sm:$0xff]
    %v1853 = vld [vmem:[%s1834 + $0x90] sm:$0xff]
    %v1854 = vld [vmem:[%s1834 + $0x98] sm:$0xff]
    %v1855 = vld [vmem:[%s1834 + $0xa0] sm:$0xff]
    %v1856 = vld [vmem:[%s1834 + $0xa8] sm:$0xff]
    %v1857 = vld [vmem:[%s1834 + $0xb0] sm:$0xff]
    %v1858 = vld [vmem:[%s1834 + $0xb8] sm:$0xff]
    %v1859 = vld [vmem:[%s1834 + $0xc0] sm:$0xff]
    %v1860 = vld [vmem:[%s1834 + $0xc8] sm:$0xff]
    %v1861 = vld [vmem:[%s1834 + $0xd0] sm:$0xff]
    %v1862 = vld [vmem:[%s1834 + $0xd8] sm:$0xff]
    %v1863 = vld [vmem:[%s1834 + $0xe0] sm:$0xff]
    %v1864 = vld [vmem:[%s1834 + $0xe8] sm:$0xff]
    %v1865 = vld [vmem:[%s1834 + $0xf0] sm:$0xff]
    %v1866 = vld [vmem:[%s1834 + $0xf8] sm:$0xff]
    %v1867 = vld [vmem:[%s1834 + $0x100] sm:$0xff]
    %v1868 = vld [vmem:[%s1834 + $0x108] sm:$0xff]
    %v1869 = vld [vmem:[%s1834 + $0x110] sm:$0xff]
    %v1870 = vld [vmem:[%s1834 + $0x118] sm:$0xff]
    %v1871 = vld [vmem:[%s1834 + $0x120] sm:$0xff]
    %v1872 = vld [vmem:[%s1834 + $0x128] sm:$0xff]
    %v1873 = vld [vmem:[%s1834 + $0x130] sm:$0xff]
    %v1874 = vld [vmem:[%s1834 + $0x138] sm:$0xff]
    %v1875 = vld [vmem:[%s1834 + $0x140] sm:$0xff]
    %v1876 = vld [vmem:[%s1834 + $0x148] sm:$0xff]
    %v1877 = vld [vmem:[%s1834 + $0x150] sm:$0xff]
    %v1878 = vld [vmem:[%s1834 + $0x158] sm:$0xff]
    %v1879 = vld [vmem:[%s1834 + $0x160] sm:$0xff]
    %v1880 = vld [vmem:[%s1834 + $0x168] sm:$0xff]
    %v1881 = vld [vmem:[%s1834 + $0x170] sm:$0xff]
    %v1882 = vld [vmem:[%s1834 + $0x178] sm:$0xff]
    %v1883 = vld [vmem:[%s1834 + $0x180] sm:$0xff]
    %v1884 = vld [vmem:[%s1834 + $0x188] sm:$0xff]
    %v1885 = vld [vmem:[%s1834 + $0x190] sm:$0xff]
    %v1886 = vld [vmem:[%s1834 + $0x198] sm:$0xff]
    %v1887 = vld [vmem:[%s1834 + $0x1a0] sm:$0xff]
    %v1888 = vld [vmem:[%s1834 + $0x1a8] sm:$0xff]
    %v1889 = vld [vmem:[%s1834 + $0x1b0] sm:$0xff]
    %v1890 = vld [vmem:[%s1834 + $0x1b8] sm:$0xff]
    %v1891 = vld [vmem:[%s1834 + $0x1c0] sm:$0xff]
    %v1892 = vld [vmem:[%s1834 + $0x1c8] sm:$0xff]
    %v1893 = vld [vmem:[%s1834 + $0x1d0] sm:$0xff]
    %v1894 = vld [vmem:[%s1834 + $0x1d8] sm:$0xff]
    %v1895 = vld [vmem:[%s1834 + $0x1e0] sm:$0xff]
    %v1896 = vld [vmem:[%s1834 + $0x1e8] sm:$0xff]
    %v1897 = vld [vmem:[%s1834 + $0x1f0] sm:$0xff]
    %v1898 = vld [vmem:[%s1834 + $0x1f8] sm:$0xff]
    %v1899 = vld [vmem:[%s1834 + $0x200] sm:$0xff]
    %v1900 = vld [vmem:[%s1834 + $0x208] sm:$0xff]
    %v1901 = vld [vmem:[%s1834 + $0x210] sm:$0xff]
    %v1902 = vld [vmem:[%s1834 + $0x218] sm:$0xff]
    %v1903 = vld [vmem:[%s1834 + $0x220] sm:$0xff]
    %v1904 = vld [vmem:[%s1834 + $0x228] sm:$0xff]
    %v1905 = vld [vmem:[%s1834 + $0x230] sm:$0xff]
    %v1906 = vld [vmem:[%s1834 + $0x238] sm:$0xff]
    %v1907 = vld [vmem:[%s1834 + $0x240] sm:$0xff]
    %v1908 = vld [vmem:[%s1834 + $0x248] sm:$0xff]
    %v1909 = vld [vmem:[%s1834 + $0x250] sm:$0xff]
    %v1910 = vld [vmem:[%s1834 + $0x258] sm:$0xff]
    %v1911 = vld [vmem:[%s1834 + $0x260] sm:$0xff]
    %v1912 = vld [vmem:[%s1834 + $0x268] sm:$0xff]
    %vm1917 = vcmask 1046528
    %v1918 = vrot.slane %v1830, 1
    %v1919 = vrot.slane %v1832, 1
    %v1920 = vsel %vm1917, %v1918, %v1919
    %v1921 = vrot.slane %v1831, 1
    %v1922 = vrot.slane %v1833, 1
    %v1923 = vsel %vm1917, %v1921, %v1922
    %v1926 = vsel %vm1743, %v1923, 0
    %v1928 = vsel %vm1743, %v1922, 0
    %1930 = vmatprep.subr.mxu0 %v1836
    %1931 = vmatpush1.msra.mxu0 %v1835
    %1932 = vmatprep.subr.mxu0 %v1839
    %1933 = vmatpush1.msra.mxu0 %v1838
    %1934 = vmatprep.subr.mxu0 %v1842
    %1935 = vmatpush1.msra.mxu0 %v1841
    %1936 = vmatprep.subr.mxu0 %v1845
    %1937 = vmatpush1.msra.mxu0 %v1844
    %1938 = vmatprep.subr.mxu0 %v1848
    %1939 = vmatpush1.msra.mxu0 %v1847
    %1940 = vmatprep.subr.mxu0 %v1851
    %1941 = vmatpush1.msra.mxu0 %v1850
    %1942 = vmatprep.subr.mxu0 %v1854
    %1943 = vmatpush1.msra.mxu0 %v1853
    %1944 = vmatprep.subr.mxu0 %v1857
    %1945 = vmatpush1.msra.mxu0 %v1856
    %1946 = vmatprep.subr.mxu0 %v1860
    %1947 = vmatpush1.msra.mxu0 %v1859
    %1948 = vmatprep.subr.mxu0 %v1863
    %1949 = vmatpush1.msra.mxu0 %v1862
    %1950 = vmatprep.subr.mxu0 %v1866
    %1951 = vmatpush1.msra.mxu0 %v1865
    %1952 = vmatprep.subr.mxu0 %v1869
    %1953 = vmatpush1.msra.mxu0 %v1868
    %1954 = vmatprep.subr.mxu0 %v1872
    %1955 = vmatpush1.msra.mxu0 %v1871
    %1956 = vmatprep.subr.mxu0 %v1875
    %1957 = vmatpush1.msra.mxu0 %v1874
    %1958 = vmatprep.subr.mxu0 %v1878
    %1959 = vmatpush1.msra.mxu0 %v1877
    %1960 = vmatprep.subr.mxu0 %v1881
    %1961 = vmatpush1.msra.mxu0 %v1880
    %1962 = vmatprep.subr.mxu0 %v1884
    %1963 = vmatpush1.msra.mxu0 %v1883
    %1964 = vmatprep.subr.mxu0 %v1887
    %1965 = vmatpush1.msra.mxu0 %v1886
    %1966 = vmatprep.subr.mxu0 %v1890
    %1967 = vmatpush1.msra.mxu0 %v1889
    %1968 = vmatprep.subr.mxu0 %v1893
    %1969 = vmatpush1.msra.mxu0 %v1892
    %1970 = vmatprep.subr.mxu0 %v1896
    %1971 = vmatpush1.msra.mxu0 %v1895
    %1972 = vmatprep.subr.mxu0 %v1899
    %1973 = vmatpush1.msra.mxu0 %v1898
    %1974 = vmatprep.subr.mxu0 %v1902
    %1975 = vmatpush1.msra.mxu0 %v1901
    %1976 = vmatprep.subr.mxu0 %v1905
    %1977 = vmatpush1.msra.mxu0 %v1904
    %1978 = vmatprep.subr.mxu0 %v1908
    %1979 = vmatpush1.msra.mxu0 %v1907
    %1980 = vmatprep.subr.mxu0 %v1911
    %1981 = vmatpush1.msra.mxu0 %v1910
    %1982 = vmatprep.subr.mxu0 0.0
    %1983 = vmatpush1.msra.mxu0 0.0
    %1984 = vmatprep.subr.mxu0 0.0
    %1985 = vmatpush1.msra.mxu0 0.0
    %1986 = vmatprep.subr.mxu0 0.0
    %1987 = vmatpush1.msra.mxu0 0.0
    %1988 = vmatprep.subr.mxu0 0.0
    %1989 = vmatpush1.msra.mxu0 0.0
    %1990 = vmatprep.subr.mxu0 0.0
    %1991 = vmatpush1.msra.mxu0 0.0
    %1992 = vmatprep.subr.mxu0 0.0
    %1993 = vmatpush1.msra.mxu0 0.0
    %1994 = vmatprep.mubr.f32.mxu0 %v1926
    %1995 = vmatmul.mubr.f32.gmra.mrb[0].mxu0 %v1920
    %v1996 = vpop.f32.mrb[0].mxu0
    %v1997 = vadd.f32 0.0, %v1996
    %v1998 = vpop.f32.mrb[0].mxu0
    %v1999 = vadd.f32 0.0, %v1998
    %2000 = vmatprep.mubr.f32.mxu0 %v1928
    %2001 = vmatmul.mubr.f32.gmra.mrb[0].mxu0 %v1919
    %v2002 = vpop.f32.mrb[0].mxu0
    %v2003 = vadd.f32 0.0, %v2002
    %v2004 = vpop.f32.mrb[0].mxu0
    %v2005 = vadd.f32 0.0, %v2004
    %2006 = vdwg.mxu0
    %2007 = vmatprep.subr.mxu0 0.0
    %2008 = vmatpush1.msra.mxu0 %v1837
    %2009 = vmatprep.subr.mxu0 0.0
    %2010 = vmatpush1.msra.mxu0 %v1840
    %2011 = vmatprep.subr.mxu0 0.0
    %2012 = vmatpush1.msra.mxu0 %v1843
    %2013 = vmatprep.subr.mxu0 0.0
    %2014 = vmatpush1.msra.mxu0 %v1846
    %2015 = vmatprep.subr.mxu0 0.0
    %2016 = vmatpush1.msra.mxu0 %v1849
    %2017 = vmatprep.subr.mxu0 0.0
    %2018 = vmatpush1.msra.mxu0 %v1852
    %2019 = vmatprep.subr.mxu0 0.0
    %2020 = vmatpush1.msra.mxu0 %v1855
    %2021 = vmatprep.subr.mxu0 0.0
    %2022 = vmatpush1.msra.mxu0 %v1858
    %2023 = vmatprep.subr.mxu0 0.0
    %2024 = vmatpush1.msra.mxu0 %v1861
    %2025 = vmatprep.subr.mxu0 0.0
    %2026 = vmatpush1.msra.mxu0 %v1864
    %2027 = vmatprep.subr.mxu0 0.0
    %2028 = vmatpush1.msra.mxu0 %v1867
    %2029 = vmatprep.subr.mxu0 0.0
    %2030 = vmatpush1.msra.mxu0 %v1870
    %2031 = vmatprep.subr.mxu0 0.0
    %2032 = vmatpush1.msra.mxu0 %v1873
    %2033 = vmatprep.subr.mxu0 0.0
    %2034 = vmatpush1.msra.mxu0 %v1876
    %2035 = vmatprep.subr.mxu0 0.0
    %2036 = vmatpush1.msra.mxu0 %v1879
    %2037 = vmatprep.subr.mxu0 0.0
    %2038 = vmatpush1.msra.mxu0 %v1882
    %2039 = vmatprep.subr.mxu0 0.0
    %2040 = vmatpush1.msra.mxu0 %v1885
    %2041 = vmatprep.subr.mxu0 0.0
    %2042 = vmatpush1.msra.mxu0 %v1888
    %2043 = vmatprep.subr.mxu0 0.0
    %2044 = vmatpush1.msra.mxu0 %v1891
    %2045 = vmatprep.subr.mxu0 0.0
    %2046 = vmatpush1.msra.mxu0 %v1894
    %2047 = vmatprep.subr.mxu0 0.0
    %2048 = vmatpush1.msra.mxu0 %v1897
    %2049 = vmatprep.subr.mxu0 0.0
    %2050 = vmatpush1.msra.mxu0 %v1900
    %2051 = vmatprep.subr.mxu0 0.0
    %2052 = vmatpush1.msra.mxu0 %v1903
    %2053 = vmatprep.subr.mxu0 0.0
    %2054 = vmatpush1.msra.mxu0 %v1906
    %2055 = vmatprep.subr.mxu0 0.0
    %2056 = vmatpush1.msra.mxu0 %v1909
    %2057 = vmatprep.subr.mxu0 0.0
    %2058 = vmatpush1.msra.mxu0 %v1912
    %2059 = vmatprep.subr.mxu0 0.0
    %2060 = vmatpush1.msra.mxu0 0.0
    %2061 = vmatprep.subr.mxu0 0.0
    %2062 = vmatpush1.msra.mxu0 0.0
    %2063 = vmatprep.subr.mxu0 0.0
    %2064 = vmatpush1.msra.mxu0 0.0
    %2065 = vmatprep.subr.mxu0 0.0
    %2066 = vmatpush1.msra.mxu0 0.0
    %2067 = vmatprep.subr.mxu0 0.0
    %2068 = vmatpush1.msra.mxu0 0.0
    %2069 = vmatprep.subr.mxu0 0.0
    %2070 = vmatpush1.msra.mxu0 0.0
    %2071 = vmatprep.mubr.f32.mxu0 %v1926
    %2072 = vmatmul.mubr.f32.gmra.mrb[0].mxu0 %v1920
    %v2073 = vpop.f32.mrb[0].mxu0
    %v2074 = vadd.f32 0.0, %v2073
    %v2075 = vpop.f32.mrb[0].mxu0
    %2076 = vmatprep.mubr.f32.mxu0 %v1928
    %2077 = vmatmul.mubr.f32.gmra.mrb[0].mxu0 %v1919
    %v2078 = vpop.f32.mrb[0].mxu0
    %v2079 = vadd.f32 0.0, %v2078
    %v2080 = vpop.f32.mrb[0].mxu0
    %2081 = vdwg.mxu0
    %v2083 = vsel %vm1743, %v1749, 0
    %v2086 = vsel %vm1743, %v1751, 0
    %2088 = vmatprep.subr.mxu0 %v1753
    %2089 = vmatpush1.msra.mxu0 %v1752
    %2090 = vmatprep.subr.mxu0 %v1756
    %2091 = vmatpush1.msra.mxu0 %v1755
    %2092 = vmatprep.subr.mxu0 %v1759
    %2093 = vmatpush1.msra.mxu0 %v1758
    %2094 = vmatprep.subr.mxu0 %v1762
    %2095 = vmatpush1.msra.mxu0 %v1761
    %2096 = vmatprep.subr.mxu0 %v1765
    %2097 = vmatpush1.msra.mxu0 %v1764
    %2098 = vmatprep.subr.mxu0 %v1768
    %2099 = vmatpush1.msra.mxu0 %v1767
    %2100 = vmatprep.subr.mxu0 %v1771
    %2101 = vmatpush1.msra.mxu0 %v1770
    %2102 = vmatprep.subr.mxu0 %v1774
    %2103 = vmatpush1.msra.mxu0 %v1773
    %2104 = vmatprep.subr.mxu0 %v1777
    %2105 = vmatpush1.msra.mxu0 %v1776
    %2106 = vmatprep.subr.mxu0 %v1780
    %2107 = vmatpush1.msra.mxu0 %v1779
    %2108 = vmatprep.subr.mxu0 %v1783
    %2109 = vmatpush1.msra.mxu0 %v1782
    %2110 = vmatprep.subr.mxu0 %v1786
    %2111 = vmatpush1.msra.mxu0 %v1785
    %2112 = vmatprep.subr.mxu0 %v1789
    %2113 = vmatpush1.msra.mxu0 %v1788
    %2114 = vmatprep.subr.mxu0 %v1792
    %2115 = vmatpush1.msra.mxu0 %v1791
    %2116 = vmatprep.subr.mxu0 %v1795
    %2117 = vmatpush1.msra.mxu0 %v1794
    %2118 = vmatprep.subr.mxu0 %v1798
    %2119 = vmatpush1.msra.mxu0 %v1797
    %2120 = vmatprep.subr.mxu0 %v1801
    %2121 = vmatpush1.msra.mxu0 %v1800
    %2122 = vmatprep.subr.mxu0 %v1804
    %2123 = vmatpush1.msra.mxu0 %v1803
    %2124 = vmatprep.subr.mxu0 %v1807
    %2125 = vmatpush1.msra.mxu0 %v1806
    %2126 = vmatprep.subr.mxu0 %v1810
    %2127 = vmatpush1.msra.mxu0 %v1809
    %2128 = vmatprep.subr.mxu0 %v1813
    %2129 = vmatpush1.msra.mxu0 %v1812
    %2130 = vmatprep.subr.mxu0 %v1816
    %2131 = vmatpush1.msra.mxu0 %v1815
    %2132 = vmatprep.subr.mxu0 %v1819
    %2133 = vmatpush1.msra.mxu0 %v1818
    %2134 = vmatprep.subr.mxu0 %v1822
    %2135 = vmatpush1.msra.mxu0 %v1821
    %2136 = vmatprep.subr.mxu0 %v1825
    %2137 = vmatpush1.msra.mxu0 %v1824
    %2138 = vmatprep.subr.mxu0 %v1828
    %2139 = vmatpush1.msra.mxu0 %v1827
    %2140 = vmatprep.subr.mxu0 0.0
    %2141 = vmatpush1.msra.mxu0 0.0
    %2142 = vmatprep.subr.mxu0 0.0
    %2143 = vmatpush1.msra.mxu0 0.0
    %2144 = vmatprep.subr.mxu0 0.0
    %2145 = vmatpush1.msra.mxu0 0.0
    %2146 = vmatprep.subr.mxu0 0.0
    %2147 = vmatpush1.msra.mxu0 0.0
    %2148 = vmatprep.subr.mxu0 0.0
    %2149 = vmatpush1.msra.mxu0 0.0
    %2150 = vmatprep.subr.mxu0 0.0
    %2151 = vmatpush1.msra.mxu0 0.0
    %2152 = vmatprep.mubr.f32.mxu0 %v2083
    %2153 = vmatmul.mubr.f32.gmra.mrb[0].mxu0 %v1748
    %v2154 = vpop.f32.mrb[0].mxu0
    %v2155 = vadd.f32 %v1997, %v2154
    %v2156 = vpop.f32.mrb[0].mxu0
    %v2157 = vadd.f32 %v1999, %v2156
    %2158 = vmatprep.mubr.f32.mxu0 %v2086
    %2159 = vmatmul.mubr.f32.gmra.mrb[0].mxu0 %v1750
    %v2160 = vpop.f32.mrb[0].mxu0
    %v2161 = vadd.f32 %v2003, %v2160
    %v2162 = vpop.f32.mrb[0].mxu0
    %v2163 = vadd.f32 %v2005, %v2162
    %2164 = vdwg.mxu0
    %2165 = vmatprep.subr.mxu0 0.0
    %2166 = vmatpush1.msra.mxu0 %v1754
    %2167 = vmatprep.subr.mxu0 0.0
    %2168 = vmatpush1.msra.mxu0 %v1757
    %2169 = vmatprep.subr.mxu0 0.0
    %2170 = vmatpush1.msra.mxu0 %v1760
    %2171 = vmatprep.subr.mxu0 0.0
    %2172 = vmatpush1.msra.mxu0 %v1763
    %2173 = vmatprep.subr.mxu0 0.0
    %2174 = vmatpush1.msra.mxu0 %v1766
    %2175 = vmatprep.subr.mxu0 0.0
    %2176 = vmatpush1.msra.mxu0 %v1769
    %2177 = vmatprep.subr.mxu0 0.0
    %2178 = vmatpush1.msra.mxu0 %v1772
    %2179 = vmatprep.subr.mxu0 0.0
    %2180 = vmatpush1.msra.mxu0 %v1775
    %2181 = vmatprep.subr.mxu0 0.0
    %2182 = vmatpush1.msra.mxu0 %v1778
    %2183 = vmatprep.subr.mxu0 0.0
    %2184 = vmatpush1.msra.mxu0 %v1781
    %2185 = vmatprep.subr.mxu0 0.0
    %2186 = vmatpush1.msra.mxu0 %v1784
    %2187 = vmatprep.subr.mxu0 0.0
    %2188 = vmatpush1.msra.mxu0 %v1787
    %2189 = vmatprep.subr.mxu0 0.0
    %2190 = vmatpush1.msra.mxu0 %v1790
    %2191 = vmatprep.subr.mxu0 0.0
    %2192 = vmatpush1.msra.mxu0 %v1793
    %2193 = vmatprep.subr.mxu0 0.0
    %2194 = vmatpush1.msra.mxu0 %v1796
    %2195 = vmatprep.subr.mxu0 0.0
    %2196 = vmatpush1.msra.mxu0 %v1799
    %2197 = vmatprep.subr.mxu0 0.0
    %2198 = vmatpush1.msra.mxu0 %v1802
    %2199 = vmatprep.subr.mxu0 0.0
    %2200 = vmatpush1.msra.mxu0 %v1805
    %2201 = vmatprep.subr.mxu0 0.0
    %2202 = vmatpush1.msra.mxu0 %v1808
    %2203 = vmatprep.subr.mxu0 0.0
    %2204 = vmatpush1.msra.mxu0 %v1811
    %2205 = vmatprep.subr.mxu0 0.0
    %2206 = vmatpush1.msra.mxu0 %v1814
    %2207 = vmatprep.subr.mxu0 0.0
    %2208 = vmatpush1.msra.mxu0 %v1817
    %2209 = vmatprep.subr.mxu0 0.0
    %2210 = vmatpush1.msra.mxu0 %v1820
    %2211 = vmatprep.subr.mxu0 0.0
    %2212 = vmatpush1.msra.mxu0 %v1823
    %2213 = vmatprep.subr.mxu0 0.0
    %2214 = vmatpush1.msra.mxu0 %v1826
    %2215 = vmatprep.subr.mxu0 0.0
    %2216 = vmatpush1.msra.mxu0 %v1829
    %2217 = vmatprep.subr.mxu0 0.0
    %2218 = vmatpush1.msra.mxu0 0.0
    %2219 = vmatprep.subr.mxu0 0.0
    %2220 = vmatpush1.msra.mxu0 0.0
    %2221 = vmatprep.subr.mxu0 0.0
    %2222 = vmatpush1.msra.mxu0 0.0
    %2223 = vmatprep.subr.mxu0 0.0
    %2224 = vmatpush1.msra.mxu0 0.0
    %2225 = vmatprep.subr.mxu0 0.0
    %2226 = vmatpush1.msra.mxu0 0.0
    %2227 = vmatprep.subr.mxu0 0.0
    %2228 = vmatpush1.msra.mxu0 0.0
    %2229 = vmatprep.mubr.f32.mxu0 %v2083
    %2230 = vmatmul.mubr.f32.gmra.mrb[0].mxu0 %v1748
    %v2231 = vpop.f32.mrb[0].mxu0
    %v2232 = vadd.f32 %v2074, %v2231
    %v2233 = vpop.f32.mrb[0].mxu0
    %2234 = vmatprep.mubr.f32.mxu0 %v2086
    %2235 = vmatmul.mubr.f32.gmra.mrb[0].mxu0 %v1750
    %v2236 = vpop.f32.mrb[0].mxu0
    %v2237 = vadd.f32 %v2079, %v2236
    %v2238 = vpop.f32.mrb[0].mxu0
    %2239 = vdwg.mxu0
    %v2240 = vld [vmem:[#allocation2] sm:$0xfc]
    %v2241 = vld [vmem:[#allocation2 + $0x8] sm:$0xfc]
    %v2242 = vld [vmem:[#allocation2 + $0x10] sm:$0x1f]
    %v2243 = vld [vmem:[#allocation2 + $0x18] sm:$0x1f]
    %s2244 = scalar_lea.vmem %s6, 1248
    %v2245 = vld [vmem:[%s2244] sm:$0xff]
    %v2246 = vld [vmem:[%s2244 + $0x8] sm:$0xff]
    %v2247 = vld [vmem:[%s2244 + $0x10] sm:$0xff]
    %v2248 = vld [vmem:[%s2244 + $0x18] sm:$0xff]
    %v2249 = vld [vmem:[%s2244 + $0x20] sm:$0xff]
    %v2250 = vld [vmem:[%s2244 + $0x28] sm:$0xff]
    %v2251 = vld [vmem:[%s2244 + $0x30] sm:$0xff]
    %v2252 = vld [vmem:[%s2244 + $0x38] sm:$0xff]
    %v2253 = vld [vmem:[%s2244 + $0x40] sm:$0xff]
    %v2254 = vld [vmem:[%s2244 + $0x48] sm:$0xff]
    %v2255 = vld [vmem:[%s2244 + $0x50] sm:$0xff]
    %v2256 = vld [vmem:[%s2244 + $0x58] sm:$0xff]
    %v2257 = vld [vmem:[%s2244 + $0x60] sm:$0xff]
    %v2258 = vld [vmem:[%s2244 + $0x68] sm:$0xff]
    %v2259 = vld [vmem:[%s2244 + $0x70] sm:$0xff]
    %v2260 = vld [vmem:[%s2244 + $0x78] sm:$0xff]
    %v2261 = vld [vmem:[%s2244 + $0x80] sm:$0xff]
    %v2262 = vld [vmem:[%s2244 + $0x88] sm:$0xff]
    %v2263 = vld [vmem:[%s2244 + $0x90] sm:$0xff]
    %v2264 = vld [vmem:[%s2244 + $0x98] sm:$0xff]
    %v2265 = vld [vmem:[%s2244 + $0xa0] sm:$0xff]
    %v2266 = vld [vmem:[%s2244 + $0xa8] sm:$0xff]
    %v2267 = vld [vmem:[%s2244 + $0xb0] sm:$0xff]
    %v2268 = vld [vmem:[%s2244 + $0xb8] sm:$0xff]
    %v2269 = vld [vmem:[%s2244 + $0xc0] sm:$0xff]
    %v2270 = vld [vmem:[%s2244 + $0xc8] sm:$0xff]
    %v2271 = vld [vmem:[%s2244 + $0xd0] sm:$0xff]
    %v2272 = vld [vmem:[%s2244 + $0xd8] sm:$0xff]
    %v2273 = vld [vmem:[%s2244 + $0xe0] sm:$0xff]
    %v2274 = vld [vmem:[%s2244 + $0xe8] sm:$0xff]
    %v2275 = vld [vmem:[%s2244 + $0xf0] sm:$0xff]
    %v2276 = vld [vmem:[%s2244 + $0xf8] sm:$0xff]
    %v2277 = vld [vmem:[%s2244 + $0x100] sm:$0xff]
    %v2278 = vld [vmem:[%s2244 + $0x108] sm:$0xff]
    %v2279 = vld [vmem:[%s2244 + $0x110] sm:$0xff]
    %v2280 = vld [vmem:[%s2244 + $0x118] sm:$0xff]
    %v2281 = vld [vmem:[%s2244 + $0x120] sm:$0xff]
    %v2282 = vld [vmem:[%s2244 + $0x128] sm:$0xff]
    %v2283 = vld [vmem:[%s2244 + $0x130] sm:$0xff]
    %v2284 = vld [vmem:[%s2244 + $0x138] sm:$0xff]
    %v2285 = vld [vmem:[%s2244 + $0x140] sm:$0xff]
    %v2286 = vld [vmem:[%s2244 + $0x148] sm:$0xff]
    %v2287 = vld [vmem:[%s2244 + $0x150] sm:$0xff]
    %v2288 = vld [vmem:[%s2244 + $0x158] sm:$0xff]
    %v2289 = vld [vmem:[%s2244 + $0x160] sm:$0xff]
    %v2290 = vld [vmem:[%s2244 + $0x168] sm:$0xff]
    %v2291 = vld [vmem:[%s2244 + $0x170] sm:$0xff]
    %v2292 = vld [vmem:[%s2244 + $0x178] sm:$0xff]
    %v2293 = vld [vmem:[%s2244 + $0x180] sm:$0xff]
    %v2294 = vld [vmem:[%s2244 + $0x188] sm:$0xff]
    %v2295 = vld [vmem:[%s2244 + $0x190] sm:$0xff]
    %v2296 = vld [vmem:[%s2244 + $0x198] sm:$0xff]
    %v2297 = vld [vmem:[%s2244 + $0x1a0] sm:$0xff]
    %v2298 = vld [vmem:[%s2244 + $0x1a8] sm:$0xff]
    %v2299 = vld [vmem:[%s2244 + $0x1b0] sm:$0xff]
    %v2300 = vld [vmem:[%s2244 + $0x1b8] sm:$0xff]
    %v2301 = vld [vmem:[%s2244 + $0x1c0] sm:$0xff]
    %v2302 = vld [vmem:[%s2244 + $0x1c8] sm:$0xff]
    %v2303 = vld [vmem:[%s2244 + $0x1d0] sm:$0xff]
    %v2304 = vld [vmem:[%s2244 + $0x1d8] sm:$0xff]
    %v2305 = vld [vmem:[%s2244 + $0x1e0] sm:$0xff]
    %v2306 = vld [vmem:[%s2244 + $0x1e8] sm:$0xff]
    %v2307 = vld [vmem:[%s2244 + $0x1f0] sm:$0xff]
    %v2308 = vld [vmem:[%s2244 + $0x1f8] sm:$0xff]
    %v2309 = vld [vmem:[%s2244 + $0x200] sm:$0xff]
    %v2310 = vld [vmem:[%s2244 + $0x208] sm:$0xff]
    %v2311 = vld [vmem:[%s2244 + $0x210] sm:$0xff]
    %v2312 = vld [vmem:[%s2244 + $0x218] sm:$0xff]
    %v2313 = vld [vmem:[%s2244 + $0x220] sm:$0xff]
    %v2314 = vld [vmem:[%s2244 + $0x228] sm:$0xff]
    %v2315 = vld [vmem:[%s2244 + $0x230] sm:$0xff]
    %v2316 = vld [vmem:[%s2244 + $0x238] sm:$0xff]
    %v2317 = vld [vmem:[%s2244 + $0x240] sm:$0xff]
    %v2318 = vld [vmem:[%s2244 + $0x248] sm:$0xff]
    %v2319 = vld [vmem:[%s2244 + $0x250] sm:$0xff]
    %v2320 = vld [vmem:[%s2244 + $0x258] sm:$0xff]
    %v2321 = vld [vmem:[%s2244 + $0x260] sm:$0xff]
    %v2322 = vld [vmem:[%s2244 + $0x268] sm:$0xff]
    %vm2327 = vcmask 1045504
    %v2328 = vrot.slane %v2240, 2
    %v2329 = vrot.slane %v2242, 2
    %v2330 = vsel %vm2327, %v2328, %v2329
    %v2331 = vrot.slane %v2241, 2
    %v2332 = vrot.slane %v2243, 2
    %v2333 = vsel %vm2327, %v2331, %v2332
    %v2336 = vsel %vm1743, %v2333, 0
    %v2338 = vsel %vm1743, %v2332, 0
    %2340 = vmatprep.subr.mxu0 %v2246
    %2341 = vmatpush1.msra.mxu0 %v2245
    %2342 = vmatprep.subr.mxu0 %v2249
    %2343 = vmatpush1.msra.mxu0 %v2248
    %2344 = vmatprep.subr.mxu0 %v2252
    %2345 = vmatpush1.msra.mxu0 %v2251
    %2346 = vmatprep.subr.mxu0 %v2255
    %2347 = vmatpush1.msra.mxu0 %v2254
    %2348 = vmatprep.subr.mxu0 %v2258
    %2349 = vmatpush1.msra.mxu0 %v2257
    %2350 = vmatprep.subr.mxu0 %v2261
    %2351 = vmatpush1.msra.mxu0 %v2260
    %2352 = vmatprep.subr.mxu0 %v2264
    %2353 = vmatpush1.msra.mxu0 %v2263
    %2354 = vmatprep.subr.mxu0 %v2267
    %2355 = vmatpush1.msra.mxu0 %v2266
    %2356 = vmatprep.subr.mxu0 %v2270
    %2357 = vmatpush1.msra.mxu0 %v2269
    %2358 = vmatprep.subr.mxu0 %v2273
    %2359 = vmatpush1.msra.mxu0 %v2272
    %2360 = vmatprep.subr.mxu0 %v2276
    %2361 = vmatpush1.msra.mxu0 %v2275
    %2362 = vmatprep.subr.mxu0 %v2279
    %2363 = vmatpush1.msra.mxu0 %v2278
    %2364 = vmatprep.subr.mxu0 %v2282
    %2365 = vmatpush1.msra.mxu0 %v2281
    %2366 = vmatprep.subr.mxu0 %v2285
    %2367 = vmatpush1.msra.mxu0 %v2284
    %2368 = vmatprep.subr.mxu0 %v2288
    %2369 = vmatpush1.msra.mxu0 %v2287
    %2370 = vmatprep.subr.mxu0 %v2291
    %2371 = vmatpush1.msra.mxu0 %v2290
    %2372 = vmatprep.subr.mxu0 %v2294
    %2373 = vmatpush1.msra.mxu0 %v2293
    %2374 = vmatprep.subr.mxu0 %v2297
    %2375 = vmatpush1.msra.mxu0 %v2296
    %2376 = vmatprep.subr.mxu0 %v2300
    %2377 = vmatpush1.msra.mxu0 %v2299
    %2378 = vmatprep.subr.mxu0 %v2303
    %2379 = vmatpush1.msra.mxu0 %v2302
    %2380 = vmatprep.subr.mxu0 %v2306
    %2381 = vmatpush1.msra.mxu0 %v2305
    %2382 = vmatprep.subr.mxu0 %v2309
    %2383 = vmatpush1.msra.mxu0 %v2308
    %2384 = vmatprep.subr.mxu0 %v2312
    %2385 = vmatpush1.msra.mxu0 %v2311
    %2386 = vmatprep.subr.mxu0 %v2315
    %2387 = vmatpush1.msra.mxu0 %v2314
    %2388 = vmatprep.subr.mxu0 %v2318
    %2389 = vmatpush1.msra.mxu0 %v2317
    %2390 = vmatprep.subr.mxu0 %v2321
    %2391 = vmatpush1.msra.mxu0 %v2320
    %2392 = vmatprep.subr.mxu0 0.0
    %2393 = vmatpush1.msra.mxu0 0.0
    %2394 = vmatprep.subr.mxu0 0.0
    %2395 = vmatpush1.msra.mxu0 0.0
    %2396 = vmatprep.subr.mxu0 0.0
    %2397 = vmatpush1.msra.mxu0 0.0
    %2398 = vmatprep.subr.mxu0 0.0
    %2399 = vmatpush1.msra.mxu0 0.0
    %2400 = vmatprep.subr.mxu0 0.0
    %2401 = vmatpush1.msra.mxu0 0.0
    %2402 = vmatprep.subr.mxu0 0.0
    %2403 = vmatpush1.msra.mxu0 0.0
    %2404 = vmatprep.mubr.f32.mxu0 %v2336
    %2405 = vmatmul.mubr.f32.gmra.mrb[0].mxu0 %v2330
    %v2406 = vpop.f32.mrb[0].mxu0
    %v2407 = vadd.f32 0.0, %v2406
    %v2408 = vpop.f32.mrb[0].mxu0
    %v2409 = vadd.f32 0.0, %v2408
    %2410 = vmatprep.mubr.f32.mxu0 %v2338
    %2411 = vmatmul.mubr.f32.gmra.mrb[0].mxu0 %v2329
    %v2412 = vpop.f32.mrb[0].mxu0
    %v2413 = vadd.f32 0.0, %v2412
    %v2414 = vpop.f32.mrb[0].mxu0
    %v2415 = vadd.f32 0.0, %v2414
    %2416 = vdwg.mxu0
    %2417 = vmatprep.subr.mxu0 0.0
    %2418 = vmatpush1.msra.mxu0 %v2247
    %2419 = vmatprep.subr.mxu0 0.0
    %2420 = vmatpush1.msra.mxu0 %v2250
    %2421 = vmatprep.subr.mxu0 0.0
    %2422 = vmatpush1.msra.mxu0 %v2253
    %2423 = vmatprep.subr.mxu0 0.0
    %2424 = vmatpush1.msra.mxu0 %v2256
    %2425 = vmatprep.subr.mxu0 0.0
    %2426 = vmatpush1.msra.mxu0 %v2259
    %2427 = vmatprep.subr.mxu0 0.0
    %2428 = vmatpush1.msra.mxu0 %v2262
    %2429 = vmatprep.subr.mxu0 0.0
    %2430 = vmatpush1.msra.mxu0 %v2265
    %2431 = vmatprep.subr.mxu0 0.0
    %2432 = vmatpush1.msra.mxu0 %v2268
    %2433 = vmatprep.subr.mxu0 0.0
    %2434 = vmatpush1.msra.mxu0 %v2271
    %2435 = vmatprep.subr.mxu0 0.0
    %2436 = vmatpush1.msra.mxu0 %v2274
    %2437 = vmatprep.subr.mxu0 0.0
    %2438 = vmatpush1.msra.mxu0 %v2277
    %2439 = vmatprep.subr.mxu0 0.0
    %2440 = vmatpush1.msra.mxu0 %v2280
    %2441 = vmatprep.subr.mxu0 0.0
    %2442 = vmatpush1.msra.mxu0 %v2283
    %2443 = vmatprep.subr.mxu0 0.0
    %2444 = vmatpush1.msra.mxu0 %v2286
    %2445 = vmatprep.subr.mxu0 0.0
    %2446 = vmatpush1.msra.mxu0 %v2289
    %2447 = vmatprep.subr.mxu0 0.0
    %2448 = vmatpush1.msra.mxu0 %v2292
    %2449 = vmatprep.subr.mxu0 0.0
    %2450 = vmatpush1.msra.mxu0 %v2295
    %2451 = vmatprep.subr.mxu0 0.0
    %2452 = vmatpush1.msra.mxu0 %v2298
    %2453 = vmatprep.subr.mxu0 0.0
    %2454 = vmatpush1.msra.mxu0 %v2301
    %2455 = vmatprep.subr.mxu0 0.0
    %2456 = vmatpush1.msra.mxu0 %v2304
    %2457 = vmatprep.subr.mxu0 0.0
    %2458 = vmatpush1.msra.mxu0 %v2307
    %2459 = vmatprep.subr.mxu0 0.0
    %2460 = vmatpush1.msra.mxu0 %v2310
    %2461 = vmatprep.subr.mxu0 0.0
    %2462 = vmatpush1.msra.mxu0 %v2313
    %2463 = vmatprep.subr.mxu0 0.0
    %2464 = vmatpush1.msra.mxu0 %v2316
    %2465 = vmatprep.subr.mxu0 0.0
    %2466 = vmatpush1.msra.mxu0 %v2319
    %2467 = vmatprep.subr.mxu0 0.0
    %2468 = vmatpush1.msra.mxu0 %v2322
    %2469 = vmatprep.subr.mxu0 0.0
    %2470 = vmatpush1.msra.mxu0 0.0
    %2471 = vmatprep.subr.mxu0 0.0
    %2472 = vmatpush1.msra.mxu0 0.0
    %2473 = vmatprep.subr.mxu0 0.0
    %2474 = vmatpush1.msra.mxu0 0.0
    %2475 = vmatprep.subr.mxu0 0.0
    %2476 = vmatpush1.msra.mxu0 0.0
    %2477 = vmatprep.subr.mxu0 0.0
    %2478 = vmatpush1.msra.mxu0 0.0
    %2479 = vmatprep.subr.mxu0 0.0
    %2480 = vmatpush1.msra.mxu0 0.0
    %2481 = vmatprep.mubr.f32.mxu0 %v2336
    %2482 = vmatmul.mubr.f32.gmra.mrb[0].mxu0 %v2330
    %v2483 = vpop.f32.mrb[0].mxu0
    %v2484 = vadd.f32 0.0, %v2483
    %v2485 = vpop.f32.mrb[0].mxu0
    %2486 = vmatprep.mubr.f32.mxu0 %v2338
    %2487 = vmatmul.mubr.f32.gmra.mrb[0].mxu0 %v2329
    %v2488 = vpop.f32.mrb[0].mxu0
    %v2489 = vadd.f32 0.0, %v2488
    %v2490 = vpop.f32.mrb[0].mxu0
    %2491 = vdwg.mxu0
    %v2492 = vadd.f32 %v2155, %v2407
    %v2493 = vadd.f32 %v2157, %v2409
    %v2494 = vadd.f32 %v2232, %v2484
    %v2495 = vadd.f32 %v2161, %v2413
    %v2496 = vadd.f32 %v2163, %v2415
    %v2497 = vadd.f32 %v2237, %v2489
    %v2498 = vld [vmem:[%s7] sm:$0x7]
    %v2500 = vlaneseq
    %v2501 = vshrl.u32 %v2500, 7
    %v2502 = vsub.s32 0, %v2501
    %v2503 = vrot.slane %v2498, %v2502
    %v2504 = vlaneseq
    %v2505 = vshrl.u32 %v2504, 7
    %v2506 = vsub.s32 1, %v2505
    %v2507 = vrot.slane %v2498, %v2506
    %v2508 = vlaneseq
    %v2509 = vshrl.u32 %v2508, 7
    %v2510 = vsub.s32 2, %v2509
    %v2511 = vrot.slane %v2498, %v2510
    %v2515 = vmul.f32 %v2492, %v2503
    %v2516 = vmul.f32 %v2493, %v2507
    %v2517 = vmul.f32 %v2494, %v2511
    %v2518 = vmul.f32 %v2495, %v2503
    %v2519 = vmul.f32 %v2496, %v2507
    %v2520 = vmul.f32 %v2497, %v2511
    %v2521 = vld [vmem:[%s8] sm:$0x7]
    %v2523 = vlaneseq
    %v2524 = vshrl.u32 %v2523, 7
    %v2525 = vsub.s32 0, %v2524
    %v2526 = vrot.slane %v2521, %v2525
    %v2527 = vlaneseq
    %v2528 = vshrl.u32 %v2527, 7
    %v2529 = vsub.s32 1, %v2528
    %v2530 = vrot.slane %v2521, %v2529
    %v2531 = vlaneseq
    %v2532 = vshrl.u32 %v2531, 7
    %v2533 = vsub.s32 2, %v2532
    %v2534 = vrot.slane %v2521, %v2533
    %v2538 = vadd.f32 %v2515, %v2526
    %v2539 = vadd.f32 %v2516, %v2530
    %v2540 = vadd.f32 %v2517, %v2534
    %v2541 = vadd.f32 %v2518, %v2526
    %v2542 = vadd.f32 %v2519, %v2530
    %v2543 = vadd.f32 %v2520, %v2534
    %v2544 = vmax.f32 %v2538, 0.0
    %v2545 = vmax.f32 %v2539, 0.0
    %v2546 = vmax.f32 %v2540, 0.0
    %v2547 = vmax.f32 %v2541, 0.0
    %v2548 = vmax.f32 %v2542, 0.0
    %v2549 = vmax.f32 %v2543, 0.0
    %v2550 = vld [vmem:[%s9] sm:$0x1f]
    %vm2551 = vcmask 89088
    %v2553 = vsel %vm2551, %v2550, 0
    %vm2555 = vcmask 1042432
    %v2557 = vsel %vm2555, %v2547, 0
    %v2560 = vsel %vm2555, %v2548, 0
    %v2563 = vsel %vm2555, %v2549, 0
    %2565 = vmatprep.subr.mxu0 %v2545
    %2566 = vmatpush1.msra.mxu0 %v2544
    %2567 = vmatprep.subr.mxu0 %v2560
    %2568 = vmatpush1.msra.mxu0 %v2557
    %2569 = vmatprep.subr.mxu0 0.0
    %2570 = vmatpush1.msra.mxu0 0.0
    %2571 = vmatprep.subr.mxu0 0.0
    %2572 = vmatpush1.msra.mxu0 0.0
    %2573 = vmatprep.subr.mxu0 0.0
    %2574 = vmatpush1.msra.mxu0 0.0
    %2575 = vmatprep.subr.mxu0 0.0
    %2576 = vmatpush1.msra.mxu0 0.0
    %2577 = vmatprep.subr.mxu0 0.0
    %2578 = vmatpush1.msra.mxu0 0.0
    %2579 = vmatprep.subr.mxu0 0.0
    %2580 = vmatpush1.msra.mxu0 0.0
    %2581 = vmatprep.subr.mxu0 0.0
    %2582 = vmatpush1.msra.mxu0 0.0
    %2583 = vmatprep.subr.mxu0 0.0
    %2584 = vmatpush1.msra.mxu0 0.0
    %2585 = vmatprep.subr.mxu0 0.0
    %2586 = vmatpush1.msra.mxu0 0.0
    %2587 = vmatprep.subr.mxu0 0.0
    %2588 = vmatpush1.msra.mxu0 0.0
    %2589 = vmatprep.subr.mxu0 0.0
    %2590 = vmatpush1.msra.mxu0 0.0
    %2591 = vmatprep.subr.mxu0 0.0
    %2592 = vmatpush1.msra.mxu0 0.0
    %2593 = vmatprep.subr.mxu0 0.0
    %2594 = vmatpush1.msra.mxu0 0.0
    %2595 = vmatprep.subr.mxu0 0.0
    %2596 = vmatpush1.msra.mxu0 0.0
    %2597 = vmatprep.subr.mxu0 0.0
    %2598 = vmatpush1.msra.mxu0 0.0
    %2599 = vmatprep.subr.mxu0 0.0
    %2600 = vmatpush1.msra.mxu0 0.0
    %2601 = vmatprep.subr.mxu0 0.0
    %2602 = vmatpush1.msra.mxu0 0.0
    %2603 = vmatprep.subr.mxu0 0.0
    %2604 = vmatpush1.msra.mxu0 0.0
    %2605 = vmatprep.subr.mxu0 0.0
    %2606 = vmatpush1.msra.mxu0 0.0
    %2607 = vmatprep.subr.mxu0 0.0
    %2608 = vmatpush1.msra.mxu0 0.0
    %2609 = vmatprep.subr.mxu0 0.0
    %2610 = vmatpush1.msra.mxu0 0.0
    %2611 = vmatprep.subr.mxu0 0.0
    %2612 = vmatpush1.msra.mxu0 0.0
    %2613 = vmatprep.subr.mxu0 0.0
    %2614 = vmatpush1.msra.mxu0 0.0
    %2615 = vmatprep.subr.mxu0 0.0
    %2616 = vmatpush1.msra.mxu0 0.0
    %2617 = vmatprep.subr.mxu0 0.0
    %2618 = vmatpush1.msra.mxu0 0.0
    %2619 = vmatprep.subr.mxu0 0.0
    %2620 = vmatpush1.msra.mxu0 0.0
    %2621 = vmatprep.subr.mxu0 0.0
    %2622 = vmatpush1.msra.mxu0 0.0
    %2623 = vmatprep.subr.mxu0 0.0
    %2624 = vmatpush1.msra.mxu0 0.0
    %2625 = vmatprep.subr.mxu0 0.0
    %2626 = vmatpush1.msra.mxu0 0.0
    %2627 = vmatprep.subr.mxu0 0.0
    %2628 = vmatpush1.msra.mxu0 0.0
    %2629 = vmatprep.mubr.f32.mxu0 0.0
    %2630 = vmatmul.mubr.f32.gmra.mrb[0].mxu0 %v2553
    %v2631 = vpop.f32.mrb[0].mxu0
    %v2632 = vadd.f32 0.0, %v2631
    %v2633 = vpop.f32.mrb[0].mxu0
    %v2634 = vadd.f32 0.0, %v2633
    %2635 = vdwg.mxu0
    %2636 = vmatprep.subr.mxu0 0.0
    %2637 = vmatpush1.msra.mxu0 %v2546
    %2638 = vmatprep.subr.mxu0 0.0
    %2639 = vmatpush1.msra.mxu0 %v2563
    %2640 = vmatprep.subr.mxu0 0.0
    %2641 = vmatpush1.msra.mxu0 0.0
    %2642 = vmatprep.subr.mxu0 0.0
    %2643 = vmatpush1.msra.mxu0 0.0
    %2644 = vmatprep.subr.mxu0 0.0
    %2645 = vmatpush1.msra.mxu0 0.0
    %2646 = vmatprep.subr.mxu0 0.0
    %2647 = vmatpush1.msra.mxu0 0.0
    %2648 = vmatprep.subr.mxu0 0.0
    %2649 = vmatpush1.msra.mxu0 0.0
    %2650 = vmatprep.subr.mxu0 0.0
    %2651 = vmatpush1.msra.mxu0 0.0
    %2652 = vmatprep.subr.mxu0 0.0
    %2653 = vmatpush1.msra.mxu0 0.0
    %2654 = vmatprep.subr.mxu0 0.0
    %2655 = vmatpush1.msra.mxu0 0.0
    %2656 = vmatprep.subr.mxu0 0.0
    %2657 = vmatpush1.msra.mxu0 0.0
    %2658 = vmatprep.subr.mxu0 0.0
    %2659 = vmatpush1.msra.mxu0 0.0
    %2660 = vmatprep.subr.mxu0 0.0
    %2661 = vmatpush1.msra.mxu0 0.0
    %2662 = vmatprep.subr.mxu0 0.0
    %2663 = vmatpush1.msra.mxu0 0.0
    %2664 = vmatprep.subr.mxu0 0.0
    %2665 = vmatpush1.msra.mxu0 0.0
    %2666 = vmatprep.subr.mxu0 0.0
    %2667 = vmatpush1.msra.mxu0 0.0
    %2668 = vmatprep.subr.mxu0 0.0
    %2669 = vmatpush1.msra.mxu0 0.0
    %2670 = vmatprep.subr.mxu0 0.0
    %2671 = vmatpush1.msra.mxu0 0.0
    %2672 = vmatprep.subr.mxu0 0.0
    %2673 = vmatpush1.msra.mxu0 0.0
    %2674 = vmatprep.subr.mxu0 0.0
    %2675 = vmatpush1.msra.mxu0 0.0
    %2676 = vmatprep.subr.mxu0 0.0
    %2677 = vmatpush1.msra.mxu0 0.0
    %2678 = vmatprep.subr.mxu0 0.0
    %2679 = vmatpush1.msra.mxu0 0.0
    %2680 = vmatprep.subr.mxu0 0.0
    %2681 = vmatpush1.msra.mxu0 0.0
    %2682 = vmatprep.subr.mxu0 0.0
    %2683 = vmatpush1.msra.mxu0 0.0
    %2684 = vmatprep.subr.mxu0 0.0
    %2685 = vmatpush1.msra.mxu0 0.0
    %2686 = vmatprep.subr.mxu0 0.0
    %2687 = vmatpush1.msra.mxu0 0.0
    %2688 = vmatprep.subr.mxu0 0.0
    %2689 = vmatpush1.msra.mxu0 0.0
    %2690 = vmatprep.subr.mxu0 0.0
    %2691 = vmatpush1.msra.mxu0 0.0
    %2692 = vmatprep.subr.mxu0 0.0
    %2693 = vmatpush1.msra.mxu0 0.0
    %2694 = vmatprep.subr.mxu0 0.0
    %2695 = vmatpush1.msra.mxu0 0.0
    %2696 = vmatprep.subr.mxu0 0.0
    %2697 = vmatpush1.msra.mxu0 0.0
    %2698 = vmatprep.subr.mxu0 0.0
    %2699 = vmatpush1.msra.mxu0 0.0
    %2700 = vmatprep.mubr.f32.mxu0 0.0
    %2701 = vmatmul.mubr.f32.gmra.mrb[0].mxu0 %v2553
    %v2702 = vpop.f32.mrb[0].mxu0
    %v2703 = vadd.f32 0.0, %v2702
    %v2704 = vpop.f32.mrb[0].mxu0
    %2705 = vdwg.mxu0
    %s2706 = scalar_lea.vmem %s9, 8
    %v2707 = vld [vmem:[%s2706] sm:$0x1f]
    %v2709 = vsel %vm2551, %v2707, 0
    %2711 = vmatprep.subr.mxu0 %v2545
    %2712 = vmatpush1.msra.mxu0 %v2544
    %2713 = vmatprep.subr.mxu0 %v2560
    %2714 = vmatpush1.msra.mxu0 %v2557
    %2715 = vmatprep.subr.mxu0 0.0
    %2716 = vmatpush1.msra.mxu0 0.0
    %2717 = vmatprep.subr.mxu0 0.0
    %2718 = vmatpush1.msra.mxu0 0.0
    %2719 = vmatprep.subr.mxu0 0.0
    %2720 = vmatpush1.msra.mxu0 0.0
    %2721 = vmatprep.subr.mxu0 0.0
    %2722 = vmatpush1.msra.mxu0 0.0
    %2723 = vmatprep.subr.mxu0 0.0
    %2724 = vmatpush1.msra.mxu0 0.0
    %2725 = vmatprep.subr.mxu0 0.0
    %2726 = vmatpush1.msra.mxu0 0.0
    %2727 = vmatprep.subr.mxu0 0.0
    %2728 = vmatpush1.msra.mxu0 0.0
    %2729 = vmatprep.subr.mxu0 0.0
    %2730 = vmatpush1.msra.mxu0 0.0
    %2731 = vmatprep.subr.mxu0 0.0
    %2732 = vmatpush1.msra.mxu0 0.0
    %2733 = vmatprep.subr.mxu0 0.0
    %2734 = vmatpush1.msra.mxu0 0.0
    %2735 = vmatprep.subr.mxu0 0.0
    %2736 = vmatpush1.msra.mxu0 0.0
    %2737 = vmatprep.subr.mxu0 0.0
    %2738 = vmatpush1.msra.mxu0 0.0
    %2739 = vmatprep.subr.mxu0 0.0
    %2740 = vmatpush1.msra.mxu0 0.0
    %2741 = vmatprep.subr.mxu0 0.0
    %2742 = vmatpush1.msra.mxu0 0.0
    %2743 = vmatprep.subr.mxu0 0.0
    %2744 = vmatpush1.msra.mxu0 0.0
    %2745 = vmatprep.subr.mxu0 0.0
    %2746 = vmatpush1.msra.mxu0 0.0
    %2747 = vmatprep.subr.mxu0 0.0
    %2748 = vmatpush1.msra.mxu0 0.0
    %2749 = vmatprep.subr.mxu0 0.0
    %2750 = vmatpush1.msra.mxu0 0.0
    %2751 = vmatprep.subr.mxu0 0.0
    %2752 = vmatpush1.msra.mxu0 0.0
    %2753 = vmatprep.subr.mxu0 0.0
    %2754 = vmatpush1.msra.mxu0 0.0
    %2755 = vmatprep.subr.mxu0 0.0
    %2756 = vmatpush1.msra.mxu0 0.0
    %2757 = vmatprep.subr.mxu0 0.0
    %2758 = vmatpush1.msra.mxu0 0.0
    %2759 = vmatprep.subr.mxu0 0.0
    %2760 = vmatpush1.msra.mxu0 0.0
    %2761 = vmatprep.subr.mxu0 0.0
    %2762 = vmatpush1.msra.mxu0 0.0
    %2763 = vmatprep.subr.mxu0 0.0
    %2764 = vmatpush1.msra.mxu0 0.0
    %2765 = vmatprep.subr.mxu0 0.0
    %2766 = vmatpush1.msra.mxu0 0.0
    %2767 = vmatprep.subr.mxu0 0.0
    %2768 = vmatpush1.msra.mxu0 0.0
    %2769 = vmatprep.subr.mxu0 0.0
    %2770 = vmatpush1.msra.mxu0 0.0
    %2771 = vmatprep.subr.mxu0 0.0
    %2772 = vmatpush1.msra.mxu0 0.0
    %2773 = vmatprep.subr.mxu0 0.0
    %2774 = vmatpush1.msra.mxu0 0.0
    %2775 = vmatprep.mubr.f32.mxu0 0.0
    %2776 = vmatmul.mubr.f32.gmra.mrb[0].mxu0 %v2709
    %v2777 = vpop.f32.mrb[0].mxu0
    %v2778 = vadd.f32 0.0, %v2777
    %v2779 = vpop.f32.mrb[0].mxu0
    %v2780 = vadd.f32 0.0, %v2779
    %2781 = vdwg.mxu0
    %2782 = vmatprep.subr.mxu0 0.0
    %2783 = vmatpush1.msra.mxu0 %v2546
    %2784 = vmatprep.subr.mxu0 0.0
    %2785 = vmatpush1.msra.mxu0 %v2563
    %2786 = vmatprep.subr.mxu0 0.0
    %2787 = vmatpush1.msra.mxu0 0.0
    %2788 = vmatprep.subr.mxu0 0.0
    %2789 = vmatpush1.msra.mxu0 0.0
    %2790 = vmatprep.subr.mxu0 0.0
    %2791 = vmatpush1.msra.mxu0 0.0
    %2792 = vmatprep.subr.mxu0 0.0
    %2793 = vmatpush1.msra.mxu0 0.0
    %2794 = vmatprep.subr.mxu0 0.0
    %2795 = vmatpush1.msra.mxu0 0.0
    %2796 = vmatprep.subr.mxu0 0.0
    %2797 = vmatpush1.msra.mxu0 0.0
    %2798 = vmatprep.subr.mxu0 0.0
    %2799 = vmatpush1.msra.mxu0 0.0
    %2800 = vmatprep.subr.mxu0 0.0
    %2801 = vmatpush1.msra.mxu0 0.0
    %2802 = vmatprep.subr.mxu0 0.0
    %2803 = vmatpush1.msra.mxu0 0.0
    %2804 = vmatprep.subr.mxu0 0.0
    %2805 = vmatpush1.msra.mxu0 0.0
    %2806 = vmatprep.subr.mxu0 0.0
    %2807 = vmatpush1.msra.mxu0 0.0
    %2808 = vmatprep.subr.mxu0 0.0
    %2809 = vmatpush1.msra.mxu0 0.0
    %2810 = vmatprep.subr.mxu0 0.0
    %2811 = vmatpush1.msra.mxu0 0.0
    %2812 = vmatprep.subr.mxu0 0.0
    %2813 = vmatpush1.msra.mxu0 0.0
    %2814 = vmatprep.subr.mxu0 0.0
    %2815 = vmatpush1.msra.mxu0 0.0
    %2816 = vmatprep.subr.mxu0 0.0
    %2817 = vmatpush1.msra.mxu0 0.0
    %2818 = vmatprep.subr.mxu0 0.0
    %2819 = vmatpush1.msra.mxu0 0.0
    %2820 = vmatprep.subr.mxu0 0.0
    %2821 = vmatpush1.msra.mxu0 0.0
    %2822 = vmatprep.subr.mxu0 0.0
    %2823 = vmatpush1.msra.mxu0 0.0
    %2824 = vmatprep.subr.mxu0 0.0
    %2825 = vmatpush1.msra.mxu0 0.0
    %2826 = vmatprep.subr.mxu0 0.0
    %2827 = vmatpush1.msra.mxu0 0.0
    %2828 = vmatprep.subr.mxu0 0.0
    %2829 = vmatpush1.msra.mxu0 0.0
    %2830 = vmatprep.subr.mxu0 0.0
    %2831 = vmatpush1.msra.mxu0 0.0
    %2832 = vmatprep.subr.mxu0 0.0
    %2833 = vmatpush1.msra.mxu0 0.0
    %2834 = vmatprep.subr.mxu0 0.0
    %2835 = vmatpush1.msra.mxu0 0.0
    %2836 = vmatprep.subr.mxu0 0.0
    %2837 = vmatpush1.msra.mxu0 0.0
    %2838 = vmatprep.subr.mxu0 0.0
    %2839 = vmatpush1.msra.mxu0 0.0
    %2840 = vmatprep.subr.mxu0 0.0
    %2841 = vmatpush1.msra.mxu0 0.0
    %2842 = vmatprep.subr.mxu0 0.0
    %2843 = vmatpush1.msra.mxu0 0.0
    %2844 = vmatprep.subr.mxu0 0.0
    %2845 = vmatpush1.msra.mxu0 0.0
    %2846 = vmatprep.mubr.f32.mxu0 0.0
    %2847 = vmatmul.mubr.f32.gmra.mrb[0].mxu0 %v2709
    %v2848 = vpop.f32.mrb[0].mxu0
    %v2849 = vadd.f32 0.0, %v2848
    %v2850 = vpop.f32.mrb[0].mxu0
    %2851 = vdwg.mxu0
    %v2852 = vmax.f32 %v2632, %v2778
    %v2853 = vmax.f32 %v2634, %v2780
    %v2854 = vmax.f32 %v2703, %v2849
    %v2855 = vld [vmem:[%s10] sm:$0xff]
    %v2856 = vld [vmem:[%s10 + $0x8] sm:$0xff]
    %v2857 = vld [vmem:[%s10 + $0x10] sm:$0xff]
    %v2858 = vld [vmem:[%s10 + $0x18] sm:$0xff]
    %v2859 = vld [vmem:[%s10 + $0x20] sm:$0xff]
    %v2860 = vld [vmem:[%s10 + $0x28] sm:$0xff]
    %v2861 = vld [vmem:[%s10 + $0x30] sm:$0xff]
    %v2862 = vld [vmem:[%s10 + $0x38] sm:$0xff]
    %v2863 = vld [vmem:[%s10 + $0x40] sm:$0xff]
    %v2864 = vld [vmem:[%s10 + $0x48] sm:$0xff]
    %v2865 = vld [vmem:[%s10 + $0x50] sm:$0xff]
    %v2866 = vld [vmem:[%s10 + $0x58] sm:$0xff]
    %v2867 = vld [vmem:[%s10 + $0x60] sm:$0xff]
    %v2868 = vld [vmem:[%s10 + $0x68] sm:$0xff]
    %v2869 = vld [vmem:[%s10 + $0x70] sm:$0xff]
    %v2870 = vld [vmem:[%s10 + $0x78] sm:$0xff]
    %v2871 = vld [vmem:[%s10 + $0x80] sm:$0xff]
    %v2872 = vld [vmem:[%s10 + $0x88] sm:$0xff]
    %v2873 = vld [vmem:[%s10 + $0x90] sm:$0xff]
    %v2874 = vld [vmem:[%s10 + $0x98] sm:$0xff]
    %v2875 = vld [vmem:[%s10 + $0xa0] sm:$0xff]
    %v2876 = vld [vmem:[%s10 + $0xa8] sm:$0xff]
    %v2877 = vld [vmem:[%s10 + $0xb0] sm:$0xff]
    %v2878 = vld [vmem:[%s10 + $0xb8] sm:$0xff]
    %v2879 = vld [vmem:[%s10 + $0xc0] sm:$0xff]
    %v2880 = vld [vmem:[%s10 + $0xc8] sm:$0xff]
    %v2881 = vld [vmem:[%s10 + $0xd0] sm:$0xff]
    %v2882 = vld [vmem:[%s10 + $0xd8] sm:$0xff]
    %v2883 = vld [vmem:[%s10 + $0xe0] sm:$0xff]
    %v2884 = vld [vmem:[%s10 + $0xe8] sm:$0xff]
    %v2885 = vld [vmem:[%s10 + $0xf0] sm:$0xff]
    %v2886 = vld [vmem:[%s10 + $0xf8] sm:$0xff]
    %v2887 = vld [vmem:[%s10 + $0x100] sm:$0xff]
    %v2888 = vld [vmem:[%s10 + $0x108] sm:$0xff]
    %v2889 = vld [vmem:[%s10 + $0x110] sm:$0xff]
    %v2890 = vld [vmem:[%s10 + $0x118] sm:$0xff]
    %v2891 = vld [vmem:[%s10 + $0x120] sm:$0xff]
    %v2892 = vld [vmem:[%s10 + $0x128] sm:$0xff]
    %v2893 = vld [vmem:[%s10 + $0x130] sm:$0xff]
    %v2894 = vld [vmem:[%s10 + $0x138] sm:$0xff]
    %v2895 = vld [vmem:[%s10 + $0x140] sm:$0xff]
    %v2896 = vld [vmem:[%s10 + $0x148] sm:$0xff]
    %v2897 = vld [vmem:[%s10 + $0x150] sm:$0xff]
    %v2898 = vld [vmem:[%s10 + $0x158] sm:$0xff]
    %v2899 = vld [vmem:[%s10 + $0x160] sm:$0xff]
    %v2900 = vld [vmem:[%s10 + $0x168] sm:$0xff]
    %v2901 = vld [vmem:[%s10 + $0x170] sm:$0xff]
    %v2902 = vld [vmem:[%s10 + $0x178] sm:$0xff]
    %v2903 = vld [vmem:[%s10 + $0x180] sm:$0xff]
    %v2904 = vld [vmem:[%s10 + $0x188] sm:$0xff]
    %v2905 = vld [vmem:[%s10 + $0x190] sm:$0xff]
    %v2906 = vld [vmem:[%s10 + $0x198] sm:$0xff]
    %v2907 = vld [vmem:[%s10 + $0x1a0] sm:$0xff]
    %v2908 = vld [vmem:[%s10 + $0x1a8] sm:$0xff]
    %v2909 = vld [vmem:[%s10 + $0x1b0] sm:$0xff]
    %v2910 = vld [vmem:[%s10 + $0x1b8] sm:$0xff]
    %v2911 = vld [vmem:[%s10 + $0x1c0] sm:$0xff]
    %v2912 = vld [vmem:[%s10 + $0x1c8] sm:$0xff]
    %v2913 = vld [vmem:[%s10 + $0x1d0] sm:$0xff]
    %v2914 = vld [vmem:[%s10 + $0x1d8] sm:$0xff]
    %v2915 = vld [vmem:[%s10 + $0x1e0] sm:$0xff]
    %v2916 = vld [vmem:[%s10 + $0x1e8] sm:$0xff]
    %v2917 = vld [vmem:[%s10 + $0x1f0] sm:$0xff]
    %v2918 = vld [vmem:[%s10 + $0x1f8] sm:$0xff]
    %v2919 = vld [vmem:[%s10 + $0x200] sm:$0xff]
    %v2920 = vld [vmem:[%s10 + $0x208] sm:$0xff]
    %v2921 = vld [vmem:[%s10 + $0x210] sm:$0xff]
    %v2922 = vld [vmem:[%s10 + $0x218] sm:$0xff]
    %v2923 = vld [vmem:[%s10 + $0x220] sm:$0xff]
    %v2924 = vld [vmem:[%s10 + $0x228] sm:$0xff]
    %v2925 = vld [vmem:[%s10 + $0x230] sm:$0xff]
    %v2926 = vld [vmem:[%s10 + $0x238] sm:$0xff]
    %v2927 = vld [vmem:[%s10 + $0x240] sm:$0xff]
    %v2928 = vld [vmem:[%s10 + $0x248] sm:$0xff]
    %v2929 = vld [vmem:[%s10 + $0x250] sm:$0xff]
    %v2930 = vld [vmem:[%s10 + $0x258] sm:$0xff]
    %v2931 = vld [vmem:[%s10 + $0x260] sm:$0xff]
    %v2932 = vld [vmem:[%s10 + $0x268] sm:$0xff]
    %v2933 = vld [vmem:[%s10 + $0x270] sm:$0xff]
    %v2934 = vld [vmem:[%s10 + $0x278] sm:$0xff]
    %v2935 = vld [vmem:[%s10 + $0x280] sm:$0xff]
    %v2936 = vld [vmem:[%s10 + $0x288] sm:$0xff]
    %v2937 = vld [vmem:[%s10 + $0x290] sm:$0xff]
    %v2938 = vld [vmem:[%s10 + $0x298] sm:$0xff]
    %v2939 = vld [vmem:[%s10 + $0x2a0] sm:$0xff]
    %v2940 = vld [vmem:[%s10 + $0x2a8] sm:$0xff]
    %v2941 = vld [vmem:[%s10 + $0x2b0] sm:$0xff]
    %v2942 = vld [vmem:[%s10 + $0x2b8] sm:$0xff]
    %vm2943 = vcmask 785408
    %v2945 = vsel %vm2943, %v2854, 0
    %2947 = vmatprep.subr.mxu0 %v2856
    %2948 = vmatpush1.msra.mxu0 %v2855
    %2949 = vmatprep.subr.mxu0 %v2858
    %2950 = vmatpush1.msra.mxu0 %v2857
    %2951 = vmatprep.subr.mxu0 %v2860
    %2952 = vmatpush1.msra.mxu0 %v2859
    %2953 = vmatprep.subr.mxu0 %v2862
    %2954 = vmatpush1.msra.mxu0 %v2861
    %2955 = vmatprep.subr.mxu0 %v2864
    %2956 = vmatpush1.msra.mxu0 %v2863
    %2957 = vmatprep.subr.mxu0 %v2866
    %2958 = vmatpush1.msra.mxu0 %v2865
    %2959 = vmatprep.subr.mxu0 %v2868
    %2960 = vmatpush1.msra.mxu0 %v2867
    %2961 = vmatprep.subr.mxu0 %v2870
    %2962 = vmatpush1.msra.mxu0 %v2869
    %2963 = vmatprep.subr.mxu0 %v2872
    %2964 = vmatpush1.msra.mxu0 %v2871
    %2965 = vmatprep.subr.mxu0 %v2874
    %2966 = vmatpush1.msra.mxu0 %v2873
    %2967 = vmatprep.subr.mxu0 %v2876
    %2968 = vmatpush1.msra.mxu0 %v2875
    %2969 = vmatprep.subr.mxu0 %v2878
    %2970 = vmatpush1.msra.mxu0 %v2877
    %2971 = vmatprep.subr.mxu0 %v2880
    %2972 = vmatpush1.msra.mxu0 %v2879
    %2973 = vmatprep.subr.mxu0 %v2882
    %2974 = vmatpush1.msra.mxu0 %v2881
    %2975 = vmatprep.subr.mxu0 %v2884
    %2976 = vmatpush1.msra.mxu0 %v2883
    %2977 = vmatprep.subr.mxu0 %v2886
    %2978 = vmatpush1.msra.mxu0 %v2885
    %2979 = vmatprep.subr.mxu0 %v2888
    %2980 = vmatpush1.msra.mxu0 %v2887
    %2981 = vmatprep.subr.mxu0 %v2890
    %2982 = vmatpush1.msra.mxu0 %v2889
    %2983 = vmatprep.subr.mxu0 %v2892
    %2984 = vmatpush1.msra.mxu0 %v2891
    %2985 = vmatprep.subr.mxu0 %v2894
    %2986 = vmatpush1.msra.mxu0 %v2893
    %2987 = vmatprep.subr.mxu0 %v2896
    %2988 = vmatpush1.msra.mxu0 %v2895
    %2989 = vmatprep.subr.mxu0 %v2898
    %2990 = vmatpush1.msra.mxu0 %v2897
    %2991 = vmatprep.subr.mxu0 %v2900
    %2992 = vmatpush1.msra.mxu0 %v2899
    %2993 = vmatprep.subr.mxu0 %v2902
    %2994 = vmatpush1.msra.mxu0 %v2901
    %2995 = vmatprep.subr.mxu0 %v2904
    %2996 = vmatpush1.msra.mxu0 %v2903
    %2997 = vmatprep.subr.mxu0 %v2906
    %2998 = vmatpush1.msra.mxu0 %v2905
    %2999 = vmatprep.subr.mxu0 %v2908
    %3000 = vmatpush1.msra.mxu0 %v2907
    %3001 = vmatprep.subr.mxu0 %v2910
    %3002 = vmatpush1.msra.mxu0 %v2909
    %3003 = vmatprep.subr.mxu0 %v2912
    %3004 = vmatpush1.msra.mxu0 %v2911
    %3005 = vmatprep.subr.mxu0 %v2914
    %3006 = vmatpush1.msra.mxu0 %v2913
    %3007 = vmatprep.subr.mxu0 %v2916
    %3008 = vmatpush1.msra.mxu0 %v2915
    %3009 = vmatprep.subr.mxu0 %v2918
    %3010 = vmatpush1.msra.mxu0 %v2917
    %3011 = vmatprep.mubr.f32.mxu0 %v2853
    %3012 = vmatmul.mubr.f32.gmra.mrb[0].mxu0 %v2852
    %v3013 = vpop.f32.mrb[0].mxu0
    %v3014 = vadd.f32 0.0, %v3013
    %v3015 = vpop.f32.mrb[0].mxu0
    %v3016 = vadd.f32 0.0, %v3015
    %3017 = vdwg.mxu0
    %3018 = vmatprep.subr.mxu0 %v2920
    %3019 = vmatpush1.msra.mxu0 %v2919
    %3020 = vmatprep.subr.mxu0 %v2922
    %3021 = vmatpush1.msra.mxu0 %v2921
    %3022 = vmatprep.subr.mxu0 %v2924
    %3023 = vmatpush1.msra.mxu0 %v2923
    %3024 = vmatprep.subr.mxu0 %v2926
    %3025 = vmatpush1.msra.mxu0 %v2925
    %3026 = vmatprep.subr.mxu0 %v2928
    %3027 = vmatpush1.msra.mxu0 %v2927
    %3028 = vmatprep.subr.mxu0 %v2930
    %3029 = vmatpush1.msra.mxu0 %v2929
    %3030 = vmatprep.subr.mxu0 %v2932
    %3031 = vmatpush1.msra.mxu0 %v2931
    %3032 = vmatprep.subr.mxu0 %v2934
    %3033 = vmatpush1.msra.mxu0 %v2933
    %3034 = vmatprep.subr.mxu0 %v2936
    %3035 = vmatpush1.msra.mxu0 %v2935
    %3036 = vmatprep.subr.mxu0 %v2938
    %3037 = vmatpush1.msra.mxu0 %v2937
    %3038 = vmatprep.subr.mxu0 %v2940
    %3039 = vmatpush1.msra.mxu0 %v2939
    %3040 = vmatprep.subr.mxu0 %v2942
    %3041 = vmatpush1.msra.mxu0 %v2941
    %3042 = vmatprep.subr.mxu0 0.0
    %3043 = vmatpush1.msra.mxu0 0.0
    %3044 = vmatprep.subr.mxu0 0.0
    %3045 = vmatpush1.msra.mxu0 0.0
    %3046 = vmatprep.subr.mxu0 0.0
    %3047 = vmatpush1.msra.mxu0 0.0
    %3048 = vmatprep.subr.mxu0 0.0
    %3049 = vmatpush1.msra.mxu0 0.0
    %3050 = vmatprep.subr.mxu0 0.0
    %3051 = vmatpush1.msra.mxu0 0.0
    %3052 = vmatprep.subr.mxu0 0.0
    %3053 = vmatpush1.msra.mxu0 0.0
    %3054 = vmatprep.subr.mxu0 0.0
    %3055 = vmatpush1.msra.mxu0 0.0
    %3056 = vmatprep.subr.mxu0 0.0
    %3057 = vmatpush1.msra.mxu0 0.0
    %3058 = vmatprep.subr.mxu0 0.0
    %3059 = vmatpush1.msra.mxu0 0.0
    %3060 = vmatprep.subr.mxu0 0.0
    %3061 = vmatpush1.msra.mxu0 0.0
    %3062 = vmatprep.subr.mxu0 0.0
    %3063 = vmatpush1.msra.mxu0 0.0
    %3064 = vmatprep.subr.mxu0 0.0
    %3065 = vmatpush1.msra.mxu0 0.0
    %3066 = vmatprep.subr.mxu0 0.0
    %3067 = vmatpush1.msra.mxu0 0.0
    %3068 = vmatprep.subr.mxu0 0.0
    %3069 = vmatpush1.msra.mxu0 0.0
    %3070 = vmatprep.subr.mxu0 0.0
    %3071 = vmatpush1.msra.mxu0 0.0
    %3072 = vmatprep.subr.mxu0 0.0
    %3073 = vmatpush1.msra.mxu0 0.0
    %3074 = vmatprep.subr.mxu0 0.0
    %3075 = vmatpush1.msra.mxu0 0.0
    %3076 = vmatprep.subr.mxu0 0.0
    %3077 = vmatpush1.msra.mxu0 0.0
    %3078 = vmatprep.subr.mxu0 0.0
    %3079 = vmatpush1.msra.mxu0 0.0
    %3080 = vmatprep.subr.mxu0 0.0
    %3081 = vmatpush1.msra.mxu0 0.0
    %3082 = vmatprep.mubr.f32.mxu0 0.0
    %3083 = vmatmul.mubr.f32.gmra.mrb[0].mxu0 %v2945
    %v3084 = vpop.f32.mrb[0].mxu0
    %v3085 = vadd.f32 %v3014, %v3084
    %v3086 = vpop.f32.mrb[0].mxu0
    %v3087 = vadd.f32 %v3016, %v3086
    %3088 = vdwg.mxu0
    %s3089 = scalar_lea.vmem %s10, 704
    %v3090 = vld [vmem:[%s3089] sm:$0xff]
    %v3091 = vld [vmem:[%s3089 + $0x8] sm:$0xff]
    %v3092 = vld [vmem:[%s3089 + $0x10] sm:$0xff]
    %v3093 = vld [vmem:[%s3089 + $0x18] sm:$0xff]
    %v3094 = vld [vmem:[%s3089 + $0x20] sm:$0xff]
    %v3095 = vld [vmem:[%s3089 + $0x28] sm:$0xff]
    %v3096 = vld [vmem:[%s3089 + $0x30] sm:$0xff]
    %v3097 = vld [vmem:[%s3089 + $0x38] sm:$0xff]
    %v3098 = vld [vmem:[%s3089 + $0x40] sm:$0xff]
    %v3099 = vld [vmem:[%s3089 + $0x48] sm:$0xff]
    %v3100 = vld [vmem:[%s3089 + $0x50] sm:$0xff]
    %v3101 = vld [vmem:[%s3089 + $0x58] sm:$0xff]
    %v3102 = vld [vmem:[%s3089 + $0x60] sm:$0xff]
    %v3103 = vld [vmem:[%s3089 + $0x68] sm:$0xff]
    %v3104 = vld [vmem:[%s3089 + $0x70] sm:$0xff]
    %v3105 = vld [vmem:[%s3089 + $0x78] sm:$0xff]
    %v3106 = vld [vmem:[%s3089 + $0x80] sm:$0xff]
    %v3107 = vld [vmem:[%s3089 + $0x88] sm:$0xff]
    %v3108 = vld [vmem:[%s3089 + $0x90] sm:$0xff]
    %v3109 = vld [vmem:[%s3089 + $0x98] sm:$0xff]
    %v3110 = vld [vmem:[%s3089 + $0xa0] sm:$0xff]
    %v3111 = vld [vmem:[%s3089 + $0xa8] sm:$0xff]
    %v3112 = vld [vmem:[%s3089 + $0xb0] sm:$0xff]
    %v3113 = vld [vmem:[%s3089 + $0xb8] sm:$0xff]
    %v3114 = vld [vmem:[%s3089 + $0xc0] sm:$0xff]
    %v3115 = vld [vmem:[%s3089 + $0xc8] sm:$0xff]
    %v3116 = vld [vmem:[%s3089 + $0xd0] sm:$0xff]
    %v3117 = vld [vmem:[%s3089 + $0xd8] sm:$0xff]
    %v3118 = vld [vmem:[%s3089 + $0xe0] sm:$0xff]
    %v3119 = vld [vmem:[%s3089 + $0xe8] sm:$0xff]
    %v3120 = vld [vmem:[%s3089 + $0xf0] sm:$0xff]
    %v3121 = vld [vmem:[%s3089 + $0xf8] sm:$0xff]
    %v3122 = vld [vmem:[%s3089 + $0x100] sm:$0xff]
    %v3123 = vld [vmem:[%s3089 + $0x108] sm:$0xff]
    %v3124 = vld [vmem:[%s3089 + $0x110] sm:$0xff]
    %v3125 = vld [vmem:[%s3089 + $0x118] sm:$0xff]
    %v3126 = vld [vmem:[%s3089 + $0x120] sm:$0xff]
    %v3127 = vld [vmem:[%s3089 + $0x128] sm:$0xff]
    %v3128 = vld [vmem:[%s3089 + $0x130] sm:$0xff]
    %v3129 = vld [vmem:[%s3089 + $0x138] sm:$0xff]
    %v3130 = vld [vmem:[%s3089 + $0x140] sm:$0xff]
    %v3131 = vld [vmem:[%s3089 + $0x148] sm:$0xff]
    %v3132 = vld [vmem:[%s3089 + $0x150] sm:$0xff]
    %v3133 = vld [vmem:[%s3089 + $0x158] sm:$0xff]
    %v3134 = vld [vmem:[%s3089 + $0x160] sm:$0xff]
    %v3135 = vld [vmem:[%s3089 + $0x168] sm:$0xff]
    %v3136 = vld [vmem:[%s3089 + $0x170] sm:$0xff]
    %v3137 = vld [vmem:[%s3089 + $0x178] sm:$0xff]
    %v3138 = vld [vmem:[%s3089 + $0x180] sm:$0xff]
    %v3139 = vld [vmem:[%s3089 + $0x188] sm:$0xff]
    %v3140 = vld [vmem:[%s3089 + $0x190] sm:$0xff]
    %v3141 = vld [vmem:[%s3089 + $0x198] sm:$0xff]
    %v3142 = vld [vmem:[%s3089 + $0x1a0] sm:$0xff]
    %v3143 = vld [vmem:[%s3089 + $0x1a8] sm:$0xff]
    %v3144 = vld [vmem:[%s3089 + $0x1b0] sm:$0xff]
    %v3145 = vld [vmem:[%s3089 + $0x1b8] sm:$0xff]
    %v3146 = vld [vmem:[%s3089 + $0x1c0] sm:$0xff]
    %v3147 = vld [vmem:[%s3089 + $0x1c8] sm:$0xff]
    %v3148 = vld [vmem:[%s3089 + $0x1d0] sm:$0xff]
    %v3149 = vld [vmem:[%s3089 + $0x1d8] sm:$0xff]
    %v3150 = vld [vmem:[%s3089 + $0x1e0] sm:$0xff]
    %v3151 = vld [vmem:[%s3089 + $0x1e8] sm:$0xff]
    %v3152 = vld [vmem:[%s3089 + $0x1f0] sm:$0xff]
    %v3153 = vld [vmem:[%s3089 + $0x1f8] sm:$0xff]
    %v3154 = vld [vmem:[%s3089 + $0x200] sm:$0xff]
    %v3155 = vld [vmem:[%s3089 + $0x208] sm:$0xff]
    %v3156 = vld [vmem:[%s3089 + $0x210] sm:$0xff]
    %v3157 = vld [vmem:[%s3089 + $0x218] sm:$0xff]
    %v3158 = vld [vmem:[%s3089 + $0x220] sm:$0xff]
    %v3159 = vld [vmem:[%s3089 + $0x228] sm:$0xff]
    %v3160 = vld [vmem:[%s3089 + $0x230] sm:$0xff]
    %v3161 = vld [vmem:[%s3089 + $0x238] sm:$0xff]
    %v3162 = vld [vmem:[%s3089 + $0x240] sm:$0xff]
    %v3163 = vld [vmem:[%s3089 + $0x248] sm:$0xff]
    %v3164 = vld [vmem:[%s3089 + $0x250] sm:$0xff]
    %v3165 = vld [vmem:[%s3089 + $0x258] sm:$0xff]
    %v3166 = vld [vmem:[%s3089 + $0x260] sm:$0xff]
    %v3167 = vld [vmem:[%s3089 + $0x268] sm:$0xff]
    %v3168 = vld [vmem:[%s3089 + $0x270] sm:$0xff]
    %v3169 = vld [vmem:[%s3089 + $0x278] sm:$0xff]
    %v3170 = vld [vmem:[%s3089 + $0x280] sm:$0xff]
    %v3171 = vld [vmem:[%s3089 + $0x288] sm:$0xff]
    %v3172 = vld [vmem:[%s3089 + $0x290] sm:$0xff]
    %v3173 = vld [vmem:[%s3089 + $0x298] sm:$0xff]
    %v3174 = vld [vmem:[%s3089 + $0x2a0] sm:$0xff]
    %v3175 = vld [vmem:[%s3089 + $0x2a8] sm:$0xff]
    %v3176 = vld [vmem:[%s3089 + $0x2b0] sm:$0xff]
    %v3177 = vld [vmem:[%s3089 + $0x2b8] sm:$0xff]
    %3178 = vmatprep.subr.mxu0 %v3091
    %3179 = vmatpush1.msra.mxu0 %v3090
    %3180 = vmatprep.subr.mxu0 %v3093
    %3181 = vmatpush1.msra.mxu0 %v3092
    %3182 = vmatprep.subr.mxu0 %v3095
    %3183 = vmatpush1.msra.mxu0 %v3094
    %3184 = vmatprep.subr.mxu0 %v3097
    %3185 = vmatpush1.msra.mxu0 %v3096
    %3186 = vmatprep.subr.mxu0 %v3099
    %3187 = vmatpush1.msra.mxu0 %v3098
    %3188 = vmatprep.subr.mxu0 %v3101
    %3189 = vmatpush1.msra.mxu0 %v3100
    %3190 = vmatprep.subr.mxu0 %v3103
    %3191 = vmatpush1.msra.mxu0 %v3102
    %3192 = vmatprep.subr.mxu0 %v3105
    %3193 = vmatpush1.msra.mxu0 %v3104
    %3194 = vmatprep.subr.mxu0 %v3107
    %3195 = vmatpush1.msra.mxu0 %v3106
    %3196 = vmatprep.subr.mxu0 %v3109
    %3197 = vmatpush1.msra.mxu0 %v3108
    %3198 = vmatprep.subr.mxu0 %v3111
    %3199 = vmatpush1.msra.mxu0 %v3110
    %3200 = vmatprep.subr.mxu0 %v3113
    %3201 = vmatpush1.msra.mxu0 %v3112
    %3202 = vmatprep.subr.mxu0 %v3115
    %3203 = vmatpush1.msra.mxu0 %v3114
    %3204 = vmatprep.subr.mxu0 %v3117
    %3205 = vmatpush1.msra.mxu0 %v3116
    %3206 = vmatprep.subr.mxu0 %v3119
    %3207 = vmatpush1.msra.mxu0 %v3118
    %3208 = vmatprep.subr.mxu0 %v3121
    %3209 = vmatpush1.msra.mxu0 %v3120
    %3210 = vmatprep.subr.mxu0 %v3123
    %3211 = vmatpush1.msra.mxu0 %v3122
    %3212 = vmatprep.subr.mxu0 %v3125
    %3213 = vmatpush1.msra.mxu0 %v3124
    %3214 = vmatprep.subr.mxu0 %v3127
    %3215 = vmatpush1.msra.mxu0 %v3126
    %3216 = vmatprep.subr.mxu0 %v3129
    %3217 = vmatpush1.msra.mxu0 %v3128
    %3218 = vmatprep.subr.mxu0 %v3131
    %3219 = vmatpush1.msra.mxu0 %v3130
    %3220 = vmatprep.subr.mxu0 %v3133
    %3221 = vmatpush1.msra.mxu0 %v3132
    %3222 = vmatprep.subr.mxu0 %v3135
    %3223 = vmatpush1.msra.mxu0 %v3134
    %3224 = vmatprep.subr.mxu0 %v3137
    %3225 = vmatpush1.msra.mxu0 %v3136
    %3226 = vmatprep.subr.mxu0 %v3139
    %3227 = vmatpush1.msra.mxu0 %v3138
    %3228 = vmatprep.subr.mxu0 %v3141
    %3229 = vmatpush1.msra.mxu0 %v3140
    %3230 = vmatprep.subr.mxu0 %v3143
    %3231 = vmatpush1.msra.mxu0 %v3142
    %3232 = vmatprep.subr.mxu0 %v3145
    %3233 = vmatpush1.msra.mxu0 %v3144
    %3234 = vmatprep.subr.mxu0 %v3147
    %3235 = vmatpush1.msra.mxu0 %v3146
    %3236 = vmatprep.subr.mxu0 %v3149
    %3237 = vmatpush1.msra.mxu0 %v3148
    %3238 = vmatprep.subr.mxu0 %v3151
    %3239 = vmatpush1.msra.mxu0 %v3150
    %3240 = vmatprep.subr.mxu0 %v3153
    %3241 = vmatpush1.msra.mxu0 %v3152
    %3242 = vmatprep.mubr.f32.mxu0 %v2853
    %3243 = vmatmul.mubr.f32.gmra.mrb[0].mxu0 %v2852
    %v3244 = vpop.f32.mrb[0].mxu0
    %v3245 = vadd.f32 0.0, %v3244
    %v3246 = vpop.f32.mrb[0].mxu0
    %v3247 = vadd.f32 0.0, %v3246
    %3248 = vdwg.mxu0
    %3249 = vmatprep.subr.mxu0 %v3155
    %3250 = vmatpush1.msra.mxu0 %v3154
    %3251 = vmatprep.subr.mxu0 %v3157
    %3252 = vmatpush1.msra.mxu0 %v3156
    %3253 = vmatprep.subr.mxu0 %v3159
    %3254 = vmatpush1.msra.mxu0 %v3158
    %3255 = vmatprep.subr.mxu0 %v3161
    %3256 = vmatpush1.msra.mxu0 %v3160
    %3257 = vmatprep.subr.mxu0 %v3163
    %3258 = vmatpush1.msra.mxu0 %v3162
    %3259 = vmatprep.subr.mxu0 %v3165
    %3260 = vmatpush1.msra.mxu0 %v3164
    %3261 = vmatprep.subr.mxu0 %v3167
    %3262 = vmatpush1.msra.mxu0 %v3166
    %3263 = vmatprep.subr.mxu0 %v3169
    %3264 = vmatpush1.msra.mxu0 %v3168
    %3265 = vmatprep.subr.mxu0 %v3171
    %3266 = vmatpush1.msra.mxu0 %v3170
    %3267 = vmatprep.subr.mxu0 %v3173
    %3268 = vmatpush1.msra.mxu0 %v3172
    %3269 = vmatprep.subr.mxu0 %v3175
    %3270 = vmatpush1.msra.mxu0 %v3174
    %3271 = vmatprep.subr.mxu0 %v3177
    %3272 = vmatpush1.msra.mxu0 %v3176
    %3273 = vmatprep.subr.mxu0 0.0
    %3274 = vmatpush1.msra.mxu0 0.0
    %3275 = vmatprep.subr.mxu0 0.0
    %3276 = vmatpush1.msra.mxu0 0.0
    %3277 = vmatprep.subr.mxu0 0.0
    %3278 = vmatpush1.msra.mxu0 0.0
    %3279 = vmatprep.subr.mxu0 0.0
    %3280 = vmatpush1.msra.mxu0 0.0
    %3281 = vmatprep.subr.mxu0 0.0
    %3282 = vmatpush1.msra.mxu0 0.0
    %3283 = vmatprep.subr.mxu0 0.0
    %3284 = vmatpush1.msra.mxu0 0.0
    %3285 = vmatprep.subr.mxu0 0.0
    %3286 = vmatpush1.msra.mxu0 0.0
    %3287 = vmatprep.subr.mxu0 0.0
    %3288 = vmatpush1.msra.mxu0 0.0
    %3289 = vmatprep.subr.mxu0 0.0
    %3290 = vmatpush1.msra.mxu0 0.0
    %3291 = vmatprep.subr.mxu0 0.0
    %3292 = vmatpush1.msra.mxu0 0.0
    %3293 = vmatprep.subr.mxu0 0.0
    %3294 = vmatpush1.msra.mxu0 0.0
    %3295 = vmatprep.subr.mxu0 0.0
    %3296 = vmatpush1.msra.mxu0 0.0
    %3297 = vmatprep.subr.mxu0 0.0
    %3298 = vmatpush1.msra.mxu0 0.0
    %3299 = vmatprep.subr.mxu0 0.0
    %3300 = vmatpush1.msra.mxu0 0.0
    %3301 = vmatprep.subr.mxu0 0.0
    %3302 = vmatpush1.msra.mxu0 0.0
    %3303 = vmatprep.subr.mxu0 0.0
    %3304 = vmatpush1.msra.mxu0 0.0
    %3305 = vmatprep.subr.mxu0 0.0
    %3306 = vmatpush1.msra.mxu0 0.0
    %3307 = vmatprep.subr.mxu0 0.0
    %3308 = vmatpush1.msra.mxu0 0.0
    %3309 = vmatprep.subr.mxu0 0.0
    %3310 = vmatpush1.msra.mxu0 0.0
    %3311 = vmatprep.subr.mxu0 0.0
    %3312 = vmatpush1.msra.mxu0 0.0
    %3313 = vmatprep.mubr.f32.mxu0 0.0
    %3314 = vmatmul.mubr.f32.gmra.mrb[0].mxu0 %v2945
    %v3315 = vpop.f32.mrb[0].mxu0
    %v3316 = vadd.f32 %v3245, %v3315
    %v3317 = vpop.f32.mrb[0].mxu0
    %v3318 = vadd.f32 %v3247, %v3317
    %3319 = vdwg.mxu0
    %v3320 = vmax.f32 %v3085, %v3316
    %v3321 = vmax.f32 %v3087, %v3318
    %3322 = vst [vmem:[#allocation3] sm:$0x1f] %v3320
    %vm3323 = vcmask 258048
    %3324 = vst.msk [vmem:[#allocation3 + $0x8] sm:$0x1f] %vm3323, %v3321
    %v3325 = vld [vmem:[#allocation3] sm:$0x7]
    %v3326 = vld [vmem:[#allocation3 + $0x8] sm:$0x7]
    %v3327 = vld [vmem:[#allocation8] sm:$0xff]
    %v3328 = vld [vmem:[#allocation8 + $0x8] sm:$0xff]
    %v3329 = vld [vmem:[#allocation8 + $0x10] sm:$0xff]
    %v3330 = vld [vmem:[#allocation8 + $0x18] sm:$0xff]
    %v3331 = vld [vmem:[#allocation8 + $0x20] sm:$0xff]
    %v3332 = vld [vmem:[#allocation8 + $0x28] sm:$0xff]
    %v3333 = vld [vmem:[#allocation8 + $0x30] sm:$0xff]
    %v3334 = vld [vmem:[#allocation8 + $0x38] sm:$0xff]
    %v3335 = vld [vmem:[#allocation8 + $0x40] sm:$0xff]
    %v3336 = vld [vmem:[#allocation8 + $0x48] sm:$0xff]
    %v3337 = vld [vmem:[#allocation8 + $0x50] sm:$0xff]
    %v3338 = vld [vmem:[#allocation8 + $0x58] sm:$0xff]
    %v3339 = vld [vmem:[#allocation8 + $0x60] sm:$0xff]
    %v3340 = vld [vmem:[#allocation8 + $0x68] sm:$0xff]
    %v3341 = vld [vmem:[#allocation8 + $0x70] sm:$0xff]
    %v3342 = vld [vmem:[#allocation8 + $0x78] sm:$0xff]
    %v3343 = vld [vmem:[#allocation8 + $0x80] sm:$0xff]
    %v3344 = vld [vmem:[#allocation8 + $0x88] sm:$0xff]
    %v3345 = vld [vmem:[#allocation8 + $0x90] sm:$0xff]
    %v3346 = vld [vmem:[#allocation8 + $0x98] sm:$0xff]
    %v3347 = vld [vmem:[#allocation8 + $0xa0] sm:$0xff]
    %v3348 = vld [vmem:[#allocation8 + $0xa8] sm:$0xff]
    %v3349 = vld [vmem:[#allocation8 + $0xb0] sm:$0xff]
    %v3350 = vld [vmem:[#allocation8 + $0xb8] sm:$0xff]
    %v3351 = vld [vmem:[#allocation8 + $0xc0] sm:$0xff]
    %v3352 = vld [vmem:[#allocation8 + $0xc8] sm:$0xff]
    %v3353 = vld [vmem:[#allocation8 + $0xd0] sm:$0xff]
    %v3354 = vld [vmem:[#allocation8 + $0xd8] sm:$0xff]
    %v3355 = vld [vmem:[#allocation8 + $0xe0] sm:$0xff]
    %v3356 = vld [vmem:[#allocation8 + $0xe8] sm:$0xff]
    %v3357 = vld [vmem:[#allocation8 + $0xf0] sm:$0xff]
    %v3358 = vld [vmem:[#allocation8 + $0xf8] sm:$0xff]
    %v3359 = vld [vmem:[#allocation8 + $0x100] sm:$0xff]
    %v3360 = vld [vmem:[#allocation8 + $0x108] sm:$0xff]
    %v3361 = vld [vmem:[#allocation8 + $0x110] sm:$0xff]
    %v3362 = vld [vmem:[#allocation8 + $0x118] sm:$0xff]
    %v3363 = vld [vmem:[#allocation8 + $0x120] sm:$0xff]
    %v3364 = vld [vmem:[#allocation8 + $0x128] sm:$0xff]
    %v3365 = vld [vmem:[#allocation8 + $0x130] sm:$0xff]
    %v3366 = vld [vmem:[#allocation8 + $0x138] sm:$0xff]
    %v3367 = vld [vmem:[#allocation3] sm:$0xe]
    %v3368 = vld [vmem:[#allocation3 + $0x8] sm:$0xe]
    %s3369 = scalar_lea.vmem [#allocation8], 320
    %v3370 = vld [vmem:[%s3369] sm:$0xff]
    %v3371 = vld [vmem:[%s3369 + $0x8] sm:$0xff]
    %v3372 = vld [vmem:[%s3369 + $0x10] sm:$0xff]
    %v3373 = vld [vmem:[%s3369 + $0x18] sm:$0xff]
    %v3374 = vld [vmem:[%s3369 + $0x20] sm:$0xff]
    %v3375 = vld [vmem:[%s3369 + $0x28] sm:$0xff]
    %v3376 = vld [vmem:[%s3369 + $0x30] sm:$0xff]
    %v3377 = vld [vmem:[%s3369 + $0x38] sm:$0xff]
    %v3378 = vld [vmem:[%s3369 + $0x40] sm:$0xff]
    %v3379 = vld [vmem:[%s3369 + $0x48] sm:$0xff]
    %v3380 = vld [vmem:[%s3369 + $0x50] sm:$0xff]
    %v3381 = vld [vmem:[%s3369 + $0x58] sm:$0xff]
    %v3382 = vld [vmem:[%s3369 + $0x60] sm:$0xff]
    %v3383 = vld [vmem:[%s3369 + $0x68] sm:$0xff]
    %v3384 = vld [vmem:[%s3369 + $0x70] sm:$0xff]
    %v3385 = vld [vmem:[%s3369 + $0x78] sm:$0xff]
    %v3386 = vld [vmem:[%s3369 + $0x80] sm:$0xff]
    %v3387 = vld [vmem:[%s3369 + $0x88] sm:$0xff]
    %v3388 = vld [vmem:[%s3369 + $0x90] sm:$0xff]
    %v3389 = vld [vmem:[%s3369 + $0x98] sm:$0xff]
    %v3390 = vld [vmem:[%s3369 + $0xa0] sm:$0xff]
    %v3391 = vld [vmem:[%s3369 + $0xa8] sm:$0xff]
    %v3392 = vld [vmem:[%s3369 + $0xb0] sm:$0xff]
    %v3393 = vld [vmem:[%s3369 + $0xb8] sm:$0xff]
    %v3394 = vld [vmem:[%s3369 + $0xc0] sm:$0xff]
    %v3395 = vld [vmem:[%s3369 + $0xc8] sm:$0xff]
    %v3396 = vld [vmem:[%s3369 + $0xd0] sm:$0xff]
    %v3397 = vld [vmem:[%s3369 + $0xd8] sm:$0xff]
    %v3398 = vld [vmem:[%s3369 + $0xe0] sm:$0xff]
    %v3399 = vld [vmem:[%s3369 + $0xe8] sm:$0xff]
    %v3400 = vld [vmem:[%s3369 + $0xf0] sm:$0xff]
    %v3401 = vld [vmem:[%s3369 + $0xf8] sm:$0xff]
    %v3402 = vld [vmem:[%s3369 + $0x100] sm:$0xff]
    %v3403 = vld [vmem:[%s3369 + $0x108] sm:$0xff]
    %v3404 = vld [vmem:[%s3369 + $0x110] sm:$0xff]
    %v3405 = vld [vmem:[%s3369 + $0x118] sm:$0xff]
    %v3406 = vld [vmem:[%s3369 + $0x120] sm:$0xff]
    %v3407 = vld [vmem:[%s3369 + $0x128] sm:$0xff]
    %v3408 = vld [vmem:[%s3369 + $0x130] sm:$0xff]
    %v3409 = vld [vmem:[%s3369 + $0x138] sm:$0xff]
    %v3412 = vrot.slane %v3367, 1
    %v3413 = vrot.slane %v3368, 1
    %v3415 = vsel %vm1318, %v3413, 0
    %3417 = vmatprep.subr.mxu0 %v3371
    %3418 = vmatpush1.msra.mxu0 %v3370
    %3419 = vmatprep.subr.mxu0 %v3373
    %3420 = vmatpush1.msra.mxu0 %v3372
    %3421 = vmatprep.subr.mxu0 %v3375
    %3422 = vmatpush1.msra.mxu0 %v3374
    %3423 = vmatprep.subr.mxu0 %v3377
    %3424 = vmatpush1.msra.mxu0 %v3376
    %3425 = vmatprep.subr.mxu0 %v3379
    %3426 = vmatpush1.msra.mxu0 %v3378
    %3427 = vmatprep.subr.mxu0 %v3381
    %3428 = vmatpush1.msra.mxu0 %v3380
    %3429 = vmatprep.subr.mxu0 %v3383
    %3430 = vmatpush1.msra.mxu0 %v3382
    %3431 = vmatprep.subr.mxu0 %v3385
    %3432 = vmatpush1.msra.mxu0 %v3384
    %3433 = vmatprep.subr.mxu0 %v3387
    %3434 = vmatpush1.msra.mxu0 %v3386
    %3435 = vmatprep.subr.mxu0 %v3389
    %3436 = vmatpush1.msra.mxu0 %v3388
    %3437 = vmatprep.subr.mxu0 %v3391
    %3438 = vmatpush1.msra.mxu0 %v3390
    %3439 = vmatprep.subr.mxu0 %v3393
    %3440 = vmatpush1.msra.mxu0 %v3392
    %3441 = vmatprep.subr.mxu0 %v3395
    %3442 = vmatpush1.msra.mxu0 %v3394
    %3443 = vmatprep.subr.mxu0 %v3397
    %3444 = vmatpush1.msra.mxu0 %v3396
    %3445 = vmatprep.subr.mxu0 %v3399
    %3446 = vmatpush1.msra.mxu0 %v3398
    %3447 = vmatprep.subr.mxu0 %v3401
    %3448 = vmatpush1.msra.mxu0 %v3400
    %3449 = vmatprep.subr.mxu0 %v3403
    %3450 = vmatpush1.msra.mxu0 %v3402
    %3451 = vmatprep.subr.mxu0 %v3405
    %3452 = vmatpush1.msra.mxu0 %v3404
    %3453 = vmatprep.subr.mxu0 %v3407
    %3454 = vmatpush1.msra.mxu0 %v3406
    %3455 = vmatprep.subr.mxu0 %v3409
    %3456 = vmatpush1.msra.mxu0 %v3408
    %3457 = vmatprep.subr.mxu0 0.0
    %3458 = vmatpush1.msra.mxu0 0.0
    %3459 = vmatprep.subr.mxu0 0.0
    %3460 = vmatpush1.msra.mxu0 0.0
    %3461 = vmatprep.subr.mxu0 0.0
    %3462 = vmatpush1.msra.mxu0 0.0
    %3463 = vmatprep.subr.mxu0 0.0
    %3464 = vmatpush1.msra.mxu0 0.0
    %3465 = vmatprep.subr.mxu0 0.0
    %3466 = vmatpush1.msra.mxu0 0.0
    %3467 = vmatprep.subr.mxu0 0.0
    %3468 = vmatpush1.msra.mxu0 0.0
    %3469 = vmatprep.subr.mxu0 0.0
    %3470 = vmatpush1.msra.mxu0 0.0
    %3471 = vmatprep.subr.mxu0 0.0
    %3472 = vmatpush1.msra.mxu0 0.0
    %3473 = vmatprep.subr.mxu0 0.0
    %3474 = vmatpush1.msra.mxu0 0.0
    %3475 = vmatprep.subr.mxu0 0.0
    %3476 = vmatpush1.msra.mxu0 0.0
    %3477 = vmatprep.subr.mxu0 0.0
    %3478 = vmatpush1.msra.mxu0 0.0
    %3479 = vmatprep.subr.mxu0 0.0
    %3480 = vmatpush1.msra.mxu0 0.0
    %3481 = vmatprep.mubr.f32.mxu0 %v3415
    %3482 = vmatmul.mubr.f32.gmra.mrb[0].mxu0 %v3412
    %v3483 = vpop.f32.mrb[0].mxu0
    %v3484 = vadd.f32 0.0, %v3483
    %v3485 = vpop.f32.mrb[0].mxu0
    %v3486 = vadd.f32 0.0, %v3485
    %3487 = vdwg.mxu0
    %v3489 = vsel %vm1318, %v3326, 0
    %3491 = vmatprep.subr.mxu0 %v3328
    %3492 = vmatpush1.msra.mxu0 %v3327
    %3493 = vmatprep.subr.mxu0 %v3330
    %3494 = vmatpush1.msra.mxu0 %v3329
    %3495 = vmatprep.subr.mxu0 %v3332
    %3496 = vmatpush1.msra.mxu0 %v3331
    %3497 = vmatprep.subr.mxu0 %v3334
    %3498 = vmatpush1.msra.mxu0 %v3333
    %3499 = vmatprep.subr.mxu0 %v3336
    %3500 = vmatpush1.msra.mxu0 %v3335
    %3501 = vmatprep.subr.mxu0 %v3338
    %3502 = vmatpush1.msra.mxu0 %v3337
    %3503 = vmatprep.subr.mxu0 %v3340
    %3504 = vmatpush1.msra.mxu0 %v3339
    %3505 = vmatprep.subr.mxu0 %v3342
    %3506 = vmatpush1.msra.mxu0 %v3341
    %3507 = vmatprep.subr.mxu0 %v3344
    %3508 = vmatpush1.msra.mxu0 %v3343
    %3509 = vmatprep.subr.mxu0 %v3346
    %3510 = vmatpush1.msra.mxu0 %v3345
    %3511 = vmatprep.subr.mxu0 %v3348
    %3512 = vmatpush1.msra.mxu0 %v3347
    %3513 = vmatprep.subr.mxu0 %v3350
    %3514 = vmatpush1.msra.mxu0 %v3349
    %3515 = vmatprep.subr.mxu0 %v3352
    %3516 = vmatpush1.msra.mxu0 %v3351
    %3517 = vmatprep.subr.mxu0 %v3354
    %3518 = vmatpush1.msra.mxu0 %v3353
    %3519 = vmatprep.subr.mxu0 %v3356
    %3520 = vmatpush1.msra.mxu0 %v3355
    %3521 = vmatprep.subr.mxu0 %v3358
    %3522 = vmatpush1.msra.mxu0 %v3357
    %3523 = vmatprep.subr.mxu0 %v3360
    %3524 = vmatpush1.msra.mxu0 %v3359
    %3525 = vmatprep.subr.mxu0 %v3362
    %3526 = vmatpush1.msra.mxu0 %v3361
    %3527 = vmatprep.subr.mxu0 %v3364
    %3528 = vmatpush1.msra.mxu0 %v3363
    %3529 = vmatprep.subr.mxu0 %v3366
    %3530 = vmatpush1.msra.mxu0 %v3365
    %3531 = vmatprep.subr.mxu0 0.0
    %3532 = vmatpush1.msra.mxu0 0.0
    %3533 = vmatprep.subr.mxu0 0.0
    %3534 = vmatpush1.msra.mxu0 0.0
    %3535 = vmatprep.subr.mxu0 0.0
    %3536 = vmatpush1.msra.mxu0 0.0
    %3537 = vmatprep.subr.mxu0 0.0
    %3538 = vmatpush1.msra.mxu0 0.0
    %3539 = vmatprep.subr.mxu0 0.0
    %3540 = vmatpush1.msra.mxu0 0.0
    %3541 = vmatprep.subr.mxu0 0.0
    %3542 = vmatpush1.msra.mxu0 0.0
    %3543 = vmatprep.subr.mxu0 0.0
    %3544 = vmatpush1.msra.mxu0 0.0
    %3545 = vmatprep.subr.mxu0 0.0
    %3546 = vmatpush1.msra.mxu0 0.0
    %3547 = vmatprep.subr.mxu0 0.0
    %3548 = vmatpush1.msra.mxu0 0.0
    %3549 = vmatprep.subr.mxu0 0.0
    %3550 = vmatpush1.msra.mxu0 0.0
    %3551 = vmatprep.subr.mxu0 0.0
    %3552 = vmatpush1.msra.mxu0 0.0
    %3553 = vmatprep.subr.mxu0 0.0
    %3554 = vmatpush1.msra.mxu0 0.0
    %3555 = vmatprep.mubr.f32.mxu0 %v3489
    %3556 = vmatmul.mubr.f32.gmra.mrb[0].mxu0 %v3325
    %v3557 = vpop.f32.mrb[0].mxu0
    %v3558 = vadd.f32 %v3484, %v3557
    %v3559 = vpop.f32.mrb[0].mxu0
    %v3560 = vadd.f32 %v3486, %v3559
    %3561 = vdwg.mxu0
    %v3562 = vld [vmem:[#allocation3] sm:$0x1c]
    %v3563 = vld [vmem:[#allocation3 + $0x8] sm:$0x1c]
    %s3564 = scalar_lea.vmem [#allocation8], 640
    %v3565 = vld [vmem:[%s3564] sm:$0xff]
    %v3566 = vld [vmem:[%s3564 + $0x8] sm:$0xff]
    %v3567 = vld [vmem:[%s3564 + $0x10] sm:$0xff]
    %v3568 = vld [vmem:[%s3564 + $0x18] sm:$0xff]
    %v3569 = vld [vmem:[%s3564 + $0x20] sm:$0xff]
    %v3570 = vld [vmem:[%s3564 + $0x28] sm:$0xff]
    %v3571 = vld [vmem:[%s3564 + $0x30] sm:$0xff]
    %v3572 = vld [vmem:[%s3564 + $0x38] sm:$0xff]
    %v3573 = vld [vmem:[%s3564 + $0x40] sm:$0xff]
    %v3574 = vld [vmem:[%s3564 + $0x48] sm:$0xff]
    %v3575 = vld [vmem:[%s3564 + $0x50] sm:$0xff]
    %v3576 = vld [vmem:[%s3564 + $0x58] sm:$0xff]
    %v3577 = vld [vmem:[%s3564 + $0x60] sm:$0xff]
    %v3578 = vld [vmem:[%s3564 + $0x68] sm:$0xff]
    %v3579 = vld [vmem:[%s3564 + $0x70] sm:$0xff]
    %v3580 = vld [vmem:[%s3564 + $0x78] sm:$0xff]
    %v3581 = vld [vmem:[%s3564 + $0x80] sm:$0xff]
    %v3582 = vld [vmem:[%s3564 + $0x88] sm:$0xff]
    %v3583 = vld [vmem:[%s3564 + $0x90] sm:$0xff]
    %v3584 = vld [vmem:[%s3564 + $0x98] sm:$0xff]
    %v3585 = vld [vmem:[%s3564 + $0xa0] sm:$0xff]
    %v3586 = vld [vmem:[%s3564 + $0xa8] sm:$0xff]
    %v3587 = vld [vmem:[%s3564 + $0xb0] sm:$0xff]
    %v3588 = vld [vmem:[%s3564 + $0xb8] sm:$0xff]
    %v3589 = vld [vmem:[%s3564 + $0xc0] sm:$0xff]
    %v3590 = vld [vmem:[%s3564 + $0xc8] sm:$0xff]
    %v3591 = vld [vmem:[%s3564 + $0xd0] sm:$0xff]
    %v3592 = vld [vmem:[%s3564 + $0xd8] sm:$0xff]
    %v3593 = vld [vmem:[%s3564 + $0xe0] sm:$0xff]
    %v3594 = vld [vmem:[%s3564 + $0xe8] sm:$0xff]
    %v3595 = vld [vmem:[%s3564 + $0xf0] sm:$0xff]
    %v3596 = vld [vmem:[%s3564 + $0xf8] sm:$0xff]
    %v3597 = vld [vmem:[%s3564 + $0x100] sm:$0xff]
    %v3598 = vld [vmem:[%s3564 + $0x108] sm:$0xff]
    %v3599 = vld [vmem:[%s3564 + $0x110] sm:$0xff]
    %v3600 = vld [vmem:[%s3564 + $0x118] sm:$0xff]
    %v3601 = vld [vmem:[%s3564 + $0x120] sm:$0xff]
    %v3602 = vld [vmem:[%s3564 + $0x128] sm:$0xff]
    %v3603 = vld [vmem:[%s3564 + $0x130] sm:$0xff]
    %v3604 = vld [vmem:[%s3564 + $0x138] sm:$0xff]
    %v3607 = vrot.slane %v3562, 2
    %v3608 = vrot.slane %v3563, 2
    %v3610 = vsel %vm1318, %v3608, 0
    %3612 = vmatprep.subr.mxu0 %v3566
    %3613 = vmatpush1.msra.mxu0 %v3565
    %3614 = vmatprep.subr.mxu0 %v3568
    %3615 = vmatpush1.msra.mxu0 %v3567
    %3616 = vmatprep.subr.mxu0 %v3570
    %3617 = vmatpush1.msra.mxu0 %v3569
    %3618 = vmatprep.subr.mxu0 %v3572
    %3619 = vmatpush1.msra.mxu0 %v3571
    %3620 = vmatprep.subr.mxu0 %v3574
    %3621 = vmatpush1.msra.mxu0 %v3573
    %3622 = vmatprep.subr.mxu0 %v3576
    %3623 = vmatpush1.msra.mxu0 %v3575
    %3624 = vmatprep.subr.mxu0 %v3578
    %3625 = vmatpush1.msra.mxu0 %v3577
    %3626 = vmatprep.subr.mxu0 %v3580
    %3627 = vmatpush1.msra.mxu0 %v3579
    %3628 = vmatprep.subr.mxu0 %v3582
    %3629 = vmatpush1.msra.mxu0 %v3581
    %3630 = vmatprep.subr.mxu0 %v3584
    %3631 = vmatpush1.msra.mxu0 %v3583
    %3632 = vmatprep.subr.mxu0 %v3586
    %3633 = vmatpush1.msra.mxu0 %v3585
    %3634 = vmatprep.subr.mxu0 %v3588
    %3635 = vmatpush1.msra.mxu0 %v3587
    %3636 = vmatprep.subr.mxu0 %v3590
    %3637 = vmatpush1.msra.mxu0 %v3589
    %3638 = vmatprep.subr.mxu0 %v3592
    %3639 = vmatpush1.msra.mxu0 %v3591
    %3640 = vmatprep.subr.mxu0 %v3594
    %3641 = vmatpush1.msra.mxu0 %v3593
    %3642 = vmatprep.subr.mxu0 %v3596
    %3643 = vmatpush1.msra.mxu0 %v3595
    %3644 = vmatprep.subr.mxu0 %v3598
    %3645 = vmatpush1.msra.mxu0 %v3597
    %3646 = vmatprep.subr.mxu0 %v3600
    %3647 = vmatpush1.msra.mxu0 %v3599
    %3648 = vmatprep.subr.mxu0 %v3602
    %3649 = vmatpush1.msra.mxu0 %v3601
    %3650 = vmatprep.subr.mxu0 %v3604
    %3651 = vmatpush1.msra.mxu0 %v3603
    %3652 = vmatprep.subr.mxu0 0.0
    %3653 = vmatpush1.msra.mxu0 0.0
    %3654 = vmatprep.subr.mxu0 0.0
    %3655 = vmatpush1.msra.mxu0 0.0
    %3656 = vmatprep.subr.mxu0 0.0
    %3657 = vmatpush1.msra.mxu0 0.0
    %3658 = vmatprep.subr.mxu0 0.0
    %3659 = vmatpush1.msra.mxu0 0.0
    %3660 = vmatprep.subr.mxu0 0.0
    %3661 = vmatpush1.msra.mxu0 0.0
    %3662 = vmatprep.subr.mxu0 0.0
    %3663 = vmatpush1.msra.mxu0 0.0
    %3664 = vmatprep.subr.mxu0 0.0
    %3665 = vmatpush1.msra.mxu0 0.0
    %3666 = vmatprep.subr.mxu0 0.0
    %3667 = vmatpush1.msra.mxu0 0.0
    %3668 = vmatprep.subr.mxu0 0.0
    %3669 = vmatpush1.msra.mxu0 0.0
    %3670 = vmatprep.subr.mxu0 0.0
    %3671 = vmatpush1.msra.mxu0 0.0
    %3672 = vmatprep.subr.mxu0 0.0
    %3673 = vmatpush1.msra.mxu0 0.0
    %3674 = vmatprep.subr.mxu0 0.0
    %3675 = vmatpush1.msra.mxu0 0.0
    %3676 = vmatprep.mubr.f32.mxu0 %v3610
    %3677 = vmatmul.mubr.f32.gmra.mrb[0].mxu0 %v3607
    %v3678 = vpop.f32.mrb[0].mxu0
    %v3679 = vadd.f32 0.0, %v3678
    %v3680 = vpop.f32.mrb[0].mxu0
    %v3681 = vadd.f32 0.0, %v3680
    %3682 = vdwg.mxu0
    %v3683 = vadd.f32 %v3558, %v3679
    %v3684 = vadd.f32 %v3560, %v3681
    %v3685 = vld [vmem:[%s12] sm:$0x3]
    %v3687 = vlaneseq
    %v3688 = vshrl.u32 %v3687, 7
    %v3689 = vsub.s32 0, %v3688
    %v3690 = vrot.slane %v3685, %v3689
    %v3691 = vlaneseq
    %v3692 = vshrl.u32 %v3691, 7
    %v3693 = vsub.s32 1, %v3692
    %v3694 = vrot.slane %v3685, %v3693
    %v3697 = vmul.f32 %v3683, %v3690
    %v3698 = vmul.f32 %v3684, %v3694
    %v3699 = vld [vmem:[%s13] sm:$0x3]
    %v3701 = vlaneseq
    %v3702 = vshrl.u32 %v3701, 7
    %v3703 = vsub.s32 0, %v3702
    %v3704 = vrot.slane %v3699, %v3703
    %v3705 = vlaneseq
    %v3706 = vshrl.u32 %v3705, 7
    %v3707 = vsub.s32 1, %v3706
    %v3708 = vrot.slane %v3699, %v3707
    %v3711 = vadd.f32 %v3697, %v3704
    %v3712 = vadd.f32 %v3698, %v3708
    %v3713 = vmax.f32 %v3711, 0.0
    %v3714 = vmax.f32 %v3712, 0.0
    %v3717 = vcombine.low %v3713, %v3714
    %vm3719 = vcmask 522244
    %vm3720 = vmor %vm3719, %vm2555
    %3721 = vst.msk [vmem:[#allocation4] sm:$0x77] %vm3720, %v3717
    %v3722 = vld [vmem:[#allocation4] ss:$4 sm:$0x3]
    %v3723 = vld [vmem:[%s14] sm:$0xff]
    %v3724 = vld [vmem:[%s14 + $0x8] sm:$0xff]
    %v3725 = vld [vmem:[%s14 + $0x10] sm:$0xff]
    %v3726 = vld [vmem:[%s14 + $0x18] sm:$0xff]
    %v3727 = vld [vmem:[%s14 + $0x20] sm:$0xff]
    %v3728 = vld [vmem:[%s14 + $0x28] sm:$0xff]
    %v3729 = vld [vmem:[%s14 + $0x30] sm:$0xff]
    %v3730 = vld [vmem:[%s14 + $0x38] sm:$0xff]
    %v3731 = vld [vmem:[%s14 + $0x40] sm:$0xff]
    %v3732 = vld [vmem:[%s14 + $0x48] sm:$0xff]
    %v3733 = vld [vmem:[%s14 + $0x50] sm:$0xff]
    %v3734 = vld [vmem:[%s14 + $0x58] sm:$0xff]
    %v3735 = vld [vmem:[%s14 + $0x60] sm:$0xff]
    %v3736 = vld [vmem:[%s14 + $0x68] sm:$0xff]
    %v3737 = vld [vmem:[%s14 + $0x70] sm:$0xff]
    %v3738 = vld [vmem:[%s14 + $0x78] sm:$0xff]
    %v3739 = vld [vmem:[%s14 + $0x80] sm:$0xff]
    %v3740 = vld [vmem:[%s14 + $0x88] sm:$0xff]
    %v3741 = vld [vmem:[%s14 + $0x90] sm:$0xff]
    %v3742 = vld [vmem:[%s14 + $0x98] sm:$0xff]
    %v3743 = vld [vmem:[%s14 + $0xa0] sm:$0xff]
    %v3744 = vld [vmem:[%s14 + $0xa8] sm:$0xff]
    %v3745 = vld [vmem:[%s14 + $0xb0] sm:$0xff]
    %v3746 = vld [vmem:[%s14 + $0xb8] sm:$0xff]
    %s3747 = scalar_lea.vmem [#allocation4], 1
    %v3748 = vld [vmem:[%s3747] ss:$4 sm:$0x3]
    %s3749 = scalar_lea.vmem %s14, 192
    %v3750 = vld [vmem:[%s3749] sm:$0xff]
    %v3751 = vld [vmem:[%s3749 + $0x8] sm:$0xff]
    %v3752 = vld [vmem:[%s3749 + $0x10] sm:$0xff]
    %v3753 = vld [vmem:[%s3749 + $0x18] sm:$0xff]
    %v3754 = vld [vmem:[%s3749 + $0x20] sm:$0xff]
    %v3755 = vld [vmem:[%s3749 + $0x28] sm:$0xff]
    %v3756 = vld [vmem:[%s3749 + $0x30] sm:$0xff]
    %v3757 = vld [vmem:[%s3749 + $0x38] sm:$0xff]
    %v3758 = vld [vmem:[%s3749 + $0x40] sm:$0xff]
    %v3759 = vld [vmem:[%s3749 + $0x48] sm:$0xff]
    %v3760 = vld [vmem:[%s3749 + $0x50] sm:$0xff]
    %v3761 = vld [vmem:[%s3749 + $0x58] sm:$0xff]
    %v3762 = vld [vmem:[%s3749 + $0x60] sm:$0xff]
    %v3763 = vld [vmem:[%s3749 + $0x68] sm:$0xff]
    %v3764 = vld [vmem:[%s3749 + $0x70] sm:$0xff]
    %v3765 = vld [vmem:[%s3749 + $0x78] sm:$0xff]
    %v3766 = vld [vmem:[%s3749 + $0x80] sm:$0xff]
    %v3767 = vld [vmem:[%s3749 + $0x88] sm:$0xff]
    %v3768 = vld [vmem:[%s3749 + $0x90] sm:$0xff]
    %v3769 = vld [vmem:[%s3749 + $0x98] sm:$0xff]
    %v3770 = vld [vmem:[%s3749 + $0xa0] sm:$0xff]
    %v3771 = vld [vmem:[%s3749 + $0xa8] sm:$0xff]
    %v3772 = vld [vmem:[%s3749 + $0xb0] sm:$0xff]
    %v3773 = vld [vmem:[%s3749 + $0xb8] sm:$0xff]
    %v3775 = vlaneseq
    %v3776 = vshrl.u32 %v3775, 7
    %v3777 = vsub.s32 0, %v3776
    %v3778 = vrot.slane %v3748, %v3777
    %v3779 = vlaneseq
    %v3780 = vshrl.u32 %v3779, 7
    %v3781 = vsub.s32 1, %v3780
    %v3782 = vrot.slane %v3748, %v3781
    %vm3784 = vcmask 523264
    %v3785 = vsel %vm3784, %v3782, 0
    %3787 = vmatprep.subr.mxu0 0.0
    %3788 = vmatpush1.msra.mxu0 %v3750
    %3789 = vmatprep.subr.mxu0 0.0
    %3790 = vmatpush1.msra.mxu0 %v3751
    %3791 = vmatprep.subr.mxu0 0.0
    %3792 = vmatpush1.msra.mxu0 %v3752
    %3793 = vmatprep.subr.mxu0 0.0
    %3794 = vmatpush1.msra.mxu0 %v3753
    %3795 = vmatprep.subr.mxu0 0.0
    %3796 = vmatpush1.msra.mxu0 %v3754
    %3797 = vmatprep.subr.mxu0 0.0
    %3798 = vmatpush1.msra.mxu0 %v3755
    %3799 = vmatprep.subr.mxu0 0.0
    %3800 = vmatpush1.msra.mxu0 %v3756
    %3801 = vmatprep.subr.mxu0 0.0
    %3802 = vmatpush1.msra.mxu0 %v3757
    %3803 = vmatprep.subr.mxu0 0.0
    %3804 = vmatpush1.msra.mxu0 %v3758
    %3805 = vmatprep.subr.mxu0 0.0
    %3806 = vmatpush1.msra.mxu0 %v3759
    %3807 = vmatprep.subr.mxu0 0.0
    %3808 = vmatpush1.msra.mxu0 %v3760
    %3809 = vmatprep.subr.mxu0 0.0
    %3810 = vmatpush1.msra.mxu0 %v3761
    %3811 = vmatprep.subr.mxu0 0.0
    %3812 = vmatpush1.msra.mxu0 %v3762
    %3813 = vmatprep.subr.mxu0 0.0
    %3814 = vmatpush1.msra.mxu0 %v3763
    %3815 = vmatprep.subr.mxu0 0.0
    %3816 = vmatpush1.msra.mxu0 %v3764
    %3817 = vmatprep.subr.mxu0 0.0
    %3818 = vmatpush1.msra.mxu0 %v3765
    %3819 = vmatprep.subr.mxu0 0.0
    %3820 = vmatpush1.msra.mxu0 %v3766
    %3821 = vmatprep.subr.mxu0 0.0
    %3822 = vmatpush1.msra.mxu0 %v3767
    %3823 = vmatprep.subr.mxu0 0.0
    %3824 = vmatpush1.msra.mxu0 %v3768
    %3825 = vmatprep.subr.mxu0 0.0
    %3826 = vmatpush1.msra.mxu0 %v3769
    %3827 = vmatprep.subr.mxu0 0.0
    %3828 = vmatpush1.msra.mxu0 %v3770
    %3829 = vmatprep.subr.mxu0 0.0
    %3830 = vmatpush1.msra.mxu0 %v3771
    %3831 = vmatprep.subr.mxu0 0.0
    %3832 = vmatpush1.msra.mxu0 %v3772
    %3833 = vmatprep.subr.mxu0 0.0
    %3834 = vmatpush1.msra.mxu0 %v3773
    %3835 = vmatprep.subr.mxu0 0.0
    %3836 = vmatpush1.msra.mxu0 0.0
    %3837 = vmatprep.subr.mxu0 0.0
    %3838 = vmatpush1.msra.mxu0 0.0
    %3839 = vmatprep.subr.mxu0 0.0
    %3840 = vmatpush1.msra.mxu0 0.0
    %3841 = vmatprep.subr.mxu0 0.0
    %3842 = vmatpush1.msra.mxu0 0.0
    %3843 = vmatprep.subr.mxu0 0.0
    %3844 = vmatpush1.msra.mxu0 0.0
    %3845 = vmatprep.subr.mxu0 0.0
    %3846 = vmatpush1.msra.mxu0 0.0
    %3847 = vmatprep.subr.mxu0 0.0
    %3848 = vmatpush1.msra.mxu0 0.0
    %3849 = vmatprep.subr.mxu0 0.0
    %3850 = vmatpush1.msra.mxu0 0.0
    %3851 = vmatprep.mubr.f32.mxu0 %v3785
    %3852 = vmatmul.mubr.f32.gmra.mrb[0].mxu0 %v3778
    %v3853 = vpop.f32.mrb[0].mxu0
    %v3854 = vadd.f32 0.0, %v3853
    %v3855 = vpop.f32.mrb[0].mxu0
    %3856 = vdwg.mxu0
    %v3858 = vlaneseq
    %v3859 = vshrl.u32 %v3858, 7
    %v3860 = vsub.s32 0, %v3859
    %v3861 = vrot.slane %v3722, %v3860
    %v3862 = vlaneseq
    %v3863 = vshrl.u32 %v3862, 7
    %v3864 = vsub.s32 1, %v3863
    %v3865 = vrot.slane %v3722, %v3864
    %v3867 = vsel %vm3784, %v3865, 0
    %3869 = vmatprep.subr.mxu0 0.0
    %3870 = vmatpush1.msra.mxu0 %v3723
    %3871 = vmatprep.subr.mxu0 0.0
    %3872 = vmatpush1.msra.mxu0 %v3724
    %3873 = vmatprep.subr.mxu0 0.0
    %3874 = vmatpush1.msra.mxu0 %v3725
    %3875 = vmatprep.subr.mxu0 0.0
    %3876 = vmatpush1.msra.mxu0 %v3726
    %3877 = vmatprep.subr.mxu0 0.0
    %3878 = vmatpush1.msra.mxu0 %v3727
    %3879 = vmatprep.subr.mxu0 0.0
    %3880 = vmatpush1.msra.mxu0 %v3728
    %3881 = vmatprep.subr.mxu0 0.0
    %3882 = vmatpush1.msra.mxu0 %v3729
    %3883 = vmatprep.subr.mxu0 0.0
    %3884 = vmatpush1.msra.mxu0 %v3730
    %3885 = vmatprep.subr.mxu0 0.0
    %3886 = vmatpush1.msra.mxu0 %v3731
    %3887 = vmatprep.subr.mxu0 0.0
    %3888 = vmatpush1.msra.mxu0 %v3732
    %3889 = vmatprep.subr.mxu0 0.0
    %3890 = vmatpush1.msra.mxu0 %v3733
    %3891 = vmatprep.subr.mxu0 0.0
    %3892 = vmatpush1.msra.mxu0 %v3734
    %3893 = vmatprep.subr.mxu0 0.0
    %3894 = vmatpush1.msra.mxu0 %v3735
    %3895 = vmatprep.subr.mxu0 0.0
    %3896 = vmatpush1.msra.mxu0 %v3736
    %3897 = vmatprep.subr.mxu0 0.0
    %3898 = vmatpush1.msra.mxu0 %v3737
    %3899 = vmatprep.subr.mxu0 0.0
    %3900 = vmatpush1.msra.mxu0 %v3738
    %3901 = vmatprep.subr.mxu0 0.0
    %3902 = vmatpush1.msra.mxu0 %v3739
    %3903 = vmatprep.subr.mxu0 0.0
    %3904 = vmatpush1.msra.mxu0 %v3740
    %3905 = vmatprep.subr.mxu0 0.0
    %3906 = vmatpush1.msra.mxu0 %v3741
    %3907 = vmatprep.subr.mxu0 0.0
    %3908 = vmatpush1.msra.mxu0 %v3742
    %3909 = vmatprep.subr.mxu0 0.0
    %3910 = vmatpush1.msra.mxu0 %v3743
    %3911 = vmatprep.subr.mxu0 0.0
    %3912 = vmatpush1.msra.mxu0 %v3744
    %3913 = vmatprep.subr.mxu0 0.0
    %3914 = vmatpush1.msra.mxu0 %v3745
    %3915 = vmatprep.subr.mxu0 0.0
    %3916 = vmatpush1.msra.mxu0 %v3746
    %3917 = vmatprep.subr.mxu0 0.0
    %3918 = vmatpush1.msra.mxu0 0.0
    %3919 = vmatprep.subr.mxu0 0.0
    %3920 = vmatpush1.msra.mxu0 0.0
    %3921 = vmatprep.subr.mxu0 0.0
    %3922 = vmatpush1.msra.mxu0 0.0
    %3923 = vmatprep.subr.mxu0 0.0
    %3924 = vmatpush1.msra.mxu0 0.0
    %3925 = vmatprep.subr.mxu0 0.0
    %3926 = vmatpush1.msra.mxu0 0.0
    %3927 = vmatprep.subr.mxu0 0.0
    %3928 = vmatpush1.msra.mxu0 0.0
    %3929 = vmatprep.subr.mxu0 0.0
    %3930 = vmatpush1.msra.mxu0 0.0
    %3931 = vmatprep.subr.mxu0 0.0
    %3932 = vmatpush1.msra.mxu0 0.0
    %3933 = vmatprep.mubr.f32.mxu0 %v3867
    %3934 = vmatmul.mubr.f32.gmra.mrb[0].mxu0 %v3861
    %v3935 = vpop.f32.mrb[0].mxu0
    %v3936 = vadd.f32 %v3854, %v3935
    %v3937 = vpop.f32.mrb[0].mxu0
    %3938 = vdwg.mxu0
    %s3939 = scalar_lea.vmem [#allocation4], 2
    %v3940 = vld [vmem:[%s3939] ss:$4 sm:$0x3]
    %s3941 = scalar_lea.vmem %s14, 384
    %v3942 = vld [vmem:[%s3941] sm:$0xff]
    %v3943 = vld [vmem:[%s3941 + $0x8] sm:$0xff]
    %v3944 = vld [vmem:[%s3941 + $0x10] sm:$0xff]
    %v3945 = vld [vmem:[%s3941 + $0x18] sm:$0xff]
    %v3946 = vld [vmem:[%s3941 + $0x20] sm:$0xff]
    %v3947 = vld [vmem:[%s3941 + $0x28] sm:$0xff]
    %v3948 = vld [vmem:[%s3941 + $0x30] sm:$0xff]
    %v3949 = vld [vmem:[%s3941 + $0x38] sm:$0xff]
    %v3950 = vld [vmem:[%s3941 + $0x40] sm:$0xff]
    %v3951 = vld [vmem:[%s3941 + $0x48] sm:$0xff]
    %v3952 = vld [vmem:[%s3941 + $0x50] sm:$0xff]
    %v3953 = vld [vmem:[%s3941 + $0x58] sm:$0xff]
    %v3954 = vld [vmem:[%s3941 + $0x60] sm:$0xff]
    %v3955 = vld [vmem:[%s3941 + $0x68] sm:$0xff]
    %v3956 = vld [vmem:[%s3941 + $0x70] sm:$0xff]
    %v3957 = vld [vmem:[%s3941 + $0x78] sm:$0xff]
    %v3958 = vld [vmem:[%s3941 + $0x80] sm:$0xff]
    %v3959 = vld [vmem:[%s3941 + $0x88] sm:$0xff]
    %v3960 = vld [vmem:[%s3941 + $0x90] sm:$0xff]
    %v3961 = vld [vmem:[%s3941 + $0x98] sm:$0xff]
    %v3962 = vld [vmem:[%s3941 + $0xa0] sm:$0xff]
    %v3963 = vld [vmem:[%s3941 + $0xa8] sm:$0xff]
    %v3964 = vld [vmem:[%s3941 + $0xb0] sm:$0xff]
    %v3965 = vld [vmem:[%s3941 + $0xb8] sm:$0xff]
    %v3967 = vlaneseq
    %v3968 = vshrl.u32 %v3967, 7
    %v3969 = vsub.s32 0, %v3968
    %v3970 = vrot.slane %v3940, %v3969
    %v3971 = vlaneseq
    %v3972 = vshrl.u32 %v3971, 7
    %v3973 = vsub.s32 1, %v3972
    %v3974 = vrot.slane %v3940, %v3973
    %v3976 = vsel %vm3784, %v3974, 0
    %3978 = vmatprep.subr.mxu0 0.0
    %3979 = vmatpush1.msra.mxu0 %v3942
    %3980 = vmatprep.subr.mxu0 0.0
    %3981 = vmatpush1.msra.mxu0 %v3943
    %3982 = vmatprep.subr.mxu0 0.0
    %3983 = vmatpush1.msra.mxu0 %v3944
    %3984 = vmatprep.subr.mxu0 0.0
    %3985 = vmatpush1.msra.mxu0 %v3945
    %3986 = vmatprep.subr.mxu0 0.0
    %3987 = vmatpush1.msra.mxu0 %v3946
    %3988 = vmatprep.subr.mxu0 0.0
    %3989 = vmatpush1.msra.mxu0 %v3947
    %3990 = vmatprep.subr.mxu0 0.0
    %3991 = vmatpush1.msra.mxu0 %v3948
    %3992 = vmatprep.subr.mxu0 0.0
    %3993 = vmatpush1.msra.mxu0 %v3949
    %3994 = vmatprep.subr.mxu0 0.0
    %3995 = vmatpush1.msra.mxu0 %v3950
    %3996 = vmatprep.subr.mxu0 0.0
    %3997 = vmatpush1.msra.mxu0 %v3951
    %3998 = vmatprep.subr.mxu0 0.0
    %3999 = vmatpush1.msra.mxu0 %v3952
    %4000 = vmatprep.subr.mxu0 0.0
    %4001 = vmatpush1.msra.mxu0 %v3953
    %4002 = vmatprep.subr.mxu0 0.0
    %4003 = vmatpush1.msra.mxu0 %v3954
    %4004 = vmatprep.subr.mxu0 0.0
    %4005 = vmatpush1.msra.mxu0 %v3955
    %4006 = vmatprep.subr.mxu0 0.0
    %4007 = vmatpush1.msra.mxu0 %v3956
    %4008 = vmatprep.subr.mxu0 0.0
    %4009 = vmatpush1.msra.mxu0 %v3957
    %4010 = vmatprep.subr.mxu0 0.0
    %4011 = vmatpush1.msra.mxu0 %v3958
    %4012 = vmatprep.subr.mxu0 0.0
    %4013 = vmatpush1.msra.mxu0 %v3959
    %4014 = vmatprep.subr.mxu0 0.0
    %4015 = vmatpush1.msra.mxu0 %v3960
    %4016 = vmatprep.subr.mxu0 0.0
    %4017 = vmatpush1.msra.mxu0 %v3961
    %4018 = vmatprep.subr.mxu0 0.0
    %4019 = vmatpush1.msra.mxu0 %v3962
    %4020 = vmatprep.subr.mxu0 0.0
    %4021 = vmatpush1.msra.mxu0 %v3963
    %4022 = vmatprep.subr.mxu0 0.0
    %4023 = vmatpush1.msra.mxu0 %v3964
    %4024 = vmatprep.subr.mxu0 0.0
    %4025 = vmatpush1.msra.mxu0 %v3965
    %4026 = vmatprep.subr.mxu0 0.0
    %4027 = vmatpush1.msra.mxu0 0.0
    %4028 = vmatprep.subr.mxu0 0.0
    %4029 = vmatpush1.msra.mxu0 0.0
    %4030 = vmatprep.subr.mxu0 0.0
    %4031 = vmatpush1.msra.mxu0 0.0
    %4032 = vmatprep.subr.mxu0 0.0
    %4033 = vmatpush1.msra.mxu0 0.0
    %4034 = vmatprep.subr.mxu0 0.0
    %4035 = vmatpush1.msra.mxu0 0.0
    %4036 = vmatprep.subr.mxu0 0.0
    %4037 = vmatpush1.msra.mxu0 0.0
    %4038 = vmatprep.subr.mxu0 0.0
    %4039 = vmatpush1.msra.mxu0 0.0
    %4040 = vmatprep.subr.mxu0 0.0
    %4041 = vmatpush1.msra.mxu0 0.0
    %4042 = vmatprep.mubr.f32.mxu0 %v3976
    %4043 = vmatmul.mubr.f32.gmra.mrb[0].mxu0 %v3970
    %v4044 = vpop.f32.mrb[0].mxu0
    %v4045 = vadd.f32 0.0, %v4044
    %v4046 = vpop.f32.mrb[0].mxu0
    %4047 = vdwg.mxu0
    %v4048 = vadd.f32 %v3936, %v4045
    %v4049 = vld [vmem:[%s15] sm:$0x1]
    %v4050 = vadd.f32 %v4048, %v4049
    %v4051 = vmax.f32 %v4050, 0.0
    %v4052 = vld [vmem:[%s16] sm:$0x1]
    %v4053 = vmul.f32 %v4051, %v4052
    %vm4054 = vcmask 516096
    %v4055 = vsel %vm4054, %v4053, 0.0
    %4056 = vadd.xlane.f32.xlu0 %v4055
    %v4057 = vpop.xlane.xlu0 %4056
    %v4058 = vld [vmem:[#allocation5] sm:$0x1]
    %v4059 = vadd.f32 %v4057, %v4058
    %v4060 = vmul.f32 %v4059, 0.5
    %v4061 = vtanh.pop %v4060
    %v4062 = vadd.f32 %v4061, 1.0
    %v4063 = vmul.f32 %v4062, 0.5
    %vm4064 = vcmask 0
    %4065 = vst.msk [vmem:[%s18] sm:$0x1] %vm4064, %v4063
    %s4066 = scalar_lea.vmem %s0, 32
    %v4067 = vld [vmem:[%s4066] sm:$0xff]
    %v4068 = vld [vmem:[%s4066 + $0x8] sm:$0xff]
    %v4069 = vld [vmem:[%s4066 + $0x10] sm:$0xff]
    %v4070 = vld [vmem:[%s4066 + $0x18] sm:$0x3]
    %v4071 = vld [vmem:[#allocation6] sm:$0xff]
    %v4072 = vld [vmem:[#allocation6 + $0x8] sm:$0xff]
    %v4073 = vld [vmem:[#allocation6 + $0x10] sm:$0xff]
    %v4074 = vld [vmem:[#allocation6 + $0x18] sm:$0xff]
    %v4075 = vld [vmem:[#allocation6 + $0x20] sm:$0xff]
    %v4076 = vld [vmem:[#allocation6 + $0x28] sm:$0xff]
    %v4077 = vld [vmem:[#allocation6 + $0x30] sm:$0xff]
    %v4078 = vld [vmem:[#allocation6 + $0x38] sm:$0xff]
    %v4079 = vld [vmem:[#allocation6 + $0x40] sm:$0xff]
    %v4080 = vld [vmem:[#allocation6 + $0x48] sm:$0xff]
    %v4081 = vld [vmem:[#allocation6 + $0x50] sm:$0xff]
    %v4082 = vld [vmem:[#allocation6 + $0x58] sm:$0xff]
    %v4083 = vld [vmem:[#allocation6 + $0x60] sm:$0xf]
    %v4084 = vld [vmem:[#allocation6 + $0x68] sm:$0xf]
    %v4085 = vld [vmem:[#allocation6 + $0x70] sm:$0xf]
    %v4086 = vld [vmem:[#allocation6 + $0x78] sm:$0xf]
    %v4087 = vld [vmem:[%s4066 + $0x1] sm:$0xff]
    %v4088 = vld [vmem:[%s4066 + $0x9] sm:$0xff]
    %v4089 = vld [vmem:[%s4066 + $0x11] sm:$0xff]
    %v4090 = vld [vmem:[%s4066 + $0x19] sm:$0x3]
    %v4091 = vld [vmem:[%s113] sm:$0xff]
    %v4092 = vld [vmem:[%s113 + $0x8] sm:$0xff]
    %v4093 = vld [vmem:[%s113 + $0x10] sm:$0xff]
    %v4094 = vld [vmem:[%s113 + $0x18] sm:$0xff]
    %v4095 = vld [vmem:[%s113 + $0x20] sm:$0xff]
    %v4096 = vld [vmem:[%s113 + $0x28] sm:$0xff]
    %v4097 = vld [vmem:[%s113 + $0x30] sm:$0xff]
    %v4098 = vld [vmem:[%s113 + $0x38] sm:$0xff]
    %v4099 = vld [vmem:[%s113 + $0x40] sm:$0xff]
    %v4100 = vld [vmem:[%s113 + $0x48] sm:$0xff]
    %v4101 = vld [vmem:[%s113 + $0x50] sm:$0xff]
    %v4102 = vld [vmem:[%s113 + $0x58] sm:$0xff]
    %v4103 = vld [vmem:[%s113 + $0x60] sm:$0xf]
    %v4104 = vld [vmem:[%s113 + $0x68] sm:$0xf]
    %v4105 = vld [vmem:[%s113 + $0x70] sm:$0xf]
    %v4106 = vld [vmem:[%s113 + $0x78] sm:$0xf]
    %v4108 = vsel %vm130, %v4087, 0
    %v4111 = vsel %vm130, %v4088, 0
    %v4114 = vsel %vm130, %v4089, 0
    %v4117 = vsel %vm130, %v4090, 0
    %v4120 = vsel %vm143, %v4103, 0
    %v4123 = vsel %vm143, %v4104, 0
    %v4126 = vsel %vm143, %v4105, 0
    %v4129 = vsel %vm143, %v4106, 0
    %4131 = vmatprep.subr.mxu0 %v4092
    %4132 = vmatpush1.msra.mxu0 %v4091
    %4133 = vmatprep.subr.mxu0 %v4096
    %4134 = vmatpush1.msra.mxu0 %v4095
    %4135 = vmatprep.subr.mxu0 %v4100
    %4136 = vmatpush1.msra.mxu0 %v4099
    %4137 = vmatprep.subr.mxu0 %v4123
    %4138 = vmatpush1.msra.mxu0 %v4120
    %4139 = vmatprep.subr.mxu0 0.0
    %4140 = vmatpush1.msra.mxu0 0.0
    %4141 = vmatprep.subr.mxu0 0.0
    %4142 = vmatpush1.msra.mxu0 0.0
    %4143 = vmatprep.subr.mxu0 0.0
    %4144 = vmatpush1.msra.mxu0 0.0
    %4145 = vmatprep.subr.mxu0 0.0
    %4146 = vmatpush1.msra.mxu0 0.0
    %4147 = vmatprep.subr.mxu0 0.0
    %4148 = vmatpush1.msra.mxu0 0.0
    %4149 = vmatprep.subr.mxu0 0.0
    %4150 = vmatpush1.msra.mxu0 0.0
    %4151 = vmatprep.subr.mxu0 0.0
    %4152 = vmatpush1.msra.mxu0 0.0
    %4153 = vmatprep.subr.mxu0 0.0
    %4154 = vmatpush1.msra.mxu0 0.0
    %4155 = vmatprep.subr.mxu0 0.0
    %4156 = vmatpush1.msra.mxu0 0.0
    %4157 = vmatprep.subr.mxu0 0.0
    %4158 = vmatpush1.msra.mxu0 0.0
    %4159 = vmatprep.subr.mxu0 0.0
    %4160 = vmatpush1.msra.mxu0 0.0
    %4161 = vmatprep.subr.mxu0 0.0
    %4162 = vmatpush1.msra.mxu0 0.0
    %4163 = vmatprep.subr.mxu0 0.0
    %4164 = vmatpush1.msra.mxu0 0.0
    %4165 = vmatprep.subr.mxu0 0.0
    %4166 = vmatpush1.msra.mxu0 0.0
    %4167 = vmatprep.subr.mxu0 0.0
    %4168 = vmatpush1.msra.mxu0 0.0
    %4169 = vmatprep.subr.mxu0 0.0
    %4170 = vmatpush1.msra.mxu0 0.0
    %4171 = vmatprep.subr.mxu0 0.0
    %4172 = vmatpush1.msra.mxu0 0.0
    %4173 = vmatprep.subr.mxu0 0.0
    %4174 = vmatpush1.msra.mxu0 0.0
    %4175 = vmatprep.subr.mxu0 0.0
    %4176 = vmatpush1.msra.mxu0 0.0
    %4177 = vmatprep.subr.mxu0 0.0
    %4178 = vmatpush1.msra.mxu0 0.0
    %4179 = vmatprep.subr.mxu0 0.0
    %4180 = vmatpush1.msra.mxu0 0.0
    %4181 = vmatprep.subr.mxu0 0.0
    %4182 = vmatpush1.msra.mxu0 0.0
    %4183 = vmatprep.subr.mxu0 0.0
    %4184 = vmatpush1.msra.mxu0 0.0
    %4185 = vmatprep.subr.mxu0 0.0
    %4186 = vmatpush1.msra.mxu0 0.0
    %4187 = vmatprep.subr.mxu0 0.0
    %4188 = vmatpush1.msra.mxu0 0.0
    %4189 = vmatprep.subr.mxu0 0.0
    %4190 = vmatpush1.msra.mxu0 0.0
    %4191 = vmatprep.subr.mxu0 0.0
    %4192 = vmatpush1.msra.mxu0 0.0
    %4193 = vmatprep.subr.mxu0 0.0
    %4194 = vmatpush1.msra.mxu0 0.0
    %4195 = vmatprep.mubr.f32.mxu0 0.0
    %4196 = vmatmul.mubr.f32.gmra.mrb[0].mxu0 %v4108
    %v4197 = vpop.f32.mrb[0].mxu0
    %v4198 = vadd.f32 0.0, %v4197
    %v4199 = vpop.f32.mrb[0].mxu0
    %v4200 = vadd.f32 0.0, %v4199
    %4201 = vmatprep.mubr.f32.mxu0 0.0
    %4202 = vmatmul.mubr.f32.gmra.mrb[0].mxu0 %v4111
    %v4203 = vpop.f32.mrb[0].mxu0
    %v4204 = vadd.f32 0.0, %v4203
    %v4205 = vpop.f32.mrb[0].mxu0
    %v4206 = vadd.f32 0.0, %v4205
    %4207 = vmatprep.mubr.f32.mxu0 0.0
    %4208 = vmatmul.mubr.f32.gmra.mrb[0].mxu0 %v4114
    %v4209 = vpop.f32.mrb[0].mxu0
    %v4210 = vadd.f32 0.0, %v4209
    %v4211 = vpop.f32.mrb[0].mxu0
    %v4212 = vadd.f32 0.0, %v4211
    %4213 = vmatprep.mubr.f32.mxu0 0.0
    %4214 = vmatmul.mubr.f32.gmra.mrb[0].mxu0 %v4117
    %v4215 = vpop.f32.mrb[0].mxu0
    %v4216 = vadd.f32 0.0, %v4215
    %v4217 = vpop.f32.mrb[0].mxu0
    %v4218 = vadd.f32 0.0, %v4217
    %4219 = vdwg.mxu0
    %4220 = vmatprep.subr.mxu0 %v4094
    %4221 = vmatpush1.msra.mxu0 %v4093
    %4222 = vmatprep.subr.mxu0 %v4098
    %4223 = vmatpush1.msra.mxu0 %v4097
    %4224 = vmatprep.subr.mxu0 %v4102
    %4225 = vmatpush1.msra.mxu0 %v4101
    %4226 = vmatprep.subr.mxu0 %v4129
    %4227 = vmatpush1.msra.mxu0 %v4126
    %4228 = vmatprep.subr.mxu0 0.0
    %4229 = vmatpush1.msra.mxu0 0.0
    %4230 = vmatprep.subr.mxu0 0.0
    %4231 = vmatpush1.msra.mxu0 0.0
    %4232 = vmatprep.subr.mxu0 0.0
    %4233 = vmatpush1.msra.mxu0 0.0
    %4234 = vmatprep.subr.mxu0 0.0
    %4235 = vmatpush1.msra.mxu0 0.0
    %4236 = vmatprep.subr.mxu0 0.0
    %4237 = vmatpush1.msra.mxu0 0.0
    %4238 = vmatprep.subr.mxu0 0.0
    %4239 = vmatpush1.msra.mxu0 0.0
    %4240 = vmatprep.subr.mxu0 0.0
    %4241 = vmatpush1.msra.mxu0 0.0
    %4242 = vmatprep.subr.mxu0 0.0
    %4243 = vmatpush1.msra.mxu0 0.0
    %4244 = vmatprep.subr.mxu0 0.0
    %4245 = vmatpush1.msra.mxu0 0.0
    %4246 = vmatprep.subr.mxu0 0.0
    %4247 = vmatpush1.msra.mxu0 0.0
    %4248 = vmatprep.subr.mxu0 0.0
    %4249 = vmatpush1.msra.mxu0 0.0
    %4250 = vmatprep.subr.mxu0 0.0
    %4251 = vmatpush1.msra.mxu0 0.0
    %4252 = vmatprep.subr.mxu0 0.0
    %4253 = vmatpush1.msra.mxu0 0.0
    %4254 = vmatprep.subr.mxu0 0.0
    %4255 = vmatpush1.msra.mxu0 0.0
    %4256 = vmatprep.subr.mxu0 0.0
    %4257 = vmatpush1.msra.mxu0 0.0
    %4258 = vmatprep.subr.mxu0 0.0
    %4259 = vmatpush1.msra.mxu0 0.0
    %4260 = vmatprep.subr.mxu0 0.0
    %4261 = vmatpush1.msra.mxu0 0.0
    %4262 = vmatprep.subr.mxu0 0.0
    %4263 = vmatpush1.msra.mxu0 0.0
    %4264 = vmatprep.subr.mxu0 0.0
    %4265 = vmatpush1.msra.mxu0 0.0
    %4266 = vmatprep.subr.mxu0 0.0
    %4267 = vmatpush1.msra.mxu0 0.0
    %4268 = vmatprep.subr.mxu0 0.0
    %4269 = vmatpush1.msra.mxu0 0.0
    %4270 = vmatprep.subr.mxu0 0.0
    %4271 = vmatpush1.msra.mxu0 0.0
    %4272 = vmatprep.subr.mxu0 0.0
    %4273 = vmatpush1.msra.mxu0 0.0
    %4274 = vmatprep.subr.mxu0 0.0
    %4275 = vmatpush1.msra.mxu0 0.0
    %4276 = vmatprep.subr.mxu0 0.0
    %4277 = vmatpush1.msra.mxu0 0.0
    %4278 = vmatprep.subr.mxu0 0.0
    %4279 = vmatpush1.msra.mxu0 0.0
    %4280 = vmatprep.subr.mxu0 0.0
    %4281 = vmatpush1.msra.mxu0 0.0
    %4282 = vmatprep.subr.mxu0 0.0
    %4283 = vmatpush1.msra.mxu0 0.0
    %4284 = vmatprep.mubr.f32.mxu0 0.0
    %4285 = vmatmul.mubr.f32.gmra.mrb[0].mxu0 %v4108
    %v4286 = vpop.f32.mrb[0].mxu0
    %v4287 = vadd.f32 0.0, %v4286
    %v4288 = vpop.f32.mrb[0].mxu0
    %v4289 = vadd.f32 0.0, %v4288
    %4290 = vmatprep.mubr.f32.mxu0 0.0
    %4291 = vmatmul.mubr.f32.gmra.mrb[0].mxu0 %v4111
    %v4292 = vpop.f32.mrb[0].mxu0
    %v4293 = vadd.f32 0.0, %v4292
    %v4294 = vpop.f32.mrb[0].mxu0
    %v4295 = vadd.f32 0.0, %v4294
    %4296 = vmatprep.mubr.f32.mxu0 0.0
    %4297 = vmatmul.mubr.f32.gmra.mrb[0].mxu0 %v4114
    %v4298 = vpop.f32.mrb[0].mxu0
    %v4299 = vadd.f32 0.0, %v4298
    %v4300 = vpop.f32.mrb[0].mxu0
    %v4301 = vadd.f32 0.0, %v4300
    %4302 = vmatprep.mubr.f32.mxu0 0.0
    %4303 = vmatmul.mubr.f32.gmra.mrb[0].mxu0 %v4117
    %v4304 = vpop.f32.mrb[0].mxu0
    %v4305 = vadd.f32 0.0, %v4304
    %v4306 = vpop.f32.mrb[0].mxu0
    %v4307 = vadd.f32 0.0, %v4306
    %4308 = vdwg.mxu0
    %v4310 = vsel %vm130, %v4067, 0
    %v4313 = vsel %vm130, %v4068, 0
    %v4316 = vsel %vm130, %v4069, 0
    %v4319 = vsel %vm130, %v4070, 0
    %v4322 = vsel %vm143, %v4083, 0
    %v4325 = vsel %vm143, %v4084, 0
    %v4328 = vsel %vm143, %v4085, 0
    %v4331 = vsel %vm143, %v4086, 0
    %4333 = vmatprep.subr.mxu0 %v4072
    %4334 = vmatpush1.msra.mxu0 %v4071
    %4335 = vmatprep.subr.mxu0 %v4076
    %4336 = vmatpush1.msra.mxu0 %v4075
    %4337 = vmatprep.subr.mxu0 %v4080
    %4338 = vmatpush1.msra.mxu0 %v4079
    %4339 = vmatprep.subr.mxu0 %v4325
    %4340 = vmatpush1.msra.mxu0 %v4322
    %4341 = vmatprep.subr.mxu0 0.0
    %4342 = vmatpush1.msra.mxu0 0.0
    %4343 = vmatprep.subr.mxu0 0.0
    %4344 = vmatpush1.msra.mxu0 0.0
    %4345 = vmatprep.subr.mxu0 0.0
    %4346 = vmatpush1.msra.mxu0 0.0
    %4347 = vmatprep.subr.mxu0 0.0
    %4348 = vmatpush1.msra.mxu0 0.0
    %4349 = vmatprep.subr.mxu0 0.0
    %4350 = vmatpush1.msra.mxu0 0.0
    %4351 = vmatprep.subr.mxu0 0.0
    %4352 = vmatpush1.msra.mxu0 0.0
    %4353 = vmatprep.subr.mxu0 0.0
    %4354 = vmatpush1.msra.mxu0 0.0
    %4355 = vmatprep.subr.mxu0 0.0
    %4356 = vmatpush1.msra.mxu0 0.0
    %4357 = vmatprep.subr.mxu0 0.0
    %4358 = vmatpush1.msra.mxu0 0.0
    %4359 = vmatprep.subr.mxu0 0.0
    %4360 = vmatpush1.msra.mxu0 0.0
    %4361 = vmatprep.subr.mxu0 0.0
    %4362 = vmatpush1.msra.mxu0 0.0
    %4363 = vmatprep.subr.mxu0 0.0
    %4364 = vmatpush1.msra.mxu0 0.0
    %4365 = vmatprep.subr.mxu0 0.0
    %4366 = vmatpush1.msra.mxu0 0.0
    %4367 = vmatprep.subr.mxu0 0.0
    %4368 = vmatpush1.msra.mxu0 0.0
    %4369 = vmatprep.subr.mxu0 0.0
    %4370 = vmatpush1.msra.mxu0 0.0
    %4371 = vmatprep.subr.mxu0 0.0
    %4372 = vmatpush1.msra.mxu0 0.0
    %4373 = vmatprep.subr.mxu0 0.0
    %4374 = vmatpush1.msra.mxu0 0.0
    %4375 = vmatprep.subr.mxu0 0.0
    %4376 = vmatpush1.msra.mxu0 0.0
    %4377 = vmatprep.subr.mxu0 0.0
    %4378 = vmatpush1.msra.mxu0 0.0
    %4379 = vmatprep.subr.mxu0 0.0
    %4380 = vmatpush1.msra.mxu0 0.0
    %4381 = vmatprep.subr.mxu0 0.0
    %4382 = vmatpush1.msra.mxu0 0.0
    %4383 = vmatprep.subr.mxu0 0.0
    %4384 = vmatpush1.msra.mxu0 0.0
    %4385 = vmatprep.subr.mxu0 0.0
    %4386 = vmatpush1.msra.mxu0 0.0
    %4387 = vmatprep.subr.mxu0 0.0
    %4388 = vmatpush1.msra.mxu0 0.0
    %4389 = vmatprep.subr.mxu0 0.0
    %4390 = vmatpush1.msra.mxu0 0.0
    %4391 = vmatprep.subr.mxu0 0.0
    %4392 = vmatpush1.msra.mxu0 0.0
    %4393 = vmatprep.subr.mxu0 0.0
    %4394 = vmatpush1.msra.mxu0 0.0
    %4395 = vmatprep.subr.mxu0 0.0
    %4396 = vmatpush1.msra.mxu0 0.0
    %4397 = vmatprep.mubr.f32.mxu0 0.0
    %4398 = vmatmul.mubr.f32.gmra.mrb[0].mxu0 %v4310
    %v4399 = vpop.f32.mrb[0].mxu0
    %v4400 = vadd.f32 %v4198, %v4399
    %v4401 = vpop.f32.mrb[0].mxu0
    %v4402 = vadd.f32 %v4200, %v4401
    %4403 = vmatprep.mubr.f32.mxu0 0.0
    %4404 = vmatmul.mubr.f32.gmra.mrb[0].mxu0 %v4313
    %v4405 = vpop.f32.mrb[0].mxu0
    %v4406 = vadd.f32 %v4204, %v4405
    %v4407 = vpop.f32.mrb[0].mxu0
    %v4408 = vadd.f32 %v4206, %v4407
    %4409 = vmatprep.mubr.f32.mxu0 0.0
    %4410 = vmatmul.mubr.f32.gmra.mrb[0].mxu0 %v4316
    %v4411 = vpop.f32.mrb[0].mxu0
    %v4412 = vadd.f32 %v4210, %v4411
    %v4413 = vpop.f32.mrb[0].mxu0
    %v4414 = vadd.f32 %v4212, %v4413
    %4415 = vmatprep.mubr.f32.mxu0 0.0
    %4416 = vmatmul.mubr.f32.gmra.mrb[0].mxu0 %v4319
    %v4417 = vpop.f32.mrb[0].mxu0
    %v4418 = vadd.f32 %v4216, %v4417
    %v4419 = vpop.f32.mrb[0].mxu0
    %v4420 = vadd.f32 %v4218, %v4419
    %4421 = vdwg.mxu0
    %4422 = vmatprep.subr.mxu0 %v4074
    %4423 = vmatpush1.msra.mxu0 %v4073
    %4424 = vmatprep.subr.mxu0 %v4078
    %4425 = vmatpush1.msra.mxu0 %v4077
    %4426 = vmatprep.subr.mxu0 %v4082
    %4427 = vmatpush1.msra.mxu0 %v4081
    %4428 = vmatprep.subr.mxu0 %v4331
    %4429 = vmatpush1.msra.mxu0 %v4328
    %4430 = vmatprep.subr.mxu0 0.0
    %4431 = vmatpush1.msra.mxu0 0.0
    %4432 = vmatprep.subr.mxu0 0.0
    %4433 = vmatpush1.msra.mxu0 0.0
    %4434 = vmatprep.subr.mxu0 0.0
    %4435 = vmatpush1.msra.mxu0 0.0
    %4436 = vmatprep.subr.mxu0 0.0
    %4437 = vmatpush1.msra.mxu0 0.0
    %4438 = vmatprep.subr.mxu0 0.0
    %4439 = vmatpush1.msra.mxu0 0.0
    %4440 = vmatprep.subr.mxu0 0.0
    %4441 = vmatpush1.msra.mxu0 0.0
    %4442 = vmatprep.subr.mxu0 0.0
    %4443 = vmatpush1.msra.mxu0 0.0
    %4444 = vmatprep.subr.mxu0 0.0
    %4445 = vmatpush1.msra.mxu0 0.0
    %4446 = vmatprep.subr.mxu0 0.0
    %4447 = vmatpush1.msra.mxu0 0.0
    %4448 = vmatprep.subr.mxu0 0.0
    %4449 = vmatpush1.msra.mxu0 0.0
    %4450 = vmatprep.subr.mxu0 0.0
    %4451 = vmatpush1.msra.mxu0 0.0
    %4452 = vmatprep.subr.mxu0 0.0
    %4453 = vmatpush1.msra.mxu0 0.0
    %4454 = vmatprep.subr.mxu0 0.0
    %4455 = vmatpush1.msra.mxu0 0.0
    %4456 = vmatprep.subr.mxu0 0.0
    %4457 = vmatpush1.msra.mxu0 0.0
    %4458 = vmatprep.subr.mxu0 0.0
    %4459 = vmatpush1.msra.mxu0 0.0
    %4460 = vmatprep.subr.mxu0 0.0
    %4461 = vmatpush1.msra.mxu0 0.0
    %4462 = vmatprep.subr.mxu0 0.0
    %4463 = vmatpush1.msra.mxu0 0.0
    %4464 = vmatprep.subr.mxu0 0.0
    %4465 = vmatpush1.msra.mxu0 0.0
    %4466 = vmatprep.subr.mxu0 0.0
    %4467 = vmatpush1.msra.mxu0 0.0
    %4468 = vmatprep.subr.mxu0 0.0
    %4469 = vmatpush1.msra.mxu0 0.0
    %4470 = vmatprep.subr.mxu0 0.0
    %4471 = vmatpush1.msra.mxu0 0.0
    %4472 = vmatprep.subr.mxu0 0.0
    %4473 = vmatpush1.msra.mxu0 0.0
    %4474 = vmatprep.subr.mxu0 0.0
    %4475 = vmatpush1.msra.mxu0 0.0
    %4476 = vmatprep.subr.mxu0 0.0
    %4477 = vmatpush1.msra.mxu0 0.0
    %4478 = vmatprep.subr.mxu0 0.0
    %4479 = vmatpush1.msra.mxu0 0.0
    %4480 = vmatprep.subr.mxu0 0.0
    %4481 = vmatpush1.msra.mxu0 0.0
    %4482 = vmatprep.subr.mxu0 0.0
    %4483 = vmatpush1.msra.mxu0 0.0
    %4484 = vmatprep.subr.mxu0 0.0
    %4485 = vmatpush1.msra.mxu0 0.0
    %4486 = vmatprep.mubr.f32.mxu0 0.0
    %4487 = vmatmul.mubr.f32.gmra.mrb[0].mxu0 %v4310
    %v4488 = vpop.f32.mrb[0].mxu0
    %v4489 = vadd.f32 %v4287, %v4488
    %v4490 = vpop.f32.mrb[0].mxu0
    %v4491 = vadd.f32 %v4289, %v4490
    %4492 = vmatprep.mubr.f32.mxu0 0.0
    %4493 = vmatmul.mubr.f32.gmra.mrb[0].mxu0 %v4313
    %v4494 = vpop.f32.mrb[0].mxu0
    %v4495 = vadd.f32 %v4293, %v4494
    %v4496 = vpop.f32.mrb[0].mxu0
    %v4497 = vadd.f32 %v4295, %v4496
    %4498 = vmatprep.mubr.f32.mxu0 0.0
    %4499 = vmatmul.mubr.f32.gmra.mrb[0].mxu0 %v4316
    %v4500 = vpop.f32.mrb[0].mxu0
    %v4501 = vadd.f32 %v4299, %v4500
    %v4502 = vpop.f32.mrb[0].mxu0
    %v4503 = vadd.f32 %v4301, %v4502
    %4504 = vmatprep.mubr.f32.mxu0 0.0
    %4505 = vmatmul.mubr.f32.gmra.mrb[0].mxu0 %v4319
    %v4506 = vpop.f32.mrb[0].mxu0
    %v4507 = vadd.f32 %v4305, %v4506
    %v4508 = vpop.f32.mrb[0].mxu0
    %v4509 = vadd.f32 %v4307, %v4508
    %4510 = vdwg.mxu0
    %v4511 = vld [vmem:[%s4066 + $0x2] sm:$0xff]
    %v4512 = vld [vmem:[%s4066 + $0xa] sm:$0xff]
    %v4513 = vld [vmem:[%s4066 + $0x12] sm:$0xff]
    %v4514 = vld [vmem:[%s4066 + $0x1a] sm:$0x3]
    %v4515 = vld [vmem:[%s540] sm:$0xff]
    %v4516 = vld [vmem:[%s540 + $0x8] sm:$0xff]
    %v4517 = vld [vmem:[%s540 + $0x10] sm:$0xff]
    %v4518 = vld [vmem:[%s540 + $0x18] sm:$0xff]
    %v4519 = vld [vmem:[%s540 + $0x20] sm:$0xff]
    %v4520 = vld [vmem:[%s540 + $0x28] sm:$0xff]
    %v4521 = vld [vmem:[%s540 + $0x30] sm:$0xff]
    %v4522 = vld [vmem:[%s540 + $0x38] sm:$0xff]
    %v4523 = vld [vmem:[%s540 + $0x40] sm:$0xff]
    %v4524 = vld [vmem:[%s540 + $0x48] sm:$0xff]
    %v4525 = vld [vmem:[%s540 + $0x50] sm:$0xff]
    %v4526 = vld [vmem:[%s540 + $0x58] sm:$0xff]
    %v4527 = vld [vmem:[%s540 + $0x60] sm:$0xf]
    %v4528 = vld [vmem:[%s540 + $0x68] sm:$0xf]
    %v4529 = vld [vmem:[%s540 + $0x70] sm:$0xf]
    %v4530 = vld [vmem:[%s540 + $0x78] sm:$0xf]
    %v4532 = vsel %vm130, %v4511, 0
    %v4535 = vsel %vm130, %v4512, 0
    %v4538 = vsel %vm130, %v4513, 0
    %v4541 = vsel %vm130, %v4514, 0
    %v4544 = vsel %vm143, %v4527, 0
    %v4547 = vsel %vm143, %v4528, 0
    %v4550 = vsel %vm143, %v4529, 0
    %v4553 = vsel %vm143, %v4530, 0
    %4555 = vmatprep.subr.mxu0 %v4516
    %4556 = vmatpush1.msra.mxu0 %v4515
    %4557 = vmatprep.subr.mxu0 %v4520
    %4558 = vmatpush1.msra.mxu0 %v4519
    %4559 = vmatprep.subr.mxu0 %v4524
    %4560 = vmatpush1.msra.mxu0 %v4523
    %4561 = vmatprep.subr.mxu0 %v4547
    %4562 = vmatpush1.msra.mxu0 %v4544
    %4563 = vmatprep.subr.mxu0 0.0
    %4564 = vmatpush1.msra.mxu0 0.0
    %4565 = vmatprep.subr.mxu0 0.0
    %4566 = vmatpush1.msra.mxu0 0.0
    %4567 = vmatprep.subr.mxu0 0.0
    %4568 = vmatpush1.msra.mxu0 0.0
    %4569 = vmatprep.subr.mxu0 0.0
    %4570 = vmatpush1.msra.mxu0 0.0
    %4571 = vmatprep.subr.mxu0 0.0
    %4572 = vmatpush1.msra.mxu0 0.0
    %4573 = vmatprep.subr.mxu0 0.0
    %4574 = vmatpush1.msra.mxu0 0.0
    %4575 = vmatprep.subr.mxu0 0.0
    %4576 = vmatpush1.msra.mxu0 0.0
    %4577 = vmatprep.subr.mxu0 0.0
    %4578 = vmatpush1.msra.mxu0 0.0
    %4579 = vmatprep.subr.mxu0 0.0
    %4580 = vmatpush1.msra.mxu0 0.0
    %4581 = vmatprep.subr.mxu0 0.0
    %4582 = vmatpush1.msra.mxu0 0.0
    %4583 = vmatprep.subr.mxu0 0.0
    %4584 = vmatpush1.msra.mxu0 0.0
    %4585 = vmatprep.subr.mxu0 0.0
    %4586 = vmatpush1.msra.mxu0 0.0
    %4587 = vmatprep.subr.mxu0 0.0
    %4588 = vmatpush1.msra.mxu0 0.0
    %4589 = vmatprep.subr.mxu0 0.0
    %4590 = vmatpush1.msra.mxu0 0.0
    %4591 = vmatprep.subr.mxu0 0.0
    %4592 = vmatpush1.msra.mxu0 0.0
    %4593 = vmatprep.subr.mxu0 0.0
    %4594 = vmatpush1.msra.mxu0 0.0
    %4595 = vmatprep.subr.mxu0 0.0
    %4596 = vmatpush1.msra.mxu0 0.0
    %4597 = vmatprep.subr.mxu0 0.0
    %4598 = vmatpush1.msra.mxu0 0.0
    %4599 = vmatprep.subr.mxu0 0.0
    %4600 = vmatpush1.msra.mxu0 0.0
    %4601 = vmatprep.subr.mxu0 0.0
    %4602 = vmatpush1.msra.mxu0 0.0
    %4603 = vmatprep.subr.mxu0 0.0
    %4604 = vmatpush1.msra.mxu0 0.0
    %4605 = vmatprep.subr.mxu0 0.0
    %4606 = vmatpush1.msra.mxu0 0.0
    %4607 = vmatprep.subr.mxu0 0.0
    %4608 = vmatpush1.msra.mxu0 0.0
    %4609 = vmatprep.subr.mxu0 0.0
    %4610 = vmatpush1.msra.mxu0 0.0
    %4611 = vmatprep.subr.mxu0 0.0
    %4612 = vmatpush1.msra.mxu0 0.0
    %4613 = vmatprep.subr.mxu0 0.0
    %4614 = vmatpush1.msra.mxu0 0.0
    %4615 = vmatprep.subr.mxu0 0.0
    %4616 = vmatpush1.msra.mxu0 0.0
    %4617 = vmatprep.subr.mxu0 0.0
    %4618 = vmatpush1.msra.mxu0 0.0
    %4619 = vmatprep.mubr.f32.mxu0 0.0
    %4620 = vmatmul.mubr.f32.gmra.mrb[0].mxu0 %v4532
    %v4621 = vpop.f32.mrb[0].mxu0
    %v4622 = vadd.f32 0.0, %v4621
    %v4623 = vpop.f32.mrb[0].mxu0
    %v4624 = vadd.f32 0.0, %v4623
    %4625 = vmatprep.mubr.f32.mxu0 0.0
    %4626 = vmatmul.mubr.f32.gmra.mrb[0].mxu0 %v4535
    %v4627 = vpop.f32.mrb[0].mxu0
    %v4628 = vadd.f32 0.0, %v4627
    %v4629 = vpop.f32.mrb[0].mxu0
    %v4630 = vadd.f32 0.0, %v4629
    %4631 = vmatprep.mubr.f32.mxu0 0.0
    %4632 = vmatmul.mubr.f32.gmra.mrb[0].mxu0 %v4538
    %v4633 = vpop.f32.mrb[0].mxu0
    %v4634 = vadd.f32 0.0, %v4633
    %v4635 = vpop.f32.mrb[0].mxu0
    %v4636 = vadd.f32 0.0, %v4635
    %4637 = vmatprep.mubr.f32.mxu0 0.0
    %4638 = vmatmul.mubr.f32.gmra.mrb[0].mxu0 %v4541
    %v4639 = vpop.f32.mrb[0].mxu0
    %v4640 = vadd.f32 0.0, %v4639
    %v4641 = vpop.f32.mrb[0].mxu0
    %v4642 = vadd.f32 0.0, %v4641
    %4643 = vdwg.mxu0
    %4644 = vmatprep.subr.mxu0 %v4518
    %4645 = vmatpush1.msra.mxu0 %v4517
    %4646 = vmatprep.subr.mxu0 %v4522
    %4647 = vmatpush1.msra.mxu0 %v4521
    %4648 = vmatprep.subr.mxu0 %v4526
    %4649 = vmatpush1.msra.mxu0 %v4525
    %4650 = vmatprep.subr.mxu0 %v4553
    %4651 = vmatpush1.msra.mxu0 %v4550
    %4652 = vmatprep.subr.mxu0 0.0
    %4653 = vmatpush1.msra.mxu0 0.0
    %4654 = vmatprep.subr.mxu0 0.0
    %4655 = vmatpush1.msra.mxu0 0.0
    %4656 = vmatprep.subr.mxu0 0.0
    %4657 = vmatpush1.msra.mxu0 0.0
    %4658 = vmatprep.subr.mxu0 0.0
    %4659 = vmatpush1.msra.mxu0 0.0
    %4660 = vmatprep.subr.mxu0 0.0
    %4661 = vmatpush1.msra.mxu0 0.0
    %4662 = vmatprep.subr.mxu0 0.0
    %4663 = vmatpush1.msra.mxu0 0.0
    %4664 = vmatprep.subr.mxu0 0.0
    %4665 = vmatpush1.msra.mxu0 0.0
    %4666 = vmatprep.subr.mxu0 0.0
    %4667 = vmatpush1.msra.mxu0 0.0
    %4668 = vmatprep.subr.mxu0 0.0
    %4669 = vmatpush1.msra.mxu0 0.0
    %4670 = vmatprep.subr.mxu0 0.0
    %4671 = vmatpush1.msra.mxu0 0.0
    %4672 = vmatprep.subr.mxu0 0.0
    %4673 = vmatpush1.msra.mxu0 0.0
    %4674 = vmatprep.subr.mxu0 0.0
    %4675 = vmatpush1.msra.mxu0 0.0
    %4676 = vmatprep.subr.mxu0 0.0
    %4677 = vmatpush1.msra.mxu0 0.0
    %4678 = vmatprep.subr.mxu0 0.0
    %4679 = vmatpush1.msra.mxu0 0.0
    %4680 = vmatprep.subr.mxu0 0.0
    %4681 = vmatpush1.msra.mxu0 0.0
    %4682 = vmatprep.subr.mxu0 0.0
    %4683 = vmatpush1.msra.mxu0 0.0
    %4684 = vmatprep.subr.mxu0 0.0
    %4685 = vmatpush1.msra.mxu0 0.0
    %4686 = vmatprep.subr.mxu0 0.0
    %4687 = vmatpush1.msra.mxu0 0.0
    %4688 = vmatprep.subr.mxu0 0.0
    %4689 = vmatpush1.msra.mxu0 0.0
    %4690 = vmatprep.subr.mxu0 0.0
    %4691 = vmatpush1.msra.mxu0 0.0
    %4692 = vmatprep.subr.mxu0 0.0
    %4693 = vmatpush1.msra.mxu0 0.0
    %4694 = vmatprep.subr.mxu0 0.0
    %4695 = vmatpush1.msra.mxu0 0.0
    %4696 = vmatprep.subr.mxu0 0.0
    %4697 = vmatpush1.msra.mxu0 0.0
    %4698 = vmatprep.subr.mxu0 0.0
    %4699 = vmatpush1.msra.mxu0 0.0
    %4700 = vmatprep.subr.mxu0 0.0
    %4701 = vmatpush1.msra.mxu0 0.0
    %4702 = vmatprep.subr.mxu0 0.0
    %4703 = vmatpush1.msra.mxu0 0.0
    %4704 = vmatprep.subr.mxu0 0.0
    %4705 = vmatpush1.msra.mxu0 0.0
    %4706 = vmatprep.subr.mxu0 0.0
    %4707 = vmatpush1.msra.mxu0 0.0
    %4708 = vmatprep.mubr.f32.mxu0 0.0
    %4709 = vmatmul.mubr.f32.gmra.mrb[0].mxu0 %v4532
    %v4710 = vpop.f32.mrb[0].mxu0
    %v4711 = vadd.f32 0.0, %v4710
    %v4712 = vpop.f32.mrb[0].mxu0
    %v4713 = vadd.f32 0.0, %v4712
    %4714 = vmatprep.mubr.f32.mxu0 0.0
    %4715 = vmatmul.mubr.f32.gmra.mrb[0].mxu0 %v4535
    %v4716 = vpop.f32.mrb[0].mxu0
    %v4717 = vadd.f32 0.0, %v4716
    %v4718 = vpop.f32.mrb[0].mxu0
    %v4719 = vadd.f32 0.0, %v4718
    %4720 = vmatprep.mubr.f32.mxu0 0.0
    %4721 = vmatmul.mubr.f32.gmra.mrb[0].mxu0 %v4538
    %v4722 = vpop.f32.mrb[0].mxu0
    %v4723 = vadd.f32 0.0, %v4722
    %v4724 = vpop.f32.mrb[0].mxu0
    %v4725 = vadd.f32 0.0, %v4724
    %4726 = vmatprep.mubr.f32.mxu0 0.0
    %4727 = vmatmul.mubr.f32.gmra.mrb[0].mxu0 %v4541
    %v4728 = vpop.f32.mrb[0].mxu0
    %v4729 = vadd.f32 0.0, %v4728
    %v4730 = vpop.f32.mrb[0].mxu0
    %v4731 = vadd.f32 0.0, %v4730
    %4732 = vdwg.mxu0
    %v4733 = vadd.f32 %v4400, %v4622
    %v4734 = vadd.f32 %v4402, %v4624
    %v4735 = vadd.f32 %v4489, %v4711
    %v4736 = vadd.f32 %v4491, %v4713
    %v4737 = vadd.f32 %v4406, %v4628
    %v4738 = vadd.f32 %v4408, %v4630
    %v4739 = vadd.f32 %v4495, %v4717
    %v4740 = vadd.f32 %v4497, %v4719
    %v4741 = vadd.f32 %v4412, %v4634
    %v4742 = vadd.f32 %v4414, %v4636
    %v4743 = vadd.f32 %v4501, %v4723
    %v4744 = vadd.f32 %v4503, %v4725
    %v4745 = vadd.f32 %v4418, %v4640
    %v4746 = vadd.f32 %v4420, %v4642
    %v4747 = vadd.f32 %v4507, %v4729
    %v4748 = vadd.f32 %v4509, %v4731
    %v4749 = vld [vmem:[%s2] sm:$0xf]
    %v4751 = vlaneseq
    %v4752 = vshrl.u32 %v4751, 7
    %v4753 = vsub.s32 0, %v4752
    %v4754 = vrot.slane %v4749, %v4753
    %v4755 = vlaneseq
    %v4756 = vshrl.u32 %v4755, 7
    %v4757 = vsub.s32 1, %v4756
    %v4758 = vrot.slane %v4749, %v4757
    %v4759 = vlaneseq
    %v4760 = vshrl.u32 %v4759, 7
    %v4761 = vsub.s32 2, %v4760
    %v4762 = vrot.slane %v4749, %v4761
    %v4763 = vlaneseq
    %v4764 = vshrl.u32 %v4763, 7
    %v4765 = vsub.s32 3, %v4764
    %v4766 = vrot.slane %v4749, %v4765
    %v4771 = vmul.f32 %v4733, %v4754
    %v4772 = vmul.f32 %v4734, %v4758
    %v4773 = vmul.f32 %v4735, %v4762
    %v4774 = vmul.f32 %v4736, %v4766
    %v4775 = vmul.f32 %v4737, %v4754
    %v4776 = vmul.f32 %v4738, %v4758
    %v4777 = vmul.f32 %v4739, %v4762
    %v4778 = vmul.f32 %v4740, %v4766
    %v4779 = vmul.f32 %v4741, %v4754
    %v4780 = vmul.f32 %v4742, %v4758
    %v4781 = vmul.f32 %v4743, %v4762
    %v4782 = vmul.f32 %v4744, %v4766
    %v4783 = vmul.f32 %v4745, %v4754
    %v4784 = vmul.f32 %v4746, %v4758
    %v4785 = vmul.f32 %v4747, %v4762
    %v4786 = vmul.f32 %v4748, %v4766
    %v4787 = vld [vmem:[%s3] sm:$0xf]
    %v4789 = vlaneseq
    %v4790 = vshrl.u32 %v4789, 7
    %v4791 = vsub.s32 0, %v4790
    %v4792 = vrot.slane %v4787, %v4791
    %v4793 = vlaneseq
    %v4794 = vshrl.u32 %v4793, 7
    %v4795 = vsub.s32 1, %v4794
    %v4796 = vrot.slane %v4787, %v4795
    %v4797 = vlaneseq
    %v4798 = vshrl.u32 %v4797, 7
    %v4799 = vsub.s32 2, %v4798
    %v4800 = vrot.slane %v4787, %v4799
    %v4801 = vlaneseq
    %v4802 = vshrl.u32 %v4801, 7
    %v4803 = vsub.s32 3, %v4802
    %v4804 = vrot.slane %v4787, %v4803
    %v4809 = vadd.f32 %v4771, %v4792
    %v4810 = vadd.f32 %v4772, %v4796
    %v4811 = vadd.f32 %v4773, %v4800
    %v4812 = vadd.f32 %v4774, %v4804
    %v4813 = vadd.f32 %v4775, %v4792
    %v4814 = vadd.f32 %v4776, %v4796
    %v4815 = vadd.f32 %v4777, %v4800
    %v4816 = vadd.f32 %v4778, %v4804
    %v4817 = vadd.f32 %v4779, %v4792
    %v4818 = vadd.f32 %v4780, %v4796
    %v4819 = vadd.f32 %v4781, %v4800
    %v4820 = vadd.f32 %v4782, %v4804
    %v4821 = vadd.f32 %v4783, %v4792
    %v4822 = vadd.f32 %v4784, %v4796
    %v4823 = vadd.f32 %v4785, %v4800
    %v4824 = vadd.f32 %v4786, %v4804
    %v4825 = vmax.f32 %v4809, 0.0
    %v4826 = vmax.f32 %v4810, 0.0
    %v4827 = vmax.f32 %v4811, 0.0
    %v4828 = vmax.f32 %v4812, 0.0
    %v4829 = vmax.f32 %v4813, 0.0
    %v4830 = vmax.f32 %v4814, 0.0
    %v4831 = vmax.f32 %v4815, 0.0
    %v4832 = vmax.f32 %v4816, 0.0
    %v4833 = vmax.f32 %v4817, 0.0
    %v4834 = vmax.f32 %v4818, 0.0
    %v4835 = vmax.f32 %v4819, 0.0
    %v4836 = vmax.f32 %v4820, 0.0
    %v4837 = vmax.f32 %v4821, 0.0
    %v4838 = vmax.f32 %v4822, 0.0
    %v4839 = vmax.f32 %v4823, 0.0
    %v4840 = vmax.f32 %v4824, 0.0
    %v4841 = vld [vmem:[%s4] sm:$0xff]
    %v4842 = vld [vmem:[%s4 + $0x8] sm:$0x1f]
    %v4844 = vsel %vm869, %v4841, 0
    %v4847 = vsel %vm869, %v4842, 0
    %v4850 = vsel %vm876, %v4837, 0
    %v4853 = vsel %vm876, %v4838, 0
    %v4856 = vsel %vm876, %v4839, 0
    %v4859 = vsel %vm876, %v4840, 0
    %4861 = vmatprep.subr.mxu0 %v4826
    %4862 = vmatpush1.msra.mxu0 %v4825
    %4863 = vmatprep.subr.mxu0 %v4830
    %4864 = vmatpush1.msra.mxu0 %v4829
    %4865 = vmatprep.subr.mxu0 %v4834
    %4866 = vmatpush1.msra.mxu0 %v4833
    %4867 = vmatprep.subr.mxu0 %v4853
    %4868 = vmatpush1.msra.mxu0 %v4850
    %4869 = vmatprep.subr.mxu0 0.0
    %4870 = vmatpush1.msra.mxu0 0.0
    %4871 = vmatprep.subr.mxu0 0.0
    %4872 = vmatpush1.msra.mxu0 0.0
    %4873 = vmatprep.subr.mxu0 0.0
    %4874 = vmatpush1.msra.mxu0 0.0
    %4875 = vmatprep.subr.mxu0 0.0
    %4876 = vmatpush1.msra.mxu0 0.0
    %4877 = vmatprep.subr.mxu0 0.0
    %4878 = vmatpush1.msra.mxu0 0.0
    %4879 = vmatprep.subr.mxu0 0.0
    %4880 = vmatpush1.msra.mxu0 0.0
    %4881 = vmatprep.subr.mxu0 0.0
    %4882 = vmatpush1.msra.mxu0 0.0
    %4883 = vmatprep.subr.mxu0 0.0
    %4884 = vmatpush1.msra.mxu0 0.0
    %4885 = vmatprep.subr.mxu0 0.0
    %4886 = vmatpush1.msra.mxu0 0.0
    %4887 = vmatprep.subr.mxu0 0.0
    %4888 = vmatpush1.msra.mxu0 0.0
    %4889 = vmatprep.subr.mxu0 0.0
    %4890 = vmatpush1.msra.mxu0 0.0
    %4891 = vmatprep.subr.mxu0 0.0
    %4892 = vmatpush1.msra.mxu0 0.0
    %4893 = vmatprep.subr.mxu0 0.0
    %4894 = vmatpush1.msra.mxu0 0.0
    %4895 = vmatprep.subr.mxu0 0.0
    %4896 = vmatpush1.msra.mxu0 0.0
    %4897 = vmatprep.subr.mxu0 0.0
    %4898 = vmatpush1.msra.mxu0 0.0
    %4899 = vmatprep.subr.mxu0 0.0
    %4900 = vmatpush1.msra.mxu0 0.0
    %4901 = vmatprep.subr.mxu0 0.0
    %4902 = vmatpush1.msra.mxu0 0.0
    %4903 = vmatprep.subr.mxu0 0.0
    %4904 = vmatpush1.msra.mxu0 0.0
    %4905 = vmatprep.subr.mxu0 0.0
    %4906 = vmatpush1.msra.mxu0 0.0
    %4907 = vmatprep.subr.mxu0 0.0
    %4908 = vmatpush1.msra.mxu0 0.0
    %4909 = vmatprep.subr.mxu0 0.0
    %4910 = vmatpush1.msra.mxu0 0.0
    %4911 = vmatprep.subr.mxu0 0.0
    %4912 = vmatpush1.msra.mxu0 0.0
    %4913 = vmatprep.subr.mxu0 0.0
    %4914 = vmatpush1.msra.mxu0 0.0
    %4915 = vmatprep.subr.mxu0 0.0
    %4916 = vmatpush1.msra.mxu0 0.0
    %4917 = vmatprep.subr.mxu0 0.0
    %4918 = vmatpush1.msra.mxu0 0.0
    %4919 = vmatprep.subr.mxu0 0.0
    %4920 = vmatpush1.msra.mxu0 0.0
    %4921 = vmatprep.subr.mxu0 0.0
    %4922 = vmatpush1.msra.mxu0 0.0
    %4923 = vmatprep.subr.mxu0 0.0
    %4924 = vmatpush1.msra.mxu0 0.0
    %4925 = vmatprep.mubr.f32.mxu0 0.0
    %4926 = vmatmul.mubr.f32.gmra.mrb[0].mxu0 %v4844
    %v4927 = vpop.f32.mrb[0].mxu0
    %v4928 = vadd.f32 0.0, %v4927
    %v4929 = vpop.f32.mrb[0].mxu0
    %v4930 = vadd.f32 0.0, %v4929
    %4931 = vmatprep.mubr.f32.mxu0 0.0
    %4932 = vmatmul.mubr.f32.gmra.mrb[0].mxu0 %v4847
    %v4933 = vpop.f32.mrb[0].mxu0
    %v4934 = vadd.f32 0.0, %v4933
    %v4935 = vpop.f32.mrb[0].mxu0
    %v4936 = vadd.f32 0.0, %v4935
    %4937 = vdwg.mxu0
    %4938 = vmatprep.subr.mxu0 %v4828
    %4939 = vmatpush1.msra.mxu0 %v4827
    %4940 = vmatprep.subr.mxu0 %v4832
    %4941 = vmatpush1.msra.mxu0 %v4831
    %4942 = vmatprep.subr.mxu0 %v4836
    %4943 = vmatpush1.msra.mxu0 %v4835
    %4944 = vmatprep.subr.mxu0 %v4859
    %4945 = vmatpush1.msra.mxu0 %v4856
    %4946 = vmatprep.subr.mxu0 0.0
    %4947 = vmatpush1.msra.mxu0 0.0
    %4948 = vmatprep.subr.mxu0 0.0
    %4949 = vmatpush1.msra.mxu0 0.0
    %4950 = vmatprep.subr.mxu0 0.0
    %4951 = vmatpush1.msra.mxu0 0.0
    %4952 = vmatprep.subr.mxu0 0.0
    %4953 = vmatpush1.msra.mxu0 0.0
    %4954 = vmatprep.subr.mxu0 0.0
    %4955 = vmatpush1.msra.mxu0 0.0
    %4956 = vmatprep.subr.mxu0 0.0
    %4957 = vmatpush1.msra.mxu0 0.0
    %4958 = vmatprep.subr.mxu0 0.0
    %4959 = vmatpush1.msra.mxu0 0.0
    %4960 = vmatprep.subr.mxu0 0.0
    %4961 = vmatpush1.msra.mxu0 0.0
    %4962 = vmatprep.subr.mxu0 0.0
    %4963 = vmatpush1.msra.mxu0 0.0
    %4964 = vmatprep.subr.mxu0 0.0
    %4965 = vmatpush1.msra.mxu0 0.0
    %4966 = vmatprep.subr.mxu0 0.0
    %4967 = vmatpush1.msra.mxu0 0.0
    %4968 = vmatprep.subr.mxu0 0.0
    %4969 = vmatpush1.msra.mxu0 0.0
    %4970 = vmatprep.subr.mxu0 0.0
    %4971 = vmatpush1.msra.mxu0 0.0
    %4972 = vmatprep.subr.mxu0 0.0
    %4973 = vmatpush1.msra.mxu0 0.0
    %4974 = vmatprep.subr.mxu0 0.0
    %4975 = vmatpush1.msra.mxu0 0.0
    %4976 = vmatprep.subr.mxu0 0.0
    %4977 = vmatpush1.msra.mxu0 0.0
    %4978 = vmatprep.subr.mxu0 0.0
    %4979 = vmatpush1.msra.mxu0 0.0
    %4980 = vmatprep.subr.mxu0 0.0
    %4981 = vmatpush1.msra.mxu0 0.0
    %4982 = vmatprep.subr.mxu0 0.0
    %4983 = vmatpush1.msra.mxu0 0.0
    %4984 = vmatprep.subr.mxu0 0.0
    %4985 = vmatpush1.msra.mxu0 0.0
    %4986 = vmatprep.subr.mxu0 0.0
    %4987 = vmatpush1.msra.mxu0 0.0
    %4988 = vmatprep.subr.mxu0 0.0
    %4989 = vmatpush1.msra.mxu0 0.0
    %4990 = vmatprep.subr.mxu0 0.0
    %4991 = vmatpush1.msra.mxu0 0.0
    %4992 = vmatprep.subr.mxu0 0.0
    %4993 = vmatpush1.msra.mxu0 0.0
    %4994 = vmatprep.subr.mxu0 0.0
    %4995 = vmatpush1.msra.mxu0 0.0
    %4996 = vmatprep.subr.mxu0 0.0
    %4997 = vmatpush1.msra.mxu0 0.0
    %4998 = vmatprep.subr.mxu0 0.0
    %4999 = vmatpush1.msra.mxu0 0.0
    %5000 = vmatprep.subr.mxu0 0.0
    %5001 = vmatpush1.msra.mxu0 0.0
    %5002 = vmatprep.mubr.f32.mxu0 0.0
    %5003 = vmatmul.mubr.f32.gmra.mrb[0].mxu0 %v4844
    %v5004 = vpop.f32.mrb[0].mxu0
    %v5005 = vadd.f32 0.0, %v5004
    %v5006 = vpop.f32.mrb[0].mxu0
    %v5007 = vadd.f32 0.0, %v5006
    %5008 = vmatprep.mubr.f32.mxu0 0.0
    %5009 = vmatmul.mubr.f32.gmra.mrb[0].mxu0 %v4847
    %v5010 = vpop.f32.mrb[0].mxu0
    %v5011 = vadd.f32 0.0, %v5010
    %v5012 = vpop.f32.mrb[0].mxu0
    %v5013 = vadd.f32 0.0, %v5012
    %5014 = vdwg.mxu0
    %v5015 = vld [vmem:[%s1043] sm:$0xff]
    %v5016 = vld [vmem:[%s1043 + $0x8] sm:$0x1f]
    %v5018 = vsel %vm869, %v5015, 0
    %v5021 = vsel %vm869, %v5016, 0
    %5023 = vmatprep.subr.mxu0 %v4826
    %5024 = vmatpush1.msra.mxu0 %v4825
    %5025 = vmatprep.subr.mxu0 %v4830
    %5026 = vmatpush1.msra.mxu0 %v4829
    %5027 = vmatprep.subr.mxu0 %v4834
    %5028 = vmatpush1.msra.mxu0 %v4833
    %5029 = vmatprep.subr.mxu0 %v4853
    %5030 = vmatpush1.msra.mxu0 %v4850
    %5031 = vmatprep.subr.mxu0 0.0
    %5032 = vmatpush1.msra.mxu0 0.0
    %5033 = vmatprep.subr.mxu0 0.0
    %5034 = vmatpush1.msra.mxu0 0.0
    %5035 = vmatprep.subr.mxu0 0.0
    %5036 = vmatpush1.msra.mxu0 0.0
    %5037 = vmatprep.subr.mxu0 0.0
    %5038 = vmatpush1.msra.mxu0 0.0
    %5039 = vmatprep.subr.mxu0 0.0
    %5040 = vmatpush1.msra.mxu0 0.0
    %5041 = vmatprep.subr.mxu0 0.0
    %5042 = vmatpush1.msra.mxu0 0.0
    %5043 = vmatprep.subr.mxu0 0.0
    %5044 = vmatpush1.msra.mxu0 0.0
    %5045 = vmatprep.subr.mxu0 0.0
    %5046 = vmatpush1.msra.mxu0 0.0
    %5047 = vmatprep.subr.mxu0 0.0
    %5048 = vmatpush1.msra.mxu0 0.0
    %5049 = vmatprep.subr.mxu0 0.0
    %5050 = vmatpush1.msra.mxu0 0.0
    %5051 = vmatprep.subr.mxu0 0.0
    %5052 = vmatpush1.msra.mxu0 0.0
    %5053 = vmatprep.subr.mxu0 0.0
    %5054 = vmatpush1.msra.mxu0 0.0
    %5055 = vmatprep.subr.mxu0 0.0
    %5056 = vmatpush1.msra.mxu0 0.0
    %5057 = vmatprep.subr.mxu0 0.0
    %5058 = vmatpush1.msra.mxu0 0.0
    %5059 = vmatprep.subr.mxu0 0.0
    %5060 = vmatpush1.msra.mxu0 0.0
    %5061 = vmatprep.subr.mxu0 0.0
    %5062 = vmatpush1.msra.mxu0 0.0
    %5063 = vmatprep.subr.mxu0 0.0
    %5064 = vmatpush1.msra.mxu0 0.0
    %5065 = vmatprep.subr.mxu0 0.0
    %5066 = vmatpush1.msra.mxu0 0.0
    %5067 = vmatprep.subr.mxu0 0.0
    %5068 = vmatpush1.msra.mxu0 0.0
    %5069 = vmatprep.subr.mxu0 0.0
    %5070 = vmatpush1.msra.mxu0 0.0
    %5071 = vmatprep.subr.mxu0 0.0
    %5072 = vmatpush1.msra.mxu0 0.0
    %5073 = vmatprep.subr.mxu0 0.0
    %5074 = vmatpush1.msra.mxu0 0.0
    %5075 = vmatprep.subr.mxu0 0.0
    %5076 = vmatpush1.msra.mxu0 0.0
    %5077 = vmatprep.subr.mxu0 0.0
    %5078 = vmatpush1.msra.mxu0 0.0
    %5079 = vmatprep.subr.mxu0 0.0
    %5080 = vmatpush1.msra.mxu0 0.0
    %5081 = vmatprep.subr.mxu0 0.0
    %5082 = vmatpush1.msra.mxu0 0.0
    %5083 = vmatprep.subr.mxu0 0.0
    %5084 = vmatpush1.msra.mxu0 0.0
    %5085 = vmatprep.subr.mxu0 0.0
    %5086 = vmatpush1.msra.mxu0 0.0
    %5087 = vmatprep.mubr.f32.mxu0 0.0
    %5088 = vmatmul.mubr.f32.gmra.mrb[0].mxu0 %v5018
    %v5089 = vpop.f32.mrb[0].mxu0
    %v5090 = vadd.f32 0.0, %v5089
    %v5091 = vpop.f32.mrb[0].mxu0
    %v5092 = vadd.f32 0.0, %v5091
    %5093 = vmatprep.mubr.f32.mxu0 0.0
    %5094 = vmatmul.mubr.f32.gmra.mrb[0].mxu0 %v5021
    %v5095 = vpop.f32.mrb[0].mxu0
    %v5096 = vadd.f32 0.0, %v5095
    %v5097 = vpop.f32.mrb[0].mxu0
    %v5098 = vadd.f32 0.0, %v5097
    %5099 = vdwg.mxu0
    %5100 = vmatprep.subr.mxu0 %v4828
    %5101 = vmatpush1.msra.mxu0 %v4827
    %5102 = vmatprep.subr.mxu0 %v4832
    %5103 = vmatpush1.msra.mxu0 %v4831
    %5104 = vmatprep.subr.mxu0 %v4836
    %5105 = vmatpush1.msra.mxu0 %v4835
    %5106 = vmatprep.subr.mxu0 %v4859
    %5107 = vmatpush1.msra.mxu0 %v4856
    %5108 = vmatprep.subr.mxu0 0.0
    %5109 = vmatpush1.msra.mxu0 0.0
    %5110 = vmatprep.subr.mxu0 0.0
    %5111 = vmatpush1.msra.mxu0 0.0
    %5112 = vmatprep.subr.mxu0 0.0
    %5113 = vmatpush1.msra.mxu0 0.0
    %5114 = vmatprep.subr.mxu0 0.0
    %5115 = vmatpush1.msra.mxu0 0.0
    %5116 = vmatprep.subr.mxu0 0.0
    %5117 = vmatpush1.msra.mxu0 0.0
    %5118 = vmatprep.subr.mxu0 0.0
    %5119 = vmatpush1.msra.mxu0 0.0
    %5120 = vmatprep.subr.mxu0 0.0
    %5121 = vmatpush1.msra.mxu0 0.0
    %5122 = vmatprep.subr.mxu0 0.0
    %5123 = vmatpush1.msra.mxu0 0.0
    %5124 = vmatprep.subr.mxu0 0.0
    %5125 = vmatpush1.msra.mxu0 0.0
    %5126 = vmatprep.subr.mxu0 0.0
    %5127 = vmatpush1.msra.mxu0 0.0
    %5128 = vmatprep.subr.mxu0 0.0
    %5129 = vmatpush1.msra.mxu0 0.0
    %5130 = vmatprep.subr.mxu0 0.0
    %5131 = vmatpush1.msra.mxu0 0.0
    %5132 = vmatprep.subr.mxu0 0.0
    %5133 = vmatpush1.msra.mxu0 0.0
    %5134 = vmatprep.subr.mxu0 0.0
    %5135 = vmatpush1.msra.mxu0 0.0
    %5136 = vmatprep.subr.mxu0 0.0
    %5137 = vmatpush1.msra.mxu0 0.0
    %5138 = vmatprep.subr.mxu0 0.0
    %5139 = vmatpush1.msra.mxu0 0.0
    %5140 = vmatprep.subr.mxu0 0.0
    %5141 = vmatpush1.msra.mxu0 0.0
    %5142 = vmatprep.subr.mxu0 0.0
    %5143 = vmatpush1.msra.mxu0 0.0
    %5144 = vmatprep.subr.mxu0 0.0
    %5145 = vmatpush1.msra.mxu0 0.0
    %5146 = vmatprep.subr.mxu0 0.0
    %5147 = vmatpush1.msra.mxu0 0.0
    %5148 = vmatprep.subr.mxu0 0.0
    %5149 = vmatpush1.msra.mxu0 0.0
    %5150 = vmatprep.subr.mxu0 0.0
    %5151 = vmatpush1.msra.mxu0 0.0
    %5152 = vmatprep.subr.mxu0 0.0
    %5153 = vmatpush1.msra.mxu0 0.0
    %5154 = vmatprep.subr.mxu0 0.0
    %5155 = vmatpush1.msra.mxu0 0.0
    %5156 = vmatprep.subr.mxu0 0.0
    %5157 = vmatpush1.msra.mxu0 0.0
    %5158 = vmatprep.subr.mxu0 0.0
    %5159 = vmatpush1.msra.mxu0 0.0
    %5160 = vmatprep.subr.mxu0 0.0
    %5161 = vmatpush1.msra.mxu0 0.0
    %5162 = vmatprep.subr.mxu0 0.0
    %5163 = vmatpush1.msra.mxu0 0.0
    %5164 = vmatprep.mubr.f32.mxu0 0.0
    %5165 = vmatmul.mubr.f32.gmra.mrb[0].mxu0 %v5018
    %v5166 = vpop.f32.mrb[0].mxu0
    %v5167 = vadd.f32 0.0, %v5166
    %v5168 = vpop.f32.mrb[0].mxu0
    %v5169 = vadd.f32 0.0, %v5168
    %5170 = vmatprep.mubr.f32.mxu0 0.0
    %5171 = vmatmul.mubr.f32.gmra.mrb[0].mxu0 %v5021
    %v5172 = vpop.f32.mrb[0].mxu0
    %v5173 = vadd.f32 0.0, %v5172
    %v5174 = vpop.f32.mrb[0].mxu0
    %v5175 = vadd.f32 0.0, %v5174
    %5176 = vdwg.mxu0
    %v5177 = vmax.f32 %v4928, %v5090
    %v5178 = vmax.f32 %v4930, %v5092
    %v5179 = vmax.f32 %v5005, %v5167
    %v5180 = vmax.f32 %v5007, %v5169
    %v5181 = vmax.f32 %v4934, %v5096
    %v5182 = vmax.f32 %v4936, %v5098
    %v5183 = vmax.f32 %v5011, %v5173
    %v5184 = vmax.f32 %v5013, %v5175
    %v5185 = vld [vmem:[%s5] sm:$0xff]
    %v5186 = vld [vmem:[%s5 + $0x8] sm:$0xff]
    %v5187 = vld [vmem:[%s5 + $0x10] sm:$0xff]
    %v5188 = vld [vmem:[%s5 + $0x18] sm:$0xff]
    %v5189 = vld [vmem:[%s5 + $0x20] sm:$0xff]
    %v5190 = vld [vmem:[%s5 + $0x28] sm:$0xff]
    %v5191 = vld [vmem:[%s5 + $0x30] sm:$0xff]
    %v5192 = vld [vmem:[%s5 + $0x38] sm:$0xff]
    %v5193 = vld [vmem:[%s5 + $0x40] sm:$0xff]
    %v5194 = vld [vmem:[%s5 + $0x48] sm:$0xff]
    %v5195 = vld [vmem:[%s5 + $0x50] sm:$0xff]
    %v5196 = vld [vmem:[%s5 + $0x58] sm:$0xff]
    %v5197 = vld [vmem:[%s5 + $0x60] sm:$0xff]
    %v5198 = vld [vmem:[%s5 + $0x68] sm:$0xff]
    %v5199 = vld [vmem:[%s5 + $0x70] sm:$0xff]
    %v5200 = vld [vmem:[%s5 + $0x78] sm:$0xff]
    %v5201 = vld [vmem:[%s5 + $0x80] sm:$0xff]
    %v5202 = vld [vmem:[%s5 + $0x88] sm:$0xff]
    %v5203 = vld [vmem:[%s5 + $0x90] sm:$0xff]
    %v5204 = vld [vmem:[%s5 + $0x98] sm:$0xff]
    %v5205 = vld [vmem:[%s5 + $0xa0] sm:$0xff]
    %v5206 = vld [vmem:[%s5 + $0xa8] sm:$0xff]
    %v5207 = vld [vmem:[%s5 + $0xb0] sm:$0xff]
    %v5208 = vld [vmem:[%s5 + $0xb8] sm:$0xff]
    %v5209 = vld [vmem:[%s5 + $0xc0] sm:$0xff]
    %v5210 = vld [vmem:[%s5 + $0xc8] sm:$0xff]
    %v5211 = vld [vmem:[%s5 + $0xd0] sm:$0xff]
    %v5212 = vld [vmem:[%s5 + $0xd8] sm:$0xff]
    %v5213 = vld [vmem:[%s5 + $0xe0] sm:$0xff]
    %v5214 = vld [vmem:[%s5 + $0xe8] sm:$0xff]
    %v5215 = vld [vmem:[%s5 + $0xf0] sm:$0xff]
    %v5216 = vld [vmem:[%s5 + $0xf8] sm:$0xff]
    %v5217 = vld [vmem:[%s5 + $0x100] sm:$0xff]
    %v5218 = vld [vmem:[%s5 + $0x108] sm:$0xff]
    %v5219 = vld [vmem:[%s5 + $0x110] sm:$0xff]
    %v5220 = vld [vmem:[%s5 + $0x118] sm:$0xff]
    %v5221 = vld [vmem:[%s5 + $0x120] sm:$0xff]
    %v5222 = vld [vmem:[%s5 + $0x128] sm:$0xff]
    %v5223 = vld [vmem:[%s5 + $0x130] sm:$0xff]
    %v5224 = vld [vmem:[%s5 + $0x138] sm:$0xff]
    %v5225 = vld [vmem:[%s5 + $0x140] sm:$0xff]
    %v5226 = vld [vmem:[%s5 + $0x148] sm:$0xff]
    %v5227 = vld [vmem:[%s5 + $0x150] sm:$0xff]
    %v5228 = vld [vmem:[%s5 + $0x158] sm:$0xff]
    %v5229 = vld [vmem:[%s5 + $0x160] sm:$0xff]
    %v5230 = vld [vmem:[%s5 + $0x168] sm:$0xff]
    %v5231 = vld [vmem:[%s5 + $0x170] sm:$0xff]
    %v5232 = vld [vmem:[%s5 + $0x178] sm:$0xff]
    %v5233 = vld [vmem:[%s5 + $0x180] sm:$0xff]
    %v5234 = vld [vmem:[%s5 + $0x188] sm:$0xff]
    %v5235 = vld [vmem:[%s5 + $0x190] sm:$0xff]
    %v5236 = vld [vmem:[%s5 + $0x198] sm:$0xff]
    %v5237 = vld [vmem:[%s5 + $0x1a0] sm:$0xff]
    %v5238 = vld [vmem:[%s5 + $0x1a8] sm:$0xff]
    %v5239 = vld [vmem:[%s5 + $0x1b0] sm:$0xff]
    %v5240 = vld [vmem:[%s5 + $0x1b8] sm:$0xff]
    %v5241 = vld [vmem:[%s5 + $0x1c0] sm:$0xff]
    %v5242 = vld [vmem:[%s5 + $0x1c8] sm:$0xff]
    %v5243 = vld [vmem:[%s5 + $0x1d0] sm:$0xff]
    %v5244 = vld [vmem:[%s5 + $0x1d8] sm:$0xff]
    %v5245 = vld [vmem:[%s5 + $0x1e0] sm:$0xff]
    %v5246 = vld [vmem:[%s5 + $0x1e8] sm:$0xff]
    %v5247 = vld [vmem:[%s5 + $0x1f0] sm:$0xff]
    %v5248 = vld [vmem:[%s5 + $0x1f8] sm:$0xff]
    %v5249 = vld [vmem:[%s5 + $0x200] sm:$0xff]
    %v5250 = vld [vmem:[%s5 + $0x208] sm:$0xff]
    %v5251 = vld [vmem:[%s5 + $0x210] sm:$0xff]
    %v5252 = vld [vmem:[%s5 + $0x218] sm:$0xff]
    %v5253 = vld [vmem:[%s5 + $0x220] sm:$0xff]
    %v5254 = vld [vmem:[%s5 + $0x228] sm:$0xff]
    %v5255 = vld [vmem:[%s5 + $0x230] sm:$0xff]
    %v5256 = vld [vmem:[%s5 + $0x238] sm:$0xff]
    %v5257 = vld [vmem:[%s5 + $0x240] sm:$0xff]
    %v5258 = vld [vmem:[%s5 + $0x248] sm:$0xff]
    %v5259 = vld [vmem:[%s5 + $0x250] sm:$0xff]
    %v5260 = vld [vmem:[%s5 + $0x258] sm:$0xff]
    %v5261 = vld [vmem:[%s5 + $0x260] sm:$0xff]
    %v5262 = vld [vmem:[%s5 + $0x268] sm:$0xff]
    %v5263 = vld [vmem:[%s5 + $0x270] sm:$0xff]
    %v5264 = vld [vmem:[%s5 + $0x278] sm:$0xff]
    %v5265 = vld [vmem:[%s5 + $0x280] sm:$0xff]
    %v5266 = vld [vmem:[%s5 + $0x288] sm:$0xff]
    %v5267 = vld [vmem:[%s5 + $0x290] sm:$0xff]
    %v5268 = vld [vmem:[%s5 + $0x298] sm:$0xff]
    %v5269 = vld [vmem:[%s5 + $0x2a0] sm:$0xff]
    %v5270 = vld [vmem:[%s5 + $0x2a8] sm:$0xff]
    %v5271 = vld [vmem:[%s5 + $0x2b0] sm:$0xff]
    %v5272 = vld [vmem:[%s5 + $0x2b8] sm:$0xff]
    %v5273 = vld [vmem:[%s5 + $0x2c0] sm:$0xff]
    %v5274 = vld [vmem:[%s5 + $0x2c8] sm:$0xff]
    %v5275 = vld [vmem:[%s5 + $0x2d0] sm:$0xff]
    %v5276 = vld [vmem:[%s5 + $0x2d8] sm:$0xff]
    %v5277 = vld [vmem:[%s5 + $0x2e0] sm:$0xff]
    %v5278 = vld [vmem:[%s5 + $0x2e8] sm:$0xff]
    %v5279 = vld [vmem:[%s5 + $0x2f0] sm:$0xff]
    %v5280 = vld [vmem:[%s5 + $0x2f8] sm:$0xff]
    %v5281 = vld [vmem:[%s5 + $0x300] sm:$0xff]
    %v5282 = vld [vmem:[%s5 + $0x308] sm:$0xff]
    %v5283 = vld [vmem:[%s5 + $0x310] sm:$0xff]
    %v5284 = vld [vmem:[%s5 + $0x318] sm:$0xff]
    %v5285 = vld [vmem:[%s5 + $0x320] sm:$0xff]
    %v5286 = vld [vmem:[%s5 + $0x328] sm:$0xff]
    %v5287 = vld [vmem:[%s5 + $0x330] sm:$0xff]
    %v5288 = vld [vmem:[%s5 + $0x338] sm:$0xff]
    %v5290 = vsel %vm1318, %v5180, 0
    %v5293 = vsel %vm1318, %v5184, 0
    %5295 = vmatprep.subr.mxu0 %v5186
    %5296 = vmatpush1.msra.mxu0 %v5185
    %5297 = vmatprep.subr.mxu0 %v5188
    %5298 = vmatpush1.msra.mxu0 %v5187
    %5299 = vmatprep.subr.mxu0 %v5190
    %5300 = vmatpush1.msra.mxu0 %v5189
    %5301 = vmatprep.subr.mxu0 %v5192
    %5302 = vmatpush1.msra.mxu0 %v5191
    %5303 = vmatprep.subr.mxu0 %v5194
    %5304 = vmatpush1.msra.mxu0 %v5193
    %5305 = vmatprep.subr.mxu0 %v5196
    %5306 = vmatpush1.msra.mxu0 %v5195
    %5307 = vmatprep.subr.mxu0 %v5198
    %5308 = vmatpush1.msra.mxu0 %v5197
    %5309 = vmatprep.subr.mxu0 %v5200
    %5310 = vmatpush1.msra.mxu0 %v5199
    %5311 = vmatprep.subr.mxu0 %v5202
    %5312 = vmatpush1.msra.mxu0 %v5201
    %5313 = vmatprep.subr.mxu0 %v5204
    %5314 = vmatpush1.msra.mxu0 %v5203
    %5315 = vmatprep.subr.mxu0 %v5206
    %5316 = vmatpush1.msra.mxu0 %v5205
    %5317 = vmatprep.subr.mxu0 %v5208
    %5318 = vmatpush1.msra.mxu0 %v5207
    %5319 = vmatprep.subr.mxu0 %v5210
    %5320 = vmatpush1.msra.mxu0 %v5209
    %5321 = vmatprep.subr.mxu0 %v5212
    %5322 = vmatpush1.msra.mxu0 %v5211
    %5323 = vmatprep.subr.mxu0 %v5214
    %5324 = vmatpush1.msra.mxu0 %v5213
    %5325 = vmatprep.subr.mxu0 %v5216
    %5326 = vmatpush1.msra.mxu0 %v5215
    %5327 = vmatprep.subr.mxu0 %v5218
    %5328 = vmatpush1.msra.mxu0 %v5217
    %5329 = vmatprep.subr.mxu0 %v5220
    %5330 = vmatpush1.msra.mxu0 %v5219
    %5331 = vmatprep.subr.mxu0 %v5222
    %5332 = vmatpush1.msra.mxu0 %v5221
    %5333 = vmatprep.subr.mxu0 %v5224
    %5334 = vmatpush1.msra.mxu0 %v5223
    %5335 = vmatprep.subr.mxu0 %v5226
    %5336 = vmatpush1.msra.mxu0 %v5225
    %5337 = vmatprep.subr.mxu0 %v5228
    %5338 = vmatpush1.msra.mxu0 %v5227
    %5339 = vmatprep.subr.mxu0 %v5230
    %5340 = vmatpush1.msra.mxu0 %v5229
    %5341 = vmatprep.subr.mxu0 %v5232
    %5342 = vmatpush1.msra.mxu0 %v5231
    %5343 = vmatprep.subr.mxu0 %v5234
    %5344 = vmatpush1.msra.mxu0 %v5233
    %5345 = vmatprep.subr.mxu0 %v5236
    %5346 = vmatpush1.msra.mxu0 %v5235
    %5347 = vmatprep.subr.mxu0 %v5238
    %5348 = vmatpush1.msra.mxu0 %v5237
    %5349 = vmatprep.subr.mxu0 %v5240
    %5350 = vmatpush1.msra.mxu0 %v5239
    %5351 = vmatprep.subr.mxu0 %v5242
    %5352 = vmatpush1.msra.mxu0 %v5241
    %5353 = vmatprep.subr.mxu0 %v5244
    %5354 = vmatpush1.msra.mxu0 %v5243
    %5355 = vmatprep.subr.mxu0 %v5246
    %5356 = vmatpush1.msra.mxu0 %v5245
    %5357 = vmatprep.subr.mxu0 %v5248
    %5358 = vmatpush1.msra.mxu0 %v5247
    %5359 = vmatprep.mubr.f32.mxu0 %v5178
    %5360 = vmatmul.mubr.f32.gmra.mrb[0].mxu0 %v5177
    %v5361 = vpop.f32.mrb[0].mxu0
    %v5362 = vadd.f32 0.0, %v5361
    %v5363 = vpop.f32.mrb[0].mxu0
    %v5364 = vadd.f32 0.0, %v5363
    %5365 = vmatprep.mubr.f32.mxu0 %v5182
    %5366 = vmatmul.mubr.f32.gmra.mrb[0].mxu0 %v5181
    %v5367 = vpop.f32.mrb[0].mxu0
    %v5368 = vadd.f32 0.0, %v5367
    %v5369 = vpop.f32.mrb[0].mxu0
    %v5370 = vadd.f32 0.0, %v5369
    %5371 = vdwg.mxu0
    %5372 = vmatprep.subr.mxu0 %v5250
    %5373 = vmatpush1.msra.mxu0 %v5249
    %5374 = vmatprep.subr.mxu0 %v5252
    %5375 = vmatpush1.msra.mxu0 %v5251
    %5376 = vmatprep.subr.mxu0 %v5254
    %5377 = vmatpush1.msra.mxu0 %v5253
    %5378 = vmatprep.subr.mxu0 %v5256
    %5379 = vmatpush1.msra.mxu0 %v5255
    %5380 = vmatprep.subr.mxu0 %v5258
    %5381 = vmatpush1.msra.mxu0 %v5257
    %5382 = vmatprep.subr.mxu0 %v5260
    %5383 = vmatpush1.msra.mxu0 %v5259
    %5384 = vmatprep.subr.mxu0 %v5262
    %5385 = vmatpush1.msra.mxu0 %v5261
    %5386 = vmatprep.subr.mxu0 %v5264
    %5387 = vmatpush1.msra.mxu0 %v5263
    %5388 = vmatprep.subr.mxu0 %v5266
    %5389 = vmatpush1.msra.mxu0 %v5265
    %5390 = vmatprep.subr.mxu0 %v5268
    %5391 = vmatpush1.msra.mxu0 %v5267
    %5392 = vmatprep.subr.mxu0 %v5270
    %5393 = vmatpush1.msra.mxu0 %v5269
    %5394 = vmatprep.subr.mxu0 %v5272
    %5395 = vmatpush1.msra.mxu0 %v5271
    %5396 = vmatprep.subr.mxu0 %v5274
    %5397 = vmatpush1.msra.mxu0 %v5273
    %5398 = vmatprep.subr.mxu0 %v5276
    %5399 = vmatpush1.msra.mxu0 %v5275
    %5400 = vmatprep.subr.mxu0 %v5278
    %5401 = vmatpush1.msra.mxu0 %v5277
    %5402 = vmatprep.subr.mxu0 %v5280
    %5403 = vmatpush1.msra.mxu0 %v5279
    %5404 = vmatprep.subr.mxu0 %v5282
    %5405 = vmatpush1.msra.mxu0 %v5281
    %5406 = vmatprep.subr.mxu0 %v5284
    %5407 = vmatpush1.msra.mxu0 %v5283
    %5408 = vmatprep.subr.mxu0 %v5286
    %5409 = vmatpush1.msra.mxu0 %v5285
    %5410 = vmatprep.subr.mxu0 %v5288
    %5411 = vmatpush1.msra.mxu0 %v5287
    %5412 = vmatprep.subr.mxu0 0.0
    %5413 = vmatpush1.msra.mxu0 0.0
    %5414 = vmatprep.subr.mxu0 0.0
    %5415 = vmatpush1.msra.mxu0 0.0
    %5416 = vmatprep.subr.mxu0 0.0
    %5417 = vmatpush1.msra.mxu0 0.0
    %5418 = vmatprep.subr.mxu0 0.0
    %5419 = vmatpush1.msra.mxu0 0.0
    %5420 = vmatprep.subr.mxu0 0.0
    %5421 = vmatpush1.msra.mxu0 0.0
    %5422 = vmatprep.subr.mxu0 0.0
    %5423 = vmatpush1.msra.mxu0 0.0
    %5424 = vmatprep.subr.mxu0 0.0
    %5425 = vmatpush1.msra.mxu0 0.0
    %5426 = vmatprep.subr.mxu0 0.0
    %5427 = vmatpush1.msra.mxu0 0.0
    %5428 = vmatprep.subr.mxu0 0.0
    %5429 = vmatpush1.msra.mxu0 0.0
    %5430 = vmatprep.subr.mxu0 0.0
    %5431 = vmatpush1.msra.mxu0 0.0
    %5432 = vmatprep.subr.mxu0 0.0
    %5433 = vmatpush1.msra.mxu0 0.0
    %5434 = vmatprep.subr.mxu0 0.0
    %5435 = vmatpush1.msra.mxu0 0.0
    %5436 = vmatprep.mubr.f32.mxu0 %v5290
    %5437 = vmatmul.mubr.f32.gmra.mrb[0].mxu0 %v5179
    %v5438 = vpop.f32.mrb[0].mxu0
    %v5439 = vadd.f32 %v5362, %v5438
    %v5440 = vpop.f32.mrb[0].mxu0
    %v5441 = vadd.f32 %v5364, %v5440
    %5442 = vmatprep.mubr.f32.mxu0 %v5293
    %5443 = vmatmul.mubr.f32.gmra.mrb[0].mxu0 %v5183
    %v5444 = vpop.f32.mrb[0].mxu0
    %v5445 = vadd.f32 %v5368, %v5444
    %v5446 = vpop.f32.mrb[0].mxu0
    %v5447 = vadd.f32 %v5370, %v5446
    %5448 = vdwg.mxu0
    %v5449 = vld [vmem:[%s1479] sm:$0xff]
    %v5450 = vld [vmem:[%s1479 + $0x8] sm:$0xff]
    %v5451 = vld [vmem:[%s1479 + $0x10] sm:$0xff]
    %v5452 = vld [vmem:[%s1479 + $0x18] sm:$0xff]
    %v5453 = vld [vmem:[%s1479 + $0x20] sm:$0xff]
    %v5454 = vld [vmem:[%s1479 + $0x28] sm:$0xff]
    %v5455 = vld [vmem:[%s1479 + $0x30] sm:$0xff]
    %v5456 = vld [vmem:[%s1479 + $0x38] sm:$0xff]
    %v5457 = vld [vmem:[%s1479 + $0x40] sm:$0xff]
    %v5458 = vld [vmem:[%s1479 + $0x48] sm:$0xff]
    %v5459 = vld [vmem:[%s1479 + $0x50] sm:$0xff]
    %v5460 = vld [vmem:[%s1479 + $0x58] sm:$0xff]
    %v5461 = vld [vmem:[%s1479 + $0x60] sm:$0xff]
    %v5462 = vld [vmem:[%s1479 + $0x68] sm:$0xff]
    %v5463 = vld [vmem:[%s1479 + $0x70] sm:$0xff]
    %v5464 = vld [vmem:[%s1479 + $0x78] sm:$0xff]
    %v5465 = vld [vmem:[%s1479 + $0x80] sm:$0xff]
    %v5466 = vld [vmem:[%s1479 + $0x88] sm:$0xff]
    %v5467 = vld [vmem:[%s1479 + $0x90] sm:$0xff]
    %v5468 = vld [vmem:[%s1479 + $0x98] sm:$0xff]
    %v5469 = vld [vmem:[%s1479 + $0xa0] sm:$0xff]
    %v5470 = vld [vmem:[%s1479 + $0xa8] sm:$0xff]
    %v5471 = vld [vmem:[%s1479 + $0xb0] sm:$0xff]
    %v5472 = vld [vmem:[%s1479 + $0xb8] sm:$0xff]
    %v5473 = vld [vmem:[%s1479 + $0xc0] sm:$0xff]
    %v5474 = vld [vmem:[%s1479 + $0xc8] sm:$0xff]
    %v5475 = vld [vmem:[%s1479 + $0xd0] sm:$0xff]
    %v5476 = vld [vmem:[%s1479 + $0xd8] sm:$0xff]
    %v5477 = vld [vmem:[%s1479 + $0xe0] sm:$0xff]
    %v5478 = vld [vmem:[%s1479 + $0xe8] sm:$0xff]
    %v5479 = vld [vmem:[%s1479 + $0xf0] sm:$0xff]
    %v5480 = vld [vmem:[%s1479 + $0xf8] sm:$0xff]
    %v5481 = vld [vmem:[%s1479 + $0x100] sm:$0xff]
    %v5482 = vld [vmem:[%s1479 + $0x108] sm:$0xff]
    %v5483 = vld [vmem:[%s1479 + $0x110] sm:$0xff]
    %v5484 = vld [vmem:[%s1479 + $0x118] sm:$0xff]
    %v5485 = vld [vmem:[%s1479 + $0x120] sm:$0xff]
    %v5486 = vld [vmem:[%s1479 + $0x128] sm:$0xff]
    %v5487 = vld [vmem:[%s1479 + $0x130] sm:$0xff]
    %v5488 = vld [vmem:[%s1479 + $0x138] sm:$0xff]
    %v5489 = vld [vmem:[%s1479 + $0x140] sm:$0xff]
    %v5490 = vld [vmem:[%s1479 + $0x148] sm:$0xff]
    %v5491 = vld [vmem:[%s1479 + $0x150] sm:$0xff]
    %v5492 = vld [vmem:[%s1479 + $0x158] sm:$0xff]
    %v5493 = vld [vmem:[%s1479 + $0x160] sm:$0xff]
    %v5494 = vld [vmem:[%s1479 + $0x168] sm:$0xff]
    %v5495 = vld [vmem:[%s1479 + $0x170] sm:$0xff]
    %v5496 = vld [vmem:[%s1479 + $0x178] sm:$0xff]
    %v5497 = vld [vmem:[%s1479 + $0x180] sm:$0xff]
    %v5498 = vld [vmem:[%s1479 + $0x188] sm:$0xff]
    %v5499 = vld [vmem:[%s1479 + $0x190] sm:$0xff]
    %v5500 = vld [vmem:[%s1479 + $0x198] sm:$0xff]
    %v5501 = vld [vmem:[%s1479 + $0x1a0] sm:$0xff]
    %v5502 = vld [vmem:[%s1479 + $0x1a8] sm:$0xff]
    %v5503 = vld [vmem:[%s1479 + $0x1b0] sm:$0xff]
    %v5504 = vld [vmem:[%s1479 + $0x1b8] sm:$0xff]
    %v5505 = vld [vmem:[%s1479 + $0x1c0] sm:$0xff]
    %v5506 = vld [vmem:[%s1479 + $0x1c8] sm:$0xff]
    %v5507 = vld [vmem:[%s1479 + $0x1d0] sm:$0xff]
    %v5508 = vld [vmem:[%s1479 + $0x1d8] sm:$0xff]
    %v5509 = vld [vmem:[%s1479 + $0x1e0] sm:$0xff]
    %v5510 = vld [vmem:[%s1479 + $0x1e8] sm:$0xff]
    %v5511 = vld [vmem:[%s1479 + $0x1f0] sm:$0xff]
    %v5512 = vld [vmem:[%s1479 + $0x1f8] sm:$0xff]
    %v5513 = vld [vmem:[%s1479 + $0x200] sm:$0xff]
    %v5514 = vld [vmem:[%s1479 + $0x208] sm:$0xff]
    %v5515 = vld [vmem:[%s1479 + $0x210] sm:$0xff]
    %v5516 = vld [vmem:[%s1479 + $0x218] sm:$0xff]
    %v5517 = vld [vmem:[%s1479 + $0x220] sm:$0xff]
    %v5518 = vld [vmem:[%s1479 + $0x228] sm:$0xff]
    %v5519 = vld [vmem:[%s1479 + $0x230] sm:$0xff]
    %v5520 = vld [vmem:[%s1479 + $0x238] sm:$0xff]
    %v5521 = vld [vmem:[%s1479 + $0x240] sm:$0xff]
    %v5522 = vld [vmem:[%s1479 + $0x248] sm:$0xff]
    %v5523 = vld [vmem:[%s1479 + $0x250] sm:$0xff]
    %v5524 = vld [vmem:[%s1479 + $0x258] sm:$0xff]
    %v5525 = vld [vmem:[%s1479 + $0x260] sm:$0xff]
    %v5526 = vld [vmem:[%s1479 + $0x268] sm:$0xff]
    %v5527 = vld [vmem:[%s1479 + $0x270] sm:$0xff]
    %v5528 = vld [vmem:[%s1479 + $0x278] sm:$0xff]
    %v5529 = vld [vmem:[%s1479 + $0x280] sm:$0xff]
    %v5530 = vld [vmem:[%s1479 + $0x288] sm:$0xff]
    %v5531 = vld [vmem:[%s1479 + $0x290] sm:$0xff]
    %v5532 = vld [vmem:[%s1479 + $0x298] sm:$0xff]
    %v5533 = vld [vmem:[%s1479 + $0x2a0] sm:$0xff]
    %v5534 = vld [vmem:[%s1479 + $0x2a8] sm:$0xff]
    %v5535 = vld [vmem:[%s1479 + $0x2b0] sm:$0xff]
    %v5536 = vld [vmem:[%s1479 + $0x2b8] sm:$0xff]
    %v5537 = vld [vmem:[%s1479 + $0x2c0] sm:$0xff]
    %v5538 = vld [vmem:[%s1479 + $0x2c8] sm:$0xff]
    %v5539 = vld [vmem:[%s1479 + $0x2d0] sm:$0xff]
    %v5540 = vld [vmem:[%s1479 + $0x2d8] sm:$0xff]
    %v5541 = vld [vmem:[%s1479 + $0x2e0] sm:$0xff]
    %v5542 = vld [vmem:[%s1479 + $0x2e8] sm:$0xff]
    %v5543 = vld [vmem:[%s1479 + $0x2f0] sm:$0xff]
    %v5544 = vld [vmem:[%s1479 + $0x2f8] sm:$0xff]
    %v5545 = vld [vmem:[%s1479 + $0x300] sm:$0xff]
    %v5546 = vld [vmem:[%s1479 + $0x308] sm:$0xff]
    %v5547 = vld [vmem:[%s1479 + $0x310] sm:$0xff]
    %v5548 = vld [vmem:[%s1479 + $0x318] sm:$0xff]
    %v5549 = vld [vmem:[%s1479 + $0x320] sm:$0xff]
    %v5550 = vld [vmem:[%s1479 + $0x328] sm:$0xff]
    %v5551 = vld [vmem:[%s1479 + $0x330] sm:$0xff]
    %v5552 = vld [vmem:[%s1479 + $0x338] sm:$0xff]
    %5553 = vmatprep.subr.mxu0 %v5450
    %5554 = vmatpush1.msra.mxu0 %v5449
    %5555 = vmatprep.subr.mxu0 %v5452
    %5556 = vmatpush1.msra.mxu0 %v5451
    %5557 = vmatprep.subr.mxu0 %v5454
    %5558 = vmatpush1.msra.mxu0 %v5453
    %5559 = vmatprep.subr.mxu0 %v5456
    %5560 = vmatpush1.msra.mxu0 %v5455
    %5561 = vmatprep.subr.mxu0 %v5458
    %5562 = vmatpush1.msra.mxu0 %v5457
    %5563 = vmatprep.subr.mxu0 %v5460
    %5564 = vmatpush1.msra.mxu0 %v5459
    %5565 = vmatprep.subr.mxu0 %v5462
    %5566 = vmatpush1.msra.mxu0 %v5461
    %5567 = vmatprep.subr.mxu0 %v5464
    %5568 = vmatpush1.msra.mxu0 %v5463
    %5569 = vmatprep.subr.mxu0 %v5466
    %5570 = vmatpush1.msra.mxu0 %v5465
    %5571 = vmatprep.subr.mxu0 %v5468
    %5572 = vmatpush1.msra.mxu0 %v5467
    %5573 = vmatprep.subr.mxu0 %v5470
    %5574 = vmatpush1.msra.mxu0 %v5469
    %5575 = vmatprep.subr.mxu0 %v5472
    %5576 = vmatpush1.msra.mxu0 %v5471
    %5577 = vmatprep.subr.mxu0 %v5474
    %5578 = vmatpush1.msra.mxu0 %v5473
    %5579 = vmatprep.subr.mxu0 %v5476
    %5580 = vmatpush1.msra.mxu0 %v5475
    %5581 = vmatprep.subr.mxu0 %v5478
    %5582 = vmatpush1.msra.mxu0 %v5477
    %5583 = vmatprep.subr.mxu0 %v5480
    %5584 = vmatpush1.msra.mxu0 %v5479
    %5585 = vmatprep.subr.mxu0 %v5482
    %5586 = vmatpush1.msra.mxu0 %v5481
    %5587 = vmatprep.subr.mxu0 %v5484
    %5588 = vmatpush1.msra.mxu0 %v5483
    %5589 = vmatprep.subr.mxu0 %v5486
    %5590 = vmatpush1.msra.mxu0 %v5485
    %5591 = vmatprep.subr.mxu0 %v5488
    %5592 = vmatpush1.msra.mxu0 %v5487
    %5593 = vmatprep.subr.mxu0 %v5490
    %5594 = vmatpush1.msra.mxu0 %v5489
    %5595 = vmatprep.subr.mxu0 %v5492
    %5596 = vmatpush1.msra.mxu0 %v5491
    %5597 = vmatprep.subr.mxu0 %v5494
    %5598 = vmatpush1.msra.mxu0 %v5493
    %5599 = vmatprep.subr.mxu0 %v5496
    %5600 = vmatpush1.msra.mxu0 %v5495
    %5601 = vmatprep.subr.mxu0 %v5498
    %5602 = vmatpush1.msra.mxu0 %v5497
    %5603 = vmatprep.subr.mxu0 %v5500
    %5604 = vmatpush1.msra.mxu0 %v5499
    %5605 = vmatprep.subr.mxu0 %v5502
    %5606 = vmatpush1.msra.mxu0 %v5501
    %5607 = vmatprep.subr.mxu0 %v5504
    %5608 = vmatpush1.msra.mxu0 %v5503
    %5609 = vmatprep.subr.mxu0 %v5506
    %5610 = vmatpush1.msra.mxu0 %v5505
    %5611 = vmatprep.subr.mxu0 %v5508
    %5612 = vmatpush1.msra.mxu0 %v5507
    %5613 = vmatprep.subr.mxu0 %v5510
    %5614 = vmatpush1.msra.mxu0 %v5509
    %5615 = vmatprep.subr.mxu0 %v5512
    %5616 = vmatpush1.msra.mxu0 %v5511
    %5617 = vmatprep.mubr.f32.mxu0 %v5178
    %5618 = vmatmul.mubr.f32.gmra.mrb[0].mxu0 %v5177
    %v5619 = vpop.f32.mrb[0].mxu0
    %v5620 = vadd.f32 0.0, %v5619
    %v5621 = vpop.f32.mrb[0].mxu0
    %v5622 = vadd.f32 0.0, %v5621
    %5623 = vmatprep.mubr.f32.mxu0 %v5182
    %5624 = vmatmul.mubr.f32.gmra.mrb[0].mxu0 %v5181
    %v5625 = vpop.f32.mrb[0].mxu0
    %v5626 = vadd.f32 0.0, %v5625
    %v5627 = vpop.f32.mrb[0].mxu0
    %v5628 = vadd.f32 0.0, %v5627
    %5629 = vdwg.mxu0
    %5630 = vmatprep.subr.mxu0 %v5514
    %5631 = vmatpush1.msra.mxu0 %v5513
    %5632 = vmatprep.subr.mxu0 %v5516
    %5633 = vmatpush1.msra.mxu0 %v5515
    %5634 = vmatprep.subr.mxu0 %v5518
    %5635 = vmatpush1.msra.mxu0 %v5517
    %5636 = vmatprep.subr.mxu0 %v5520
    %5637 = vmatpush1.msra.mxu0 %v5519
    %5638 = vmatprep.subr.mxu0 %v5522
    %5639 = vmatpush1.msra.mxu0 %v5521
    %5640 = vmatprep.subr.mxu0 %v5524
    %5641 = vmatpush1.msra.mxu0 %v5523
    %5642 = vmatprep.subr.mxu0 %v5526
    %5643 = vmatpush1.msra.mxu0 %v5525
    %5644 = vmatprep.subr.mxu0 %v5528
    %5645 = vmatpush1.msra.mxu0 %v5527
    %5646 = vmatprep.subr.mxu0 %v5530
    %5647 = vmatpush1.msra.mxu0 %v5529
    %5648 = vmatprep.subr.mxu0 %v5532
    %5649 = vmatpush1.msra.mxu0 %v5531
    %5650 = vmatprep.subr.mxu0 %v5534
    %5651 = vmatpush1.msra.mxu0 %v5533
    %5652 = vmatprep.subr.mxu0 %v5536
    %5653 = vmatpush1.msra.mxu0 %v5535
    %5654 = vmatprep.subr.mxu0 %v5538
    %5655 = vmatpush1.msra.mxu0 %v5537
    %5656 = vmatprep.subr.mxu0 %v5540
    %5657 = vmatpush1.msra.mxu0 %v5539
    %5658 = vmatprep.subr.mxu0 %v5542
    %5659 = vmatpush1.msra.mxu0 %v5541
    %5660 = vmatprep.subr.mxu0 %v5544
    %5661 = vmatpush1.msra.mxu0 %v5543
    %5662 = vmatprep.subr.mxu0 %v5546
    %5663 = vmatpush1.msra.mxu0 %v5545
    %5664 = vmatprep.subr.mxu0 %v5548
    %5665 = vmatpush1.msra.mxu0 %v5547
    %5666 = vmatprep.subr.mxu0 %v5550
    %5667 = vmatpush1.msra.mxu0 %v5549
    %5668 = vmatprep.subr.mxu0 %v5552
    %5669 = vmatpush1.msra.mxu0 %v5551
    %5670 = vmatprep.subr.mxu0 0.0
    %5671 = vmatpush1.msra.mxu0 0.0
    %5672 = vmatprep.subr.mxu0 0.0
    %5673 = vmatpush1.msra.mxu0 0.0
    %5674 = vmatprep.subr.mxu0 0.0
    %5675 = vmatpush1.msra.mxu0 0.0
    %5676 = vmatprep.subr.mxu0 0.0
    %5677 = vmatpush1.msra.mxu0 0.0
    %5678 = vmatprep.subr.mxu0 0.0
    %5679 = vmatpush1.msra.mxu0 0.0
    %5680 = vmatprep.subr.mxu0 0.0
    %5681 = vmatpush1.msra.mxu0 0.0
    %5682 = vmatprep.subr.mxu0 0.0
    %5683 = vmatpush1.msra.mxu0 0.0
    %5684 = vmatprep.subr.mxu0 0.0
    %5685 = vmatpush1.msra.mxu0 0.0
    %5686 = vmatprep.subr.mxu0 0.0
    %5687 = vmatpush1.msra.mxu0 0.0
    %5688 = vmatprep.subr.mxu0 0.0
    %5689 = vmatpush1.msra.mxu0 0.0
    %5690 = vmatprep.subr.mxu0 0.0
    %5691 = vmatpush1.msra.mxu0 0.0
    %5692 = vmatprep.subr.mxu0 0.0
    %5693 = vmatpush1.msra.mxu0 0.0
    %5694 = vmatprep.mubr.f32.mxu0 %v5290
    %5695 = vmatmul.mubr.f32.gmra.mrb[0].mxu0 %v5179
    %v5696 = vpop.f32.mrb[0].mxu0
    %v5697 = vadd.f32 %v5620, %v5696
    %v5698 = vpop.f32.mrb[0].mxu0
    %v5699 = vadd.f32 %v5622, %v5698
    %5700 = vmatprep.mubr.f32.mxu0 %v5293
    %5701 = vmatmul.mubr.f32.gmra.mrb[0].mxu0 %v5183
    %v5702 = vpop.f32.mrb[0].mxu0
    %v5703 = vadd.f32 %v5626, %v5702
    %v5704 = vpop.f32.mrb[0].mxu0
    %v5705 = vadd.f32 %v5628, %v5704
    %5706 = vdwg.mxu0
    %v5707 = vmax.f32 %v5439, %v5697
    %v5708 = vmax.f32 %v5441, %v5699
    %v5709 = vmax.f32 %v5445, %v5703
    %v5710 = vmax.f32 %v5447, %v5705
    %5711 = vst [vmem:[#allocation2] sm:$0xff] %v5707
    %5712 = vst.msk [vmem:[#allocation2 + $0x8] sm:$0xff] %vm1743, %v5708
    %5713 = vst [vmem:[#allocation2 + $0x10] sm:$0x1f] %v5709
    %5714 = vst.msk [vmem:[#allocation2 + $0x18] sm:$0x1f] %vm1746, %v5710
    %v5715 = vld [vmem:[#allocation2] sm:$0xff]
    %v5716 = vld [vmem:[#allocation2 + $0x8] sm:$0xff]
    %v5717 = vld [vmem:[#allocation2 + $0x10] sm:$0x7]
    %v5718 = vld [vmem:[#allocation2 + $0x18] sm:$0x7]
    %v5719 = vld [vmem:[%s6] sm:$0xff]
    %v5720 = vld [vmem:[%s6 + $0x8] sm:$0xff]
    %v5721 = vld [vmem:[%s6 + $0x10] sm:$0xff]
    %v5722 = vld [vmem:[%s6 + $0x18] sm:$0xff]
    %v5723 = vld [vmem:[%s6 + $0x20] sm:$0xff]
    %v5724 = vld [vmem:[%s6 + $0x28] sm:$0xff]
    %v5725 = vld [vmem:[%s6 + $0x30] sm:$0xff]
    %v5726 = vld [vmem:[%s6 + $0x38] sm:$0xff]
    %v5727 = vld [vmem:[%s6 + $0x40] sm:$0xff]
    %v5728 = vld [vmem:[%s6 + $0x48] sm:$0xff]
    %v5729 = vld [vmem:[%s6 + $0x50] sm:$0xff]
    %v5730 = vld [vmem:[%s6 + $0x58] sm:$0xff]
    %v5731 = vld [vmem:[%s6 + $0x60] sm:$0xff]
    %v5732 = vld [vmem:[%s6 + $0x68] sm:$0xff]
    %v5733 = vld [vmem:[%s6 + $0x70] sm:$0xff]
    %v5734 = vld [vmem:[%s6 + $0x78] sm:$0xff]
    %v5735 = vld [vmem:[%s6 + $0x80] sm:$0xff]
    %v5736 = vld [vmem:[%s6 + $0x88] sm:$0xff]
    %v5737 = vld [vmem:[%s6 + $0x90] sm:$0xff]
    %v5738 = vld [vmem:[%s6 + $0x98] sm:$0xff]
    %v5739 = vld [vmem:[%s6 + $0xa0] sm:$0xff]
    %v5740 = vld [vmem:[%s6 + $0xa8] sm:$0xff]
    %v5741 = vld [vmem:[%s6 + $0xb0] sm:$0xff]
    %v5742 = vld [vmem:[%s6 + $0xb8] sm:$0xff]
    %v5743 = vld [vmem:[%s6 + $0xc0] sm:$0xff]
    %v5744 = vld [vmem:[%s6 + $0xc8] sm:$0xff]
    %v5745 = vld [vmem:[%s6 + $0xd0] sm:$0xff]
    %v5746 = vld [vmem:[%s6 + $0xd8] sm:$0xff]
    %v5747 = vld [vmem:[%s6 + $0xe0] sm:$0xff]
    %v5748 = vld [vmem:[%s6 + $0xe8] sm:$0xff]
    %v5749 = vld [vmem:[%s6 + $0xf0] sm:$0xff]
    %v5750 = vld [vmem:[%s6 + $0xf8] sm:$0xff]
    %v5751 = vld [vmem:[%s6 + $0x100] sm:$0xff]
    %v5752 = vld [vmem:[%s6 + $0x108] sm:$0xff]
    %v5753 = vld [vmem:[%s6 + $0x110] sm:$0xff]
    %v5754 = vld [vmem:[%s6 + $0x118] sm:$0xff]
    %v5755 = vld [vmem:[%s6 + $0x120] sm:$0xff]
    %v5756 = vld [vmem:[%s6 + $0x128] sm:$0xff]
    %v5757 = vld [vmem:[%s6 + $0x130] sm:$0xff]
    %v5758 = vld [vmem:[%s6 + $0x138] sm:$0xff]
    %v5759 = vld [vmem:[%s6 + $0x140] sm:$0xff]
    %v5760 = vld [vmem:[%s6 + $0x148] sm:$0xff]
    %v5761 = vld [vmem:[%s6 + $0x150] sm:$0xff]
    %v5762 = vld [vmem:[%s6 + $0x158] sm:$0xff]
    %v5763 = vld [vmem:[%s6 + $0x160] sm:$0xff]
    %v5764 = vld [vmem:[%s6 + $0x168] sm:$0xff]
    %v5765 = vld [vmem:[%s6 + $0x170] sm:$0xff]
    %v5766 = vld [vmem:[%s6 + $0x178] sm:$0xff]
    %v5767 = vld [vmem:[%s6 + $0x180] sm:$0xff]
    %v5768 = vld [vmem:[%s6 + $0x188] sm:$0xff]
    %v5769 = vld [vmem:[%s6 + $0x190] sm:$0xff]
    %v5770 = vld [vmem:[%s6 + $0x198] sm:$0xff]
    %v5771 = vld [vmem:[%s6 + $0x1a0] sm:$0xff]
    %v5772 = vld [vmem:[%s6 + $0x1a8] sm:$0xff]
    %v5773 = vld [vmem:[%s6 + $0x1b0] sm:$0xff]
    %v5774 = vld [vmem:[%s6 + $0x1b8] sm:$0xff]
    %v5775 = vld [vmem:[%s6 + $0x1c0] sm:$0xff]
    %v5776 = vld [vmem:[%s6 + $0x1c8] sm:$0xff]
    %v5777 = vld [vmem:[%s6 + $0x1d0] sm:$0xff]
    %v5778 = vld [vmem:[%s6 + $0x1d8] sm:$0xff]
    %v5779 = vld [vmem:[%s6 + $0x1e0] sm:$0xff]
    %v5780 = vld [vmem:[%s6 + $0x1e8] sm:$0xff]
    %v5781 = vld [vmem:[%s6 + $0x1f0] sm:$0xff]
    %v5782 = vld [vmem:[%s6 + $0x1f8] sm:$0xff]
    %v5783 = vld [vmem:[%s6 + $0x200] sm:$0xff]
    %v5784 = vld [vmem:[%s6 + $0x208] sm:$0xff]
    %v5785 = vld [vmem:[%s6 + $0x210] sm:$0xff]
    %v5786 = vld [vmem:[%s6 + $0x218] sm:$0xff]
    %v5787 = vld [vmem:[%s6 + $0x220] sm:$0xff]
    %v5788 = vld [vmem:[%s6 + $0x228] sm:$0xff]
    %v5789 = vld [vmem:[%s6 + $0x230] sm:$0xff]
    %v5790 = vld [vmem:[%s6 + $0x238] sm:$0xff]
    %v5791 = vld [vmem:[%s6 + $0x240] sm:$0xff]
    %v5792 = vld [vmem:[%s6 + $0x248] sm:$0xff]
    %v5793 = vld [vmem:[%s6 + $0x250] sm:$0xff]
    %v5794 = vld [vmem:[%s6 + $0x258] sm:$0xff]
    %v5795 = vld [vmem:[%s6 + $0x260] sm:$0xff]
    %v5796 = vld [vmem:[%s6 + $0x268] sm:$0xff]
    %v5797 = vld [vmem:[#allocation2] sm:$0xfe]
    %v5798 = vld [vmem:[#allocation2 + $0x8] sm:$0xfe]
    %v5799 = vld [vmem:[#allocation2 + $0x10] sm:$0xf]
    %v5800 = vld [vmem:[#allocation2 + $0x18] sm:$0xf]
    %v5801 = vld [vmem:[%s1834] sm:$0xff]
    %v5802 = vld [vmem:[%s1834 + $0x8] sm:$0xff]
    %v5803 = vld [vmem:[%s1834 + $0x10] sm:$0xff]
    %v5804 = vld [vmem:[%s1834 + $0x18] sm:$0xff]
    %v5805 = vld [vmem:[%s1834 + $0x20] sm:$0xff]
    %v5806 = vld [vmem:[%s1834 + $0x28] sm:$0xff]
    %v5807 = vld [vmem:[%s1834 + $0x30] sm:$0xff]
    %v5808 = vld [vmem:[%s1834 + $0x38] sm:$0xff]
    %v5809 = vld [vmem:[%s1834 + $0x40] sm:$0xff]
    %v5810 = vld [vmem:[%s1834 + $0x48] sm:$0xff]
    %v5811 = vld [vmem:[%s1834 + $0x50] sm:$0xff]
    %v5812 = vld [vmem:[%s1834 + $0x58] sm:$0xff]
    %v5813 = vld [vmem:[%s1834 + $0x60] sm:$0xff]
    %v5814 = vld [vmem:[%s1834 + $0x68] sm:$0xff]
    %v5815 = vld [vmem:[%s1834 + $0x70] sm:$0xff]
    %v5816 = vld [vmem:[%s1834 + $0x78] sm:$0xff]
    %v5817 = vld [vmem:[%s1834 + $0x80] sm:$0xff]
    %v5818 = vld [vmem:[%s1834 + $0x88] sm:$0xff]
    %v5819 = vld [vmem:[%s1834 + $0x90] sm:$0xff]
    %v5820 = vld [vmem:[%s1834 + $0x98] sm:$0xff]
    %v5821 = vld [vmem:[%s1834 + $0xa0] sm:$0xff]
    %v5822 = vld [vmem:[%s1834 + $0xa8] sm:$0xff]
    %v5823 = vld [vmem:[%s1834 + $0xb0] sm:$0xff]
    %v5824 = vld [vmem:[%s1834 + $0xb8] sm:$0xff]
    %v5825 = vld [vmem:[%s1834 + $0xc0] sm:$0xff]
    %v5826 = vld [vmem:[%s1834 + $0xc8] sm:$0xff]
    %v5827 = vld [vmem:[%s1834 + $0xd0] sm:$0xff]
    %v5828 = vld [vmem:[%s1834 + $0xd8] sm:$0xff]
    %v5829 = vld [vmem:[%s1834 + $0xe0] sm:$0xff]
    %v5830 = vld [vmem:[%s1834 + $0xe8] sm:$0xff]
    %v5831 = vld [vmem:[%s1834 + $0xf0] sm:$0xff]
    %v5832 = vld [vmem:[%s1834 + $0xf8] sm:$0xff]
    %v5833 = vld [vmem:[%s1834 + $0x100] sm:$0xff]
    %v5834 = vld [vmem:[%s1834 + $0x108] sm:$0xff]
    %v5835 = vld [vmem:[%s1834 + $0x110] sm:$0xff]
    %v5836 = vld [vmem:[%s1834 + $0x118] sm:$0xff]
    %v5837 = vld [vmem:[%s1834 + $0x120] sm:$0xff]
    %v5838 = vld [vmem:[%s1834 + $0x128] sm:$0xff]
    %v5839 = vld [vmem:[%s1834 + $0x130] sm:$0xff]
    %v5840 = vld [vmem:[%s1834 + $0x138] sm:$0xff]
    %v5841 = vld [vmem:[%s1834 + $0x140] sm:$0xff]
    %v5842 = vld [vmem:[%s1834 + $0x148] sm:$0xff]
    %v5843 = vld [vmem:[%s1834 + $0x150] sm:$0xff]
    %v5844 = vld [vmem:[%s1834 + $0x158] sm:$0xff]
    %v5845 = vld [vmem:[%s1834 + $0x160] sm:$0xff]
    %v5846 = vld [vmem:[%s1834 + $0x168] sm:$0xff]
    %v5847 = vld [vmem:[%s1834 + $0x170] sm:$0xff]
    %v5848 = vld [vmem:[%s1834 + $0x178] sm:$0xff]
    %v5849 = vld [vmem:[%s1834 + $0x180] sm:$0xff]
    %v5850 = vld [vmem:[%s1834 + $0x188] sm:$0xff]
    %v5851 = vld [vmem:[%s1834 + $0x190] sm:$0xff]
    %v5852 = vld [vmem:[%s1834 + $0x198] sm:$0xff]
    %v5853 = vld [vmem:[%s1834 + $0x1a0] sm:$0xff]
    %v5854 = vld [vmem:[%s1834 + $0x1a8] sm:$0xff]
    %v5855 = vld [vmem:[%s1834 + $0x1b0] sm:$0xff]
    %v5856 = vld [vmem:[%s1834 + $0x1b8] sm:$0xff]
    %v5857 = vld [vmem:[%s1834 + $0x1c0] sm:$0xff]
    %v5858 = vld [vmem:[%s1834 + $0x1c8] sm:$0xff]
    %v5859 = vld [vmem:[%s1834 + $0x1d0] sm:$0xff]
    %v5860 = vld [vmem:[%s1834 + $0x1d8] sm:$0xff]
    %v5861 = vld [vmem:[%s1834 + $0x1e0] sm:$0xff]
    %v5862 = vld [vmem:[%s1834 + $0x1e8] sm:$0xff]
    %v5863 = vld [vmem:[%s1834 + $0x1f0] sm:$0xff]
    %v5864 = vld [vmem:[%s1834 + $0x1f8] sm:$0xff]
    %v5865 = vld [vmem:[%s1834 + $0x200] sm:$0xff]
    %v5866 = vld [vmem:[%s1834 + $0x208] sm:$0xff]
    %v5867 = vld [vmem:[%s1834 + $0x210] sm:$0xff]
    %v5868 = vld [vmem:[%s1834 + $0x218] sm:$0xff]
    %v5869 = vld [vmem:[%s1834 + $0x220] sm:$0xff]
    %v5870 = vld [vmem:[%s1834 + $0x228] sm:$0xff]
    %v5871 = vld [vmem:[%s1834 + $0x230] sm:$0xff]
    %v5872 = vld [vmem:[%s1834 + $0x238] sm:$0xff]
    %v5873 = vld [vmem:[%s1834 + $0x240] sm:$0xff]
    %v5874 = vld [vmem:[%s1834 + $0x248] sm:$0xff]
    %v5875 = vld [vmem:[%s1834 + $0x250] sm:$0xff]
    %v5876 = vld [vmem:[%s1834 + $0x258] sm:$0xff]
    %v5877 = vld [vmem:[%s1834 + $0x260] sm:$0xff]
    %v5878 = vld [vmem:[%s1834 + $0x268] sm:$0xff]
    %v5883 = vrot.slane %v5797, 1
    %v5884 = vrot.slane %v5799, 1
    %v5885 = vsel %vm1917, %v5883, %v5884
    %v5886 = vrot.slane %v5798, 1
    %v5887 = vrot.slane %v5800, 1
    %v5888 = vsel %vm1917, %v5886, %v5887
    %v5891 = vsel %vm1743, %v5888, 0
    %v5893 = vsel %vm1743, %v5887, 0
    %5895 = vmatprep.subr.mxu0 %v5802
    %5896 = vmatpush1.msra.mxu0 %v5801
    %5897 = vmatprep.subr.mxu0 %v5805
    %5898 = vmatpush1.msra.mxu0 %v5804
    %5899 = vmatprep.subr.mxu0 %v5808
    %5900 = vmatpush1.msra.mxu0 %v5807
    %5901 = vmatprep.subr.mxu0 %v5811
    %5902 = vmatpush1.msra.mxu0 %v5810
    %5903 = vmatprep.subr.mxu0 %v5814
    %5904 = vmatpush1.msra.mxu0 %v5813
    %5905 = vmatprep.subr.mxu0 %v5817
    %5906 = vmatpush1.msra.mxu0 %v5816
    %5907 = vmatprep.subr.mxu0 %v5820
    %5908 = vmatpush1.msra.mxu0 %v5819
    %5909 = vmatprep.subr.mxu0 %v5823
    %5910 = vmatpush1.msra.mxu0 %v5822
    %5911 = vmatprep.subr.mxu0 %v5826
    %5912 = vmatpush1.msra.mxu0 %v5825
    %5913 = vmatprep.subr.mxu0 %v5829
    %5914 = vmatpush1.msra.mxu0 %v5828
    %5915 = vmatprep.subr.mxu0 %v5832
    %5916 = vmatpush1.msra.mxu0 %v5831
    %5917 = vmatprep.subr.mxu0 %v5835
    %5918 = vmatpush1.msra.mxu0 %v5834
    %5919 = vmatprep.subr.mxu0 %v5838
    %5920 = vmatpush1.msra.mxu0 %v5837
    %5921 = vmatprep.subr.mxu0 %v5841
    %5922 = vmatpush1.msra.mxu0 %v5840
    %5923 = vmatprep.subr.mxu0 %v5844
    %5924 = vmatpush1.msra.mxu0 %v5843
    %5925 = vmatprep.subr.mxu0 %v5847
    %5926 = vmatpush1.msra.mxu0 %v5846
    %5927 = vmatprep.subr.mxu0 %v5850
    %5928 = vmatpush1.msra.mxu0 %v5849
    %5929 = vmatprep.subr.mxu0 %v5853
    %5930 = vmatpush1.msra.mxu0 %v5852
    %5931 = vmatprep.subr.mxu0 %v5856
    %5932 = vmatpush1.msra.mxu0 %v5855
    %5933 = vmatprep.subr.mxu0 %v5859
    %5934 = vmatpush1.msra.mxu0 %v5858
    %5935 = vmatprep.subr.mxu0 %v5862
    %5936 = vmatpush1.msra.mxu0 %v5861
    %5937 = vmatprep.subr.mxu0 %v5865
    %5938 = vmatpush1.msra.mxu0 %v5864
    %5939 = vmatprep.subr.mxu0 %v5868
    %5940 = vmatpush1.msra.mxu0 %v5867
    %5941 = vmatprep.subr.mxu0 %v5871
    %5942 = vmatpush1.msra.mxu0 %v5870
    %5943 = vmatprep.subr.mxu0 %v5874
    %5944 = vmatpush1.msra.mxu0 %v5873
    %5945 = vmatprep.subr.mxu0 %v5877
    %5946 = vmatpush1.msra.mxu0 %v5876
    %5947 = vmatprep.subr.mxu0 0.0
    %5948 = vmatpush1.msra.mxu0 0.0
    %5949 = vmatprep.subr.mxu0 0.0
    %5950 = vmatpush1.msra.mxu0 0.0
    %5951 = vmatprep.subr.mxu0 0.0
    %5952 = vmatpush1.msra.mxu0 0.0
    %5953 = vmatprep.subr.mxu0 0.0
    %5954 = vmatpush1.msra.mxu0 0.0
    %5955 = vmatprep.subr.mxu0 0.0
    %5956 = vmatpush1.msra.mxu0 0.0
    %5957 = vmatprep.subr.mxu0 0.0
    %5958 = vmatpush1.msra.mxu0 0.0
    %5959 = vmatprep.mubr.f32.mxu0 %v5891
    %5960 = vmatmul.mubr.f32.gmra.mrb[0].mxu0 %v5885
    %v5961 = vpop.f32.mrb[0].mxu0
    %v5962 = vadd.f32 0.0, %v5961
    %v5963 = vpop.f32.mrb[0].mxu0
    %v5964 = vadd.f32 0.0, %v5963
    %5965 = vmatprep.mubr.f32.mxu0 %v5893
    %5966 = vmatmul.mubr.f32.gmra.mrb[0].mxu0 %v5884
    %v5967 = vpop.f32.mrb[0].mxu0
    %v5968 = vadd.f32 0.0, %v5967
    %v5969 = vpop.f32.mrb[0].mxu0
    %v5970 = vadd.f32 0.0, %v5969
    %5971 = vdwg.mxu0
    %5972 = vmatprep.subr.mxu0 0.0
    %5973 = vmatpush1.msra.mxu0 %v5803
    %5974 = vmatprep.subr.mxu0 0.0
    %5975 = vmatpush1.msra.mxu0 %v5806
    %5976 = vmatprep.subr.mxu0 0.0
    %5977 = vmatpush1.msra.mxu0 %v5809
    %5978 = vmatprep.subr.mxu0 0.0
    %5979 = vmatpush1.msra.mxu0 %v5812
    %5980 = vmatprep.subr.mxu0 0.0
    %5981 = vmatpush1.msra.mxu0 %v5815
    %5982 = vmatprep.subr.mxu0 0.0
    %5983 = vmatpush1.msra.mxu0 %v5818
    %5984 = vmatprep.subr.mxu0 0.0
    %5985 = vmatpush1.msra.mxu0 %v5821
    %5986 = vmatprep.subr.mxu0 0.0
    %5987 = vmatpush1.msra.mxu0 %v5824
    %5988 = vmatprep.subr.mxu0 0.0
    %5989 = vmatpush1.msra.mxu0 %v5827
    %5990 = vmatprep.subr.mxu0 0.0
    %5991 = vmatpush1.msra.mxu0 %v5830
    %5992 = vmatprep.subr.mxu0 0.0
    %5993 = vmatpush1.msra.mxu0 %v5833
    %5994 = vmatprep.subr.mxu0 0.0
    %5995 = vmatpush1.msra.mxu0 %v5836
    %5996 = vmatprep.subr.mxu0 0.0
    %5997 = vmatpush1.msra.mxu0 %v5839
    %5998 = vmatprep.subr.mxu0 0.0
    %5999 = vmatpush1.msra.mxu0 %v5842
    %6000 = vmatprep.subr.mxu0 0.0
    %6001 = vmatpush1.msra.mxu0 %v5845
    %6002 = vmatprep.subr.mxu0 0.0
    %6003 = vmatpush1.msra.mxu0 %v5848
    %6004 = vmatprep.subr.mxu0 0.0
    %6005 = vmatpush1.msra.mxu0 %v5851
    %6006 = vmatprep.subr.mxu0 0.0
    %6007 = vmatpush1.msra.mxu0 %v5854
    %6008 = vmatprep.subr.mxu0 0.0
    %6009 = vmatpush1.msra.mxu0 %v5857
    %6010 = vmatprep.subr.mxu0 0.0
    %6011 = vmatpush1.msra.mxu0 %v5860
    %6012 = vmatprep.subr.mxu0 0.0
    %6013 = vmatpush1.msra.mxu0 %v5863
    %6014 = vmatprep.subr.mxu0 0.0
    %6015 = vmatpush1.msra.mxu0 %v5866
    %6016 = vmatprep.subr.mxu0 0.0
    %6017 = vmatpush1.msra.mxu0 %v5869
    %6018 = vmatprep.subr.mxu0 0.0
    %6019 = vmatpush1.msra.mxu0 %v5872
    %6020 = vmatprep.subr.mxu0 0.0
    %6021 = vmatpush1.msra.mxu0 %v5875
    %6022 = vmatprep.subr.mxu0 0.0
    %6023 = vmatpush1.msra.mxu0 %v5878
    %6024 = vmatprep.subr.mxu0 0.0
    %6025 = vmatpush1.msra.mxu0 0.0
    %6026 = vmatprep.subr.mxu0 0.0
    %6027 = vmatpush1.msra.mxu0 0.0
    %6028 = vmatprep.subr.mxu0 0.0
    %6029 = vmatpush1.msra.mxu0 0.0
    %6030 = vmatprep.subr.mxu0 0.0
    %6031 = vmatpush1.msra.mxu0 0.0
    %6032 = vmatprep.subr.mxu0 0.0
    %6033 = vmatpush1.msra.mxu0 0.0
    %6034 = vmatprep.subr.mxu0 0.0
    %6035 = vmatpush1.msra.mxu0 0.0
    %6036 = vmatprep.mubr.f32.mxu0 %v5891
    %6037 = vmatmul.mubr.f32.gmra.mrb[0].mxu0 %v5885
    %v6038 = vpop.f32.mrb[0].mxu0
    %v6039 = vadd.f32 0.0, %v6038
    %v6040 = vpop.f32.mrb[0].mxu0
    %6041 = vmatprep.mubr.f32.mxu0 %v5893
    %6042 = vmatmul.mubr.f32.gmra.mrb[0].mxu0 %v5884
    %v6043 = vpop.f32.mrb[0].mxu0
    %v6044 = vadd.f32 0.0, %v6043
    %v6045 = vpop.f32.mrb[0].mxu0
    %6046 = vdwg.mxu0
    %v6048 = vsel %vm1743, %v5716, 0
    %v6051 = vsel %vm1743, %v5718, 0
    %6053 = vmatprep.subr.mxu0 %v5720
    %6054 = vmatpush1.msra.mxu0 %v5719
    %6055 = vmatprep.subr.mxu0 %v5723
    %6056 = vmatpush1.msra.mxu0 %v5722
    %6057 = vmatprep.subr.mxu0 %v5726
    %6058 = vmatpush1.msra.mxu0 %v5725
    %6059 = vmatprep.subr.mxu0 %v5729
    %6060 = vmatpush1.msra.mxu0 %v5728
    %6061 = vmatprep.subr.mxu0 %v5732
    %6062 = vmatpush1.msra.mxu0 %v5731
    %6063 = vmatprep.subr.mxu0 %v5735
    %6064 = vmatpush1.msra.mxu0 %v5734
    %6065 = vmatprep.subr.mxu0 %v5738
    %6066 = vmatpush1.msra.mxu0 %v5737
    %6067 = vmatprep.subr.mxu0 %v5741
    %6068 = vmatpush1.msra.mxu0 %v5740
    %6069 = vmatprep.subr.mxu0 %v5744
    %6070 = vmatpush1.msra.mxu0 %v5743
    %6071 = vmatprep.subr.mxu0 %v5747
    %6072 = vmatpush1.msra.mxu0 %v5746
    %6073 = vmatprep.subr.mxu0 %v5750
    %6074 = vmatpush1.msra.mxu0 %v5749
    %6075 = vmatprep.subr.mxu0 %v5753
    %6076 = vmatpush1.msra.mxu0 %v5752
    %6077 = vmatprep.subr.mxu0 %v5756
    %6078 = vmatpush1.msra.mxu0 %v5755
    %6079 = vmatprep.subr.mxu0 %v5759
    %6080 = vmatpush1.msra.mxu0 %v5758
    %6081 = vmatprep.subr.mxu0 %v5762
    %6082 = vmatpush1.msra.mxu0 %v5761
    %6083 = vmatprep.subr.mxu0 %v5765
    %6084 = vmatpush1.msra.mxu0 %v5764
    %6085 = vmatprep.subr.mxu0 %v5768
    %6086 = vmatpush1.msra.mxu0 %v5767
    %6087 = vmatprep.subr.mxu0 %v5771
    %6088 = vmatpush1.msra.mxu0 %v5770
    %6089 = vmatprep.subr.mxu0 %v5774
    %6090 = vmatpush1.msra.mxu0 %v5773
    %6091 = vmatprep.subr.mxu0 %v5777
    %6092 = vmatpush1.msra.mxu0 %v5776
    %6093 = vmatprep.subr.mxu0 %v5780
    %6094 = vmatpush1.msra.mxu0 %v5779
    %6095 = vmatprep.subr.mxu0 %v5783
    %6096 = vmatpush1.msra.mxu0 %v5782
    %6097 = vmatprep.subr.mxu0 %v5786
    %6098 = vmatpush1.msra.mxu0 %v5785
    %6099 = vmatprep.subr.mxu0 %v5789
    %6100 = vmatpush1.msra.mxu0 %v5788
    %6101 = vmatprep.subr.mxu0 %v5792
    %6102 = vmatpush1.msra.mxu0 %v5791
    %6103 = vmatprep.subr.mxu0 %v5795
    %6104 = vmatpush1.msra.mxu0 %v5794
    %6105 = vmatprep.subr.mxu0 0.0
    %6106 = vmatpush1.msra.mxu0 0.0
    %6107 = vmatprep.subr.mxu0 0.0
    %6108 = vmatpush1.msra.mxu0 0.0
    %6109 = vmatprep.subr.mxu0 0.0
    %6110 = vmatpush1.msra.mxu0 0.0
    %6111 = vmatprep.subr.mxu0 0.0
    %6112 = vmatpush1.msra.mxu0 0.0
    %6113 = vmatprep.subr.mxu0 0.0
    %6114 = vmatpush1.msra.mxu0 0.0
    %6115 = vmatprep.subr.mxu0 0.0
    %6116 = vmatpush1.msra.mxu0 0.0
    %6117 = vmatprep.mubr.f32.mxu0 %v6048
    %6118 = vmatmul.mubr.f32.gmra.mrb[0].mxu0 %v5715
    %v6119 = vpop.f32.mrb[0].mxu0
    %v6120 = vadd.f32 %v5962, %v6119
    %v6121 = vpop.f32.mrb[0].mxu0
    %v6122 = vadd.f32 %v5964, %v6121
    %6123 = vmatprep.mubr.f32.mxu0 %v6051
    %6124 = vmatmul.mubr.f32.gmra.mrb[0].mxu0 %v5717
    %v6125 = vpop.f32.mrb[0].mxu0
    %v6126 = vadd.f32 %v5968, %v6125
    %v6127 = vpop.f32.mrb[0].mxu0
    %v6128 = vadd.f32 %v5970, %v6127
    %6129 = vdwg.mxu0
    %6130 = vmatprep.subr.mxu0 0.0
    %6131 = vmatpush1.msra.mxu0 %v5721
    %6132 = vmatprep.subr.mxu0 0.0
    %6133 = vmatpush1.msra.mxu0 %v5724
    %6134 = vmatprep.subr.mxu0 0.0
    %6135 = vmatpush1.msra.mxu0 %v5727
    %6136 = vmatprep.subr.mxu0 0.0
    %6137 = vmatpush1.msra.mxu0 %v5730
    %6138 = vmatprep.subr.mxu0 0.0
    %6139 = vmatpush1.msra.mxu0 %v5733
    %6140 = vmatprep.subr.mxu0 0.0
    %6141 = vmatpush1.msra.mxu0 %v5736
    %6142 = vmatprep.subr.mxu0 0.0
    %6143 = vmatpush1.msra.mxu0 %v5739
    %6144 = vmatprep.subr.mxu0 0.0
    %6145 = vmatpush1.msra.mxu0 %v5742
    %6146 = vmatprep.subr.mxu0 0.0
    %6147 = vmatpush1.msra.mxu0 %v5745
    %6148 = vmatprep.subr.mxu0 0.0
    %6149 = vmatpush1.msra.mxu0 %v5748
    %6150 = vmatprep.subr.mxu0 0.0
    %6151 = vmatpush1.msra.mxu0 %v5751
    %6152 = vmatprep.subr.mxu0 0.0
    %6153 = vmatpush1.msra.mxu0 %v5754
    %6154 = vmatprep.subr.mxu0 0.0
    %6155 = vmatpush1.msra.mxu0 %v5757
    %6156 = vmatprep.subr.mxu0 0.0
    %6157 = vmatpush1.msra.mxu0 %v5760
    %6158 = vmatprep.subr.mxu0 0.0
    %6159 = vmatpush1.msra.mxu0 %v5763
    %6160 = vmatprep.subr.mxu0 0.0
    %6161 = vmatpush1.msra.mxu0 %v5766
    %6162 = vmatprep.subr.mxu0 0.0
    %6163 = vmatpush1.msra.mxu0 %v5769
    %6164 = vmatprep.subr.mxu0 0.0
    %6165 = vmatpush1.msra.mxu0 %v5772
    %6166 = vmatprep.subr.mxu0 0.0
    %6167 = vmatpush1.msra.mxu0 %v5775
    %6168 = vmatprep.subr.mxu0 0.0
    %6169 = vmatpush1.msra.mxu0 %v5778
    %6170 = vmatprep.subr.mxu0 0.0
    %6171 = vmatpush1.msra.mxu0 %v5781
    %6172 = vmatprep.subr.mxu0 0.0
    %6173 = vmatpush1.msra.mxu0 %v5784
    %6174 = vmatprep.subr.mxu0 0.0
    %6175 = vmatpush1.msra.mxu0 %v5787
    %6176 = vmatprep.subr.mxu0 0.0
    %6177 = vmatpush1.msra.mxu0 %v5790
    %6178 = vmatprep.subr.mxu0 0.0
    %6179 = vmatpush1.msra.mxu0 %v5793
    %6180 = vmatprep.subr.mxu0 0.0
    %6181 = vmatpush1.msra.mxu0 %v5796
    %6182 = vmatprep.subr.mxu0 0.0
    %6183 = vmatpush1.msra.mxu0 0.0
    %6184 = vmatprep.subr.mxu0 0.0
    %6185 = vmatpush1.msra.mxu0 0.0
    %6186 = vmatprep.subr.mxu0 0.0
    %6187 = vmatpush1.msra.mxu0 0.0
    %6188 = vmatprep.subr.mxu0 0.0
    %6189 = vmatpush1.msra.mxu0 0.0
    %6190 = vmatprep.subr.mxu0 0.0
    %6191 = vmatpush1.msra.mxu0 0.0
    %6192 = vmatprep.subr.mxu0 0.0
    %6193 = vmatpush1.msra.mxu0 0.0
    %6194 = vmatprep.mubr.f32.mxu0 %v6048
    %6195 = vmatmul.mubr.f32.gmra.mrb[0].mxu0 %v5715
    %v6196 = vpop.f32.mrb[0].mxu0
    %v6197 = vadd.f32 %v6039, %v6196
    %v6198 = vpop.f32.mrb[0].mxu0
    %6199 = vmatprep.mubr.f32.mxu0 %v6051
    %6200 = vmatmul.mubr.f32.gmra.mrb[0].mxu0 %v5717
    %v6201 = vpop.f32.mrb[0].mxu0
    %v6202 = vadd.f32 %v6044, %v6201
    %v6203 = vpop.f32.mrb[0].mxu0
    %6204 = vdwg.mxu0
    %v6205 = vld [vmem:[#allocation2] sm:$0xfc]
    %v6206 = vld [vmem:[#allocation2 + $0x8] sm:$0xfc]
    %v6207 = vld [vmem:[#allocation2 + $0x10] sm:$0x1f]
    %v6208 = vld [vmem:[#allocation2 + $0x18] sm:$0x1f]
    %v6209 = vld [vmem:[%s2244] sm:$0xff]
    %v6210 = vld [vmem:[%s2244 + $0x8] sm:$0xff]
    %v6211 = vld [vmem:[%s2244 + $0x10] sm:$0xff]
    %v6212 = vld [vmem:[%s2244 + $0x18] sm:$0xff]
    %v6213 = vld [vmem:[%s2244 + $0x20] sm:$0xff]
    %v6214 = vld [vmem:[%s2244 + $0x28] sm:$0xff]
    %v6215 = vld [vmem:[%s2244 + $0x30] sm:$0xff]
    %v6216 = vld [vmem:[%s2244 + $0x38] sm:$0xff]
    %v6217 = vld [vmem:[%s2244 + $0x40] sm:$0xff]
    %v6218 = vld [vmem:[%s2244 + $0x48] sm:$0xff]
    %v6219 = vld [vmem:[%s2244 + $0x50] sm:$0xff]
    %v6220 = vld [vmem:[%s2244 + $0x58] sm:$0xff]
    %v6221 = vld [vmem:[%s2244 + $0x60] sm:$0xff]
    %v6222 = vld [vmem:[%s2244 + $0x68] sm:$0xff]
    %v6223 = vld [vmem:[%s2244 + $0x70] sm:$0xff]
    %v6224 = vld [vmem:[%s2244 + $0x78] sm:$0xff]
    %v6225 = vld [vmem:[%s2244 + $0x80] sm:$0xff]
    %v6226 = vld [vmem:[%s2244 + $0x88] sm:$0xff]
    %v6227 = vld [vmem:[%s2244 + $0x90] sm:$0xff]
    %v6228 = vld [vmem:[%s2244 + $0x98] sm:$0xff]
    %v6229 = vld [vmem:[%s2244 + $0xa0] sm:$0xff]
    %v6230 = vld [vmem:[%s2244 + $0xa8] sm:$0xff]
    %v6231 = vld [vmem:[%s2244 + $0xb0] sm:$0xff]
    %v6232 = vld [vmem:[%s2244 + $0xb8] sm:$0xff]
    %v6233 = vld [vmem:[%s2244 + $0xc0] sm:$0xff]
    %v6234 = vld [vmem:[%s2244 + $0xc8] sm:$0xff]
    %v6235 = vld [vmem:[%s2244 + $0xd0] sm:$0xff]
    %v6236 = vld [vmem:[%s2244 + $0xd8] sm:$0xff]
    %v6237 = vld [vmem:[%s2244 + $0xe0] sm:$0xff]
    %v6238 = vld [vmem:[%s2244 + $0xe8] sm:$0xff]
    %v6239 = vld [vmem:[%s2244 + $0xf0] sm:$0xff]
    %v6240 = vld [vmem:[%s2244 + $0xf8] sm:$0xff]
    %v6241 = vld [vmem:[%s2244 + $0x100] sm:$0xff]
    %v6242 = vld [vmem:[%s2244 + $0x108] sm:$0xff]
    %v6243 = vld [vmem:[%s2244 + $0x110] sm:$0xff]
    %v6244 = vld [vmem:[%s2244 + $0x118] sm:$0xff]
    %v6245 = vld [vmem:[%s2244 + $0x120] sm:$0xff]
    %v6246 = vld [vmem:[%s2244 + $0x128] sm:$0xff]
    %v6247 = vld [vmem:[%s2244 + $0x130] sm:$0xff]
    %v6248 = vld [vmem:[%s2244 + $0x138] sm:$0xff]
    %v6249 = vld [vmem:[%s2244 + $0x140] sm:$0xff]
    %v6250 = vld [vmem:[%s2244 + $0x148] sm:$0xff]
    %v6251 = vld [vmem:[%s2244 + $0x150] sm:$0xff]
    %v6252 = vld [vmem:[%s2244 + $0x158] sm:$0xff]
    %v6253 = vld [vmem:[%s2244 + $0x160] sm:$0xff]
    %v6254 = vld [vmem:[%s2244 + $0x168] sm:$0xff]
    %v6255 = vld [vmem:[%s2244 + $0x170] sm:$0xff]
    %v6256 = vld [vmem:[%s2244 + $0x178] sm:$0xff]
    %v6257 = vld [vmem:[%s2244 + $0x180] sm:$0xff]
    %v6258 = vld [vmem:[%s2244 + $0x188] sm:$0xff]
    %v6259 = vld [vmem:[%s2244 + $0x190] sm:$0xff]
    %v6260 = vld [vmem:[%s2244 + $0x198] sm:$0xff]
    %v6261 = vld [vmem:[%s2244 + $0x1a0] sm:$0xff]
    %v6262 = vld [vmem:[%s2244 + $0x1a8] sm:$0xff]
    %v6263 = vld [vmem:[%s2244 + $0x1b0] sm:$0xff]
    %v6264 = vld [vmem:[%s2244 + $0x1b8] sm:$0xff]
    %v6265 = vld [vmem:[%s2244 + $0x1c0] sm:$0xff]
    %v6266 = vld [vmem:[%s2244 + $0x1c8] sm:$0xff]
    %v6267 = vld [vmem:[%s2244 + $0x1d0] sm:$0xff]
    %v6268 = vld [vmem:[%s2244 + $0x1d8] sm:$0xff]
    %v6269 = vld [vmem:[%s2244 + $0x1e0] sm:$0xff]
    %v6270 = vld [vmem:[%s2244 + $0x1e8] sm:$0xff]
    %v6271 = vld [vmem:[%s2244 + $0x1f0] sm:$0xff]
    %v6272 = vld [vmem:[%s2244 + $0x1f8] sm:$0xff]
    %v6273 = vld [vmem:[%s2244 + $0x200] sm:$0xff]
    %v6274 = vld [vmem:[%s2244 + $0x208] sm:$0xff]
    %v6275 = vld [vmem:[%s2244 + $0x210] sm:$0xff]
    %v6276 = vld [vmem:[%s2244 + $0x218] sm:$0xff]
    %v6277 = vld [vmem:[%s2244 + $0x220] sm:$0xff]
    %v6278 = vld [vmem:[%s2244 + $0x228] sm:$0xff]
    %v6279 = vld [vmem:[%s2244 + $0x230] sm:$0xff]
    %v6280 = vld [vmem:[%s2244 + $0x238] sm:$0xff]
    %v6281 = vld [vmem:[%s2244 + $0x240] sm:$0xff]
    %v6282 = vld [vmem:[%s2244 + $0x248] sm:$0xff]
    %v6283 = vld [vmem:[%s2244 + $0x250] sm:$0xff]
    %v6284 = vld [vmem:[%s2244 + $0x258] sm:$0xff]
    %v6285 = vld [vmem:[%s2244 + $0x260] sm:$0xff]
    %v6286 = vld [vmem:[%s2244 + $0x268] sm:$0xff]
    %v6291 = vrot.slane %v6205, 2
    %v6292 = vrot.slane %v6207, 2
    %v6293 = vsel %vm2327, %v6291, %v6292
    %v6294 = vrot.slane %v6206, 2
    %v6295 = vrot.slane %v6208, 2
    %v6296 = vsel %vm2327, %v6294, %v6295
    %v6299 = vsel %vm1743, %v6296, 0
    %v6301 = vsel %vm1743, %v6295, 0
    %6303 = vmatprep.subr.mxu0 %v6210
    %6304 = vmatpush1.msra.mxu0 %v6209
    %6305 = vmatprep.subr.mxu0 %v6213
    %6306 = vmatpush1.msra.mxu0 %v6212
    %6307 = vmatprep.subr.mxu0 %v6216
    %6308 = vmatpush1.msra.mxu0 %v6215
    %6309 = vmatprep.subr.mxu0 %v6219
    %6310 = vmatpush1.msra.mxu0 %v6218
    %6311 = vmatprep.subr.mxu0 %v6222
    %6312 = vmatpush1.msra.mxu0 %v6221
    %6313 = vmatprep.subr.mxu0 %v6225
    %6314 = vmatpush1.msra.mxu0 %v6224
    %6315 = vmatprep.subr.mxu0 %v6228
    %6316 = vmatpush1.msra.mxu0 %v6227
    %6317 = vmatprep.subr.mxu0 %v6231
    %6318 = vmatpush1.msra.mxu0 %v6230
    %6319 = vmatprep.subr.mxu0 %v6234
    %6320 = vmatpush1.msra.mxu0 %v6233
    %6321 = vmatprep.subr.mxu0 %v6237
    %6322 = vmatpush1.msra.mxu0 %v6236
    %6323 = vmatprep.subr.mxu0 %v6240
    %6324 = vmatpush1.msra.mxu0 %v6239
    %6325 = vmatprep.subr.mxu0 %v6243
    %6326 = vmatpush1.msra.mxu0 %v6242
    %6327 = vmatprep.subr.mxu0 %v6246
    %6328 = vmatpush1.msra.mxu0 %v6245
    %6329 = vmatprep.subr.mxu0 %v6249
    %6330 = vmatpush1.msra.mxu0 %v6248
    %6331 = vmatprep.subr.mxu0 %v6252
    %6332 = vmatpush1.msra.mxu0 %v6251
    %6333 = vmatprep.subr.mxu0 %v6255
    %6334 = vmatpush1.msra.mxu0 %v6254
    %6335 = vmatprep.subr.mxu0 %v6258
    %6336 = vmatpush1.msra.mxu0 %v6257
    %6337 = vmatprep.subr.mxu0 %v6261
    %6338 = vmatpush1.msra.mxu0 %v6260
    %6339 = vmatprep.subr.mxu0 %v6264
    %6340 = vmatpush1.msra.mxu0 %v6263
    %6341 = vmatprep.subr.mxu0 %v6267
    %6342 = vmatpush1.msra.mxu0 %v6266
    %6343 = vmatprep.subr.mxu0 %v6270
    %6344 = vmatpush1.msra.mxu0 %v6269
    %6345 = vmatprep.subr.mxu0 %v6273
    %6346 = vmatpush1.msra.mxu0 %v6272
    %6347 = vmatprep.subr.mxu0 %v6276
    %6348 = vmatpush1.msra.mxu0 %v6275
    %6349 = vmatprep.subr.mxu0 %v6279
    %6350 = vmatpush1.msra.mxu0 %v6278
    %6351 = vmatprep.subr.mxu0 %v6282
    %6352 = vmatpush1.msra.mxu0 %v6281
    %6353 = vmatprep.subr.mxu0 %v6285
    %6354 = vmatpush1.msra.mxu0 %v6284
    %6355 = vmatprep.subr.mxu0 0.0
    %6356 = vmatpush1.msra.mxu0 0.0
    %6357 = vmatprep.subr.mxu0 0.0
    %6358 = vmatpush1.msra.mxu0 0.0
    %6359 = vmatprep.subr.mxu0 0.0
    %6360 = vmatpush1.msra.mxu0 0.0
    %6361 = vmatprep.subr.mxu0 0.0
    %6362 = vmatpush1.msra.mxu0 0.0
    %6363 = vmatprep.subr.mxu0 0.0
    %6364 = vmatpush1.msra.mxu0 0.0
    %6365 = vmatprep.subr.mxu0 0.0
    %6366 = vmatpush1.msra.mxu0 0.0
    %6367 = vmatprep.mubr.f32.mxu0 %v6299
    %6368 = vmatmul.mubr.f32.gmra.mrb[0].mxu0 %v6293
    %v6369 = vpop.f32.mrb[0].mxu0
    %v6370 = vadd.f32 0.0, %v6369
    %v6371 = vpop.f32.mrb[0].mxu0
    %v6372 = vadd.f32 0.0, %v6371
    %6373 = vmatprep.mubr.f32.mxu0 %v6301
    %6374 = vmatmul.mubr.f32.gmra.mrb[0].mxu0 %v6292
    %v6375 = vpop.f32.mrb[0].mxu0
    %v6376 = vadd.f32 0.0, %v6375
    %v6377 = vpop.f32.mrb[0].mxu0
    %v6378 = vadd.f32 0.0, %v6377
    %6379 = vdwg.mxu0
    %6380 = vmatprep.subr.mxu0 0.0
    %6381 = vmatpush1.msra.mxu0 %v6211
    %6382 = vmatprep.subr.mxu0 0.0
    %6383 = vmatpush1.msra.mxu0 %v6214
    %6384 = vmatprep.subr.mxu0 0.0
    %6385 = vmatpush1.msra.mxu0 %v6217
    %6386 = vmatprep.subr.mxu0 0.0
    %6387 = vmatpush1.msra.mxu0 %v6220
    %6388 = vmatprep.subr.mxu0 0.0
    %6389 = vmatpush1.msra.mxu0 %v6223
    %6390 = vmatprep.subr.mxu0 0.0
    %6391 = vmatpush1.msra.mxu0 %v6226
    %6392 = vmatprep.subr.mxu0 0.0
    %6393 = vmatpush1.msra.mxu0 %v6229
    %6394 = vmatprep.subr.mxu0 0.0
    %6395 = vmatpush1.msra.mxu0 %v6232
    %6396 = vmatprep.subr.mxu0 0.0
    %6397 = vmatpush1.msra.mxu0 %v6235
    %6398 = vmatprep.subr.mxu0 0.0
    %6399 = vmatpush1.msra.mxu0 %v6238
    %6400 = vmatprep.subr.mxu0 0.0
    %6401 = vmatpush1.msra.mxu0 %v6241
    %6402 = vmatprep.subr.mxu0 0.0
    %6403 = vmatpush1.msra.mxu0 %v6244
    %6404 = vmatprep.subr.mxu0 0.0
    %6405 = vmatpush1.msra.mxu0 %v6247
    %6406 = vmatprep.subr.mxu0 0.0
    %6407 = vmatpush1.msra.mxu0 %v6250
    %6408 = vmatprep.subr.mxu0 0.0
    %6409 = vmatpush1.msra.mxu0 %v6253
    %6410 = vmatprep.subr.mxu0 0.0
    %6411 = vmatpush1.msra.mxu0 %v6256
    %6412 = vmatprep.subr.mxu0 0.0
    %6413 = vmatpush1.msra.mxu0 %v6259
    %6414 = vmatprep.subr.mxu0 0.0
    %6415 = vmatpush1.msra.mxu0 %v6262
    %6416 = vmatprep.subr.mxu0 0.0
    %6417 = vmatpush1.msra.mxu0 %v6265
    %6418 = vmatprep.subr.mxu0 0.0
    %6419 = vmatpush1.msra.mxu0 %v6268
    %6420 = vmatprep.subr.mxu0 0.0
    %6421 = vmatpush1.msra.mxu0 %v6271
    %6422 = vmatprep.subr.mxu0 0.0
    %6423 = vmatpush1.msra.mxu0 %v6274
    %6424 = vmatprep.subr.mxu0 0.0
    %6425 = vmatpush1.msra.mxu0 %v6277
    %6426 = vmatprep.subr.mxu0 0.0
    %6427 = vmatpush1.msra.mxu0 %v6280
    %6428 = vmatprep.subr.mxu0 0.0
    %6429 = vmatpush1.msra.mxu0 %v6283
    %6430 = vmatprep.subr.mxu0 0.0
    %6431 = vmatpush1.msra.mxu0 %v6286
    %6432 = vmatprep.subr.mxu0 0.0
    %6433 = vmatpush1.msra.mxu0 0.0
    %6434 = vmatprep.subr.mxu0 0.0
    %6435 = vmatpush1.msra.mxu0 0.0
    %6436 = vmatprep.subr.mxu0 0.0
    %6437 = vmatpush1.msra.mxu0 0.0
    %6438 = vmatprep.subr.mxu0 0.0
    %6439 = vmatpush1.msra.mxu0 0.0
    %6440 = vmatprep.subr.mxu0 0.0
    %6441 = vmatpush1.msra.mxu0 0.0
    %6442 = vmatprep.subr.mxu0 0.0
    %6443 = vmatpush1.msra.mxu0 0.0
    %6444 = vmatprep.mubr.f32.mxu0 %v6299
    %6445 = vmatmul.mubr.f32.gmra.mrb[0].mxu0 %v6293
    %v6446 = vpop.f32.mrb[0].mxu0
    %v6447 = vadd.f32 0.0, %v6446
    %v6448 = vpop.f32.mrb[0].mxu0
    %6449 = vmatprep.mubr.f32.mxu0 %v6301
    %6450 = vmatmul.mubr.f32.gmra.mrb[0].mxu0 %v6292
    %v6451 = vpop.f32.mrb[0].mxu0
    %v6452 = vadd.f32 0.0, %v6451
    %v6453 = vpop.f32.mrb[0].mxu0
    %6454 = vdwg.mxu0
    %v6455 = vadd.f32 %v6120, %v6370
    %v6456 = vadd.f32 %v6122, %v6372
    %v6457 = vadd.f32 %v6197, %v6447
    %v6458 = vadd.f32 %v6126, %v6376
    %v6459 = vadd.f32 %v6128, %v6378
    %v6460 = vadd.f32 %v6202, %v6452
    %v6461 = vld [vmem:[%s7] sm:$0x7]
    %v6463 = vlaneseq
    %v6464 = vshrl.u32 %v6463, 7
    %v6465 = vsub.s32 0, %v6464
    %v6466 = vrot.slane %v6461, %v6465
    %v6467 = vlaneseq
    %v6468 = vshrl.u32 %v6467, 7
    %v6469 = vsub.s32 1, %v6468
    %v6470 = vrot.slane %v6461, %v6469
    %v6471 = vlaneseq
    %v6472 = vshrl.u32 %v6471, 7
    %v6473 = vsub.s32 2, %v6472
    %v6474 = vrot.slane %v6461, %v6473
    %v6478 = vmul.f32 %v6455, %v6466
    %v6479 = vmul.f32 %v6456, %v6470
    %v6480 = vmul.f32 %v6457, %v6474
    %v6481 = vmul.f32 %v6458, %v6466
    %v6482 = vmul.f32 %v6459, %v6470
    %v6483 = vmul.f32 %v6460, %v6474
    %v6484 = vld [vmem:[%s8] sm:$0x7]
    %v6486 = vlaneseq
    %v6487 = vshrl.u32 %v6486, 7
    %v6488 = vsub.s32 0, %v6487
    %v6489 = vrot.slane %v6484, %v6488
    %v6490 = vlaneseq
    %v6491 = vshrl.u32 %v6490, 7
    %v6492 = vsub.s32 1, %v6491
    %v6493 = vrot.slane %v6484, %v6492
    %v6494 = vlaneseq
    %v6495 = vshrl.u32 %v6494, 7
    %v6496 = vsub.s32 2, %v6495
    %v6497 = vrot.slane %v6484, %v6496
    %v6501 = vadd.f32 %v6478, %v6489
    %v6502 = vadd.f32 %v6479, %v6493
    %v6503 = vadd.f32 %v6480, %v6497
    %v6504 = vadd.f32 %v6481, %v6489
    %v6505 = vadd.f32 %v6482, %v6493
    %v6506 = vadd.f32 %v6483, %v6497
    %v6507 = vmax.f32 %v6501, 0.0
    %v6508 = vmax.f32 %v6502, 0.0
    %v6509 = vmax.f32 %v6503, 0.0
    %v6510 = vmax.f32 %v6504, 0.0
    %v6511 = vmax.f32 %v6505, 0.0
    %v6512 = vmax.f32 %v6506, 0.0
    %v6513 = vld [vmem:[%s9] sm:$0x1f]
    %v6515 = vsel %vm2551, %v6513, 0
    %v6518 = vsel %vm2555, %v6510, 0
    %v6521 = vsel %vm2555, %v6511, 0
    %v6524 = vsel %vm2555, %v6512, 0
    %6526 = vmatprep.subr.mxu0 %v6508
    %6527 = vmatpush1.msra.mxu0 %v6507
    %6528 = vmatprep.subr.mxu0 %v6521
    %6529 = vmatpush1.msra.mxu0 %v6518
    %6530 = vmatprep.subr.mxu0 0.0
    %6531 = vmatpush1.msra.mxu0 0.0
    %6532 = vmatprep.subr.mxu0 0.0
    %6533 = vmatpush1.msra.mxu0 0.0
    %6534 = vmatprep.subr.mxu0 0.0
    %6535 = vmatpush1.msra.mxu0 0.0
    %6536 = vmatprep.subr.mxu0 0.0
    %6537 = vmatpush1.msra.mxu0 0.0
    %6538 = vmatprep.subr.mxu0 0.0
    %6539 = vmatpush1.msra.mxu0 0.0
    %6540 = vmatprep.subr.mxu0 0.0
    %6541 = vmatpush1.msra.mxu0 0.0
    %6542 = vmatprep.subr.mxu0 0.0
    %6543 = vmatpush1.msra.mxu0 0.0
    %6544 = vmatprep.subr.mxu0 0.0
    %6545 = vmatpush1.msra.mxu0 0.0
    %6546 = vmatprep.subr.mxu0 0.0
    %6547 = vmatpush1.msra.mxu0 0.0
    %6548 = vmatprep.subr.mxu0 0.0
    %6549 = vmatpush1.msra.mxu0 0.0
    %6550 = vmatprep.subr.mxu0 0.0
    %6551 = vmatpush1.msra.mxu0 0.0
    %6552 = vmatprep.subr.mxu0 0.0
    %6553 = vmatpush1.msra.mxu0 0.0
    %6554 = vmatprep.subr.mxu0 0.0
    %6555 = vmatpush1.msra.mxu0 0.0
    %6556 = vmatprep.subr.mxu0 0.0
    %6557 = vmatpush1.msra.mxu0 0.0
    %6558 = vmatprep.subr.mxu0 0.0
    %6559 = vmatpush1.msra.mxu0 0.0
    %6560 = vmatprep.subr.mxu0 0.0
    %6561 = vmatpush1.msra.mxu0 0.0
    %6562 = vmatprep.subr.mxu0 0.0
    %6563 = vmatpush1.msra.mxu0 0.0
    %6564 = vmatprep.subr.mxu0 0.0
    %6565 = vmatpush1.msra.mxu0 0.0
    %6566 = vmatprep.subr.mxu0 0.0
    %6567 = vmatpush1.msra.mxu0 0.0
    %6568 = vmatprep.subr.mxu0 0.0
    %6569 = vmatpush1.msra.mxu0 0.0
    %6570 = vmatprep.subr.mxu0 0.0
    %6571 = vmatpush1.msra.mxu0 0.0
    %6572 = vmatprep.subr.mxu0 0.0
    %6573 = vmatpush1.msra.mxu0 0.0
    %6574 = vmatprep.subr.mxu0 0.0
    %6575 = vmatpush1.msra.mxu0 0.0
    %6576 = vmatprep.subr.mxu0 0.0
    %6577 = vmatpush1.msra.mxu0 0.0
    %6578 = vmatprep.subr.mxu0 0.0
    %6579 = vmatpush1.msra.mxu0 0.0
    %6580 = vmatprep.subr.mxu0 0.0
    %6581 = vmatpush1.msra.mxu0 0.0
    %6582 = vmatprep.subr.mxu0 0.0
    %6583 = vmatpush1.msra.mxu0 0.0
    %6584 = vmatprep.subr.mxu0 0.0
    %6585 = vmatpush1.msra.mxu0 0.0
    %6586 = vmatprep.subr.mxu0 0.0
    %6587 = vmatpush1.msra.mxu0 0.0
    %6588 = vmatprep.subr.mxu0 0.0
    %6589 = vmatpush1.msra.mxu0 0.0
    %6590 = vmatprep.mubr.f32.mxu0 0.0
    %6591 = vmatmul.mubr.f32.gmra.mrb[0].mxu0 %v6515
    %v6592 = vpop.f32.mrb[0].mxu0
    %v6593 = vadd.f32 0.0, %v6592
    %v6594 = vpop.f32.mrb[0].mxu0
    %v6595 = vadd.f32 0.0, %v6594
    %6596 = vdwg.mxu0
    %6597 = vmatprep.subr.mxu0 0.0
    %6598 = vmatpush1.msra.mxu0 %v6509
    %6599 = vmatprep.subr.mxu0 0.0
    %6600 = vmatpush1.msra.mxu0 %v6524
    %6601 = vmatprep.subr.mxu0 0.0
    %6602 = vmatpush1.msra.mxu0 0.0
    %6603 = vmatprep.subr.mxu0 0.0
    %6604 = vmatpush1.msra.mxu0 0.0
    %6605 = vmatprep.subr.mxu0 0.0
    %6606 = vmatpush1.msra.mxu0 0.0
    %6607 = vmatprep.subr.mxu0 0.0
    %6608 = vmatpush1.msra.mxu0 0.0
    %6609 = vmatprep.subr.mxu0 0.0
    %6610 = vmatpush1.msra.mxu0 0.0
    %6611 = vmatprep.subr.mxu0 0.0
    %6612 = vmatpush1.msra.mxu0 0.0
    %6613 = vmatprep.subr.mxu0 0.0
    %6614 = vmatpush1.msra.mxu0 0.0
    %6615 = vmatprep.subr.mxu0 0.0
    %6616 = vmatpush1.msra.mxu0 0.0
    %6617 = vmatprep.subr.mxu0 0.0
    %6618 = vmatpush1.msra.mxu0 0.0
    %6619 = vmatprep.subr.mxu0 0.0
    %6620 = vmatpush1.msra.mxu0 0.0
    %6621 = vmatprep.subr.mxu0 0.0
    %6622 = vmatpush1.msra.mxu0 0.0
    %6623 = vmatprep.subr.mxu0 0.0
    %6624 = vmatpush1.msra.mxu0 0.0
    %6625 = vmatprep.subr.mxu0 0.0
    %6626 = vmatpush1.msra.mxu0 0.0
    %6627 = vmatprep.subr.mxu0 0.0
    %6628 = vmatpush1.msra.mxu0 0.0
    %6629 = vmatprep.subr.mxu0 0.0
    %6630 = vmatpush1.msra.mxu0 0.0
    %6631 = vmatprep.subr.mxu0 0.0
    %6632 = vmatpush1.msra.mxu0 0.0
    %6633 = vmatprep.subr.mxu0 0.0
    %6634 = vmatpush1.msra.mxu0 0.0
    %6635 = vmatprep.subr.mxu0 0.0
    %6636 = vmatpush1.msra.mxu0 0.0
    %6637 = vmatprep.subr.mxu0 0.0
    %6638 = vmatpush1.msra.mxu0 0.0
    %6639 = vmatprep.subr.mxu0 0.0
    %6640 = vmatpush1.msra.mxu0 0.0
    %6641 = vmatprep.subr.mxu0 0.0
    %6642 = vmatpush1.msra.mxu0 0.0
    %6643 = vmatprep.subr.mxu0 0.0
    %6644 = vmatpush1.msra.mxu0 0.0
    %6645 = vmatprep.subr.mxu0 0.0
    %6646 = vmatpush1.msra.mxu0 0.0
    %6647 = vmatprep.subr.mxu0 0.0
    %6648 = vmatpush1.msra.mxu0 0.0
    %6649 = vmatprep.subr.mxu0 0.0
    %6650 = vmatpush1.msra.mxu0 0.0
    %6651 = vmatprep.subr.mxu0 0.0
    %6652 = vmatpush1.msra.mxu0 0.0
    %6653 = vmatprep.subr.mxu0 0.0
    %6654 = vmatpush1.msra.mxu0 0.0
    %6655 = vmatprep.subr.mxu0 0.0
    %6656 = vmatpush1.msra.mxu0 0.0
    %6657 = vmatprep.subr.mxu0 0.0
    %6658 = vmatpush1.msra.mxu0 0.0
    %6659 = vmatprep.subr.mxu0 0.0
    %6660 = vmatpush1.msra.mxu0 0.0
    %6661 = vmatprep.mubr.f32.mxu0 0.0
    %6662 = vmatmul.mubr.f32.gmra.mrb[0].mxu0 %v6515
    %v6663 = vpop.f32.mrb[0].mxu0
    %v6664 = vadd.f32 0.0, %v6663
    %v6665 = vpop.f32.mrb[0].mxu0
    %6666 = vdwg.mxu0
    %v6667 = vld [vmem:[%s2706] sm:$0x1f]
    %v6669 = vsel %vm2551, %v6667, 0
    %6671 = vmatprep.subr.mxu0 %v6508
    %6672 = vmatpush1.msra.mxu0 %v6507
    %6673 = vmatprep.subr.mxu0 %v6521
    %6674 = vmatpush1.msra.mxu0 %v6518
    %6675 = vmatprep.subr.mxu0 0.0
    %6676 = vmatpush1.msra.mxu0 0.0
    %6677 = vmatprep.subr.mxu0 0.0
    %6678 = vmatpush1.msra.mxu0 0.0
    %6679 = vmatprep.subr.mxu0 0.0
    %6680 = vmatpush1.msra.mxu0 0.0
    %6681 = vmatprep.subr.mxu0 0.0
    %6682 = vmatpush1.msra.mxu0 0.0
    %6683 = vmatprep.subr.mxu0 0.0
    %6684 = vmatpush1.msra.mxu0 0.0
    %6685 = vmatprep.subr.mxu0 0.0
    %6686 = vmatpush1.msra.mxu0 0.0
    %6687 = vmatprep.subr.mxu0 0.0
    %6688 = vmatpush1.msra.mxu0 0.0
    %6689 = vmatprep.subr.mxu0 0.0
    %6690 = vmatpush1.msra.mxu0 0.0
    %6691 = vmatprep.subr.mxu0 0.0
    %6692 = vmatpush1.msra.mxu0 0.0
    %6693 = vmatprep.subr.mxu0 0.0
    %6694 = vmatpush1.msra.mxu0 0.0
    %6695 = vmatprep.subr.mxu0 0.0
    %6696 = vmatpush1.msra.mxu0 0.0
    %6697 = vmatprep.subr.mxu0 0.0
    %6698 = vmatpush1.msra.mxu0 0.0
    %6699 = vmatprep.subr.mxu0 0.0
    %6700 = vmatpush1.msra.mxu0 0.0
    %6701 = vmatprep.subr.mxu0 0.0
    %6702 = vmatpush1.msra.mxu0 0.0
    %6703 = vmatprep.subr.mxu0 0.0
    %6704 = vmatpush1.msra.mxu0 0.0
    %6705 = vmatprep.subr.mxu0 0.0
    %6706 = vmatpush1.msra.mxu0 0.0
    %6707 = vmatprep.subr.mxu0 0.0
    %6708 = vmatpush1.msra.mxu0 0.0
    %6709 = vmatprep.subr.mxu0 0.0
    %6710 = vmatpush1.msra.mxu0 0.0
    %6711 = vmatprep.subr.mxu0 0.0
    %6712 = vmatpush1.msra.mxu0 0.0
    %6713 = vmatprep.subr.mxu0 0.0
    %6714 = vmatpush1.msra.mxu0 0.0
    %6715 = vmatprep.subr.mxu0 0.0
    %6716 = vmatpush1.msra.mxu0 0.0
    %6717 = vmatprep.subr.mxu0 0.0
    %6718 = vmatpush1.msra.mxu0 0.0
    %6719 = vmatprep.subr.mxu0 0.0
    %6720 = vmatpush1.msra.mxu0 0.0
    %6721 = vmatprep.subr.mxu0 0.0
    %6722 = vmatpush1.msra.mxu0 0.0
    %6723 = vmatprep.subr.mxu0 0.0
    %6724 = vmatpush1.msra.mxu0 0.0
    %6725 = vmatprep.subr.mxu0 0.0
    %6726 = vmatpush1.msra.mxu0 0.0
    %6727 = vmatprep.subr.mxu0 0.0
    %6728 = vmatpush1.msra.mxu0 0.0
    %6729 = vmatprep.subr.mxu0 0.0
    %6730 = vmatpush1.msra.mxu0 0.0
    %6731 = vmatprep.subr.mxu0 0.0
    %6732 = vmatpush1.msra.mxu0 0.0
    %6733 = vmatprep.subr.mxu0 0.0
    %6734 = vmatpush1.msra.mxu0 0.0
    %6735 = vmatprep.mubr.f32.mxu0 0.0
    %6736 = vmatmul.mubr.f32.gmra.mrb[0].mxu0 %v6669
    %v6737 = vpop.f32.mrb[0].mxu0
    %v6738 = vadd.f32 0.0, %v6737
    %v6739 = vpop.f32.mrb[0].mxu0
    %v6740 = vadd.f32 0.0, %v6739
    %6741 = vdwg.mxu0
    %6742 = vmatprep.subr.mxu0 0.0
    %6743 = vmatpush1.msra.mxu0 %v6509
    %6744 = vmatprep.subr.mxu0 0.0
    %6745 = vmatpush1.msra.mxu0 %v6524
    %6746 = vmatprep.subr.mxu0 0.0
    %6747 = vmatpush1.msra.mxu0 0.0
    %6748 = vmatprep.subr.mxu0 0.0
    %6749 = vmatpush1.msra.mxu0 0.0
    %6750 = vmatprep.subr.mxu0 0.0
    %6751 = vmatpush1.msra.mxu0 0.0
    %6752 = vmatprep.subr.mxu0 0.0
    %6753 = vmatpush1.msra.mxu0 0.0
    %6754 = vmatprep.subr.mxu0 0.0
    %6755 = vmatpush1.msra.mxu0 0.0
    %6756 = vmatprep.subr.mxu0 0.0
    %6757 = vmatpush1.msra.mxu0 0.0
    %6758 = vmatprep.subr.mxu0 0.0
    %6759 = vmatpush1.msra.mxu0 0.0
    %6760 = vmatprep.subr.mxu0 0.0
    %6761 = vmatpush1.msra.mxu0 0.0
    %6762 = vmatprep.subr.mxu0 0.0
    %6763 = vmatpush1.msra.mxu0 0.0
    %6764 = vmatprep.subr.mxu0 0.0
    %6765 = vmatpush1.msra.mxu0 0.0
    %6766 = vmatprep.subr.mxu0 0.0
    %6767 = vmatpush1.msra.mxu0 0.0
    %6768 = vmatprep.subr.mxu0 0.0
    %6769 = vmatpush1.msra.mxu0 0.0
    %6770 = vmatprep.subr.mxu0 0.0
    %6771 = vmatpush1.msra.mxu0 0.0
    %6772 = vmatprep.subr.mxu0 0.0
    %6773 = vmatpush1.msra.mxu0 0.0
    %6774 = vmatprep.subr.mxu0 0.0
    %6775 = vmatpush1.msra.mxu0 0.0
    %6776 = vmatprep.subr.mxu0 0.0
    %6777 = vmatpush1.msra.mxu0 0.0
    %6778 = vmatprep.subr.mxu0 0.0
    %6779 = vmatpush1.msra.mxu0 0.0
    %6780 = vmatprep.subr.mxu0 0.0
    %6781 = vmatpush1.msra.mxu0 0.0
    %6782 = vmatprep.subr.mxu0 0.0
    %6783 = vmatpush1.msra.mxu0 0.0
    %6784 = vmatprep.subr.mxu0 0.0
    %6785 = vmatpush1.msra.mxu0 0.0
    %6786 = vmatprep.subr.mxu0 0.0
    %6787 = vmatpush1.msra.mxu0 0.0
    %6788 = vmatprep.subr.mxu0 0.0
    %6789 = vmatpush1.msra.mxu0 0.0
    %6790 = vmatprep.subr.mxu0 0.0
    %6791 = vmatpush1.msra.mxu0 0.0
    %6792 = vmatprep.subr.mxu0 0.0
    %6793 = vmatpush1.msra.mxu0 0.0
    %6794 = vmatprep.subr.mxu0 0.0
    %6795 = vmatpush1.msra.mxu0 0.0
    %6796 = vmatprep.subr.mxu0 0.0
    %6797 = vmatpush1.msra.mxu0 0.0
    %6798 = vmatprep.subr.mxu0 0.0
    %6799 = vmatpush1.msra.mxu0 0.0
    %6800 = vmatprep.subr.mxu0 0.0
    %6801 = vmatpush1.msra.mxu0 0.0
    %6802 = vmatprep.subr.mxu0 0.0
    %6803 = vmatpush1.msra.mxu0 0.0
    %6804 = vmatprep.subr.mxu0 0.0
    %6805 = vmatpush1.msra.mxu0 0.0
    %6806 = vmatprep.mubr.f32.mxu0 0.0
    %6807 = vmatmul.mubr.f32.gmra.mrb[0].mxu0 %v6669
    %v6808 = vpop.f32.mrb[0].mxu0
    %v6809 = vadd.f32 0.0, %v6808
    %v6810 = vpop.f32.mrb[0].mxu0
    %6811 = vdwg.mxu0
    %v6812 = vmax.f32 %v6593, %v6738
    %v6813 = vmax.f32 %v6595, %v6740
    %v6814 = vmax.f32 %v6664, %v6809
    %v6815 = vld [vmem:[%s10] sm:$0xff]
    %v6816 = vld [vmem:[%s10 + $0x8] sm:$0xff]
    %v6817 = vld [vmem:[%s10 + $0x10] sm:$0xff]
    %v6818 = vld [vmem:[%s10 + $0x18] sm:$0xff]
    %v6819 = vld [vmem:[%s10 + $0x20] sm:$0xff]
    %v6820 = vld [vmem:[%s10 + $0x28] sm:$0xff]
    %v6821 = vld [vmem:[%s10 + $0x30] sm:$0xff]
    %v6822 = vld [vmem:[%s10 + $0x38] sm:$0xff]
    %v6823 = vld [vmem:[%s10 + $0x40] sm:$0xff]
    %v6824 = vld [vmem:[%s10 + $0x48] sm:$0xff]
    %v6825 = vld [vmem:[%s10 + $0x50] sm:$0xff]
    %v6826 = vld [vmem:[%s10 + $0x58] sm:$0xff]
    %v6827 = vld [vmem:[%s10 + $0x60] sm:$0xff]
    %v6828 = vld [vmem:[%s10 + $0x68] sm:$0xff]
    %v6829 = vld [vmem:[%s10 + $0x70] sm:$0xff]
    %v6830 = vld [vmem:[%s10 + $0x78] sm:$0xff]
    %v6831 = vld [vmem:[%s10 + $0x80] sm:$0xff]
    %v6832 = vld [vmem:[%s10 + $0x88] sm:$0xff]
    %v6833 = vld [vmem:[%s10 + $0x90] sm:$0xff]
    %v6834 = vld [vmem:[%s10 + $0x98] sm:$0xff]
    %v6835 = vld [vmem:[%s10 + $0xa0] sm:$0xff]
    %v6836 = vld [vmem:[%s10 + $0xa8] sm:$0xff]
    %v6837 = vld [vmem:[%s10 + $0xb0] sm:$0xff]
    %v6838 = vld [vmem:[%s10 + $0xb8] sm:$0xff]
    %v6839 = vld [vmem:[%s10 + $0xc0] sm:$0xff]
    %v6840 = vld [vmem:[%s10 + $0xc8] sm:$0xff]
    %v6841 = vld [vmem:[%s10 + $0xd0] sm:$0xff]
    %v6842 = vld [vmem:[%s10 + $0xd8] sm:$0xff]
    %v6843 = vld [vmem:[%s10 + $0xe0] sm:$0xff]
    %v6844 = vld [vmem:[%s10 + $0xe8] sm:$0xff]
    %v6845 = vld [vmem:[%s10 + $0xf0] sm:$0xff]
    %v6846 = vld [vmem:[%s10 + $0xf8] sm:$0xff]
    %v6847 = vld [vmem:[%s10 + $0x100] sm:$0xff]
    %v6848 = vld [vmem:[%s10 + $0x108] sm:$0xff]
    %v6849 = vld [vmem:[%s10 + $0x110] sm:$0xff]
    %v6850 = vld [vmem:[%s10 + $0x118] sm:$0xff]
    %v6851 = vld [vmem:[%s10 + $0x120] sm:$0xff]
    %v6852 = vld [vmem:[%s10 + $0x128] sm:$0xff]
    %v6853 = vld [vmem:[%s10 + $0x130] sm:$0xff]
    %v6854 = vld [vmem:[%s10 + $0x138] sm:$0xff]
    %v6855 = vld [vmem:[%s10 + $0x140] sm:$0xff]
    %v6856 = vld [vmem:[%s10 + $0x148] sm:$0xff]
    %v6857 = vld [vmem:[%s10 + $0x150] sm:$0xff]
    %v6858 = vld [vmem:[%s10 + $0x158] sm:$0xff]
    %v6859 = vld [vmem:[%s10 + $0x160] sm:$0xff]
    %v6860 = vld [vmem:[%s10 + $0x168] sm:$0xff]
    %v6861 = vld [vmem:[%s10 + $0x170] sm:$0xff]
    %v6862 = vld [vmem:[%s10 + $0x178] sm:$0xff]
    %v6863 = vld [vmem:[%s10 + $0x180] sm:$0xff]
    %v6864 = vld [vmem:[%s10 + $0x188] sm:$0xff]
    %v6865 = vld [vmem:[%s10 + $0x190] sm:$0xff]
    %v6866 = vld [vmem:[%s10 + $0x198] sm:$0xff]
    %v6867 = vld [vmem:[%s10 + $0x1a0] sm:$0xff]
    %v6868 = vld [vmem:[%s10 + $0x1a8] sm:$0xff]
    %v6869 = vld [vmem:[%s10 + $0x1b0] sm:$0xff]
    %v6870 = vld [vmem:[%s10 + $0x1b8] sm:$0xff]
    %v6871 = vld [vmem:[%s10 + $0x1c0] sm:$0xff]
    %v6872 = vld [vmem:[%s10 + $0x1c8] sm:$0xff]
    %v6873 = vld [vmem:[%s10 + $0x1d0] sm:$0xff]
    %v6874 = vld [vmem:[%s10 + $0x1d8] sm:$0xff]
    %v6875 = vld [vmem:[%s10 + $0x1e0] sm:$0xff]
    %v6876 = vld [vmem:[%s10 + $0x1e8] sm:$0xff]
    %v6877 = vld [vmem:[%s10 + $0x1f0] sm:$0xff]
    %v6878 = vld [vmem:[%s10 + $0x1f8] sm:$0xff]
    %v6879 = vld [vmem:[%s10 + $0x200] sm:$0xff]
    %v6880 = vld [vmem:[%s10 + $0x208] sm:$0xff]
    %v6881 = vld [vmem:[%s10 + $0x210] sm:$0xff]
    %v6882 = vld [vmem:[%s10 + $0x218] sm:$0xff]
    %v6883 = vld [vmem:[%s10 + $0x220] sm:$0xff]
    %v6884 = vld [vmem:[%s10 + $0x228] sm:$0xff]
    %v6885 = vld [vmem:[%s10 + $0x230] sm:$0xff]
    %v6886 = vld [vmem:[%s10 + $0x238] sm:$0xff]
    %v6887 = vld [vmem:[%s10 + $0x240] sm:$0xff]
    %v6888 = vld [vmem:[%s10 + $0x248] sm:$0xff]
    %v6889 = vld [vmem:[%s10 + $0x250] sm:$0xff]
    %v6890 = vld [vmem:[%s10 + $0x258] sm:$0xff]
    %v6891 = vld [vmem:[%s10 + $0x260] sm:$0xff]
    %v6892 = vld [vmem:[%s10 + $0x268] sm:$0xff]
    %v6893 = vld [vmem:[%s10 + $0x270] sm:$0xff]
    %v6894 = vld [vmem:[%s10 + $0x278] sm:$0xff]
    %v6895 = vld [vmem:[%s10 + $0x280] sm:$0xff]
    %v6896 = vld [vmem:[%s10 + $0x288] sm:$0xff]
    %v6897 = vld [vmem:[%s10 + $0x290] sm:$0xff]
    %v6898 = vld [vmem:[%s10 + $0x298] sm:$0xff]
    %v6899 = vld [vmem:[%s10 + $0x2a0] sm:$0xff]
    %v6900 = vld [vmem:[%s10 + $0x2a8] sm:$0xff]
    %v6901 = vld [vmem:[%s10 + $0x2b0] sm:$0xff]
    %v6902 = vld [vmem:[%s10 + $0x2b8] sm:$0xff]
    %v6904 = vsel %vm2943, %v6814, 0
    %6906 = vmatprep.subr.mxu0 %v6816
    %6907 = vmatpush1.msra.mxu0 %v6815
    %6908 = vmatprep.subr.mxu0 %v6818
    %6909 = vmatpush1.msra.mxu0 %v6817
    %6910 = vmatprep.subr.mxu0 %v6820
    %6911 = vmatpush1.msra.mxu0 %v6819
    %6912 = vmatprep.subr.mxu0 %v6822
    %6913 = vmatpush1.msra.mxu0 %v6821
    %6914 = vmatprep.subr.mxu0 %v6824
    %6915 = vmatpush1.msra.mxu0 %v6823
    %6916 = vmatprep.subr.mxu0 %v6826
    %6917 = vmatpush1.msra.mxu0 %v6825
    %6918 = vmatprep.subr.mxu0 %v6828
    %6919 = vmatpush1.msra.mxu0 %v6827
    %6920 = vmatprep.subr.mxu0 %v6830
    %6921 = vmatpush1.msra.mxu0 %v6829
    %6922 = vmatprep.subr.mxu0 %v6832
    %6923 = vmatpush1.msra.mxu0 %v6831
    %6924 = vmatprep.subr.mxu0 %v6834
    %6925 = vmatpush1.msra.mxu0 %v6833
    %6926 = vmatprep.subr.mxu0 %v6836
    %6927 = vmatpush1.msra.mxu0 %v6835
    %6928 = vmatprep.subr.mxu0 %v6838
    %6929 = vmatpush1.msra.mxu0 %v6837
    %6930 = vmatprep.subr.mxu0 %v6840
    %6931 = vmatpush1.msra.mxu0 %v6839
    %6932 = vmatprep.subr.mxu0 %v6842
    %6933 = vmatpush1.msra.mxu0 %v6841
    %6934 = vmatprep.subr.mxu0 %v6844
    %6935 = vmatpush1.msra.mxu0 %v6843
    %6936 = vmatprep.subr.mxu0 %v6846
    %6937 = vmatpush1.msra.mxu0 %v6845
    %6938 = vmatprep.subr.mxu0 %v6848
    %6939 = vmatpush1.msra.mxu0 %v6847
    %6940 = vmatprep.subr.mxu0 %v6850
    %6941 = vmatpush1.msra.mxu0 %v6849
    %6942 = vmatprep.subr.mxu0 %v6852
    %6943 = vmatpush1.msra.mxu0 %v6851
    %6944 = vmatprep.subr.mxu0 %v6854
    %6945 = vmatpush1.msra.mxu0 %v6853
    %6946 = vmatprep.subr.mxu0 %v6856
    %6947 = vmatpush1.msra.mxu0 %v6855
    %6948 = vmatprep.subr.mxu0 %v6858
    %6949 = vmatpush1.msra.mxu0 %v6857
    %6950 = vmatprep.subr.mxu0 %v6860
    %6951 = vmatpush1.msra.mxu0 %v6859
    %6952 = vmatprep.subr.mxu0 %v6862
    %6953 = vmatpush1.msra.mxu0 %v6861
    %6954 = vmatprep.subr.mxu0 %v6864
    %6955 = vmatpush1.msra.mxu0 %v6863
    %6956 = vmatprep.subr.mxu0 %v6866
    %6957 = vmatpush1.msra.mxu0 %v6865
    %6958 = vmatprep.subr.mxu0 %v6868
    %6959 = vmatpush1.msra.mxu0 %v6867
    %6960 = vmatprep.subr.mxu0 %v6870
    %6961 = vmatpush1.msra.mxu0 %v6869
    %6962 = vmatprep.subr.mxu0 %v6872
    %6963 = vmatpush1.msra.mxu0 %v6871
    %6964 = vmatprep.subr.mxu0 %v6874
    %6965 = vmatpush1.msra.mxu0 %v6873
    %6966 = vmatprep.subr.mxu0 %v6876
    %6967 = vmatpush1.msra.mxu0 %v6875
    %6968 = vmatprep.subr.mxu0 %v6878
    %6969 = vmatpush1.msra.mxu0 %v6877
    %6970 = vmatprep.mubr.f32.mxu0 %v6813
    %6971 = vmatmul.mubr.f32.gmra.mrb[0].mxu0 %v6812
    %v6972 = vpop.f32.mrb[0].mxu0
    %v6973 = vadd.f32 0.0, %v6972
    %v6974 = vpop.f32.mrb[0].mxu0
    %v6975 = vadd.f32 0.0, %v6974
    %6976 = vdwg.mxu0
    %6977 = vmatprep.subr.mxu0 %v6880
    %6978 = vmatpush1.msra.mxu0 %v6879
    %6979 = vmatprep.subr.mxu0 %v6882
    %6980 = vmatpush1.msra.mxu0 %v6881
    %6981 = vmatprep.subr.mxu0 %v6884
    %6982 = vmatpush1.msra.mxu0 %v6883
    %6983 = vmatprep.subr.mxu0 %v6886
    %6984 = vmatpush1.msra.mxu0 %v6885
    %6985 = vmatprep.subr.mxu0 %v6888
    %6986 = vmatpush1.msra.mxu0 %v6887
    %6987 = vmatprep.subr.mxu0 %v6890
    %6988 = vmatpush1.msra.mxu0 %v6889
    %6989 = vmatprep.subr.mxu0 %v6892
    %6990 = vmatpush1.msra.mxu0 %v6891
    %6991 = vmatprep.subr.mxu0 %v6894
    %6992 = vmatpush1.msra.mxu0 %v6893
    %6993 = vmatprep.subr.mxu0 %v6896
    %6994 = vmatpush1.msra.mxu0 %v6895
    %6995 = vmatprep.subr.mxu0 %v6898
    %6996 = vmatpush1.msra.mxu0 %v6897
    %6997 = vmatprep.subr.mxu0 %v6900
    %6998 = vmatpush1.msra.mxu0 %v6899
    %6999 = vmatprep.subr.mxu0 %v6902
    %7000 = vmatpush1.msra.mxu0 %v6901
    %7001 = vmatprep.subr.mxu0 0.0
    %7002 = vmatpush1.msra.mxu0 0.0
    %7003 = vmatprep.subr.mxu0 0.0
    %7004 = vmatpush1.msra.mxu0 0.0
    %7005 = vmatprep.subr.mxu0 0.0
    %7006 = vmatpush1.msra.mxu0 0.0
    %7007 = vmatprep.subr.mxu0 0.0
    %7008 = vmatpush1.msra.mxu0 0.0
    %7009 = vmatprep.subr.mxu0 0.0
    %7010 = vmatpush1.msra.mxu0 0.0
    %7011 = vmatprep.subr.mxu0 0.0
    %7012 = vmatpush1.msra.mxu0 0.0
    %7013 = vmatprep.subr.mxu0 0.0
    %7014 = vmatpush1.msra.mxu0 0.0
    %7015 = vmatprep.subr.mxu0 0.0
    %7016 = vmatpush1.msra.mxu0 0.0
    %7017 = vmatprep.subr.mxu0 0.0
    %7018 = vmatpush1.msra.mxu0 0.0
    %7019 = vmatprep.subr.mxu0 0.0
    %7020 = vmatpush1.msra.mxu0 0.0
    %7021 = vmatprep.subr.mxu0 0.0
    %7022 = vmatpush1.msra.mxu0 0.0
    %7023 = vmatprep.subr.mxu0 0.0
    %7024 = vmatpush1.msra.mxu0 0.0
    %7025 = vmatprep.subr.mxu0 0.0
    %7026 = vmatpush1.msra.mxu0 0.0
    %7027 = vmatprep.subr.mxu0 0.0
    %7028 = vmatpush1.msra.mxu0 0.0
    %7029 = vmatprep.subr.mxu0 0.0
    %7030 = vmatpush1.msra.mxu0 0.0
    %7031 = vmatprep.subr.mxu0 0.0
    %7032 = vmatpush1.msra.mxu0 0.0
    %7033 = vmatprep.subr.mxu0 0.0
    %7034 = vmatpush1.msra.mxu0 0.0
    %7035 = vmatprep.subr.mxu0 0.0
    %7036 = vmatpush1.msra.mxu0 0.0
    %7037 = vmatprep.subr.mxu0 0.0
    %7038 = vmatpush1.msra.mxu0 0.0
    %7039 = vmatprep.subr.mxu0 0.0
    %7040 = vmatpush1.msra.mxu0 0.0
    %7041 = vmatprep.mubr.f32.mxu0 0.0
    %7042 = vmatmul.mubr.f32.gmra.mrb[0].mxu0 %v6904
    %v7043 = vpop.f32.mrb[0].mxu0
    %v7044 = vadd.f32 %v6973, %v7043
    %v7045 = vpop.f32.mrb[0].mxu0
    %v7046 = vadd.f32 %v6975, %v7045
    %7047 = vdwg.mxu0
    %v7048 = vld [vmem:[%s3089] sm:$0xff]
    %v7049 = vld [vmem:[%s3089 + $0x8] sm:$0xff]
    %v7050 = vld [vmem:[%s3089 + $0x10] sm:$0xff]
    %v7051 = vld [vmem:[%s3089 + $0x18] sm:$0xff]
    %v7052 = vld [vmem:[%s3089 + $0x20] sm:$0xff]
    %v7053 = vld [vmem:[%s3089 + $0x28] sm:$0xff]
    %v7054 = vld [vmem:[%s3089 + $0x30] sm:$0xff]
    %v7055 = vld [vmem:[%s3089 + $0x38] sm:$0xff]
    %v7056 = vld [vmem:[%s3089 + $0x40] sm:$0xff]
    %v7057 = vld [vmem:[%s3089 + $0x48] sm:$0xff]
    %v7058 = vld [vmem:[%s3089 + $0x50] sm:$0xff]
    %v7059 = vld [vmem:[%s3089 + $0x58] sm:$0xff]
    %v7060 = vld [vmem:[%s3089 + $0x60] sm:$0xff]
    %v7061 = vld [vmem:[%s3089 + $0x68] sm:$0xff]
    %v7062 = vld [vmem:[%s3089 + $0x70] sm:$0xff]
    %v7063 = vld [vmem:[%s3089 + $0x78] sm:$0xff]
    %v7064 = vld [vmem:[%s3089 + $0x80] sm:$0xff]
    %v7065 = vld [vmem:[%s3089 + $0x88] sm:$0xff]
    %v7066 = vld [vmem:[%s3089 + $0x90] sm:$0xff]
    %v7067 = vld [vmem:[%s3089 + $0x98] sm:$0xff]
    %v7068 = vld [vmem:[%s3089 + $0xa0] sm:$0xff]
    %v7069 = vld [vmem:[%s3089 + $0xa8] sm:$0xff]
    %v7070 = vld [vmem:[%s3089 + $0xb0] sm:$0xff]
    %v7071 = vld [vmem:[%s3089 + $0xb8] sm:$0xff]
    %v7072 = vld [vmem:[%s3089 + $0xc0] sm:$0xff]
    %v7073 = vld [vmem:[%s3089 + $0xc8] sm:$0xff]
    %v7074 = vld [vmem:[%s3089 + $0xd0] sm:$0xff]
    %v7075 = vld [vmem:[%s3089 + $0xd8] sm:$0xff]
    %v7076 = vld [vmem:[%s3089 + $0xe0] sm:$0xff]
    %v7077 = vld [vmem:[%s3089 + $0xe8] sm:$0xff]
    %v7078 = vld [vmem:[%s3089 + $0xf0] sm:$0xff]
    %v7079 = vld [vmem:[%s3089 + $0xf8] sm:$0xff]
    %v7080 = vld [vmem:[%s3089 + $0x100] sm:$0xff]
    %v7081 = vld [vmem:[%s3089 + $0x108] sm:$0xff]
    %v7082 = vld [vmem:[%s3089 + $0x110] sm:$0xff]
    %v7083 = vld [vmem:[%s3089 + $0x118] sm:$0xff]
    %v7084 = vld [vmem:[%s3089 + $0x120] sm:$0xff]
    %v7085 = vld [vmem:[%s3089 + $0x128] sm:$0xff]
    %v7086 = vld [vmem:[%s3089 + $0x130] sm:$0xff]
    %v7087 = vld [vmem:[%s3089 + $0x138] sm:$0xff]
    %v7088 = vld [vmem:[%s3089 + $0x140] sm:$0xff]
    %v7089 = vld [vmem:[%s3089 + $0x148] sm:$0xff]
    %v7090 = vld [vmem:[%s3089 + $0x150] sm:$0xff]
    %v7091 = vld [vmem:[%s3089 + $0x158] sm:$0xff]
    %v7092 = vld [vmem:[%s3089 + $0x160] sm:$0xff]
    %v7093 = vld [vmem:[%s3089 + $0x168] sm:$0xff]
    %v7094 = vld [vmem:[%s3089 + $0x170] sm:$0xff]
    %v7095 = vld [vmem:[%s3089 + $0x178] sm:$0xff]
    %v7096 = vld [vmem:[%s3089 + $0x180] sm:$0xff]
    %v7097 = vld [vmem:[%s3089 + $0x188] sm:$0xff]
    %v7098 = vld [vmem:[%s3089 + $0x190] sm:$0xff]
    %v7099 = vld [vmem:[%s3089 + $0x198] sm:$0xff]
    %v7100 = vld [vmem:[%s3089 + $0x1a0] sm:$0xff]
    %v7101 = vld [vmem:[%s3089 + $0x1a8] sm:$0xff]
    %v7102 = vld [vmem:[%s3089 + $0x1b0] sm:$0xff]
    %v7103 = vld [vmem:[%s3089 + $0x1b8] sm:$0xff]
    %v7104 = vld [vmem:[%s3089 + $0x1c0] sm:$0xff]
    %v7105 = vld [vmem:[%s3089 + $0x1c8] sm:$0xff]
    %v7106 = vld [vmem:[%s3089 + $0x1d0] sm:$0xff]
    %v7107 = vld [vmem:[%s3089 + $0x1d8] sm:$0xff]
    %v7108 = vld [vmem:[%s3089 + $0x1e0] sm:$0xff]
    %v7109 = vld [vmem:[%s3089 + $0x1e8] sm:$0xff]
    %v7110 = vld [vmem:[%s3089 + $0x1f0] sm:$0xff]
    %v7111 = vld [vmem:[%s3089 + $0x1f8] sm:$0xff]
    %v7112 = vld [vmem:[%s3089 + $0x200] sm:$0xff]
    %v7113 = vld [vmem:[%s3089 + $0x208] sm:$0xff]
    %v7114 = vld [vmem:[%s3089 + $0x210] sm:$0xff]
    %v7115 = vld [vmem:[%s3089 + $0x218] sm:$0xff]
    %v7116 = vld [vmem:[%s3089 + $0x220] sm:$0xff]
    %v7117 = vld [vmem:[%s3089 + $0x228] sm:$0xff]
    %v7118 = vld [vmem:[%s3089 + $0x230] sm:$0xff]
    %v7119 = vld [vmem:[%s3089 + $0x238] sm:$0xff]
    %v7120 = vld [vmem:[%s3089 + $0x240] sm:$0xff]
    %v7121 = vld [vmem:[%s3089 + $0x248] sm:$0xff]
    %v7122 = vld [vmem:[%s3089 + $0x250] sm:$0xff]
    %v7123 = vld [vmem:[%s3089 + $0x258] sm:$0xff]
    %v7124 = vld [vmem:[%s3089 + $0x260] sm:$0xff]
    %v7125 = vld [vmem:[%s3089 + $0x268] sm:$0xff]
    %v7126 = vld [vmem:[%s3089 + $0x270] sm:$0xff]
    %v7127 = vld [vmem:[%s3089 + $0x278] sm:$0xff]
    %v7128 = vld [vmem:[%s3089 + $0x280] sm:$0xff]
    %v7129 = vld [vmem:[%s3089 + $0x288] sm:$0xff]
    %v7130 = vld [vmem:[%s3089 + $0x290] sm:$0xff]
    %v7131 = vld [vmem:[%s3089 + $0x298] sm:$0xff]
    %v7132 = vld [vmem:[%s3089 + $0x2a0] sm:$0xff]
    %v7133 = vld [vmem:[%s3089 + $0x2a8] sm:$0xff]
    %v7134 = vld [vmem:[%s3089 + $0x2b0] sm:$0xff]
    %v7135 = vld [vmem:[%s3089 + $0x2b8] sm:$0xff]
    %7136 = vmatprep.subr.mxu0 %v7049
    %7137 = vmatpush1.msra.mxu0 %v7048
    %7138 = vmatprep.subr.mxu0 %v7051
    %7139 = vmatpush1.msra.mxu0 %v7050
    %7140 = vmatprep.subr.mxu0 %v7053
    %7141 = vmatpush1.msra.mxu0 %v7052
    %7142 = vmatprep.subr.mxu0 %v7055
    %7143 = vmatpush1.msra.mxu0 %v7054
    %7144 = vmatprep.subr.mxu0 %v7057
    %7145 = vmatpush1.msra.mxu0 %v7056
    %7146 = vmatprep.subr.mxu0 %v7059
    %7147 = vmatpush1.msra.mxu0 %v7058
    %7148 = vmatprep.subr.mxu0 %v7061
    %7149 = vmatpush1.msra.mxu0 %v7060
    %7150 = vmatprep.subr.mxu0 %v7063
    %7151 = vmatpush1.msra.mxu0 %v7062
    %7152 = vmatprep.subr.mxu0 %v7065
    %7153 = vmatpush1.msra.mxu0 %v7064
    %7154 = vmatprep.subr.mxu0 %v7067
    %7155 = vmatpush1.msra.mxu0 %v7066
    %7156 = vmatprep.subr.mxu0 %v7069
    %7157 = vmatpush1.msra.mxu0 %v7068
    %7158 = vmatprep.subr.mxu0 %v7071
    %7159 = vmatpush1.msra.mxu0 %v7070
    %7160 = vmatprep.subr.mxu0 %v7073
    %7161 = vmatpush1.msra.mxu0 %v7072
    %7162 = vmatprep.subr.mxu0 %v7075
    %7163 = vmatpush1.msra.mxu0 %v7074
    %7164 = vmatprep.subr.mxu0 %v7077
    %7165 = vmatpush1.msra.mxu0 %v7076
    %7166 = vmatprep.subr.mxu0 %v7079
    %7167 = vmatpush1.msra.mxu0 %v7078
    %7168 = vmatprep.subr.mxu0 %v7081
    %7169 = vmatpush1.msra.mxu0 %v7080
    %7170 = vmatprep.subr.mxu0 %v7083
    %7171 = vmatpush1.msra.mxu0 %v7082
    %7172 = vmatprep.subr.mxu0 %v7085
    %7173 = vmatpush1.msra.mxu0 %v7084
    %7174 = vmatprep.subr.mxu0 %v7087
    %7175 = vmatpush1.msra.mxu0 %v7086
    %7176 = vmatprep.subr.mxu0 %v7089
    %7177 = vmatpush1.msra.mxu0 %v7088
    %7178 = vmatprep.subr.mxu0 %v7091
    %7179 = vmatpush1.msra.mxu0 %v7090
    %7180 = vmatprep.subr.mxu0 %v7093
    %7181 = vmatpush1.msra.mxu0 %v7092
    %7182 = vmatprep.subr.mxu0 %v7095
    %7183 = vmatpush1.msra.mxu0 %v7094
    %7184 = vmatprep.subr.mxu0 %v7097
    %7185 = vmatpush1.msra.mxu0 %v7096
    %7186 = vmatprep.subr.mxu0 %v7099
    %7187 = vmatpush1.msra.mxu0 %v7098
    %7188 = vmatprep.subr.mxu0 %v7101
    %7189 = vmatpush1.msra.mxu0 %v7100
    %7190 = vmatprep.subr.mxu0 %v7103
    %7191 = vmatpush1.msra.mxu0 %v7102
    %7192 = vmatprep.subr.mxu0 %v7105
    %7193 = vmatpush1.msra.mxu0 %v7104
    %7194 = vmatprep.subr.mxu0 %v7107
    %7195 = vmatpush1.msra.mxu0 %v7106
    %7196 = vmatprep.subr.mxu0 %v7109
    %7197 = vmatpush1.msra.mxu0 %v7108
    %7198 = vmatprep.subr.mxu0 %v7111
    %7199 = vmatpush1.msra.mxu0 %v7110
    %7200 = vmatprep.mubr.f32.mxu0 %v6813
    %7201 = vmatmul.mubr.f32.gmra.mrb[0].mxu0 %v6812
    %v7202 = vpop.f32.mrb[0].mxu0
    %v7203 = vadd.f32 0.0, %v7202
    %v7204 = vpop.f32.mrb[0].mxu0
    %v7205 = vadd.f32 0.0, %v7204
    %7206 = vdwg.mxu0
    %7207 = vmatprep.subr.mxu0 %v7113
    %7208 = vmatpush1.msra.mxu0 %v7112
    %7209 = vmatprep.subr.mxu0 %v7115
    %7210 = vmatpush1.msra.mxu0 %v7114
    %7211 = vmatprep.subr.mxu0 %v7117
    %7212 = vmatpush1.msra.mxu0 %v7116
    %7213 = vmatprep.subr.mxu0 %v7119
    %7214 = vmatpush1.msra.mxu0 %v7118
    %7215 = vmatprep.subr.mxu0 %v7121
    %7216 = vmatpush1.msra.mxu0 %v7120
    %7217 = vmatprep.subr.mxu0 %v7123
    %7218 = vmatpush1.msra.mxu0 %v7122
    %7219 = vmatprep.subr.mxu0 %v7125
    %7220 = vmatpush1.msra.mxu0 %v7124
    %7221 = vmatprep.subr.mxu0 %v7127
    %7222 = vmatpush1.msra.mxu0 %v7126
    %7223 = vmatprep.subr.mxu0 %v7129
    %7224 = vmatpush1.msra.mxu0 %v7128
    %7225 = vmatprep.subr.mxu0 %v7131
    %7226 = vmatpush1.msra.mxu0 %v7130
    %7227 = vmatprep.subr.mxu0 %v7133
    %7228 = vmatpush1.msra.mxu0 %v7132
    %7229 = vmatprep.subr.mxu0 %v7135
    %7230 = vmatpush1.msra.mxu0 %v7134
    %7231 = vmatprep.subr.mxu0 0.0
    %7232 = vmatpush1.msra.mxu0 0.0
    %7233 = vmatprep.subr.mxu0 0.0
    %7234 = vmatpush1.msra.mxu0 0.0
    %7235 = vmatprep.subr.mxu0 0.0
    %7236 = vmatpush1.msra.mxu0 0.0
    %7237 = vmatprep.subr.mxu0 0.0
    %7238 = vmatpush1.msra.mxu0 0.0
    %7239 = vmatprep.subr.mxu0 0.0
    %7240 = vmatpush1.msra.mxu0 0.0
    %7241 = vmatprep.subr.mxu0 0.0
    %7242 = vmatpush1.msra.mxu0 0.0
    %7243 = vmatprep.subr.mxu0 0.0
    %7244 = vmatpush1.msra.mxu0 0.0
    %7245 = vmatprep.subr.mxu0 0.0
    %7246 = vmatpush1.msra.mxu0 0.0
    %7247 = vmatprep.subr.mxu0 0.0
    %7248 = vmatpush1.msra.mxu0 0.0
    %7249 = vmatprep.subr.mxu0 0.0
    %7250 = vmatpush1.msra.mxu0 0.0
    %7251 = vmatprep.subr.mxu0 0.0
    %7252 = vmatpush1.msra.mxu0 0.0
    %7253 = vmatprep.subr.mxu0 0.0
    %7254 = vmatpush1.msra.mxu0 0.0
    %7255 = vmatprep.subr.mxu0 0.0
    %7256 = vmatpush1.msra.mxu0 0.0
    %7257 = vmatprep.subr.mxu0 0.0
    %7258 = vmatpush1.msra.mxu0 0.0
    %7259 = vmatprep.subr.mxu0 0.0
    %7260 = vmatpush1.msra.mxu0 0.0
    %7261 = vmatprep.subr.mxu0 0.0
    %7262 = vmatpush1.msra.mxu0 0.0
    %7263 = vmatprep.subr.mxu0 0.0
    %7264 = vmatpush1.msra.mxu0 0.0
    %7265 = vmatprep.subr.mxu0 0.0
    %7266 = vmatpush1.msra.mxu0 0.0
    %7267 = vmatprep.subr.mxu0 0.0
    %7268 = vmatpush1.msra.mxu0 0.0
    %7269 = vmatprep.subr.mxu0 0.0
    %7270 = vmatpush1.msra.mxu0 0.0
    %7271 = vmatprep.mubr.f32.mxu0 0.0
    %7272 = vmatmul.mubr.f32.gmra.mrb[0].mxu0 %v6904
    %v7273 = vpop.f32.mrb[0].mxu0
    %v7274 = vadd.f32 %v7203, %v7273
    %v7275 = vpop.f32.mrb[0].mxu0
    %v7276 = vadd.f32 %v7205, %v7275
    %7277 = vdwg.mxu0
    %v7278 = vmax.f32 %v7044, %v7274
    %v7279 = vmax.f32 %v7046, %v7276
    %7280 = vst [vmem:[#allocation3] sm:$0x1f] %v7278
    %7281 = vst.msk [vmem:[#allocation3 + $0x8] sm:$0x1f] %vm3323, %v7279
    %v7282 = vld [vmem:[#allocation3] sm:$0x7]
    %v7283 = vld [vmem:[#allocation3 + $0x8] sm:$0x7]
    %v7284 = vld [vmem:[#allocation8] sm:$0xff]
    %v7285 = vld [vmem:[#allocation8 + $0x8] sm:$0xff]
    %v7286 = vld [vmem:[#allocation8 + $0x10] sm:$0xff]
    %v7287 = vld [vmem:[#allocation8 + $0x18] sm:$0xff]
    %v7288 = vld [vmem:[#allocation8 + $0x20] sm:$0xff]
    %v7289 = vld [vmem:[#allocation8 + $0x28] sm:$0xff]
    %v7290 = vld [vmem:[#allocation8 + $0x30] sm:$0xff]
    %v7291 = vld [vmem:[#allocation8 + $0x38] sm:$0xff]
    %v7292 = vld [vmem:[#allocation8 + $0x40] sm:$0xff]
    %v7293 = vld [vmem:[#allocation8 + $0x48] sm:$0xff]
    %v7294 = vld [vmem:[#allocation8 + $0x50] sm:$0xff]
    %v7295 = vld [vmem:[#allocation8 + $0x58] sm:$0xff]
    %v7296 = vld [vmem:[#allocation8 + $0x60] sm:$0xff]
    %v7297 = vld [vmem:[#allocation8 + $0x68] sm:$0xff]
    %v7298 = vld [vmem:[#allocation8 + $0x70] sm:$0xff]
    %v7299 = vld [vmem:[#allocation8 + $0x78] sm:$0xff]
    %v7300 = vld [vmem:[#allocation8 + $0x80] sm:$0xff]
    %v7301 = vld [vmem:[#allocation8 + $0x88] sm:$0xff]
    %v7302 = vld [vmem:[#allocation8 + $0x90] sm:$0xff]
    %v7303 = vld [vmem:[#allocation8 + $0x98] sm:$0xff]
    %v7304 = vld [vmem:[#allocation8 + $0xa0] sm:$0xff]
    %v7305 = vld [vmem:[#allocation8 + $0xa8] sm:$0xff]
    %v7306 = vld [vmem:[#allocation8 + $0xb0] sm:$0xff]
    %v7307 = vld [vmem:[#allocation8 + $0xb8] sm:$0xff]
    %v7308 = vld [vmem:[#allocation8 + $0xc0] sm:$0xff]
    %v7309 = vld [vmem:[#allocation8 + $0xc8] sm:$0xff]
    %v7310 = vld [vmem:[#allocation8 + $0xd0] sm:$0xff]
    %v7311 = vld [vmem:[#allocation8 + $0xd8] sm:$0xff]
    %v7312 = vld [vmem:[#allocation8 + $0xe0] sm:$0xff]
    %v7313 = vld [vmem:[#allocation8 + $0xe8] sm:$0xff]
    %v7314 = vld [vmem:[#allocation8 + $0xf0] sm:$0xff]
    %v7315 = vld [vmem:[#allocation8 + $0xf8] sm:$0xff]
    %v7316 = vld [vmem:[#allocation8 + $0x100] sm:$0xff]
    %v7317 = vld [vmem:[#allocation8 + $0x108] sm:$0xff]
    %v7318 = vld [vmem:[#allocation8 + $0x110] sm:$0xff]
    %v7319 = vld [vmem:[#allocation8 + $0x118] sm:$0xff]
    %v7320 = vld [vmem:[#allocation8 + $0x120] sm:$0xff]
    %v7321 = vld [vmem:[#allocation8 + $0x128] sm:$0xff]
    %v7322 = vld [vmem:[#allocation8 + $0x130] sm:$0xff]
    %v7323 = vld [vmem:[#allocation8 + $0x138] sm:$0xff]
    %v7324 = vld [vmem:[#allocation3] sm:$0xe]
    %v7325 = vld [vmem:[#allocation3 + $0x8] sm:$0xe]
    %v7326 = vld [vmem:[%s3369] sm:$0xff]
    %v7327 = vld [vmem:[%s3369 + $0x8] sm:$0xff]
    %v7328 = vld [vmem:[%s3369 + $0x10] sm:$0xff]
    %v7329 = vld [vmem:[%s3369 + $0x18] sm:$0xff]
    %v7330 = vld [vmem:[%s3369 + $0x20] sm:$0xff]
    %v7331 = vld [vmem:[%s3369 + $0x28] sm:$0xff]
    %v7332 = vld [vmem:[%s3369 + $0x30] sm:$0xff]
    %v7333 = vld [vmem:[%s3369 + $0x38] sm:$0xff]
    %v7334 = vld [vmem:[%s3369 + $0x40] sm:$0xff]
    %v7335 = vld [vmem:[%s3369 + $0x48] sm:$0xff]
    %v7336 = vld [vmem:[%s3369 + $0x50] sm:$0xff]
    %v7337 = vld [vmem:[%s3369 + $0x58] sm:$0xff]
    %v7338 = vld [vmem:[%s3369 + $0x60] sm:$0xff]
    %v7339 = vld [vmem:[%s3369 + $0x68] sm:$0xff]
    %v7340 = vld [vmem:[%s3369 + $0x70] sm:$0xff]
    %v7341 = vld [vmem:[%s3369 + $0x78] sm:$0xff]
    %v7342 = vld [vmem:[%s3369 + $0x80] sm:$0xff]
    %v7343 = vld [vmem:[%s3369 + $0x88] sm:$0xff]
    %v7344 = vld [vmem:[%s3369 + $0x90] sm:$0xff]
    %v7345 = vld [vmem:[%s3369 + $0x98] sm:$0xff]
    %v7346 = vld [vmem:[%s3369 + $0xa0] sm:$0xff]
    %v7347 = vld [vmem:[%s3369 + $0xa8] sm:$0xff]
    %v7348 = vld [vmem:[%s3369 + $0xb0] sm:$0xff]
    %v7349 = vld [vmem:[%s3369 + $0xb8] sm:$0xff]
    %v7350 = vld [vmem:[%s3369 + $0xc0] sm:$0xff]
    %v7351 = vld [vmem:[%s3369 + $0xc8] sm:$0xff]
    %v7352 = vld [vmem:[%s3369 + $0xd0] sm:$0xff]
    %v7353 = vld [vmem:[%s3369 + $0xd8] sm:$0xff]
    %v7354 = vld [vmem:[%s3369 + $0xe0] sm:$0xff]
    %v7355 = vld [vmem:[%s3369 + $0xe8] sm:$0xff]
    %v7356 = vld [vmem:[%s3369 + $0xf0] sm:$0xff]
    %v7357 = vld [vmem:[%s3369 + $0xf8] sm:$0xff]
    %v7358 = vld [vmem:[%s3369 + $0x100] sm:$0xff]
    %v7359 = vld [vmem:[%s3369 + $0x108] sm:$0xff]
    %v7360 = vld [vmem:[%s3369 + $0x110] sm:$0xff]
    %v7361 = vld [vmem:[%s3369 + $0x118] sm:$0xff]
    %v7362 = vld [vmem:[%s3369 + $0x120] sm:$0xff]
    %v7363 = vld [vmem:[%s3369 + $0x128] sm:$0xff]
    %v7364 = vld [vmem:[%s3369 + $0x130] sm:$0xff]
    %v7365 = vld [vmem:[%s3369 + $0x138] sm:$0xff]
    %v7368 = vrot.slane %v7324, 1
    %v7369 = vrot.slane %v7325, 1
    %v7371 = vsel %vm1318, %v7369, 0
    %7373 = vmatprep.subr.mxu0 %v7327
    %7374 = vmatpush1.msra.mxu0 %v7326
    %7375 = vmatprep.subr.mxu0 %v7329
    %7376 = vmatpush1.msra.mxu0 %v7328
    %7377 = vmatprep.subr.mxu0 %v7331
    %7378 = vmatpush1.msra.mxu0 %v7330
    %7379 = vmatprep.subr.mxu0 %v7333
    %7380 = vmatpush1.msra.mxu0 %v7332
    %7381 = vmatprep.subr.mxu0 %v7335
    %7382 = vmatpush1.msra.mxu0 %v7334
    %7383 = vmatprep.subr.mxu0 %v7337
    %7384 = vmatpush1.msra.mxu0 %v7336
    %7385 = vmatprep.subr.mxu0 %v7339
    %7386 = vmatpush1.msra.mxu0 %v7338
    %7387 = vmatprep.subr.mxu0 %v7341
    %7388 = vmatpush1.msra.mxu0 %v7340
    %7389 = vmatprep.subr.mxu0 %v7343
    %7390 = vmatpush1.msra.mxu0 %v7342
    %7391 = vmatprep.subr.mxu0 %v7345
    %7392 = vmatpush1.msra.mxu0 %v7344
    %7393 = vmatprep.subr.mxu0 %v7347
    %7394 = vmatpush1.msra.mxu0 %v7346
    %7395 = vmatprep.subr.mxu0 %v7349
    %7396 = vmatpush1.msra.mxu0 %v7348
    %7397 = vmatprep.subr.mxu0 %v7351
    %7398 = vmatpush1.msra.mxu0 %v7350
    %7399 = vmatprep.subr.mxu0 %v7353
    %7400 = vmatpush1.msra.mxu0 %v7352
    %7401 = vmatprep.subr.mxu0 %v7355
    %7402 = vmatpush1.msra.mxu0 %v7354
    %7403 = vmatprep.subr.mxu0 %v7357
    %7404 = vmatpush1.msra.mxu0 %v7356
    %7405 = vmatprep.subr.mxu0 %v7359
    %7406 = vmatpush1.msra.mxu0 %v7358
    %7407 = vmatprep.subr.mxu0 %v7361
    %7408 = vmatpush1.msra.mxu0 %v7360
    %7409 = vmatprep.subr.mxu0 %v7363
    %7410 = vmatpush1.msra.mxu0 %v7362
    %7411 = vmatprep.subr.mxu0 %v7365
    %7412 = vmatpush1.msra.mxu0 %v7364
    %7413 = vmatprep.subr.mxu0 0.0
    %7414 = vmatpush1.msra.mxu0 0.0
    %7415 = vmatprep.subr.mxu0 0.0
    %7416 = vmatpush1.msra.mxu0 0.0
    %7417 = vmatprep.subr.mxu0 0.0
    %7418 = vmatpush1.msra.mxu0 0.0
    %7419 = vmatprep.subr.mxu0 0.0
    %7420 = vmatpush1.msra.mxu0 0.0
    %7421 = vmatprep.subr.mxu0 0.0
    %7422 = vmatpush1.msra.mxu0 0.0
    %7423 = vmatprep.subr.mxu0 0.0
    %7424 = vmatpush1.msra.mxu0 0.0
    %7425 = vmatprep.subr.mxu0 0.0
    %7426 = vmatpush1.msra.mxu0 0.0
    %7427 = vmatprep.subr.mxu0 0.0
    %7428 = vmatpush1.msra.mxu0 0.0
    %7429 = vmatprep.subr.mxu0 0.0
    %7430 = vmatpush1.msra.mxu0 0.0
    %7431 = vmatprep.subr.mxu0 0.0
    %7432 = vmatpush1.msra.mxu0 0.0
    %7433 = vmatprep.subr.mxu0 0.0
    %7434 = vmatpush1.msra.mxu0 0.0
    %7435 = vmatprep.subr.mxu0 0.0
    %7436 = vmatpush1.msra.mxu0 0.0
    %7437 = vmatprep.mubr.f32.mxu0 %v7371
    %7438 = vmatmul.mubr.f32.gmra.mrb[0].mxu0 %v7368
    %v7439 = vpop.f32.mrb[0].mxu0
    %v7440 = vadd.f32 0.0, %v7439
    %v7441 = vpop.f32.mrb[0].mxu0
    %v7442 = vadd.f32 0.0, %v7441
    %7443 = vdwg.mxu0
    %v7445 = vsel %vm1318, %v7283, 0
    %7447 = vmatprep.subr.mxu0 %v7285
    %7448 = vmatpush1.msra.mxu0 %v7284
    %7449 = vmatprep.subr.mxu0 %v7287
    %7450 = vmatpush1.msra.mxu0 %v7286
    %7451 = vmatprep.subr.mxu0 %v7289
    %7452 = vmatpush1.msra.mxu0 %v7288
    %7453 = vmatprep.subr.mxu0 %v7291
    %7454 = vmatpush1.msra.mxu0 %v7290
    %7455 = vmatprep.subr.mxu0 %v7293
    %7456 = vmatpush1.msra.mxu0 %v7292
    %7457 = vmatprep.subr.mxu0 %v7295
    %7458 = vmatpush1.msra.mxu0 %v7294
    %7459 = vmatprep.subr.mxu0 %v7297
    %7460 = vmatpush1.msra.mxu0 %v7296
    %7461 = vmatprep.subr.mxu0 %v7299
    %7462 = vmatpush1.msra.mxu0 %v7298
    %7463 = vmatprep.subr.mxu0 %v7301
    %7464 = vmatpush1.msra.mxu0 %v7300
    %7465 = vmatprep.subr.mxu0 %v7303
    %7466 = vmatpush1.msra.mxu0 %v7302
    %7467 = vmatprep.subr.mxu0 %v7305
    %7468 = vmatpush1.msra.mxu0 %v7304
    %7469 = vmatprep.subr.mxu0 %v7307
    %7470 = vmatpush1.msra.mxu0 %v7306
    %7471 = vmatprep.subr.mxu0 %v7309
    %7472 = vmatpush1.msra.mxu0 %v7308
    %7473 = vmatprep.subr.mxu0 %v7311
    %7474 = vmatpush1.msra.mxu0 %v7310
    %7475 = vmatprep.subr.mxu0 %v7313
    %7476 = vmatpush1.msra.mxu0 %v7312
    %7477 = vmatprep.subr.mxu0 %v7315
    %7478 = vmatpush1.msra.mxu0 %v7314
    %7479 = vmatprep.subr.mxu0 %v7317
    %7480 = vmatpush1.msra.mxu0 %v7316
    %7481 = vmatprep.subr.mxu0 %v7319
    %7482 = vmatpush1.msra.mxu0 %v7318
    %7483 = vmatprep.subr.mxu0 %v7321
    %7484 = vmatpush1.msra.mxu0 %v7320
    %7485 = vmatprep.subr.mxu0 %v7323
    %7486 = vmatpush1.msra.mxu0 %v7322
    %7487 = vmatprep.subr.mxu0 0.0
    %7488 = vmatpush1.msra.mxu0 0.0
    %7489 = vmatprep.subr.mxu0 0.0
    %7490 = vmatpush1.msra.mxu0 0.0
    %7491 = vmatprep.subr.mxu0 0.0
    %7492 = vmatpush1.msra.mxu0 0.0
    %7493 = vmatprep.subr.mxu0 0.0
    %7494 = vmatpush1.msra.mxu0 0.0
    %7495 = vmatprep.subr.mxu0 0.0
    %7496 = vmatpush1.msra.mxu0 0.0
    %7497 = vmatprep.subr.mxu0 0.0
    %7498 = vmatpush1.msra.mxu0 0.0
    %7499 = vmatprep.subr.mxu0 0.0
    %7500 = vmatpush1.msra.mxu0 0.0
    %7501 = vmatprep.subr.mxu0 0.0
    %7502 = vmatpush1.msra.mxu0 0.0
    %7503 = vmatprep.subr.mxu0 0.0
    %7504 = vmatpush1.msra.mxu0 0.0
    %7505 = vmatprep.subr.mxu0 0.0
    %7506 = vmatpush1.msra.mxu0 0.0
    %7507 = vmatprep.subr.mxu0 0.0
    %7508 = vmatpush1.msra.mxu0 0.0
    %7509 = vmatprep.subr.mxu0 0.0
    %7510 = vmatpush1.msra.mxu0 0.0
    %7511 = vmatprep.mubr.f32.mxu0 %v7445
    %7512 = vmatmul.mubr.f32.gmra.mrb[0].mxu0 %v7282
    %v7513 = vpop.f32.mrb[0].mxu0
    %v7514 = vadd.f32 %v7440, %v7513
    %v7515 = vpop.f32.mrb[0].mxu0
    %v7516 = vadd.f32 %v7442, %v7515
    %7517 = vdwg.mxu0
    %v7518 = vld [vmem:[#allocation3] sm:$0x1c]
    %v7519 = vld [vmem:[#allocation3 + $0x8] sm:$0x1c]
    %v7520 = vld [vmem:[%s3564] sm:$0xff]
    %v7521 = vld [vmem:[%s3564 + $0x8] sm:$0xff]
    %v7522 = vld [vmem:[%s3564 + $0x10] sm:$0xff]
    %v7523 = vld [vmem:[%s3564 + $0x18] sm:$0xff]
    %v7524 = vld [vmem:[%s3564 + $0x20] sm:$0xff]
    %v7525 = vld [vmem:[%s3564 + $0x28] sm:$0xff]
    %v7526 = vld [vmem:[%s3564 + $0x30] sm:$0xff]
    %v7527 = vld [vmem:[%s3564 + $0x38] sm:$0xff]
    %v7528 = vld [vmem:[%s3564 + $0x40] sm:$0xff]
    %v7529 = vld [vmem:[%s3564 + $0x48] sm:$0xff]
    %v7530 = vld [vmem:[%s3564 + $0x50] sm:$0xff]
    %v7531 = vld [vmem:[%s3564 + $0x58] sm:$0xff]
    %v7532 = vld [vmem:[%s3564 + $0x60] sm:$0xff]
    %v7533 = vld [vmem:[%s3564 + $0x68] sm:$0xff]
    %v7534 = vld [vmem:[%s3564 + $0x70] sm:$0xff]
    %v7535 = vld [vmem:[%s3564 + $0x78] sm:$0xff]
    %v7536 = vld [vmem:[%s3564 + $0x80] sm:$0xff]
    %v7537 = vld [vmem:[%s3564 + $0x88] sm:$0xff]
    %v7538 = vld [vmem:[%s3564 + $0x90] sm:$0xff]
    %v7539 = vld [vmem:[%s3564 + $0x98] sm:$0xff]
    %v7540 = vld [vmem:[%s3564 + $0xa0] sm:$0xff]
    %v7541 = vld [vmem:[%s3564 + $0xa8] sm:$0xff]
    %v7542 = vld [vmem:[%s3564 + $0xb0] sm:$0xff]
    %v7543 = vld [vmem:[%s3564 + $0xb8] sm:$0xff]
    %v7544 = vld [vmem:[%s3564 + $0xc0] sm:$0xff]
    %v7545 = vld [vmem:[%s3564 + $0xc8] sm:$0xff]
    %v7546 = vld [vmem:[%s3564 + $0xd0] sm:$0xff]
    %v7547 = vld [vmem:[%s3564 + $0xd8] sm:$0xff]
    %v7548 = vld [vmem:[%s3564 + $0xe0] sm:$0xff]
    %v7549 = vld [vmem:[%s3564 + $0xe8] sm:$0xff]
    %v7550 = vld [vmem:[%s3564 + $0xf0] sm:$0xff]
    %v7551 = vld [vmem:[%s3564 + $0xf8] sm:$0xff]
    %v7552 = vld [vmem:[%s3564 + $0x100] sm:$0xff]
    %v7553 = vld [vmem:[%s3564 + $0x108] sm:$0xff]
    %v7554 = vld [vmem:[%s3564 + $0x110] sm:$0xff]
    %v7555 = vld [vmem:[%s3564 + $0x118] sm:$0xff]
    %v7556 = vld [vmem:[%s3564 + $0x120] sm:$0xff]
    %v7557 = vld [vmem:[%s3564 + $0x128] sm:$0xff]
    %v7558 = vld [vmem:[%s3564 + $0x130] sm:$0xff]
    %v7559 = vld [vmem:[%s3564 + $0x138] sm:$0xff]
    %v7562 = vrot.slane %v7518, 2
    %v7563 = vrot.slane %v7519, 2
    %v7565 = vsel %vm1318, %v7563, 0
    %7567 = vmatprep.subr.mxu0 %v7521
    %7568 = vmatpush1.msra.mxu0 %v7520
    %7569 = vmatprep.subr.mxu0 %v7523
    %7570 = vmatpush1.msra.mxu0 %v7522
    %7571 = vmatprep.subr.mxu0 %v7525
    %7572 = vmatpush1.msra.mxu0 %v7524
    %7573 = vmatprep.subr.mxu0 %v7527
    %7574 = vmatpush1.msra.mxu0 %v7526
    %7575 = vmatprep.subr.mxu0 %v7529
    %7576 = vmatpush1.msra.mxu0 %v7528
    %7577 = vmatprep.subr.mxu0 %v7531
    %7578 = vmatpush1.msra.mxu0 %v7530
    %7579 = vmatprep.subr.mxu0 %v7533
    %7580 = vmatpush1.msra.mxu0 %v7532
    %7581 = vmatprep.subr.mxu0 %v7535
    %7582 = vmatpush1.msra.mxu0 %v7534
    %7583 = vmatprep.subr.mxu0 %v7537
    %7584 = vmatpush1.msra.mxu0 %v7536
    %7585 = vmatprep.subr.mxu0 %v7539
    %7586 = vmatpush1.msra.mxu0 %v7538
    %7587 = vmatprep.subr.mxu0 %v7541
    %7588 = vmatpush1.msra.mxu0 %v7540
    %7589 = vmatprep.subr.mxu0 %v7543
    %7590 = vmatpush1.msra.mxu0 %v7542
    %7591 = vmatprep.subr.mxu0 %v7545
    %7592 = vmatpush1.msra.mxu0 %v7544
    %7593 = vmatprep.subr.mxu0 %v7547
    %7594 = vmatpush1.msra.mxu0 %v7546
    %7595 = vmatprep.subr.mxu0 %v7549
    %7596 = vmatpush1.msra.mxu0 %v7548
    %7597 = vmatprep.subr.mxu0 %v7551
    %7598 = vmatpush1.msra.mxu0 %v7550
    %7599 = vmatprep.subr.mxu0 %v7553
    %7600 = vmatpush1.msra.mxu0 %v7552
    %7601 = vmatprep.subr.mxu0 %v7555
    %7602 = vmatpush1.msra.mxu0 %v7554
    %7603 = vmatprep.subr.mxu0 %v7557
    %7604 = vmatpush1.msra.mxu0 %v7556
    %7605 = vmatprep.subr.mxu0 %v7559
    %7606 = vmatpush1.msra.mxu0 %v7558
    %7607 = vmatprep.subr.mxu0 0.0
    %7608 = vmatpush1.msra.mxu0 0.0
    %7609 = vmatprep.subr.mxu0 0.0
    %7610 = vmatpush1.msra.mxu0 0.0
    %7611 = vmatprep.subr.mxu0 0.0
    %7612 = vmatpush1.msra.mxu0 0.0
    %7613 = vmatprep.subr.mxu0 0.0
    %7614 = vmatpush1.msra.mxu0 0.0
    %7615 = vmatprep.subr.mxu0 0.0
    %7616 = vmatpush1.msra.mxu0 0.0
    %7617 = vmatprep.subr.mxu0 0.0
    %7618 = vmatpush1.msra.mxu0 0.0
    %7619 = vmatprep.subr.mxu0 0.0
    %7620 = vmatpush1.msra.mxu0 0.0
    %7621 = vmatprep.subr.mxu0 0.0
    %7622 = vmatpush1.msra.mxu0 0.0
    %7623 = vmatprep.subr.mxu0 0.0
    %7624 = vmatpush1.msra.mxu0 0.0
    %7625 = vmatprep.subr.mxu0 0.0
    %7626 = vmatpush1.msra.mxu0 0.0
    %7627 = vmatprep.subr.mxu0 0.0
    %7628 = vmatpush1.msra.mxu0 0.0
    %7629 = vmatprep.subr.mxu0 0.0
    %7630 = vmatpush1.msra.mxu0 0.0
    %7631 = vmatprep.mubr.f32.mxu0 %v7565
    %7632 = vmatmul.mubr.f32.gmra.mrb[0].mxu0 %v7562
    %v7633 = vpop.f32.mrb[0].mxu0
    %v7634 = vadd.f32 0.0, %v7633
    %v7635 = vpop.f32.mrb[0].mxu0
    %v7636 = vadd.f32 0.0, %v7635
    %7637 = vdwg.mxu0
    %v7638 = vadd.f32 %v7514, %v7634
    %v7639 = vadd.f32 %v7516, %v7636
    %v7640 = vld [vmem:[%s12] sm:$0x3]
    %v7642 = vlaneseq
    %v7643 = vshrl.u32 %v7642, 7
    %v7644 = vsub.s32 0, %v7643
    %v7645 = vrot.slane %v7640, %v7644
    %v7646 = vlaneseq
    %v7647 = vshrl.u32 %v7646, 7
    %v7648 = vsub.s32 1, %v7647
    %v7649 = vrot.slane %v7640, %v7648
    %v7652 = vmul.f32 %v7638, %v7645
    %v7653 = vmul.f32 %v7639, %v7649
    %v7654 = vld [vmem:[%s13] sm:$0x3]
    %v7656 = vlaneseq
    %v7657 = vshrl.u32 %v7656, 7
    %v7658 = vsub.s32 0, %v7657
    %v7659 = vrot.slane %v7654, %v7658
    %v7660 = vlaneseq
    %v7661 = vshrl.u32 %v7660, 7
    %v7662 = vsub.s32 1, %v7661
    %v7663 = vrot.slane %v7654, %v7662
    %v7666 = vadd.f32 %v7652, %v7659
    %v7667 = vadd.f32 %v7653, %v7663
    %v7668 = vmax.f32 %v7666, 0.0
    %v7669 = vmax.f32 %v7667, 0.0
    %v7672 = vcombine.low %v7668, %v7669
    %7674 = vst.msk [vmem:[#allocation4] sm:$0x77] %vm3720, %v7672
    %v7675 = vld [vmem:[#allocation4] ss:$4 sm:$0x3]
    %v7676 = vld [vmem:[%s14] sm:$0xff]
    %v7677 = vld [vmem:[%s14 + $0x8] sm:$0xff]
    %v7678 = vld [vmem:[%s14 + $0x10] sm:$0xff]
    %v7679 = vld [vmem:[%s14 + $0x18] sm:$0xff]
    %v7680 = vld [vmem:[%s14 + $0x20] sm:$0xff]
    %v7681 = vld [vmem:[%s14 + $0x28] sm:$0xff]
    %v7682 = vld [vmem:[%s14 + $0x30] sm:$0xff]
    %v7683 = vld [vmem:[%s14 + $0x38] sm:$0xff]
    %v7684 = vld [vmem:[%s14 + $0x40] sm:$0xff]
    %v7685 = vld [vmem:[%s14 + $0x48] sm:$0xff]
    %v7686 = vld [vmem:[%s14 + $0x50] sm:$0xff]
    %v7687 = vld [vmem:[%s14 + $0x58] sm:$0xff]
    %v7688 = vld [vmem:[%s14 + $0x60] sm:$0xff]
    %v7689 = vld [vmem:[%s14 + $0x68] sm:$0xff]
    %v7690 = vld [vmem:[%s14 + $0x70] sm:$0xff]
    %v7691 = vld [vmem:[%s14 + $0x78] sm:$0xff]
    %v7692 = vld [vmem:[%s14 + $0x80] sm:$0xff]
    %v7693 = vld [vmem:[%s14 + $0x88] sm:$0xff]
    %v7694 = vld [vmem:[%s14 + $0x90] sm:$0xff]
    %v7695 = vld [vmem:[%s14 + $0x98] sm:$0xff]
    %v7696 = vld [vmem:[%s14 + $0xa0] sm:$0xff]
    %v7697 = vld [vmem:[%s14 + $0xa8] sm:$0xff]
    %v7698 = vld [vmem:[%s14 + $0xb0] sm:$0xff]
    %v7699 = vld [vmem:[%s14 + $0xb8] sm:$0xff]
    %v7700 = vld [vmem:[%s3747] ss:$4 sm:$0x3]
    %v7701 = vld [vmem:[%s3749] sm:$0xff]
    %v7702 = vld [vmem:[%s3749 + $0x8] sm:$0xff]
    %v7703 = vld [vmem:[%s3749 + $0x10] sm:$0xff]
    %v7704 = vld [vmem:[%s3749 + $0x18] sm:$0xff]
    %v7705 = vld [vmem:[%s3749 + $0x20] sm:$0xff]
    %v7706 = vld [vmem:[%s3749 + $0x28] sm:$0xff]
    %v7707 = vld [vmem:[%s3749 + $0x30] sm:$0xff]
    %v7708 = vld [vmem:[%s3749 + $0x38] sm:$0xff]
    %v7709 = vld [vmem:[%s3749 + $0x40] sm:$0xff]
    %v7710 = vld [vmem:[%s3749 + $0x48] sm:$0xff]
    %v7711 = vld [vmem:[%s3749 + $0x50] sm:$0xff]
    %v7712 = vld [vmem:[%s3749 + $0x58] sm:$0xff]
    %v7713 = vld [vmem:[%s3749 + $0x60] sm:$0xff]
    %v7714 = vld [vmem:[%s3749 + $0x68] sm:$0xff]
    %v7715 = vld [vmem:[%s3749 + $0x70] sm:$0xff]
    %v7716 = vld [vmem:[%s3749 + $0x78] sm:$0xff]
    %v7717 = vld [vmem:[%s3749 + $0x80] sm:$0xff]
    %v7718 = vld [vmem:[%s3749 + $0x88] sm:$0xff]
    %v7719 = vld [vmem:[%s3749 + $0x90] sm:$0xff]
    %v7720 = vld [vmem:[%s3749 + $0x98] sm:$0xff]
    %v7721 = vld [vmem:[%s3749 + $0xa0] sm:$0xff]
    %v7722 = vld [vmem:[%s3749 + $0xa8] sm:$0xff]
    %v7723 = vld [vmem:[%s3749 + $0xb0] sm:$0xff]
    %v7724 = vld [vmem:[%s3749 + $0xb8] sm:$0xff]
    %v7726 = vlaneseq
    %v7727 = vshrl.u32 %v7726, 7
    %v7728 = vsub.s32 0, %v7727
    %v7729 = vrot.slane %v7700, %v7728
    %v7730 = vlaneseq
    %v7731 = vshrl.u32 %v7730, 7
    %v7732 = vsub.s32 1, %v7731
    %v7733 = vrot.slane %v7700, %v7732
    %v7735 = vsel %vm3784, %v7733, 0
    %7737 = vmatprep.subr.mxu0 0.0
    %7738 = vmatpush1.msra.mxu0 %v7701
    %7739 = vmatprep.subr.mxu0 0.0
    %7740 = vmatpush1.msra.mxu0 %v7702
    %7741 = vmatprep.subr.mxu0 0.0
    %7742 = vmatpush1.msra.mxu0 %v7703
    %7743 = vmatprep.subr.mxu0 0.0
    %7744 = vmatpush1.msra.mxu0 %v7704
    %7745 = vmatprep.subr.mxu0 0.0
    %7746 = vmatpush1.msra.mxu0 %v7705
    %7747 = vmatprep.subr.mxu0 0.0
    %7748 = vmatpush1.msra.mxu0 %v7706
    %7749 = vmatprep.subr.mxu0 0.0
    %7750 = vmatpush1.msra.mxu0 %v7707
    %7751 = vmatprep.subr.mxu0 0.0
    %7752 = vmatpush1.msra.mxu0 %v7708
    %7753 = vmatprep.subr.mxu0 0.0
    %7754 = vmatpush1.msra.mxu0 %v7709
    %7755 = vmatprep.subr.mxu0 0.0
    %7756 = vmatpush1.msra.mxu0 %v7710
    %7757 = vmatprep.subr.mxu0 0.0
    %7758 = vmatpush1.msra.mxu0 %v7711
    %7759 = vmatprep.subr.mxu0 0.0
    %7760 = vmatpush1.msra.mxu0 %v7712
    %7761 = vmatprep.subr.mxu0 0.0
    %7762 = vmatpush1.msra.mxu0 %v7713
    %7763 = vmatprep.subr.mxu0 0.0
    %7764 = vmatpush1.msra.mxu0 %v7714
    %7765 = vmatprep.subr.mxu0 0.0
    %7766 = vmatpush1.msra.mxu0 %v7715
    %7767 = vmatprep.subr.mxu0 0.0
    %7768 = vmatpush1.msra.mxu0 %v7716
    %7769 = vmatprep.subr.mxu0 0.0
    %7770 = vmatpush1.msra.mxu0 %v7717
    %7771 = vmatprep.subr.mxu0 0.0
    %7772 = vmatpush1.msra.mxu0 %v7718
    %7773 = vmatprep.subr.mxu0 0.0
    %7774 = vmatpush1.msra.mxu0 %v7719
    %7775 = vmatprep.subr.mxu0 0.0
    %7776 = vmatpush1.msra.mxu0 %v7720
    %7777 = vmatprep.subr.mxu0 0.0
    %7778 = vmatpush1.msra.mxu0 %v7721
    %7779 = vmatprep.subr.mxu0 0.0
    %7780 = vmatpush1.msra.mxu0 %v7722
    %7781 = vmatprep.subr.mxu0 0.0
    %7782 = vmatpush1.msra.mxu0 %v7723
    %7783 = vmatprep.subr.mxu0 0.0
    %7784 = vmatpush1.msra.mxu0 %v7724
    %7785 = vmatprep.subr.mxu0 0.0
    %7786 = vmatpush1.msra.mxu0 0.0
    %7787 = vmatprep.subr.mxu0 0.0
    %7788 = vmatpush1.msra.mxu0 0.0
    %7789 = vmatprep.subr.mxu0 0.0
    %7790 = vmatpush1.msra.mxu0 0.0
    %7791 = vmatprep.subr.mxu0 0.0
    %7792 = vmatpush1.msra.mxu0 0.0
    %7793 = vmatprep.subr.mxu0 0.0
    %7794 = vmatpush1.msra.mxu0 0.0
    %7795 = vmatprep.subr.mxu0 0.0
    %7796 = vmatpush1.msra.mxu0 0.0
    %7797 = vmatprep.subr.mxu0 0.0
    %7798 = vmatpush1.msra.mxu0 0.0
    %7799 = vmatprep.subr.mxu0 0.0
    %7800 = vmatpush1.msra.mxu0 0.0
    %7801 = vmatprep.mubr.f32.mxu0 %v7735
    %7802 = vmatmul.mubr.f32.gmra.mrb[0].mxu0 %v7729
    %v7803 = vpop.f32.mrb[0].mxu0
    %v7804 = vadd.f32 0.0, %v7803
    %v7805 = vpop.f32.mrb[0].mxu0
    %7806 = vdwg.mxu0
    %v7808 = vlaneseq
    %v7809 = vshrl.u32 %v7808, 7
    %v7810 = vsub.s32 0, %v7809
    %v7811 = vrot.slane %v7675, %v7810
    %v7812 = vlaneseq
    %v7813 = vshrl.u32 %v7812, 7
    %v7814 = vsub.s32 1, %v7813
    %v7815 = vrot.slane %v7675, %v7814
    %v7817 = vsel %vm3784, %v7815, 0
    %7819 = vmatprep.subr.mxu0 0.0
    %7820 = vmatpush1.msra.mxu0 %v7676
    %7821 = vmatprep.subr.mxu0 0.0
    %7822 = vmatpush1.msra.mxu0 %v7677
    %7823 = vmatprep.subr.mxu0 0.0
    %7824 = vmatpush1.msra.mxu0 %v7678
    %7825 = vmatprep.subr.mxu0 0.0
    %7826 = vmatpush1.msra.mxu0 %v7679
    %7827 = vmatprep.subr.mxu0 0.0
    %7828 = vmatpush1.msra.mxu0 %v7680
    %7829 = vmatprep.subr.mxu0 0.0
    %7830 = vmatpush1.msra.mxu0 %v7681
    %7831 = vmatprep.subr.mxu0 0.0
    %7832 = vmatpush1.msra.mxu0 %v7682
    %7833 = vmatprep.subr.mxu0 0.0
    %7834 = vmatpush1.msra.mxu0 %v7683
    %7835 = vmatprep.subr.mxu0 0.0
    %7836 = vmatpush1.msra.mxu0 %v7684
    %7837 = vmatprep.subr.mxu0 0.0
    %7838 = vmatpush1.msra.mxu0 %v7685
    %7839 = vmatprep.subr.mxu0 0.0
    %7840 = vmatpush1.msra.mxu0 %v7686
    %7841 = vmatprep.subr.mxu0 0.0
    %7842 = vmatpush1.msra.mxu0 %v7687
    %7843 = vmatprep.subr.mxu0 0.0
    %7844 = vmatpush1.msra.mxu0 %v7688
    %7845 = vmatprep.subr.mxu0 0.0
    %7846 = vmatpush1.msra.mxu0 %v7689
    %7847 = vmatprep.subr.mxu0 0.0
    %7848 = vmatpush1.msra.mxu0 %v7690
    %7849 = vmatprep.subr.mxu0 0.0
    %7850 = vmatpush1.msra.mxu0 %v7691
    %7851 = vmatprep.subr.mxu0 0.0
    %7852 = vmatpush1.msra.mxu0 %v7692
    %7853 = vmatprep.subr.mxu0 0.0
    %7854 = vmatpush1.msra.mxu0 %v7693
    %7855 = vmatprep.subr.mxu0 0.0
    %7856 = vmatpush1.msra.mxu0 %v7694
    %7857 = vmatprep.subr.mxu0 0.0
    %7858 = vmatpush1.msra.mxu0 %v7695
    %7859 = vmatprep.subr.mxu0 0.0
    %7860 = vmatpush1.msra.mxu0 %v7696
    %7861 = vmatprep.subr.mxu0 0.0
    %7862 = vmatpush1.msra.mxu0 %v7697
    %7863 = vmatprep.subr.mxu0 0.0
    %7864 = vmatpush1.msra.mxu0 %v7698
    %7865 = vmatprep.subr.mxu0 0.0
    %7866 = vmatpush1.msra.mxu0 %v7699
    %7867 = vmatprep.subr.mxu0 0.0
    %7868 = vmatpush1.msra.mxu0 0.0
    %7869 = vmatprep.subr.mxu0 0.0
    %7870 = vmatpush1.msra.mxu0 0.0
    %7871 = vmatprep.subr.mxu0 0.0
    %7872 = vmatpush1.msra.mxu0 0.0
    %7873 = vmatprep.subr.mxu0 0.0
    %7874 = vmatpush1.msra.mxu0 0.0
    %7875 = vmatprep.subr.mxu0 0.0
    %7876 = vmatpush1.msra.mxu0 0.0
    %7877 = vmatprep.subr.mxu0 0.0
    %7878 = vmatpush1.msra.mxu0 0.0
    %7879 = vmatprep.subr.mxu0 0.0
    %7880 = vmatpush1.msra.mxu0 0.0
    %7881 = vmatprep.subr.mxu0 0.0
    %7882 = vmatpush1.msra.mxu0 0.0
    %7883 = vmatprep.mubr.f32.mxu0 %v7817
    %7884 = vmatmul.mubr.f32.gmra.mrb[0].mxu0 %v7811
    %v7885 = vpop.f32.mrb[0].mxu0
    %v7886 = vadd.f32 %v7804, %v7885
    %v7887 = vpop.f32.mrb[0].mxu0
    %7888 = vdwg.mxu0
    %v7889 = vld [vmem:[%s3939] ss:$4 sm:$0x3]
    %v7890 = vld [vmem:[%s3941] sm:$0xff]
    %v7891 = vld [vmem:[%s3941 + $0x8] sm:$0xff]
    %v7892 = vld [vmem:[%s3941 + $0x10] sm:$0xff]
    %v7893 = vld [vmem:[%s3941 + $0x18] sm:$0xff]
    %v7894 = vld [vmem:[%s3941 + $0x20] sm:$0xff]
    %v7895 = vld [vmem:[%s3941 + $0x28] sm:$0xff]
    %v7896 = vld [vmem:[%s3941 + $0x30] sm:$0xff]
    %v7897 = vld [vmem:[%s3941 + $0x38] sm:$0xff]
    %v7898 = vld [vmem:[%s3941 + $0x40] sm:$0xff]
    %v7899 = vld [vmem:[%s3941 + $0x48] sm:$0xff]
    %v7900 = vld [vmem:[%s3941 + $0x50] sm:$0xff]
    %v7901 = vld [vmem:[%s3941 + $0x58] sm:$0xff]
    %v7902 = vld [vmem:[%s3941 + $0x60] sm:$0xff]
    %v7903 = vld [vmem:[%s3941 + $0x68] sm:$0xff]
    %v7904 = vld [vmem:[%s3941 + $0x70] sm:$0xff]
    %v7905 = vld [vmem:[%s3941 + $0x78] sm:$0xff]
    %v7906 = vld [vmem:[%s3941 + $0x80] sm:$0xff]
    %v7907 = vld [vmem:[%s3941 + $0x88] sm:$0xff]
    %v7908 = vld [vmem:[%s3941 + $0x90] sm:$0xff]
    %v7909 = vld [vmem:[%s3941 + $0x98] sm:$0xff]
    %v7910 = vld [vmem:[%s3941 + $0xa0] sm:$0xff]
    %v7911 = vld [vmem:[%s3941 + $0xa8] sm:$0xff]
    %v7912 = vld [vmem:[%s3941 + $0xb0] sm:$0xff]
    %v7913 = vld [vmem:[%s3941 + $0xb8] sm:$0xff]
    %v7915 = vlaneseq
    %v7916 = vshrl.u32 %v7915, 7
    %v7917 = vsub.s32 0, %v7916
    %v7918 = vrot.slane %v7889, %v7917
    %v7919 = vlaneseq
    %v7920 = vshrl.u32 %v7919, 7
    %v7921 = vsub.s32 1, %v7920
    %v7922 = vrot.slane %v7889, %v7921
    %v7924 = vsel %vm3784, %v7922, 0
    %7926 = vmatprep.subr.mxu0 0.0
    %7927 = vmatpush1.msra.mxu0 %v7890
    %7928 = vmatprep.subr.mxu0 0.0
    %7929 = vmatpush1.msra.mxu0 %v7891
    %7930 = vmatprep.subr.mxu0 0.0
    %7931 = vmatpush1.msra.mxu0 %v7892
    %7932 = vmatprep.subr.mxu0 0.0
    %7933 = vmatpush1.msra.mxu0 %v7893
    %7934 = vmatprep.subr.mxu0 0.0
    %7935 = vmatpush1.msra.mxu0 %v7894
    %7936 = vmatprep.subr.mxu0 0.0
    %7937 = vmatpush1.msra.mxu0 %v7895
    %7938 = vmatprep.subr.mxu0 0.0
    %7939 = vmatpush1.msra.mxu0 %v7896
    %7940 = vmatprep.subr.mxu0 0.0
    %7941 = vmatpush1.msra.mxu0 %v7897
    %7942 = vmatprep.subr.mxu0 0.0
    %7943 = vmatpush1.msra.mxu0 %v7898
    %7944 = vmatprep.subr.mxu0 0.0
    %7945 = vmatpush1.msra.mxu0 %v7899
    %7946 = vmatprep.subr.mxu0 0.0
    %7947 = vmatpush1.msra.mxu0 %v7900
    %7948 = vmatprep.subr.mxu0 0.0
    %7949 = vmatpush1.msra.mxu0 %v7901
    %7950 = vmatprep.subr.mxu0 0.0
    %7951 = vmatpush1.msra.mxu0 %v7902
    %7952 = vmatprep.subr.mxu0 0.0
    %7953 = vmatpush1.msra.mxu0 %v7903
    %7954 = vmatprep.subr.mxu0 0.0
    %7955 = vmatpush1.msra.mxu0 %v7904
    %7956 = vmatprep.subr.mxu0 0.0
    %7957 = vmatpush1.msra.mxu0 %v7905
    %7958 = vmatprep.subr.mxu0 0.0
    %7959 = vmatpush1.msra.mxu0 %v7906
    %7960 = vmatprep.subr.mxu0 0.0
    %7961 = vmatpush1.msra.mxu0 %v7907
    %7962 = vmatprep.subr.mxu0 0.0
    %7963 = vmatpush1.msra.mxu0 %v7908
    %7964 = vmatprep.subr.mxu0 0.0
    %7965 = vmatpush1.msra.mxu0 %v7909
    %7966 = vmatprep.subr.mxu0 0.0
    %7967 = vmatpush1.msra.mxu0 %v7910
    %7968 = vmatprep.subr.mxu0 0.0
    %7969 = vmatpush1.msra.mxu0 %v7911
    %7970 = vmatprep.subr.mxu0 0.0
    %7971 = vmatpush1.msra.mxu0 %v7912
    %7972 = vmatprep.subr.mxu0 0.0
    %7973 = vmatpush1.msra.mxu0 %v7913
    %7974 = vmatprep.subr.mxu0 0.0
    %7975 = vmatpush1.msra.mxu0 0.0
    %7976 = vmatprep.subr.mxu0 0.0
    %7977 = vmatpush1.msra.mxu0 0.0
    %7978 = vmatprep.subr.mxu0 0.0
    %7979 = vmatpush1.msra.mxu0 0.0
    %7980 = vmatprep.subr.mxu0 0.0
    %7981 = vmatpush1.msra.mxu0 0.0
    %7982 = vmatprep.subr.mxu0 0.0
    %7983 = vmatpush1.msra.mxu0 0.0
    %7984 = vmatprep.subr.mxu0 0.0
    %7985 = vmatpush1.msra.mxu0 0.0
    %7986 = vmatprep.subr.mxu0 0.0
    %7987 = vmatpush1.msra.mxu0 0.0
    %7988 = vmatprep.subr.mxu0 0.0
    %7989 = vmatpush1.msra.mxu0 0.0
    %7990 = vmatprep.mubr.f32.mxu0 %v7924
    %7991 = vmatmul.mubr.f32.gmra.mrb[0].mxu0 %v7918
    %v7992 = vpop.f32.mrb[0].mxu0
    %v7993 = vadd.f32 0.0, %v7992
    %v7994 = vpop.f32.mrb[0].mxu0
    %7995 = vdwg.mxu0
    %v7996 = vadd.f32 %v7886, %v7993
    %v7997 = vld [vmem:[%s15] sm:$0x1]
    %v7998 = vadd.f32 %v7996, %v7997
    %v7999 = vmax.f32 %v7998, 0.0
    %v8000 = vld [vmem:[%s16] sm:$0x1]
    %v8001 = vmul.f32 %v7999, %v8000
    %v8002 = vsel %vm4054, %v8001, 0.0
    %8003 = vadd.xlane.f32.xlu0 %v8002
    %v8004 = vpop.xlane.xlu0 %8003
    %v8005 = vld [vmem:[#allocation5] sm:$0x1]
    %v8006 = vadd.f32 %v8004, %v8005
    %v8007 = vmul.f32 %v8006, 0.5
    %v8008 = vtanh.pop %v8007
    %v8009 = vadd.f32 %v8008, 1.0
    %v8010 = vmul.f32 %v8009, 0.5
    %8011 = vst.msk [vmem:[%s18 + $0x1] sm:$0x1] %vm4064, %v8010
    // Predicated region
    $region82: #{mnist_mil_forward.1} parent=1 // pred_check
      _
    $region83: #{mnist_mil_forward.1} parent=1 // pred_check_branch
      %8013 = sbr.rel (0) target = $region85
    $region84: #{mnist_mil_forward.1} parent=1 // pred_region
      _
    $region85: #{mnist_mil_forward.1} parent=1 // pred_fallthru
      _
    // Predicated region
    $region86: #{mnist_mil_forward.1} parent=1 // pred_check
      _
    $region87: #{mnist_mil_forward.1} parent=1 // pred_check_branch
      %8015 = sbr.rel (0) target = $region89
    $region88: #{mnist_mil_forward.1} parent=1 // pred_region
      _
    $region89: #{mnist_mil_forward.1} parent=1 // pred_fallthru
      _
    %8016 = vsyncpa [#allocation7], 1
    %8017 = vsyncpa [#allocation9], 1

</llo_original>
